<compile_context>
chip_gen: v7x
topology: tpu7x:2x2x1
jax: 0.10.0
libtpu: 0.0.40
codegen_flags: <defaults>
</compile_context>

<pallas_src>
import functools

import jax
import jax.numpy as jnp
from jax.experimental import pallas as pl
from jax.experimental.pallas import tpu as pltpu


# ----------------------------------------------------------------------------
# Fused kernel: 5-layer conv stack on (pred || target) for ONE batch element
# + per-layer MSE accumulation -> one dense (1, 8, 128) partial-loss block.
# ----------------------------------------------------------------------------
def _fused_feature_loss_kernel(pred_ref, tgt_ref, w_ref, b_ref, mask_ref,
                               out_ref, act_ref, patch_ref,
                               *, H, W, N, channels, cmax):
    num_layers = len(channels) - 1
    HW = H * W
    L2 = 2 * HW
    c0 = channels[0]

    # Load pred || target into one channel-major, lane-dense activation buffer:
    # sublanes = channels, lanes = [pred pixels | target pixels].
    act_ref[0:c0, 0:HW] = pred_ref[0]
    act_ref[0:c0, HW:L2] = tgt_ref[0]
    # Zero only the padding-channel rows (guards against uninitialized VMEM on
    # the first step; afterwards the zero-padded weights keep them at exactly 0).
    if c0 < cmax:
        act_ref[c0:cmax, :] = jnp.zeros((cmax - c0, L2), jnp.float32)

    # Vector loss accumulator (no per-layer scalar / cross-lane reduction).
    loss_vec = jnp.zeros((cmax, HW), jnp.float32)

    for l in range(num_layers):
        x = act_ref[...]  # (cmax, 2*HW)

        # --- im2col: 9 lane-rolled + masked copies stacked along sublanes ---
        # patch[(kh*3+kw)*cmax + ci, j] = act[ci, j + (kh-1)*W + (kw-1)] (or 0
        # outside the image).  The mask also kills any pred/target seam leak.
        for t in range(9):
            kh, kw = divmod(t, 3)
            s = (kh - 1) * W + (kw - 1)
            if s == 0:
                patch_ref[t * cmax:(t + 1) * cmax, :] = x
            else:
                shifted = pltpu.roll(x, shift=(-s) % L2, axis=1)
                patch_ref[t * cmax:(t + 1) * cmax, :] = shifted * mask_ref[t]

        # --- one MXU matmul per layer, lane-dense output (cmax, 2*HW) ---
        # pred and target share the same RHS-weight push.
        pre = jnp.dot(w_ref[l], patch_ref[...],
                      preferred_element_type=jnp.float32)

        # Pre-activation MSE contribution (the shared bias cancels in the
        # difference); fold the mean normalization into the accumulate.
        d = pre[:, 0:HW] - pre[:, HW:L2]
        cout = channels[l + 1]
        scale = 1.0 / float(N * H * W * cout)
        loss_vec = loss_vec + (d * d) * scale

        # Bias + ReLU feed the next encoder block; stays VMEM-resident.
        # (Padded rows stay exactly 0: zero weights + zero bias -> relu(0)=0.)
        if l + 1 < num_layers:
            act_ref[...] = jnp.maximum(pre + b_ref[l], 0.0)

    # Fold (cmax, HW) -> (8, 128) with vreg-aligned slice adds (pure VPU);
    # the wrapper does the final scalar sum over the (N, 8, 128) output.
    red = loss_vec[:, 0:128]
    for q in range(1, HW // 128):
        red = red + loss_vec[:, q * 128:(q + 1) * 128]
    blk = red[0:8, :]
    for q in range(1, cmax // 8):
        blk = blk + red[q * 8:(q + 1) * 8, :]
    out_ref[0] = blk


# ----------------------------------------------------------------------------
# Synthetic DAE encoder parameters (deterministic init).
# ----------------------------------------------------------------------------
def make_encoder_params(key, channels):
    params = []
    for i in range(len(channels) - 1):
        key, kw, kb = jax.random.split(key, 3)
        cin, cout = channels[i], channels[i + 1]
        fan_in = 9 * cin
        w = jax.random.normal(kw, (3, 3, cin, cout), jnp.float32) * (2.0 / fan_in) ** 0.5
        b = jax.random.normal(kb, (cout,), jnp.float32) * 0.01
        params.append((w, b))
    return params


def pack_encoder_params(params, cmax):
    """Pack all layer weights/biases into single zero-padded buffers.

    w_packed[l, co, (kh*3+kw)*cmax + ci] = w_l[kh, kw, ci, co]  (else 0)
    b_packed[l, co, 0]                   = b_l[co]              (else 0)
    """
    L = len(params)
    w_packed = jnp.zeros((L, cmax, 9 * cmax), jnp.float32)
    b_packed = jnp.zeros((L, cmax, 1), jnp.float32)
    for l, (w, b) in enumerate(params):
        cin, cout = w.shape[2], w.shape[3]
        wt = jnp.transpose(w, (3, 0, 1, 2))                 # (cout, 3, 3, cin)
        w_full = jnp.zeros((cmax, 3, 3, cmax), jnp.float32)
        w_full = w_full.at[:cout, :, :, :cin].set(wt)
        w_packed = w_packed.at[l].set(w_full.reshape(cmax, 9 * cmax))
        b_packed = b_packed.at[l, :cout, 0].set(b)
    return w_packed, b_packed


def build_tap_masks(H, W):
    """Per-tap validity mask over the [pred | target] flattened lane axis."""
    HW = H * W
    y = jnp.arange(HW) // W
    x = jnp.arange(HW) % W
    masks = []
    for kh in range(3):
        for kw in range(3):
            dh, dw = kh - 1, kw - 1
            valid = ((y + dh >= 0) & (y + dh < H) &
                     (x + dw >= 0) & (x + dw < W))
            m = valid.astype(jnp.float32)
            masks.append(jnp.concatenate([m, m]))
    return jnp.stack(masks).reshape(9, 1, 2 * HW)


# ----------------------------------------------------------------------------
# FeatureReconstructionLoss forward.
# prediction, target: NCHW float32.  Returns shape (1,) float32, matching
# torch.tensor([0.0]) accumulation in the reference module.
# ----------------------------------------------------------------------------
def feature_reconstruction_loss(prediction, target, w_packed, b_packed, channels):
    N, C, H, W = prediction.shape
    HW = H * W
    L = len(channels) - 1
    cmax = w_packed.shape[1]
    assert C == channels[0]
    assert HW % 128 == 0 and cmax % 8 == 0

    # NCHW -> (N, C, H*W): channels on sublanes, spatial lane-dense.
    # (Pure reshape; no transpose needed.)
    p = prediction.reshape(N, C, HW).astype(jnp.float32)
    t = target.reshape(N, C, HW).astype(jnp.float32)
    masks = build_tap_masks(H, W)

    kernel = functools.partial(_fused_feature_loss_kernel, H=H, W=W, N=N,
                               channels=tuple(channels), cmax=cmax)

    partial_losses = pl.pallas_call(
        kernel,
        grid=(N,),
        in_specs=[
            pl.BlockSpec((1, C, HW), lambda n: (n, 0, 0)),           # pred
            pl.BlockSpec((1, C, HW), lambda n: (n, 0, 0)),           # target
            pl.BlockSpec((L, cmax, 9 * cmax), lambda n: (0, 0, 0)),  # packed W
            pl.BlockSpec((L, cmax, 1), lambda n: (0, 0, 0)),         # packed b
            pl.BlockSpec((9, 1, 2 * HW), lambda n: (0, 0, 0)),       # tap masks
        ],
        out_specs=pl.BlockSpec((1, 8, 128), lambda n: (n, 0, 0)),
        out_shape=jax.ShapeDtypeStruct((N, 8, 128), jnp.float32),
        scratch_shapes=[
            pltpu.VMEM((cmax, 2 * HW), jnp.float32),        # activations p||t
            pltpu.VMEM((9 * cmax, 2 * HW), jnp.float32),    # im2col patches
        ],
        compiler_params=pltpu.CompilerParams(
            dimension_semantics=("parallel",)),
    )(p, t, w_packed, b_packed, masks)

    # Each grid step's block sums to sum_l SSE_l(n)/(N*H*W*Cout_l); summing
    # over the batch (and block lanes) gives exactly sum_l MSE_l.
    return jnp.sum(partial_losses).reshape(1)


if __name__ == "__main__":
    key = jax.random.PRNGKey(0)
    k_params, k_pred, k_tgt = jax.random.split(key, 3)

    # Synthetic DAE encoder channel progression (input has 4 channels).
    channels = [4, 8, 16, 16, 32, 32]
    params = make_encoder_params(k_params, channels)
    cmax = ((max(channels) + 7) // 8) * 8
    w_packed, b_packed = pack_encoder_params(params, cmax)

    # Small deterministic inputs: batch=2, channels=4, spatial=16x16 (NCHW).
    prediction = jax.random.normal(k_pred, (2, 4, 16, 16), jnp.float32)
    target = jax.random.normal(k_tgt, (2, 4, 16, 16), jnp.float32)

    loss_fn = jax.jit(
        lambda p, t, w, b: feature_reconstruction_loss(p, t, w, b,
                                                       tuple(channels)))
    feature_loss = loss_fn(prediction, target, w_packed, b_packed)
    jax.block_until_ready(feature_loss)

    assert feature_loss.shape == (1,)
    assert jnp.isfinite(feature_loss).all()
    print("KERNEL_OK")
</pallas_src>

<mosaic_0001>
module attributes {stable_mosaic.version = 11 : i64} {
  func.func @_fused_feature_loss_kernel(%arg0: i32, %arg1: memref<1x4x256xf32, #tpu.memory_space<vmem>>, %arg2: memref<1x4x256xf32, #tpu.memory_space<vmem>>, %arg3: memref<5x32x288xf32, #tpu.memory_space<vmem>>, %arg4: memref<5x32x1xf32, #tpu.memory_space<vmem>>, %arg5: memref<9x1x512xf32, #tpu.memory_space<vmem>>, %arg6: memref<1x8x128xf32, #tpu.memory_space<vmem>>, %arg7: memref<32x512xf32, #tpu.memory_space<vmem>>, %arg8: memref<288x512xf32, #tpu.memory_space<vmem>>) attributes {dimension_semantics = [#tpu.dimension_semantics<parallel>], iteration_bounds = array<i64: 2>, scalar_prefetch = 0 : i64, scratch_operands = 2 : i64, tpu.core_type = #tpu.core_type<tc>, window_params = [{transform_indices = @transform_0, window_bounds = array<i64: 1, 4, 256>}, {transform_indices = @transform_1, window_bounds = array<i64: 1, 4, 256>}, {pipeline_mode = #tpu.pipeline_mode<synchronous>, transform_indices = @transform_2, window_bounds = array<i64: 5, 32, 288>}, {pipeline_mode = #tpu.pipeline_mode<synchronous>, transform_indices = @transform_3, window_bounds = array<i64: 5, 32, 1>}, {pipeline_mode = #tpu.pipeline_mode<synchronous>, transform_indices = @transform_4, window_bounds = array<i64: 9, 1, 512>}, {transform_indices = @transform_5, window_bounds = array<i64: 1, 8, 128>}]} {
    %c0 = arith.constant 0 : index
    %c0_0 = arith.constant 0 : index
    %c0_1 = arith.constant 0 : index
    %0 = vector.load %arg1[%c0, %c0_0, %c0_1] : memref<1x4x256xf32, #tpu.memory_space<vmem>>, vector<1x4x256xf32>
    %1 = vector.shape_cast %0 : vector<1x4x256xf32> to vector<4x256xf32>
    %c0_2 = arith.constant 0 : index
    %c0_3 = arith.constant 0 : index
    %2 = vector.load %arg7[%c0_2, %c0_3] : memref<32x512xf32, #tpu.memory_space<vmem>>, vector<4x256xf32>
    tpu.vector_store %arg7[%c0_2, %c0_3], %1 {strides = array<i32>} : memref<32x512xf32, #tpu.memory_space<vmem>>, vector<4x256xf32>,
    %c0_4 = arith.constant 0 : index
    %c0_5 = arith.constant 0 : index
    %c0_6 = arith.constant 0 : index
    %3 = vector.load %arg2[%c0_4, %c0_5, %c0_6] : memref<1x4x256xf32, #tpu.memory_space<vmem>>, vector<1x4x256xf32>
    %4 = vector.shape_cast %3 : vector<1x4x256xf32> to vector<4x256xf32>
    %c0_7 = arith.constant 0 : index
    %c256 = arith.constant 256 : index
    %5 = vector.load %arg7[%c0_7, %c256] : memref<32x512xf32, #tpu.memory_space<vmem>>, vector<4x256xf32>
    tpu.vector_store %arg7[%c0_7, %c256], %4 {strides = array<i32>} : memref<32x512xf32, #tpu.memory_space<vmem>>, vector<4x256xf32>,
    %cst = arith.constant 0.000000e+00 : f32
    %6 = vector.broadcast %cst : f32 to vector<28x512xf32>
    %c4 = arith.constant 4 : index
    %c0_8 = arith.constant 0 : index
    %7 = vector.load %arg7[%c4, %c0_8] : memref<32x512xf32, #tpu.memory_space<vmem>>, vector<28x512xf32>
    tpu.vector_store %arg7[%c4, %c0_8], %6 {strides = array<i32>} : memref<32x512xf32, #tpu.memory_space<vmem>>, vector<28x512xf32>,
    %cst_9 = arith.constant 0.000000e+00 : f32
    %8 = vector.broadcast %cst_9 : f32 to vector<32x256xf32>
    %c0_10 = arith.constant 0 : index
    %c0_11 = arith.constant 0 : index
    %9 = vector.load %arg7[%c0_10, %c0_11] : memref<32x512xf32, #tpu.memory_space<vmem>>, vector<32x512xf32>
    %c17_i32 = arith.constant 17 : i32
    %10 = tpu.dynamic_rotate %9 by %c17_i32 dim 1 : vector<32x512xf32>, i32 -> vector<32x512xf32>
    %c0_12 = arith.constant 0 : index
    %c0_13 = arith.constant 0 : index
    %c0_14 = arith.constant 0 : index
    %11 = vector.load %arg5[%c0_12, %c0_13, %c0_14] : memref<9x1x512xf32, #tpu.memory_space<vmem>>, vector<1x1x512xf32>
    %12 = vector.shape_cast %11 : vector<1x1x512xf32> to vector<1x512xf32>
    %13 = vector.broadcast %12 : vector<1x512xf32> to vector<32x512xf32>
    %14 = arith.mulf %10, %13 : vector<32x512xf32>
    %c0_15 = arith.constant 0 : index
    %c0_16 = arith.constant 0 : index
    %15 = vector.load %arg8[%c0_15, %c0_16] : memref<288x512xf32, #tpu.memory_space<vmem>>, vector<32x512xf32>
    tpu.vector_store %arg8[%c0_15, %c0_16], %14 {strides = array<i32>} : memref<288x512xf32, #tpu.memory_space<vmem>>, vector<32x512xf32>,
    %c16_i32 = arith.constant 16 : i32
    %16 = tpu.dynamic_rotate %9 by %c16_i32 dim 1 : vector<32x512xf32>, i32 -> vector<32x512xf32>
    %c1 = arith.constant 1 : index
    %c0_17 = arith.constant 0 : index
    %c0_18 = arith.constant 0 : index
    %17 = vector.load %arg5[%c1, %c0_17, %c0_18] : memref<9x1x512xf32, #tpu.memory_space<vmem>>, vector<1x1x512xf32>
    %18 = vector.shape_cast %17 : vector<1x1x512xf32> to vector<1x512xf32>
    %19 = vector.broadcast %18 : vector<1x512xf32> to vector<32x512xf32>
    %20 = arith.mulf %16, %19 : vector<32x512xf32>
    %c32 = arith.constant 32 : index
    %c0_19 = arith.constant 0 : index
    %21 = vector.load %arg8[%c32, %c0_19] : memref<288x512xf32, #tpu.memory_space<vmem>>, vector<32x512xf32>
    tpu.vector_store %arg8[%c32, %c0_19], %20 {strides = array<i32>} : memref<288x512xf32, #tpu.memory_space<vmem>>, vector<32x512xf32>,
    %c15_i32 = arith.constant 15 : i32
    %22 = tpu.dynamic_rotate %9 by %c15_i32 dim 1 : vector<32x512xf32>, i32 -> vector<32x512xf32>
    %c2 = arith.constant 2 : index
    %c0_20 = arith.constant 0 : index
    %c0_21 = arith.constant 0 : index
    %23 = vector.load %arg5[%c2, %c0_20, %c0_21] : memref<9x1x512xf32, #tpu.memory_space<vmem>>, vector<1x1x512xf32>
    %24 = vector.shape_cast %23 : vector<1x1x512xf32> to vector<1x512xf32>
    %25 = vector.broadcast %24 : vector<1x512xf32> to vector<32x512xf32>
    %26 = arith.mulf %22, %25 : vector<32x512xf32>
    %c64 = arith.constant 64 : index
    %c0_22 = arith.constant 0 : index
    %27 = vector.load %arg8[%c64, %c0_22] : memref<288x512xf32, #tpu.memory_space<vmem>>, vector<32x512xf32>
    tpu.vector_store %arg8[%c64, %c0_22], %26 {strides = array<i32>} : memref<288x512xf32, #tpu.memory_space<vmem>>, vector<32x512xf32>,
    %c1_i32 = arith.constant 1 : i32
    %28 = tpu.dynamic_rotate %9 by %c1_i32 dim 1 : vector<32x512xf32>, i32 -> vector<32x512xf32>
    %c3 = arith.constant 3 : index
    %c0_23 = arith.constant 0 : index
    %c0_24 = arith.constant 0 : index
    %29 = vector.load %arg5[%c3, %c0_23, %c0_24] : memref<9x1x512xf32, #tpu.memory_space<vmem>>, vector<1x1x512xf32>
    %30 = vector.shape_cast %29 : vector<1x1x512xf32> to vector<1x512xf32>
    %31 = vector.broadcast %30 : vector<1x512xf32> to vector<32x512xf32>
    %32 = arith.mulf %28, %31 : vector<32x512xf32>
    %c96 = arith.constant 96 : index
    %c0_25 = arith.constant 0 : index
    %33 = vector.load %arg8[%c96, %c0_25] : memref<288x512xf32, #tpu.memory_space<vmem>>, vector<32x512xf32>
    tpu.vector_store %arg8[%c96, %c0_25], %32 {strides = array<i32>} : memref<288x512xf32, #tpu.memory_space<vmem>>, vector<32x512xf32>,
    %c128 = arith.constant 128 : index
    %c0_26 = arith.constant 0 : index
    %34 = vector.load %arg8[%c128, %c0_26] : memref<288x512xf32, #tpu.memory_space<vmem>>, vector<32x512xf32>
    tpu.vector_store %arg8[%c128, %c0_26], %9 {strides = array<i32>} : memref<288x512xf32, #tpu.memory_space<vmem>>, vector<32x512xf32>,
    %c511_i32 = arith.constant 511 : i32
    %35 = tpu.dynamic_rotate %9 by %c511_i32 dim 1 : vector<32x512xf32>, i32 -> vector<32x512xf32>
    %c5 = arith.constant 5 : index
    %c0_27 = arith.constant 0 : index
    %c0_28 = arith.constant 0 : index
    %36 = vector.load %arg5[%c5, %c0_27, %c0_28] : memref<9x1x512xf32, #tpu.memory_space<vmem>>, vector<1x1x512xf32>
    %37 = vector.shape_cast %36 : vector<1x1x512xf32> to vector<1x512xf32>
    %38 = vector.broadcast %37 : vector<1x512xf32> to vector<32x512xf32>
    %39 = arith.mulf %35, %38 : vector<32x512xf32>
    %c160 = arith.constant 160 : index
    %c0_29 = arith.constant 0 : index
    %40 = vector.load %arg8[%c160, %c0_29] : memref<288x512xf32, #tpu.memory_space<vmem>>, vector<32x512xf32>
    tpu.vector_store %arg8[%c160, %c0_29], %39 {strides = array<i32>} : memref<288x512xf32, #tpu.memory_space<vmem>>, vector<32x512xf32>,
    %c497_i32 = arith.constant 497 : i32
    %41 = tpu.dynamic_rotate %9 by %c497_i32 dim 1 : vector<32x512xf32>, i32 -> vector<32x512xf32>
    %c6 = arith.constant 6 : index
    %c0_30 = arith.constant 0 : index
    %c0_31 = arith.constant 0 : index
    %42 = vector.load %arg5[%c6, %c0_30, %c0_31] : memref<9x1x512xf32, #tpu.memory_space<vmem>>, vector<1x1x512xf32>
    %43 = vector.shape_cast %42 : vector<1x1x512xf32> to vector<1x512xf32>
    %44 = vector.broadcast %43 : vector<1x512xf32> to vector<32x512xf32>
    %45 = arith.mulf %41, %44 : vector<32x512xf32>
    %c192 = arith.constant 192 : index
    %c0_32 = arith.constant 0 : index
    %46 = vector.load %arg8[%c192, %c0_32] : memref<288x512xf32, #tpu.memory_space<vmem>>, vector<32x512xf32>
    tpu.vector_store %arg8[%c192, %c0_32], %45 {strides = array<i32>} : memref<288x512xf32, #tpu.memory_space<vmem>>, vector<32x512xf32>,
    %c496_i32 = arith.constant 496 : i32
    %47 = tpu.dynamic_rotate %9 by %c496_i32 dim 1 : vector<32x512xf32>, i32 -> vector<32x512xf32>
    %c7 = arith.constant 7 : index
    %c0_33 = arith.constant 0 : index
    %c0_34 = arith.constant 0 : index
    %48 = vector.load %arg5[%c7, %c0_33, %c0_34] : memref<9x1x512xf32, #tpu.memory_space<vmem>>, vector<1x1x512xf32>
    %49 = vector.shape_cast %48 : vector<1x1x512xf32> to vector<1x512xf32>
    %50 = vector.broadcast %49 : vector<1x512xf32> to vector<32x512xf32>
    %51 = arith.mulf %47, %50 : vector<32x512xf32>
    %c224 = arith.constant 224 : index
    %c0_35 = arith.constant 0 : index
    %52 = vector.load %arg8[%c224, %c0_35] : memref<288x512xf32, #tpu.memory_space<vmem>>, vector<32x512xf32>
    tpu.vector_store %arg8[%c224, %c0_35], %51 {strides = array<i32>} : memref<288x512xf32, #tpu.memory_space<vmem>>, vector<32x512xf32>,
    %c495_i32 = arith.constant 495 : i32
    %53 = tpu.dynamic_rotate %9 by %c495_i32 dim 1 : vector<32x512xf32>, i32 -> vector<32x512xf32>
    %c8 = arith.constant 8 : index
    %c0_36 = arith.constant 0 : index
    %c0_37 = arith.constant 0 : index
    %54 = vector.load %arg5[%c8, %c0_36, %c0_37] : memref<9x1x512xf32, #tpu.memory_space<vmem>>, vector<1x1x512xf32>
    %55 = vector.shape_cast %54 : vector<1x1x512xf32> to vector<1x512xf32>
    %56 = vector.broadcast %55 : vector<1x512xf32> to vector<32x512xf32>
    %57 = arith.mulf %53, %56 : vector<32x512xf32>
    %c256_38 = arith.constant 256 : index
    %c0_39 = arith.constant 0 : index
    %58 = vector.load %arg8[%c256_38, %c0_39] : memref<288x512xf32, #tpu.memory_space<vmem>>, vector<32x512xf32>
    tpu.vector_store %arg8[%c256_38, %c0_39], %57 {strides = array<i32>} : memref<288x512xf32, #tpu.memory_space<vmem>>, vector<32x512xf32>,
    %c0_40 = arith.constant 0 : index
    %c0_41 = arith.constant 0 : index
    %c0_42 = arith.constant 0 : index
    %59 = vector.load %arg3[%c0_40, %c0_41, %c0_42] : memref<5x32x288xf32, #tpu.memory_space<vmem>>, vector<1x32x288xf32>
    %60 = vector.shape_cast %59 : vector<1x32x288xf32> to vector<32x288xf32>
    %c0_43 = arith.constant 0 : index
    %c0_44 = arith.constant 0 : index
    %61 = vector.load %arg8[%c0_43, %c0_44] : memref<288x512xf32, #tpu.memory_space<vmem>>, vector<288x512xf32>
    %cst_45 = arith.constant dense<0.000000e+00> : vector<32x512xf32>
    %62 = tpu.matmul %60, %61, %cst_45 {dimension_numbers = #tpu.dot_dimension_numbers<[1], [0], [0], [1], [0, 0, 1, 1], [], []>} : vector<32x288xf32>, vector<288x512xf32>, vector<32x512xf32> -> vector<32x512xf32>
    %63 = vector.extract_strided_slice %62 {offsets = [0, 0], sizes = [32, 256], strides = [1, 1]} : vector<32x512xf32> to vector<32x256xf32>
    %64 = vector.extract_strided_slice %62 {offsets = [0, 256], sizes = [32, 256], strides = [1, 1]} : vector<32x512xf32> to vector<32x256xf32>
    %65 = arith.subf %63, %64 : vector<32x256xf32>
    %66 = arith.mulf %65, %65 : vector<32x256xf32>
    %cst_46 = arith.constant 2.44140625E-4 : f32
    %67 = vector.broadcast %cst_46 : f32 to vector<32x256xf32>
    %68 = arith.mulf %66, %67 : vector<32x256xf32>
    %69 = arith.addf %8, %68 : vector<32x256xf32>
    %c0_47 = arith.constant 0 : index
    %c0_48 = arith.constant 0 : index
    %c0_49 = arith.constant 0 : index
    %70 = vector.load %arg4[%c0_47, %c0_48, %c0_49] : memref<5x32x1xf32, #tpu.memory_space<vmem>>, vector<1x32x1xf32>
    %71 = vector.shape_cast %70 : vector<1x32x1xf32> to vector<32x1xf32>
    %72 = vector.broadcast %71 : vector<32x1xf32> to vector<32x512xf32>
    %73 = arith.addf %62, %72 : vector<32x512xf32>
    %cst_50 = arith.constant 0.000000e+00 : f32
    %74 = vector.broadcast %cst_50 : f32 to vector<32x512xf32>
    %75 = arith.maximumf %73, %74 : vector<32x512xf32>
    %c0_51 = arith.constant 0 : index
    %c0_52 = arith.constant 0 : index
    %76 = vector.load %arg7[%c0_51, %c0_52] : memref<32x512xf32, #tpu.memory_space<vmem>>, vector<32x512xf32>
    tpu.vector_store %arg7[%c0_51, %c0_52], %75 {strides = array<i32>} : memref<32x512xf32, #tpu.memory_space<vmem>>, vector<32x512xf32>,
    %c0_53 = arith.constant 0 : index
    %c0_54 = arith.constant 0 : index
    %77 = vector.load %arg7[%c0_53, %c0_54] : memref<32x512xf32, #tpu.memory_space<vmem>>, vector<32x512xf32>
    %c17_i32_55 = arith.constant 17 : i32
    %78 = tpu.dynamic_rotate %77 by %c17_i32_55 dim 1 : vector<32x512xf32>, i32 -> vector<32x512xf32>
    %c0_56 = arith.constant 0 : index
    %c0_57 = arith.constant 0 : index
    %c0_58 = arith.constant 0 : index
    %79 = vector.load %arg5[%c0_56, %c0_57, %c0_58] : memref<9x1x512xf32, #tpu.memory_space<vmem>>, vector<1x1x512xf32>
    %80 = vector.shape_cast %79 : vector<1x1x512xf32> to vector<1x512xf32>
    %81 = vector.broadcast %80 : vector<1x512xf32> to vector<32x512xf32>
    %82 = arith.mulf %78, %81 : vector<32x512xf32>
    %c0_59 = arith.constant 0 : index
    %c0_60 = arith.constant 0 : index
    %83 = vector.load %arg8[%c0_59, %c0_60] : memref<288x512xf32, #tpu.memory_space<vmem>>, vector<32x512xf32>
    tpu.vector_store %arg8[%c0_59, %c0_60], %82 {strides = array<i32>} : memref<288x512xf32, #tpu.memory_space<vmem>>, vector<32x512xf32>,
    %c16_i32_61 = arith.constant 16 : i32
    %84 = tpu.dynamic_rotate %77 by %c16_i32_61 dim 1 : vector<32x512xf32>, i32 -> vector<32x512xf32>
    %c1_62 = arith.constant 1 : index
    %c0_63 = arith.constant 0 : index
    %c0_64 = arith.constant 0 : index
    %85 = vector.load %arg5[%c1_62, %c0_63, %c0_64] : memref<9x1x512xf32, #tpu.memory_space<vmem>>, vector<1x1x512xf32>
    %86 = vector.shape_cast %85 : vector<1x1x512xf32> to vector<1x512xf32>
    %87 = vector.broadcast %86 : vector<1x512xf32> to vector<32x512xf32>
    %88 = arith.mulf %84, %87 : vector<32x512xf32>
    %c32_65 = arith.constant 32 : index
    %c0_66 = arith.constant 0 : index
    %89 = vector.load %arg8[%c32_65, %c0_66] : memref<288x512xf32, #tpu.memory_space<vmem>>, vector<32x512xf32>
    tpu.vector_store %arg8[%c32_65, %c0_66], %88 {strides = array<i32>} : memref<288x512xf32, #tpu.memory_space<vmem>>, vector<32x512xf32>,
    %c15_i32_67 = arith.constant 15 : i32
    %90 = tpu.dynamic_rotate %77 by %c15_i32_67 dim 1 : vector<32x512xf32>, i32 -> vector<32x512xf32>
    %c2_68 = arith.constant 2 : index
    %c0_69 = arith.constant 0 : index
    %c0_70 = arith.constant 0 : index
    %91 = vector.load %arg5[%c2_68, %c0_69, %c0_70] : memref<9x1x512xf32, #tpu.memory_space<vmem>>, vector<1x1x512xf32>
    %92 = vector.shape_cast %91 : vector<1x1x512xf32> to vector<1x512xf32>
    %93 = vector.broadcast %92 : vector<1x512xf32> to vector<32x512xf32>
    %94 = arith.mulf %90, %93 : vector<32x512xf32>
    %c64_71 = arith.constant 64 : index
    %c0_72 = arith.constant 0 : index
    %95 = vector.load %arg8[%c64_71, %c0_72] : memref<288x512xf32, #tpu.memory_space<vmem>>, vector<32x512xf32>
    tpu.vector_store %arg8[%c64_71, %c0_72], %94 {strides = array<i32>} : memref<288x512xf32, #tpu.memory_space<vmem>>, vector<32x512xf32>,
    %c1_i32_73 = arith.constant 1 : i32
    %96 = tpu.dynamic_rotate %77 by %c1_i32_73 dim 1 : vector<32x512xf32>, i32 -> vector<32x512xf32>
    %c3_74 = arith.constant 3 : index
    %c0_75 = arith.constant 0 : index
    %c0_76 = arith.constant 0 : index
    %97 = vector.load %arg5[%c3_74, %c0_75, %c0_76] : memref<9x1x512xf32, #tpu.memory_space<vmem>>, vector<1x1x512xf32>
    %98 = vector.shape_cast %97 : vector<1x1x512xf32> to vector<1x512xf32>
    %99 = vector.broadcast %98 : vector<1x512xf32> to vector<32x512xf32>
    %100 = arith.mulf %96, %99 : vector<32x512xf32>
    %c96_77 = arith.constant 96 : index
    %c0_78 = arith.constant 0 : index
    %101 = vector.load %arg8[%c96_77, %c0_78] : memref<288x512xf32, #tpu.memory_space<vmem>>, vector<32x512xf32>
    tpu.vector_store %arg8[%c96_77, %c0_78], %100 {strides = array<i32>} : memref<288x512xf32, #tpu.memory_space<vmem>>, vector<32x512xf32>,
    %c128_79 = arith.constant 128 : index
    %c0_80 = arith.constant 0 : index
    %102 = vector.load %arg8[%c128_79, %c0_80] : memref<288x512xf32, #tpu.memory_space<vmem>>, vector<32x512xf32>
    tpu.vector_store %arg8[%c128_79, %c0_80], %77 {strides = array<i32>} : memref<288x512xf32, #tpu.memory_space<vmem>>, vector<32x512xf32>,
    %c511_i32_81 = arith.constant 511 : i32
    %103 = tpu.dynamic_rotate %77 by %c511_i32_81 dim 1 : vector<32x512xf32>, i32 -> vector<32x512xf32>
    %c5_82 = arith.constant 5 : index
    %c0_83 = arith.constant 0 : index
    %c0_84 = arith.constant 0 : index
    %104 = vector.load %arg5[%c5_82, %c0_83, %c0_84] : memref<9x1x512xf32, #tpu.memory_space<vmem>>, vector<1x1x512xf32>
    %105 = vector.shape_cast %104 : vector<1x1x512xf32> to vector<1x512xf32>
    %106 = vector.broadcast %105 : vector<1x512xf32> to vector<32x512xf32>
    %107 = arith.mulf %103, %106 : vector<32x512xf32>
    %c160_85 = arith.constant 160 : index
    %c0_86 = arith.constant 0 : index
    %108 = vector.load %arg8[%c160_85, %c0_86] : memref<288x512xf32, #tpu.memory_space<vmem>>, vector<32x512xf32>
    tpu.vector_store %arg8[%c160_85, %c0_86], %107 {strides = array<i32>} : memref<288x512xf32, #tpu.memory_space<vmem>>, vector<32x512xf32>,
    %c497_i32_87 = arith.constant 497 : i32
    %109 = tpu.dynamic_rotate %77 by %c497_i32_87 dim 1 : vector<32x512xf32>, i32 -> vector<32x512xf32>
    %c6_88 = arith.constant 6 : index
    %c0_89 = arith.constant 0 : index
    %c0_90 = arith.constant 0 : index
    %110 = vector.load %arg5[%c6_88, %c0_89, %c0_90] : memref<9x1x512xf32, #tpu.memory_space<vmem>>, vector<1x1x512xf32>
    %111 = vector.shape_cast %110 : vector<1x1x512xf32> to vector<1x512xf32>
    %112 = vector.broadcast %111 : vector<1x512xf32> to vector<32x512xf32>
    %113 = arith.mulf %109, %112 : vector<32x512xf32>
    %c192_91 = arith.constant 192 : index
    %c0_92 = arith.constant 0 : index
    %114 = vector.load %arg8[%c192_91, %c0_92] : memref<288x512xf32, #tpu.memory_space<vmem>>, vector<32x512xf32>
    tpu.vector_store %arg8[%c192_91, %c0_92], %113 {strides = array<i32>} : memref<288x512xf32, #tpu.memory_space<vmem>>, vector<32x512xf32>,
    %c496_i32_93 = arith.constant 496 : i32
    %115 = tpu.dynamic_rotate %77 by %c496_i32_93 dim 1 : vector<32x512xf32>, i32 -> vector<32x512xf32>
    %c7_94 = arith.constant 7 : index
    %c0_95 = arith.constant 0 : index
    %c0_96 = arith.constant 0 : index
    %116 = vector.load %arg5[%c7_94, %c0_95, %c0_96] : memref<9x1x512xf32, #tpu.memory_space<vmem>>, vector<1x1x512xf32>
    %117 = vector.shape_cast %116 : vector<1x1x512xf32> to vector<1x512xf32>
    %118 = vector.broadcast %117 : vector<1x512xf32> to vector<32x512xf32>
    %119 = arith.mulf %115, %118 : vector<32x512xf32>
    %c224_97 = arith.constant 224 : index
    %c0_98 = arith.constant 0 : index
    %120 = vector.load %arg8[%c224_97, %c0_98] : memref<288x512xf32, #tpu.memory_space<vmem>>, vector<32x512xf32>
    tpu.vector_store %arg8[%c224_97, %c0_98], %119 {strides = array<i32>} : memref<288x512xf32, #tpu.memory_space<vmem>>, vector<32x512xf32>,
    %c495_i32_99 = arith.constant 495 : i32
    %121 = tpu.dynamic_rotate %77 by %c495_i32_99 dim 1 : vector<32x512xf32>, i32 -> vector<32x512xf32>
    %c8_100 = arith.constant 8 : index
    %c0_101 = arith.constant 0 : index
    %c0_102 = arith.constant 0 : index
    %122 = vector.load %arg5[%c8_100, %c0_101, %c0_102] : memref<9x1x512xf32, #tpu.memory_space<vmem>>, vector<1x1x512xf32>
    %123 = vector.shape_cast %122 : vector<1x1x512xf32> to vector<1x512xf32>
    %124 = vector.broadcast %123 : vector<1x512xf32> to vector<32x512xf32>
    %125 = arith.mulf %121, %124 : vector<32x512xf32>
    %c256_103 = arith.constant 256 : index
    %c0_104 = arith.constant 0 : index
    %126 = vector.load %arg8[%c256_103, %c0_104] : memref<288x512xf32, #tpu.memory_space<vmem>>, vector<32x512xf32>
    tpu.vector_store %arg8[%c256_103, %c0_104], %125 {strides = array<i32>} : memref<288x512xf32, #tpu.memory_space<vmem>>, vector<32x512xf32>,
    %c1_105 = arith.constant 1 : index
    %c0_106 = arith.constant 0 : index
    %c0_107 = arith.constant 0 : index
    %127 = vector.load %arg3[%c1_105, %c0_106, %c0_107] : memref<5x32x288xf32, #tpu.memory_space<vmem>>, vector<1x32x288xf32>
    %128 = vector.shape_cast %127 : vector<1x32x288xf32> to vector<32x288xf32>
    %c0_108 = arith.constant 0 : index
    %c0_109 = arith.constant 0 : index
    %129 = vector.load %arg8[%c0_108, %c0_109] : memref<288x512xf32, #tpu.memory_space<vmem>>, vector<288x512xf32>
    %cst_110 = arith.constant dense<0.000000e+00> : vector<32x512xf32>
    %130 = tpu.matmul %128, %129, %cst_110 {dimension_numbers = #tpu.dot_dimension_numbers<[1], [0], [0], [1], [0, 0, 1, 1], [], []>} : vector<32x288xf32>, vector<288x512xf32>, vector<32x512xf32> -> vector<32x512xf32>
    %131 = vector.extract_strided_slice %130 {offsets = [0, 0], sizes = [32, 256], strides = [1, 1]} : vector<32x512xf32> to vector<32x256xf32>
    %132 = vector.extract_strided_slice %130 {offsets = [0, 256], sizes = [32, 256], strides = [1, 1]} : vector<32x512xf32> to vector<32x256xf32>
    %133 = arith.subf %131, %132 : vector<32x256xf32>
    %134 = arith.mulf %133, %133 : vector<32x256xf32>
    %cst_111 = arith.constant 1.22070313E-4 : f32
    %135 = vector.broadcast %cst_111 : f32 to vector<32x256xf32>
    %136 = arith.mulf %134, %135 : vector<32x256xf32>
    %137 = arith.addf %69, %136 : vector<32x256xf32>
    %c1_112 = arith.constant 1 : index
    %c0_113 = arith.constant 0 : index
    %c0_114 = arith.constant 0 : index
    %138 = vector.load %arg4[%c1_112, %c0_113, %c0_114] : memref<5x32x1xf32, #tpu.memory_space<vmem>>, vector<1x32x1xf32>
    %139 = vector.shape_cast %138 : vector<1x32x1xf32> to vector<32x1xf32>
    %140 = vector.broadcast %139 : vector<32x1xf32> to vector<32x512xf32>
    %141 = arith.addf %130, %140 : vector<32x512xf32>
    %cst_115 = arith.constant 0.000000e+00 : f32
    %142 = vector.broadcast %cst_115 : f32 to vector<32x512xf32>
    %143 = arith.maximumf %141, %142 : vector<32x512xf32>
    %c0_116 = arith.constant 0 : index
    %c0_117 = arith.constant 0 : index
    %144 = vector.load %arg7[%c0_116, %c0_117] : memref<32x512xf32, #tpu.memory_space<vmem>>, vector<32x512xf32>
    tpu.vector_store %arg7[%c0_116, %c0_117], %143 {strides = array<i32>} : memref<32x512xf32, #tpu.memory_space<vmem>>, vector<32x512xf32>,
    %c0_118 = arith.constant 0 : index
    %c0_119 = arith.constant 0 : index
    %145 = vector.load %arg7[%c0_118, %c0_119] : memref<32x512xf32, #tpu.memory_space<vmem>>, vector<32x512xf32>
    %c17_i32_120 = arith.constant 17 : i32
    %146 = tpu.dynamic_rotate %145 by %c17_i32_120 dim 1 : vector<32x512xf32>, i32 -> vector<32x512xf32>
    %c0_121 = arith.constant 0 : index
    %c0_122 = arith.constant 0 : index
    %c0_123 = arith.constant 0 : index
    %147 = vector.load %arg5[%c0_121, %c0_122, %c0_123] : memref<9x1x512xf32, #tpu.memory_space<vmem>>, vector<1x1x512xf32>
    %148 = vector.shape_cast %147 : vector<1x1x512xf32> to vector<1x512xf32>
    %149 = vector.broadcast %148 : vector<1x512xf32> to vector<32x512xf32>
    %150 = arith.mulf %146, %149 : vector<32x512xf32>
    %c0_124 = arith.constant 0 : index
    %c0_125 = arith.constant 0 : index
    %151 = vector.load %arg8[%c0_124, %c0_125] : memref<288x512xf32, #tpu.memory_space<vmem>>, vector<32x512xf32>
    tpu.vector_store %arg8[%c0_124, %c0_125], %150 {strides = array<i32>} : memref<288x512xf32, #tpu.memory_space<vmem>>, vector<32x512xf32>,
    %c16_i32_126 = arith.constant 16 : i32
    %152 = tpu.dynamic_rotate %145 by %c16_i32_126 dim 1 : vector<32x512xf32>, i32 -> vector<32x512xf32>
    %c1_127 = arith.constant 1 : index
    %c0_128 = arith.constant 0 : index
    %c0_129 = arith.constant 0 : index
    %153 = vector.load %arg5[%c1_127, %c0_128, %c0_129] : memref<9x1x512xf32, #tpu.memory_space<vmem>>, vector<1x1x512xf32>
    %154 = vector.shape_cast %153 : vector<1x1x512xf32> to vector<1x512xf32>
    %155 = vector.broadcast %154 : vector<1x512xf32> to vector<32x512xf32>
    %156 = arith.mulf %152, %155 : vector<32x512xf32>
    %c32_130 = arith.constant 32 : index
    %c0_131 = arith.constant 0 : index
    %157 = vector.load %arg8[%c32_130, %c0_131] : memref<288x512xf32, #tpu.memory_space<vmem>>, vector<32x512xf32>
    tpu.vector_store %arg8[%c32_130, %c0_131], %156 {strides = array<i32>} : memref<288x512xf32, #tpu.memory_space<vmem>>, vector<32x512xf32>,
    %c15_i32_132 = arith.constant 15 : i32
    %158 = tpu.dynamic_rotate %145 by %c15_i32_132 dim 1 : vector<32x512xf32>, i32 -> vector<32x512xf32>
    %c2_133 = arith.constant 2 : index
    %c0_134 = arith.constant 0 : index
    %c0_135 = arith.constant 0 : index
    %159 = vector.load %arg5[%c2_133, %c0_134, %c0_135] : memref<9x1x512xf32, #tpu.memory_space<vmem>>, vector<1x1x512xf32>
    %160 = vector.shape_cast %159 : vector<1x1x512xf32> to vector<1x512xf32>
    %161 = vector.broadcast %160 : vector<1x512xf32> to vector<32x512xf32>
    %162 = arith.mulf %158, %161 : vector<32x512xf32>
    %c64_136 = arith.constant 64 : index
    %c0_137 = arith.constant 0 : index
    %163 = vector.load %arg8[%c64_136, %c0_137] : memref<288x512xf32, #tpu.memory_space<vmem>>, vector<32x512xf32>
    tpu.vector_store %arg8[%c64_136, %c0_137], %162 {strides = array<i32>} : memref<288x512xf32, #tpu.memory_space<vmem>>, vector<32x512xf32>,
    %c1_i32_138 = arith.constant 1 : i32
    %164 = tpu.dynamic_rotate %145 by %c1_i32_138 dim 1 : vector<32x512xf32>, i32 -> vector<32x512xf32>
    %c3_139 = arith.constant 3 : index
    %c0_140 = arith.constant 0 : index
    %c0_141 = arith.constant 0 : index
    %165 = vector.load %arg5[%c3_139, %c0_140, %c0_141] : memref<9x1x512xf32, #tpu.memory_space<vmem>>, vector<1x1x512xf32>
    %166 = vector.shape_cast %165 : vector<1x1x512xf32> to vector<1x512xf32>
    %167 = vector.broadcast %166 : vector<1x512xf32> to vector<32x512xf32>
    %168 = arith.mulf %164, %167 : vector<32x512xf32>
    %c96_142 = arith.constant 96 : index
    %c0_143 = arith.constant 0 : index
    %169 = vector.load %arg8[%c96_142, %c0_143] : memref<288x512xf32, #tpu.memory_space<vmem>>, vector<32x512xf32>
    tpu.vector_store %arg8[%c96_142, %c0_143], %168 {strides = array<i32>} : memref<288x512xf32, #tpu.memory_space<vmem>>, vector<32x512xf32>,
    %c128_144 = arith.constant 128 : index
    %c0_145 = arith.constant 0 : index
    %170 = vector.load %arg8[%c128_144, %c0_145] : memref<288x512xf32, #tpu.memory_space<vmem>>, vector<32x512xf32>
    tpu.vector_store %arg8[%c128_144, %c0_145], %145 {strides = array<i32>} : memref<288x512xf32, #tpu.memory_space<vmem>>, vector<32x512xf32>,
    %c511_i32_146 = arith.constant 511 : i32
    %171 = tpu.dynamic_rotate %145 by %c511_i32_146 dim 1 : vector<32x512xf32>, i32 -> vector<32x512xf32>
    %c5_147 = arith.constant 5 : index
    %c0_148 = arith.constant 0 : index
    %c0_149 = arith.constant 0 : index
    %172 = vector.load %arg5[%c5_147, %c0_148, %c0_149] : memref<9x1x512xf32, #tpu.memory_space<vmem>>, vector<1x1x512xf32>
    %173 = vector.shape_cast %172 : vector<1x1x512xf32> to vector<1x512xf32>
    %174 = vector.broadcast %173 : vector<1x512xf32> to vector<32x512xf32>
    %175 = arith.mulf %171, %174 : vector<32x512xf32>
    %c160_150 = arith.constant 160 : index
    %c0_151 = arith.constant 0 : index
    %176 = vector.load %arg8[%c160_150, %c0_151] : memref<288x512xf32, #tpu.memory_space<vmem>>, vector<32x512xf32>
    tpu.vector_store %arg8[%c160_150, %c0_151], %175 {strides = array<i32>} : memref<288x512xf32, #tpu.memory_space<vmem>>, vector<32x512xf32>,
    %c497_i32_152 = arith.constant 497 : i32
    %177 = tpu.dynamic_rotate %145 by %c497_i32_152 dim 1 : vector<32x512xf32>, i32 -> vector<32x512xf32>
    %c6_153 = arith.constant 6 : index
    %c0_154 = arith.constant 0 : index
    %c0_155 = arith.constant 0 : index
    %178 = vector.load %arg5[%c6_153, %c0_154, %c0_155] : memref<9x1x512xf32, #tpu.memory_space<vmem>>, vector<1x1x512xf32>
    %179 = vector.shape_cast %178 : vector<1x1x512xf32> to vector<1x512xf32>
    %180 = vector.broadcast %179 : vector<1x512xf32> to vector<32x512xf32>
    %181 = arith.mulf %177, %180 : vector<32x512xf32>
    %c192_156 = arith.constant 192 : index
    %c0_157 = arith.constant 0 : index
    %182 = vector.load %arg8[%c192_156, %c0_157] : memref<288x512xf32, #tpu.memory_space<vmem>>, vector<32x512xf32>
    tpu.vector_store %arg8[%c192_156, %c0_157], %181 {strides = array<i32>} : memref<288x512xf32, #tpu.memory_space<vmem>>, vector<32x512xf32>,
    %c496_i32_158 = arith.constant 496 : i32
    %183 = tpu.dynamic_rotate %145 by %c496_i32_158 dim 1 : vector<32x512xf32>, i32 -> vector<32x512xf32>
    %c7_159 = arith.constant 7 : index
    %c0_160 = arith.constant 0 : index
    %c0_161 = arith.constant 0 : index
    %184 = vector.load %arg5[%c7_159, %c0_160, %c0_161] : memref<9x1x512xf32, #tpu.memory_space<vmem>>, vector<1x1x512xf32>
    %185 = vector.shape_cast %184 : vector<1x1x512xf32> to vector<1x512xf32>
    %186 = vector.broadcast %185 : vector<1x512xf32> to vector<32x512xf32>
    %187 = arith.mulf %183, %186 : vector<32x512xf32>
    %c224_162 = arith.constant 224 : index
    %c0_163 = arith.constant 0 : index
    %188 = vector.load %arg8[%c224_162, %c0_163] : memref<288x512xf32, #tpu.memory_space<vmem>>, vector<32x512xf32>
    tpu.vector_store %arg8[%c224_162, %c0_163], %187 {strides = array<i32>} : memref<288x512xf32, #tpu.memory_space<vmem>>, vector<32x512xf32>,
    %c495_i32_164 = arith.constant 495 : i32
    %189 = tpu.dynamic_rotate %145 by %c495_i32_164 dim 1 : vector<32x512xf32>, i32 -> vector<32x512xf32>
    %c8_165 = arith.constant 8 : index
    %c0_166 = arith.constant 0 : index
    %c0_167 = arith.constant 0 : index
    %190 = vector.load %arg5[%c8_165, %c0_166, %c0_167] : memref<9x1x512xf32, #tpu.memory_space<vmem>>, vector<1x1x512xf32>
    %191 = vector.shape_cast %190 : vector<1x1x512xf32> to vector<1x512xf32>
    %192 = vector.broadcast %191 : vector<1x512xf32> to vector<32x512xf32>
    %193 = arith.mulf %189, %192 : vector<32x512xf32>
    %c256_168 = arith.constant 256 : index
    %c0_169 = arith.constant 0 : index
    %194 = vector.load %arg8[%c256_168, %c0_169] : memref<288x512xf32, #tpu.memory_space<vmem>>, vector<32x512xf32>
    tpu.vector_store %arg8[%c256_168, %c0_169], %193 {strides = array<i32>} : memref<288x512xf32, #tpu.memory_space<vmem>>, vector<32x512xf32>,
    %c2_170 = arith.constant 2 : index
    %c0_171 = arith.constant 0 : index
    %c0_172 = arith.constant 0 : index
    %195 = vector.load %arg3[%c2_170, %c0_171, %c0_172] : memref<5x32x288xf32, #tpu.memory_space<vmem>>, vector<1x32x288xf32>
    %196 = vector.shape_cast %195 : vector<1x32x288xf32> to vector<32x288xf32>
    %c0_173 = arith.constant 0 : index
    %c0_174 = arith.constant 0 : index
    %197 = vector.load %arg8[%c0_173, %c0_174] : memref<288x512xf32, #tpu.memory_space<vmem>>, vector<288x512xf32>
    %cst_175 = arith.constant dense<0.000000e+00> : vector<32x512xf32>
    %198 = tpu.matmul %196, %197, %cst_175 {dimension_numbers = #tpu.dot_dimension_numbers<[1], [0], [0], [1], [0, 0, 1, 1], [], []>} : vector<32x288xf32>, vector<288x512xf32>, vector<32x512xf32> -> vector<32x512xf32>
    %199 = vector.extract_strided_slice %198 {offsets = [0, 0], sizes = [32, 256], strides = [1, 1]} : vector<32x512xf32> to vector<32x256xf32>
    %200 = vector.extract_strided_slice %198 {offsets = [0, 256], sizes = [32, 256], strides = [1, 1]} : vector<32x512xf32> to vector<32x256xf32>
    %201 = arith.subf %199, %200 : vector<32x256xf32>
    %202 = arith.mulf %201, %201 : vector<32x256xf32>
    %cst_176 = arith.constant 1.22070313E-4 : f32
    %203 = vector.broadcast %cst_176 : f32 to vector<32x256xf32>
    %204 = arith.mulf %202, %203 : vector<32x256xf32>
    %205 = arith.addf %137, %204 : vector<32x256xf32>
    %c2_177 = arith.constant 2 : index
    %c0_178 = arith.constant 0 : index
    %c0_179 = arith.constant 0 : index
    %206 = vector.load %arg4[%c2_177, %c0_178, %c0_179] : memref<5x32x1xf32, #tpu.memory_space<vmem>>, vector<1x32x1xf32>
    %207 = vector.shape_cast %206 : vector<1x32x1xf32> to vector<32x1xf32>
    %208 = vector.broadcast %207 : vector<32x1xf32> to vector<32x512xf32>
    %209 = arith.addf %198, %208 : vector<32x512xf32>
    %cst_180 = arith.constant 0.000000e+00 : f32
    %210 = vector.broadcast %cst_180 : f32 to vector<32x512xf32>
    %211 = arith.maximumf %209, %210 : vector<32x512xf32>
    %c0_181 = arith.constant 0 : index
    %c0_182 = arith.constant 0 : index
    %212 = vector.load %arg7[%c0_181, %c0_182] : memref<32x512xf32, #tpu.memory_space<vmem>>, vector<32x512xf32>
    tpu.vector_store %arg7[%c0_181, %c0_182], %211 {strides = array<i32>} : memref<32x512xf32, #tpu.memory_space<vmem>>, vector<32x512xf32>,
    %c0_183 = arith.constant 0 : index
    %c0_184 = arith.constant 0 : index
    %213 = vector.load %arg7[%c0_183, %c0_184] : memref<32x512xf32, #tpu.memory_space<vmem>>, vector<32x512xf32>
    %c17_i32_185 = arith.constant 17 : i32
    %214 = tpu.dynamic_rotate %213 by %c17_i32_185 dim 1 : vector<32x512xf32>, i32 -> vector<32x512xf32>
    %c0_186 = arith.constant 0 : index
    %c0_187 = arith.constant 0 : index
    %c0_188 = arith.constant 0 : index
    %215 = vector.load %arg5[%c0_186, %c0_187, %c0_188] : memref<9x1x512xf32, #tpu.memory_space<vmem>>, vector<1x1x512xf32>
    %216 = vector.shape_cast %215 : vector<1x1x512xf32> to vector<1x512xf32>
    %217 = vector.broadcast %216 : vector<1x512xf32> to vector<32x512xf32>
    %218 = arith.mulf %214, %217 : vector<32x512xf32>
    %c0_189 = arith.constant 0 : index
    %c0_190 = arith.constant 0 : index
    %219 = vector.load %arg8[%c0_189, %c0_190] : memref<288x512xf32, #tpu.memory_space<vmem>>, vector<32x512xf32>
    tpu.vector_store %arg8[%c0_189, %c0_190], %218 {strides = array<i32>} : memref<288x512xf32, #tpu.memory_space<vmem>>, vector<32x512xf32>,
    %c16_i32_191 = arith.constant 16 : i32
    %220 = tpu.dynamic_rotate %213 by %c16_i32_191 dim 1 : vector<32x512xf32>, i32 -> vector<32x512xf32>
    %c1_192 = arith.constant 1 : index
    %c0_193 = arith.constant 0 : index
    %c0_194 = arith.constant 0 : index
    %221 = vector.load %arg5[%c1_192, %c0_193, %c0_194] : memref<9x1x512xf32, #tpu.memory_space<vmem>>, vector<1x1x512xf32>
    %222 = vector.shape_cast %221 : vector<1x1x512xf32> to vector<1x512xf32>
    %223 = vector.broadcast %222 : vector<1x512xf32> to vector<32x512xf32>
    %224 = arith.mulf %220, %223 : vector<32x512xf32>
    %c32_195 = arith.constant 32 : index
    %c0_196 = arith.constant 0 : index
    %225 = vector.load %arg8[%c32_195, %c0_196] : memref<288x512xf32, #tpu.memory_space<vmem>>, vector<32x512xf32>
    tpu.vector_store %arg8[%c32_195, %c0_196], %224 {strides = array<i32>} : memref<288x512xf32, #tpu.memory_space<vmem>>, vector<32x512xf32>,
    %c15_i32_197 = arith.constant 15 : i32
    %226 = tpu.dynamic_rotate %213 by %c15_i32_197 dim 1 : vector<32x512xf32>, i32 -> vector<32x512xf32>
    %c2_198 = arith.constant 2 : index
    %c0_199 = arith.constant 0 : index
    %c0_200 = arith.constant 0 : index
    %227 = vector.load %arg5[%c2_198, %c0_199, %c0_200] : memref<9x1x512xf32, #tpu.memory_space<vmem>>, vector<1x1x512xf32>
    %228 = vector.shape_cast %227 : vector<1x1x512xf32> to vector<1x512xf32>
    %229 = vector.broadcast %228 : vector<1x512xf32> to vector<32x512xf32>
    %230 = arith.mulf %226, %229 : vector<32x512xf32>
    %c64_201 = arith.constant 64 : index
    %c0_202 = arith.constant 0 : index
    %231 = vector.load %arg8[%c64_201, %c0_202] : memref<288x512xf32, #tpu.memory_space<vmem>>, vector<32x512xf32>
    tpu.vector_store %arg8[%c64_201, %c0_202], %230 {strides = array<i32>} : memref<288x512xf32, #tpu.memory_space<vmem>>, vector<32x512xf32>,
    %c1_i32_203 = arith.constant 1 : i32
    %232 = tpu.dynamic_rotate %213 by %c1_i32_203 dim 1 : vector<32x512xf32>, i32 -> vector<32x512xf32>
    %c3_204 = arith.constant 3 : index
    %c0_205 = arith.constant 0 : index
    %c0_206 = arith.constant 0 : index
    %233 = vector.load %arg5[%c3_204, %c0_205, %c0_206] : memref<9x1x512xf32, #tpu.memory_space<vmem>>, vector<1x1x512xf32>
    %234 = vector.shape_cast %233 : vector<1x1x512xf32> to vector<1x512xf32>
    %235 = vector.broadcast %234 : vector<1x512xf32> to vector<32x512xf32>
    %236 = arith.mulf %232, %235 : vector<32x512xf32>
    %c96_207 = arith.constant 96 : index
    %c0_208 = arith.constant 0 : index
    %237 = vector.load %arg8[%c96_207, %c0_208] : memref<288x512xf32, #tpu.memory_space<vmem>>, vector<32x512xf32>
    tpu.vector_store %arg8[%c96_207, %c0_208], %236 {strides = array<i32>} : memref<288x512xf32, #tpu.memory_space<vmem>>, vector<32x512xf32>,
    %c128_209 = arith.constant 128 : index
    %c0_210 = arith.constant 0 : index
    %238 = vector.load %arg8[%c128_209, %c0_210] : memref<288x512xf32, #tpu.memory_space<vmem>>, vector<32x512xf32>
    tpu.vector_store %arg8[%c128_209, %c0_210], %213 {strides = array<i32>} : memref<288x512xf32, #tpu.memory_space<vmem>>, vector<32x512xf32>,
    %c511_i32_211 = arith.constant 511 : i32
    %239 = tpu.dynamic_rotate %213 by %c511_i32_211 dim 1 : vector<32x512xf32>, i32 -> vector<32x512xf32>
    %c5_212 = arith.constant 5 : index
    %c0_213 = arith.constant 0 : index
    %c0_214 = arith.constant 0 : index
    %240 = vector.load %arg5[%c5_212, %c0_213, %c0_214] : memref<9x1x512xf32, #tpu.memory_space<vmem>>, vector<1x1x512xf32>
    %241 = vector.shape_cast %240 : vector<1x1x512xf32> to vector<1x512xf32>
    %242 = vector.broadcast %241 : vector<1x512xf32> to vector<32x512xf32>
    %243 = arith.mulf %239, %242 : vector<32x512xf32>
    %c160_215 = arith.constant 160 : index
    %c0_216 = arith.constant 0 : index
    %244 = vector.load %arg8[%c160_215, %c0_216] : memref<288x512xf32, #tpu.memory_space<vmem>>, vector<32x512xf32>
    tpu.vector_store %arg8[%c160_215, %c0_216], %243 {strides = array<i32>} : memref<288x512xf32, #tpu.memory_space<vmem>>, vector<32x512xf32>,
    %c497_i32_217 = arith.constant 497 : i32
    %245 = tpu.dynamic_rotate %213 by %c497_i32_217 dim 1 : vector<32x512xf32>, i32 -> vector<32x512xf32>
    %c6_218 = arith.constant 6 : index
    %c0_219 = arith.constant 0 : index
    %c0_220 = arith.constant 0 : index
    %246 = vector.load %arg5[%c6_218, %c0_219, %c0_220] : memref<9x1x512xf32, #tpu.memory_space<vmem>>, vector<1x1x512xf32>
    %247 = vector.shape_cast %246 : vector<1x1x512xf32> to vector<1x512xf32>
    %248 = vector.broadcast %247 : vector<1x512xf32> to vector<32x512xf32>
    %249 = arith.mulf %245, %248 : vector<32x512xf32>
    %c192_221 = arith.constant 192 : index
    %c0_222 = arith.constant 0 : index
    %250 = vector.load %arg8[%c192_221, %c0_222] : memref<288x512xf32, #tpu.memory_space<vmem>>, vector<32x512xf32>
    tpu.vector_store %arg8[%c192_221, %c0_222], %249 {strides = array<i32>} : memref<288x512xf32, #tpu.memory_space<vmem>>, vector<32x512xf32>,
    %c496_i32_223 = arith.constant 496 : i32
    %251 = tpu.dynamic_rotate %213 by %c496_i32_223 dim 1 : vector<32x512xf32>, i32 -> vector<32x512xf32>
    %c7_224 = arith.constant 7 : index
    %c0_225 = arith.constant 0 : index
    %c0_226 = arith.constant 0 : index
    %252 = vector.load %arg5[%c7_224, %c0_225, %c0_226] : memref<9x1x512xf32, #tpu.memory_space<vmem>>, vector<1x1x512xf32>
    %253 = vector.shape_cast %252 : vector<1x1x512xf32> to vector<1x512xf32>
    %254 = vector.broadcast %253 : vector<1x512xf32> to vector<32x512xf32>
    %255 = arith.mulf %251, %254 : vector<32x512xf32>
    %c224_227 = arith.constant 224 : index
    %c0_228 = arith.constant 0 : index
    %256 = vector.load %arg8[%c224_227, %c0_228] : memref<288x512xf32, #tpu.memory_space<vmem>>, vector<32x512xf32>
    tpu.vector_store %arg8[%c224_227, %c0_228], %255 {strides = array<i32>} : memref<288x512xf32, #tpu.memory_space<vmem>>, vector<32x512xf32>,
    %c495_i32_229 = arith.constant 495 : i32
    %257 = tpu.dynamic_rotate %213 by %c495_i32_229 dim 1 : vector<32x512xf32>, i32 -> vector<32x512xf32>
    %c8_230 = arith.constant 8 : index
    %c0_231 = arith.constant 0 : index
    %c0_232 = arith.constant 0 : index
    %258 = vector.load %arg5[%c8_230, %c0_231, %c0_232] : memref<9x1x512xf32, #tpu.memory_space<vmem>>, vector<1x1x512xf32>
    %259 = vector.shape_cast %258 : vector<1x1x512xf32> to vector<1x512xf32>
    %260 = vector.broadcast %259 : vector<1x512xf32> to vector<32x512xf32>
    %261 = arith.mulf %257, %260 : vector<32x512xf32>
    %c256_233 = arith.constant 256 : index
    %c0_234 = arith.constant 0 : index
    %262 = vector.load %arg8[%c256_233, %c0_234] : memref<288x512xf32, #tpu.memory_space<vmem>>, vector<32x512xf32>
    tpu.vector_store %arg8[%c256_233, %c0_234], %261 {strides = array<i32>} : memref<288x512xf32, #tpu.memory_space<vmem>>, vector<32x512xf32>,
    %c3_235 = arith.constant 3 : index
    %c0_236 = arith.constant 0 : index
    %c0_237 = arith.constant 0 : index
    %263 = vector.load %arg3[%c3_235, %c0_236, %c0_237] : memref<5x32x288xf32, #tpu.memory_space<vmem>>, vector<1x32x288xf32>
    %264 = vector.shape_cast %263 : vector<1x32x288xf32> to vector<32x288xf32>
    %c0_238 = arith.constant 0 : index
    %c0_239 = arith.constant 0 : index
    %265 = vector.load %arg8[%c0_238, %c0_239] : memref<288x512xf32, #tpu.memory_space<vmem>>, vector<288x512xf32>
    %cst_240 = arith.constant dense<0.000000e+00> : vector<32x512xf32>
    %266 = tpu.matmul %264, %265, %cst_240 {dimension_numbers = #tpu.dot_dimension_numbers<[1], [0], [0], [1], [0, 0, 1, 1], [], []>} : vector<32x288xf32>, vector<288x512xf32>, vector<32x512xf32> -> vector<32x512xf32>
    %267 = vector.extract_strided_slice %266 {offsets = [0, 0], sizes = [32, 256], strides = [1, 1]} : vector<32x512xf32> to vector<32x256xf32>
    %268 = vector.extract_strided_slice %266 {offsets = [0, 256], sizes = [32, 256], strides = [1, 1]} : vector<32x512xf32> to vector<32x256xf32>
    %269 = arith.subf %267, %268 : vector<32x256xf32>
    %270 = arith.mulf %269, %269 : vector<32x256xf32>
    %cst_241 = arith.constant 6.10351563E-5 : f32
    %271 = vector.broadcast %cst_241 : f32 to vector<32x256xf32>
    %272 = arith.mulf %270, %271 : vector<32x256xf32>
    %273 = arith.addf %205, %272 : vector<32x256xf32>
    %c3_242 = arith.constant 3 : index
    %c0_243 = arith.constant 0 : index
    %c0_244 = arith.constant 0 : index
    %274 = vector.load %arg4[%c3_242, %c0_243, %c0_244] : memref<5x32x1xf32, #tpu.memory_space<vmem>>, vector<1x32x1xf32>
    %275 = vector.shape_cast %274 : vector<1x32x1xf32> to vector<32x1xf32>
    %276 = vector.broadcast %275 : vector<32x1xf32> to vector<32x512xf32>
    %277 = arith.addf %266, %276 : vector<32x512xf32>
    %cst_245 = arith.constant 0.000000e+00 : f32
    %278 = vector.broadcast %cst_245 : f32 to vector<32x512xf32>
    %279 = arith.maximumf %277, %278 : vector<32x512xf32>
    %c0_246 = arith.constant 0 : index
    %c0_247 = arith.constant 0 : index
    %280 = vector.load %arg7[%c0_246, %c0_247] : memref<32x512xf32, #tpu.memory_space<vmem>>, vector<32x512xf32>
    tpu.vector_store %arg7[%c0_246, %c0_247], %279 {strides = array<i32>} : memref<32x512xf32, #tpu.memory_space<vmem>>, vector<32x512xf32>,
    %c0_248 = arith.constant 0 : index
    %c0_249 = arith.constant 0 : index
    %281 = vector.load %arg7[%c0_248, %c0_249] : memref<32x512xf32, #tpu.memory_space<vmem>>, vector<32x512xf32>
    %c17_i32_250 = arith.constant 17 : i32
    %282 = tpu.dynamic_rotate %281 by %c17_i32_250 dim 1 : vector<32x512xf32>, i32 -> vector<32x512xf32>
    %c0_251 = arith.constant 0 : index
    %c0_252 = arith.constant 0 : index
    %c0_253 = arith.constant 0 : index
    %283 = vector.load %arg5[%c0_251, %c0_252, %c0_253] : memref<9x1x512xf32, #tpu.memory_space<vmem>>, vector<1x1x512xf32>
    %284 = vector.shape_cast %283 : vector<1x1x512xf32> to vector<1x512xf32>
    %285 = vector.broadcast %284 : vector<1x512xf32> to vector<32x512xf32>
    %286 = arith.mulf %282, %285 : vector<32x512xf32>
    %c0_254 = arith.constant 0 : index
    %c0_255 = arith.constant 0 : index
    %287 = vector.load %arg8[%c0_254, %c0_255] : memref<288x512xf32, #tpu.memory_space<vmem>>, vector<32x512xf32>
    tpu.vector_store %arg8[%c0_254, %c0_255], %286 {strides = array<i32>} : memref<288x512xf32, #tpu.memory_space<vmem>>, vector<32x512xf32>,
    %c16_i32_256 = arith.constant 16 : i32
    %288 = tpu.dynamic_rotate %281 by %c16_i32_256 dim 1 : vector<32x512xf32>, i32 -> vector<32x512xf32>
    %c1_257 = arith.constant 1 : index
    %c0_258 = arith.constant 0 : index
    %c0_259 = arith.constant 0 : index
    %289 = vector.load %arg5[%c1_257, %c0_258, %c0_259] : memref<9x1x512xf32, #tpu.memory_space<vmem>>, vector<1x1x512xf32>
    %290 = vector.shape_cast %289 : vector<1x1x512xf32> to vector<1x512xf32>
    %291 = vector.broadcast %290 : vector<1x512xf32> to vector<32x512xf32>
    %292 = arith.mulf %288, %291 : vector<32x512xf32>
    %c32_260 = arith.constant 32 : index
    %c0_261 = arith.constant 0 : index
    %293 = vector.load %arg8[%c32_260, %c0_261] : memref<288x512xf32, #tpu.memory_space<vmem>>, vector<32x512xf32>
    tpu.vector_store %arg8[%c32_260, %c0_261], %292 {strides = array<i32>} : memref<288x512xf32, #tpu.memory_space<vmem>>, vector<32x512xf32>,
    %c15_i32_262 = arith.constant 15 : i32
    %294 = tpu.dynamic_rotate %281 by %c15_i32_262 dim 1 : vector<32x512xf32>, i32 -> vector<32x512xf32>
    %c2_263 = arith.constant 2 : index
    %c0_264 = arith.constant 0 : index
    %c0_265 = arith.constant 0 : index
    %295 = vector.load %arg5[%c2_263, %c0_264, %c0_265] : memref<9x1x512xf32, #tpu.memory_space<vmem>>, vector<1x1x512xf32>
    %296 = vector.shape_cast %295 : vector<1x1x512xf32> to vector<1x512xf32>
    %297 = vector.broadcast %296 : vector<1x512xf32> to vector<32x512xf32>
    %298 = arith.mulf %294, %297 : vector<32x512xf32>
    %c64_266 = arith.constant 64 : index
    %c0_267 = arith.constant 0 : index
    %299 = vector.load %arg8[%c64_266, %c0_267] : memref<288x512xf32, #tpu.memory_space<vmem>>, vector<32x512xf32>
    tpu.vector_store %arg8[%c64_266, %c0_267], %298 {strides = array<i32>} : memref<288x512xf32, #tpu.memory_space<vmem>>, vector<32x512xf32>,
    %c1_i32_268 = arith.constant 1 : i32
    %300 = tpu.dynamic_rotate %281 by %c1_i32_268 dim 1 : vector<32x512xf32>, i32 -> vector<32x512xf32>
    %c3_269 = arith.constant 3 : index
    %c0_270 = arith.constant 0 : index
    %c0_271 = arith.constant 0 : index
    %301 = vector.load %arg5[%c3_269, %c0_270, %c0_271] : memref<9x1x512xf32, #tpu.memory_space<vmem>>, vector<1x1x512xf32>
    %302 = vector.shape_cast %301 : vector<1x1x512xf32> to vector<1x512xf32>
    %303 = vector.broadcast %302 : vector<1x512xf32> to vector<32x512xf32>
    %304 = arith.mulf %300, %303 : vector<32x512xf32>
    %c96_272 = arith.constant 96 : index
    %c0_273 = arith.constant 0 : index
    %305 = vector.load %arg8[%c96_272, %c0_273] : memref<288x512xf32, #tpu.memory_space<vmem>>, vector<32x512xf32>
    tpu.vector_store %arg8[%c96_272, %c0_273], %304 {strides = array<i32>} : memref<288x512xf32, #tpu.memory_space<vmem>>, vector<32x512xf32>,
    %c128_274 = arith.constant 128 : index
    %c0_275 = arith.constant 0 : index
    %306 = vector.load %arg8[%c128_274, %c0_275] : memref<288x512xf32, #tpu.memory_space<vmem>>, vector<32x512xf32>
    tpu.vector_store %arg8[%c128_274, %c0_275], %281 {strides = array<i32>} : memref<288x512xf32, #tpu.memory_space<vmem>>, vector<32x512xf32>,
    %c511_i32_276 = arith.constant 511 : i32
    %307 = tpu.dynamic_rotate %281 by %c511_i32_276 dim 1 : vector<32x512xf32>, i32 -> vector<32x512xf32>
    %c5_277 = arith.constant 5 : index
    %c0_278 = arith.constant 0 : index
    %c0_279 = arith.constant 0 : index
    %308 = vector.load %arg5[%c5_277, %c0_278, %c0_279] : memref<9x1x512xf32, #tpu.memory_space<vmem>>, vector<1x1x512xf32>
    %309 = vector.shape_cast %308 : vector<1x1x512xf32> to vector<1x512xf32>
    %310 = vector.broadcast %309 : vector<1x512xf32> to vector<32x512xf32>
    %311 = arith.mulf %307, %310 : vector<32x512xf32>
    %c160_280 = arith.constant 160 : index
    %c0_281 = arith.constant 0 : index
    %312 = vector.load %arg8[%c160_280, %c0_281] : memref<288x512xf32, #tpu.memory_space<vmem>>, vector<32x512xf32>
    tpu.vector_store %arg8[%c160_280, %c0_281], %311 {strides = array<i32>} : memref<288x512xf32, #tpu.memory_space<vmem>>, vector<32x512xf32>,
    %c497_i32_282 = arith.constant 497 : i32
    %313 = tpu.dynamic_rotate %281 by %c497_i32_282 dim 1 : vector<32x512xf32>, i32 -> vector<32x512xf32>
    %c6_283 = arith.constant 6 : index
    %c0_284 = arith.constant 0 : index
    %c0_285 = arith.constant 0 : index
    %314 = vector.load %arg5[%c6_283, %c0_284, %c0_285] : memref<9x1x512xf32, #tpu.memory_space<vmem>>, vector<1x1x512xf32>
    %315 = vector.shape_cast %314 : vector<1x1x512xf32> to vector<1x512xf32>
    %316 = vector.broadcast %315 : vector<1x512xf32> to vector<32x512xf32>
    %317 = arith.mulf %313, %316 : vector<32x512xf32>
    %c192_286 = arith.constant 192 : index
    %c0_287 = arith.constant 0 : index
    %318 = vector.load %arg8[%c192_286, %c0_287] : memref<288x512xf32, #tpu.memory_space<vmem>>, vector<32x512xf32>
    tpu.vector_store %arg8[%c192_286, %c0_287], %317 {strides = array<i32>} : memref<288x512xf32, #tpu.memory_space<vmem>>, vector<32x512xf32>,
    %c496_i32_288 = arith.constant 496 : i32
    %319 = tpu.dynamic_rotate %281 by %c496_i32_288 dim 1 : vector<32x512xf32>, i32 -> vector<32x512xf32>
    %c7_289 = arith.constant 7 : index
    %c0_290 = arith.constant 0 : index
    %c0_291 = arith.constant 0 : index
    %320 = vector.load %arg5[%c7_289, %c0_290, %c0_291] : memref<9x1x512xf32, #tpu.memory_space<vmem>>, vector<1x1x512xf32>
    %321 = vector.shape_cast %320 : vector<1x1x512xf32> to vector<1x512xf32>
    %322 = vector.broadcast %321 : vector<1x512xf32> to vector<32x512xf32>
    %323 = arith.mulf %319, %322 : vector<32x512xf32>
    %c224_292 = arith.constant 224 : index
    %c0_293 = arith.constant 0 : index
    %324 = vector.load %arg8[%c224_292, %c0_293] : memref<288x512xf32, #tpu.memory_space<vmem>>, vector<32x512xf32>
    tpu.vector_store %arg8[%c224_292, %c0_293], %323 {strides = array<i32>} : memref<288x512xf32, #tpu.memory_space<vmem>>, vector<32x512xf32>,
    %c495_i32_294 = arith.constant 495 : i32
    %325 = tpu.dynamic_rotate %281 by %c495_i32_294 dim 1 : vector<32x512xf32>, i32 -> vector<32x512xf32>
    %c8_295 = arith.constant 8 : index
    %c0_296 = arith.constant 0 : index
    %c0_297 = arith.constant 0 : index
    %326 = vector.load %arg5[%c8_295, %c0_296, %c0_297] : memref<9x1x512xf32, #tpu.memory_space<vmem>>, vector<1x1x512xf32>
    %327 = vector.shape_cast %326 : vector<1x1x512xf32> to vector<1x512xf32>
    %328 = vector.broadcast %327 : vector<1x512xf32> to vector<32x512xf32>
    %329 = arith.mulf %325, %328 : vector<32x512xf32>
    %c256_298 = arith.constant 256 : index
    %c0_299 = arith.constant 0 : index
    %330 = vector.load %arg8[%c256_298, %c0_299] : memref<288x512xf32, #tpu.memory_space<vmem>>, vector<32x512xf32>
    tpu.vector_store %arg8[%c256_298, %c0_299], %329 {strides = array<i32>} : memref<288x512xf32, #tpu.memory_space<vmem>>, vector<32x512xf32>,
    %c4_300 = arith.constant 4 : index
    %c0_301 = arith.constant 0 : index
    %c0_302 = arith.constant 0 : index
    %331 = vector.load %arg3[%c4_300, %c0_301, %c0_302] : memref<5x32x288xf32, #tpu.memory_space<vmem>>, vector<1x32x288xf32>
    %332 = vector.shape_cast %331 : vector<1x32x288xf32> to vector<32x288xf32>
    %c0_303 = arith.constant 0 : index
    %c0_304 = arith.constant 0 : index
    %333 = vector.load %arg8[%c0_303, %c0_304] : memref<288x512xf32, #tpu.memory_space<vmem>>, vector<288x512xf32>
    %cst_305 = arith.constant dense<0.000000e+00> : vector<32x512xf32>
    %334 = tpu.matmul %332, %333, %cst_305 {dimension_numbers = #tpu.dot_dimension_numbers<[1], [0], [0], [1], [0, 0, 1, 1], [], []>} : vector<32x288xf32>, vector<288x512xf32>, vector<32x512xf32> -> vector<32x512xf32>
    %335 = vector.extract_strided_slice %334 {offsets = [0, 0], sizes = [32, 256], strides = [1, 1]} : vector<32x512xf32> to vector<32x256xf32>
    %336 = vector.extract_strided_slice %334 {offsets = [0, 256], sizes = [32, 256], strides = [1, 1]} : vector<32x512xf32> to vector<32x256xf32>
    %337 = arith.subf %335, %336 : vector<32x256xf32>
    %338 = arith.mulf %337, %337 : vector<32x256xf32>
    %cst_306 = arith.constant 6.10351563E-5 : f32
    %339 = vector.broadcast %cst_306 : f32 to vector<32x256xf32>
    %340 = arith.mulf %338, %339 : vector<32x256xf32>
    %341 = arith.addf %273, %340 : vector<32x256xf32>
    %342 = vector.extract_strided_slice %341 {offsets = [0, 0], sizes = [32, 128], strides = [1, 1]} : vector<32x256xf32> to vector<32x128xf32>
    %343 = vector.extract_strided_slice %341 {offsets = [0, 128], sizes = [32, 128], strides = [1, 1]} : vector<32x256xf32> to vector<32x128xf32>
    %344 = arith.addf %342, %343 : vector<32x128xf32>
    %345 = vector.extract_strided_slice %344 {offsets = [0, 0], sizes = [8, 128], strides = [1, 1]} : vector<32x128xf32> to vector<8x128xf32>
    %346 = vector.extract_strided_slice %344 {offsets = [8, 0], sizes = [8, 128], strides = [1, 1]} : vector<32x128xf32> to vector<8x128xf32>
    %347 = arith.addf %345, %346 : vector<8x128xf32>
    %348 = vector.extract_strided_slice %344 {offsets = [16, 0], sizes = [8, 128], strides = [1, 1]} : vector<32x128xf32> to vector<8x128xf32>
    %349 = arith.addf %347, %348 : vector<8x128xf32>
    %350 = vector.extract_strided_slice %344 {offsets = [24, 0], sizes = [8, 128], strides = [1, 1]} : vector<32x128xf32> to vector<8x128xf32>
    %351 = arith.addf %349, %350 : vector<8x128xf32>
    %c0_307 = arith.constant 0 : index
    %c0_308 = arith.constant 0 : index
    %c0_309 = arith.constant 0 : index
    %352 = vector.load %arg6[%c0_307, %c0_308, %c0_309] : memref<1x8x128xf32, #tpu.memory_space<vmem>>, vector<1x8x128xf32>
    %353 = vector.shape_cast %352 : vector<1x8x128xf32> to vector<8x128xf32>
    %354 = vector.shape_cast %351 : vector<8x128xf32> to vector<1x8x128xf32>
    tpu.vector_store %arg6[%c0_307, %c0_308, %c0_309], %354 {strides = array<i32>} : memref<1x8x128xf32, #tpu.memory_space<vmem>>, vector<1x8x128xf32>,
    return
  }
  func.func @transform_0(%arg0: i32) -> (i32, i32, i32) {
    %c0_i32 = arith.constant 0 : i32
    %c0_i32_0 = arith.constant 0 : i32
    %c0_i32_1 = arith.constant 0 : i32
    return %arg0, %c0_i32, %c0_i32_0 : i32, i32, i32
  }
  func.func @transform_1(%arg0: i32) -> (i32, i32, i32) {
    %c0_i32 = arith.constant 0 : i32
    %c0_i32_0 = arith.constant 0 : i32
    %c0_i32_1 = arith.constant 0 : i32
    return %arg0, %c0_i32, %c0_i32_0 : i32, i32, i32
  }
  func.func @transform_2(%arg0: i32) -> (i32, i32, i32) {
    %c0_i32 = arith.constant 0 : i32
    %c0_i32_0 = arith.constant 0 : i32
    %c0_i32_1 = arith.constant 0 : i32
    %c0_i32_2 = arith.constant 0 : i32
    return %c0_i32, %c0_i32_0, %c0_i32_1 : i32, i32, i32
  }
  func.func @transform_3(%arg0: i32) -> (i32, i32, i32) {
    %c0_i32 = arith.constant 0 : i32
    %c0_i32_0 = arith.constant 0 : i32
    %c0_i32_1 = arith.constant 0 : i32
    %c0_i32_2 = arith.constant 0 : i32
    return %c0_i32, %c0_i32_0, %c0_i32_1 : i32, i32, i32
  }
  func.func @transform_4(%arg0: i32) -> (i32, i32, i32) {
    %c0_i32 = arith.constant 0 : i32
    %c0_i32_0 = arith.constant 0 : i32
    %c0_i32_1 = arith.constant 0 : i32
    %c0_i32_2 = arith.constant 0 : i32
    return %c0_i32, %c0_i32_0, %c0_i32_1 : i32, i32, i32
  }
  func.func @transform_5(%arg0: i32) -> (i32, i32, i32) {
    %c0_i32 = arith.constant 0 : i32
    %c0_i32_0 = arith.constant 0 : i32
    %c0_i32_1 = arith.constant 0 : i32
    return %arg0, %c0_i32, %c0_i32_0 : i32, i32, i32
  }
}

</mosaic_0001>

<llo_original>
// kernel: _lambda_.1
$region0: #{_lambda_.1}
  #allocation0 [shape = 'u32[]', space=smem, size = 0x4, offset = 0x4, fixed_abs, tag = 'smem constant byte address 0x4 - core index']
  #allocation1 [shape = 'u32[144,128]{1,0:T(1,128)}', space=vmem, size = 0x12000, scoped, tag = 'internal scratch']
  #allocation2 [shape = 'f32[32,512]{1,0:T(8,128)}', space=vmem, size = 0x10000, scoped, tag = 'scratch operand']
  #allocation3 [shape = 'f32[288,512]{1,0:T(8,128)}', space=vmem, size = 0x90000, scoped, tag = 'scratch operand']
  %s0 = inlined_call_operand.vmem [shape: f32[2,4,256], index: 0, kind: input, shape index: {}]
  %s1 = inlined_call_operand.vmem [shape: f32[2,4,256], index: 1, kind: input, shape index: {}]
  %s2 = inlined_call_operand.vmem [shape: f32[5,32,288], index: 2, kind: input, shape index: {}]
  %s3 = inlined_call_operand.vmem [shape: f32[5,32,1], index: 3, kind: input, shape index: {}]
  %s4 = inlined_call_operand.vmem [shape: f32[9,1,512], index: 4, kind: input, shape index: {}]
  %s5 = inlined_call_operand.vmem [shape: f32[2,8,128], index: 5, kind: output, shape index: {}]
  %s6 = sld [smem:[#allocation0]]
  $region53: #{_lambda_.1} parent=0
    _
  %s8 = ssub.s32 1, %s6
  %s9 = scalar_select 0, %s8, %s6
  loop: start=0, step=1, limit=4
  $region2: #{_lambda_.1} parent=0 // loop_pre_header
    _
  $region3: #{_lambda_.1} parent=0 // loop_header
    %s11 = sphi 0, %s15
    %p12 = scmp.ge.s32.totalorder %s11, 4
    %s21 = sphi 0, %s23
    %s24 = sphi 0, %s21
    %s25 = sphi 0, %s24
    %s41 = sphi 0, %s25
    %s47 = sphi 0, %s49
    %s50 = sphi 0, %s47
    %s51 = sphi 0, %s50
    %s67 = sphi 0, %s51
    %s71 = sphi 0, %s71
    %s73 = sphi 0, %s71
    %s74 = sphi 0, %s73
    %s88 = sphi 0, %s74
    %s92 = sphi 0, %s92
    %s94 = sphi 0, %s92
    %s95 = sphi 0, %s94
    %s109 = sphi 0, %s95
    %s113 = sphi 0, %s113
    %s115 = sphi 0, %s113
    %s116 = sphi 0, %s115
    %s130 = sphi 0, %s116
    %s136 = sphi 0, %s138
    %s139 = sphi 0, %s136
    %s140 = sphi 0, %s139
    %s156 = sphi 0, %s140
  $region4: #{_lambda_.1} parent=0 // loop_header_branch
    %14 = sbr.rel (%p12) target = $region8
  $region5: #{_lambda_.1} parent=0 // loop_body
    %s16 = ssub.s32 %s11, 1
    %s17 = ssub.s32 %s11, 2
    %s18 = sadd.s32 %s11, 1
    %s19 = ssub.s32 %s11, %s18
    %p20 = scmp.eq.s32.totalorder %s19, 0
    %s22 = sadd.s32 %s21, 1
    %s23 = scalar_select %p20, %s21, %s22
    %p26 = pneg %p20
    %p27 = scmp.eq.s32.totalorder %s11, 1
    %p28 = por %p26, %p27
    %p29 = scmp.ne.s32.totalorder %s21, %s24
    %p30 = scmp.eq.s32.totalorder %s11, 0
    %p31 = por %p29, %p30
    %p32 = scmp.ne.s32.totalorder %s21, %s24
    %p33 = scmp.eq.s32.totalorder %s16, 1
    %p34 = por %p32, %p33
    %p35 = scmp.ne.s32.totalorder %s24, %s25
    %p36 = scmp.eq.s32.totalorder %s16, 0
    %p37 = por %p35, %p36
    %p38 = scmp.ne.s32.totalorder %s24, %s25
    %p39 = scmp.eq.s32.totalorder %s17, 1
    %p40 = por %p38, %p39
    %p42 = scmp.ne.s32.totalorder %s25, %s41
    %p43 = scmp.eq.s32.totalorder %s17, 0
    %p44 = por %p42, %p43
    %s45 = ssub.s32 %s11, %s18
    %p46 = scmp.eq.s32.totalorder %s45, 0
    %s48 = sadd.s32 %s47, 1
    %s49 = scalar_select %p46, %s47, %s48
    %p52 = pneg %p46
    %p53 = scmp.eq.s32.totalorder %s11, 1
    %p54 = por %p52, %p53
    %p55 = scmp.ne.s32.totalorder %s47, %s50
    %p56 = scmp.eq.s32.totalorder %s11, 0
    %p57 = por %p55, %p56
    %p58 = scmp.ne.s32.totalorder %s47, %s50
    %p59 = scmp.eq.s32.totalorder %s16, 1
    %p60 = por %p58, %p59
    %p61 = scmp.ne.s32.totalorder %s50, %s51
    %p62 = scmp.eq.s32.totalorder %s16, 0
    %p63 = por %p61, %p62
    %p64 = scmp.ne.s32.totalorder %s50, %s51
    %p65 = scmp.eq.s32.totalorder %s17, 1
    %p66 = por %p64, %p65
    %p68 = scmp.ne.s32.totalorder %s51, %s67
    %p69 = scmp.eq.s32.totalorder %s17, 0
    %p70 = por %p68, %p69
    %s72 = sadd.s32 %s71, 1
    %p75 = scmp.eq.s32.totalorder %s11, 1
    %p76 = scmp.ne.s32.totalorder %s71, %s73
    %p77 = scmp.eq.s32.totalorder %s11, 0
    %p78 = por %p76, %p77
    %p79 = scmp.ne.s32.totalorder %s71, %s73
    %p80 = scmp.eq.s32.totalorder %s16, 1
    %p81 = por %p79, %p80
    %p82 = scmp.ne.s32.totalorder %s73, %s74
    %p83 = scmp.eq.s32.totalorder %s16, 0
    %p84 = por %p82, %p83
    %p85 = scmp.ne.s32.totalorder %s73, %s74
    %p86 = scmp.eq.s32.totalorder %s17, 1
    %p87 = por %p85, %p86
    %p89 = scmp.ne.s32.totalorder %s74, %s88
    %p90 = scmp.eq.s32.totalorder %s17, 0
    %p91 = por %p89, %p90
    %s93 = sadd.s32 %s92, 1
    %p96 = scmp.eq.s32.totalorder %s11, 1
    %p97 = scmp.ne.s32.totalorder %s92, %s94
    %p98 = scmp.eq.s32.totalorder %s11, 0
    %p99 = por %p97, %p98
    %p100 = scmp.ne.s32.totalorder %s92, %s94
    %p101 = scmp.eq.s32.totalorder %s16, 1
    %p102 = por %p100, %p101
    %p103 = scmp.ne.s32.totalorder %s94, %s95
    %p104 = scmp.eq.s32.totalorder %s16, 0
    %p105 = por %p103, %p104
    %p106 = scmp.ne.s32.totalorder %s94, %s95
    %p107 = scmp.eq.s32.totalorder %s17, 1
    %p108 = por %p106, %p107
    %p110 = scmp.ne.s32.totalorder %s95, %s109
    %p111 = scmp.eq.s32.totalorder %s17, 0
    %p112 = por %p110, %p111
    %s114 = sadd.s32 %s113, 1
    %p117 = scmp.eq.s32.totalorder %s11, 1
    %p118 = scmp.ne.s32.totalorder %s113, %s115
    %p119 = scmp.eq.s32.totalorder %s11, 0
    %p120 = por %p118, %p119
    %p121 = scmp.ne.s32.totalorder %s113, %s115
    %p122 = scmp.eq.s32.totalorder %s16, 1
    %p123 = por %p121, %p122
    %p124 = scmp.ne.s32.totalorder %s115, %s116
    %p125 = scmp.eq.s32.totalorder %s16, 0
    %p126 = por %p124, %p125
    %p127 = scmp.ne.s32.totalorder %s115, %s116
    %p128 = scmp.eq.s32.totalorder %s17, 1
    %p129 = por %p127, %p128
    %p131 = scmp.ne.s32.totalorder %s116, %s130
    %p132 = scmp.eq.s32.totalorder %s17, 0
    %p133 = por %p131, %p132
    %s134 = ssub.s32 %s11, %s18
    %p135 = scmp.eq.s32.totalorder %s134, 0
    %s137 = sadd.s32 %s136, 1
    %s138 = scalar_select %p135, %s136, %s137
    %p141 = pneg %p135
    %p142 = scmp.eq.s32.totalorder %s11, 1
    %p143 = por %p141, %p142
    %p144 = scmp.ne.s32.totalorder %s136, %s139
    %p145 = scmp.eq.s32.totalorder %s11, 0
    %p146 = por %p144, %p145
    %p147 = scmp.ne.s32.totalorder %s136, %s139
    %p148 = scmp.eq.s32.totalorder %s16, 1
    %p149 = por %p147, %p148
    %p150 = scmp.ne.s32.totalorder %s139, %s140
    %p151 = scmp.eq.s32.totalorder %s16, 0
    %p152 = por %p150, %p151
    %p153 = scmp.ne.s32.totalorder %s139, %s140
    %p154 = scmp.eq.s32.totalorder %s17, 1
    %p155 = por %p153, %p154
    %p157 = scmp.ne.s32.totalorder %s140, %s156
    %p158 = scmp.eq.s32.totalorder %s17, 0
    %p159 = por %p157, %p158
    %p160 = scmp.le.s32.totalorder 1, %s11
    %p161 = scmp.lt.s32.totalorder %s11, 3
    %p162 = pnand %p160, %p161
    %p163 = pneg %p162
    // Predicated region
    $region9: #{_lambda_.1} parent=5 // pred_check
      _
    $region10: #{_lambda_.1} parent=5 // pred_check_branch
      %165 = sbr.rel (%p162) target = $region12
    $region11: #{_lambda_.1} parent=5 // pred_region
      %s166 = ssub.s32 %s11, 1
      // Predicated region
      $region13: #{_lambda_.1} parent=11 // pred_check
        %p167 = pneg %p84
      $region14: #{_lambda_.1} parent=11 // pred_check_branch
        %169 = sbr.rel (%p167) target = $region16
      $region15: #{_lambda_.1} parent=11 // pred_region
        _
      $region16: #{_lambda_.1} parent=11 // pred_fallthru
        _
      // Predicated region
      $region17: #{_lambda_.1} parent=11 // pred_check
        %p170 = pneg %p105
      $region18: #{_lambda_.1} parent=11 // pred_check_branch
        %172 = sbr.rel (%p170) target = $region20
      $region19: #{_lambda_.1} parent=11 // pred_region
        _
      $region20: #{_lambda_.1} parent=11 // pred_fallthru
        _
      // Predicated region
      $region21: #{_lambda_.1} parent=11 // pred_check
        %p173 = pneg %p126
      $region22: #{_lambda_.1} parent=11 // pred_check_branch
        %175 = sbr.rel (%p173) target = $region24
      $region23: #{_lambda_.1} parent=11 // pred_region
        _
      $region24: #{_lambda_.1} parent=11 // pred_fallthru
        _
    $region12: #{_lambda_.1} parent=5 // pred_fallthru
      _
    %p176 = scmp.lt.s32.totalorder %s11, 2
    // Predicated region
    $region25: #{_lambda_.1} parent=5 // pred_check
      %p177 = pneg %p176
    $region26: #{_lambda_.1} parent=5 // pred_check_branch
      %179 = sbr.rel (%p177) target = $region28
    $region27: #{_lambda_.1} parent=5 // pred_region
      // Predicated region
      $region29: #{_lambda_.1} parent=27 // pred_check
        %p180 = pneg %p31
      $region30: #{_lambda_.1} parent=27 // pred_check_branch
        %182 = sbr.rel (%p180) target = $region32
      $region31: #{_lambda_.1} parent=27 // pred_region
        %p183 = scmp.lt.s32.totalorder %s11, 1
        %s184 = scalar_select %p183, %s11, 1
        %s185 = smul.addr %s184, 2
        %s186 = smul.addr %s185, 4
        %s187 = scalar_lea.vmem %s0, %s186
      $region32: #{_lambda_.1} parent=27 // pred_fallthru
        _
      // Predicated region
      $region33: #{_lambda_.1} parent=27 // pred_check
        %p188 = pneg %p57
      $region34: #{_lambda_.1} parent=27 // pred_check_branch
        %190 = sbr.rel (%p188) target = $region36
      $region35: #{_lambda_.1} parent=27 // pred_region
        %p191 = scmp.lt.s32.totalorder %s11, 1
        %s192 = scalar_select %p191, %s11, 1
        %s193 = smul.addr %s192, 2
        %s194 = smul.addr %s193, 4
        %s195 = scalar_lea.vmem %s1, %s194
      $region36: #{_lambda_.1} parent=27 // pred_fallthru
        _
    $region28: #{_lambda_.1} parent=5 // pred_fallthru
      _
    %p196 = scmp.le.s32.totalorder 1, %s11
    %p197 = scmp.lt.s32.totalorder %s11, 3
    %p198 = pnand %p196, %p197
    %p199 = pneg %p198
    // Predicated region
    $region37: #{_lambda_.1} parent=5 // pred_check
      _
    $region38: #{_lambda_.1} parent=5 // pred_check_branch
      %201 = sbr.rel (%p198) target = $region40
    $region39: #{_lambda_.1} parent=5 // pred_region
      %s202 = ssub.s32 %s11, 1
      %p203 = scmp.lt.s32.totalorder %s16, 1
      %s204 = scalar_select %p203, %s16, 1
      %s205 = smul.addr %s204, 2
      %s206 = smul.addr %s205, 4
      %s207 = scalar_lea.vmem %s0, %s206
      %p208 = pneg %p37
      %p209 = pneg %p34
      %p210 = scmp.lt.s32.totalorder %s16, 1
      %s211 = scalar_select %p210, %s16, 1
      %s212 = smul.addr %s211, 2
      %s213 = smul.addr %s212, 4
      %s214 = scalar_lea.vmem %s1, %s213
      %p215 = pneg %p63
      %p216 = pneg %p60
      %p217 = pneg %p84
      %p218 = pneg %p81
      %p219 = pneg %p105
      %p220 = pneg %p102
      %p221 = pneg %p126
      %p222 = pneg %p123
      %p223 = pneg %p152
      %p224 = pneg %p149
      %p225 = scmp.lt.s32.totalorder %s16, 1
      %s226 = scalar_select %p225, %s16, 1
      %s227 = smul.addr %s226, 8
      %s228 = scalar_lea.vmem %s5, %s227
      %p229 = scmp.lt.s32.totalorder %s16, 1
      %s230 = scalar_select %p229, %s16, 1
      %s231 = smul.addr %s230, 2
      %s232 = smul.addr %s231, 4
      %s233 = scalar_lea.vmem %s0, %s232
      %p234 = scmp.lt.s32.totalorder %s16, 1
      %s235 = scalar_select %p234, %s16, 1
      %s236 = smul.addr %s235, 2
      %s237 = smul.addr %s236, 4
      %s238 = scalar_lea.vmem %s1, %s237
      %p239 = scmp.lt.s32.totalorder %s16, 1
      %s240 = scalar_select %p239, %s16, 1
      %s241 = smul.addr %s240, 8
      %s242 = scalar_lea.vmem %s5, %s241
      %v243 = vld [vmem:[%s233] sm:$0xff]
      %v245 = vcombine.high %v243, %v243
      %247 = vst [vmem:[#allocation2] sm:$0xf] %v243
      %248 = vst [vmem:[#allocation2 + $0x8] sm:$0xf] %v245
      %v249 = vld [vmem:[%s238] sm:$0xff]
      %v251 = vcombine.high %v249, %v249
      %253 = vst [vmem:[#allocation2 + $0x10] sm:$0xf] %v249
      %254 = vst [vmem:[#allocation2 + $0x18] sm:$0xf] %v251
      %255 = vst [vmem:[#allocation2] sm:$0xf0] 0.0
      %256 = vst [vmem:[#allocation2 + $0x8] sm:$0xf0] 0.0
      %257 = vst [vmem:[#allocation2 + $0x10] sm:$0xf0] 0.0
      %258 = vst [vmem:[#allocation2 + $0x18] sm:$0xf0] 0.0
      %259 = vst [vmem:[#allocation2 + $0x20] sm:$0xff] 0.0
      %260 = vst [vmem:[#allocation2 + $0x28] sm:$0xff] 0.0
      %261 = vst [vmem:[#allocation2 + $0x30] sm:$0xff] 0.0
      %262 = vst [vmem:[#allocation2 + $0x38] sm:$0xff] 0.0
      %263 = vst [vmem:[#allocation2 + $0x40] sm:$0xff] 0.0
      %264 = vst [vmem:[#allocation2 + $0x48] sm:$0xff] 0.0
      %265 = vst [vmem:[#allocation2 + $0x50] sm:$0xff] 0.0
      %266 = vst [vmem:[#allocation2 + $0x58] sm:$0xff] 0.0
      %267 = vst [vmem:[#allocation2 + $0x60] sm:$0xff] 0.0
      %268 = vst [vmem:[#allocation2 + $0x68] sm:$0xff] 0.0
      %269 = vst [vmem:[#allocation2 + $0x70] sm:$0xff] 0.0
      %270 = vst [vmem:[#allocation2 + $0x78] sm:$0xff] 0.0
      %v271 = vld [vmem:[#allocation2] sm:$0xff]
      %v272 = vld [vmem:[#allocation2 + $0x8] sm:$0xff]
      %v273 = vld [vmem:[#allocation2 + $0x10] sm:$0xff]
      %v274 = vld [vmem:[#allocation2 + $0x18] sm:$0xff]
      %v275 = vld [vmem:[#allocation2 + $0x20] sm:$0xff]
      %v276 = vld [vmem:[#allocation2 + $0x28] sm:$0xff]
      %v277 = vld [vmem:[#allocation2 + $0x30] sm:$0xff]
      %v278 = vld [vmem:[#allocation2 + $0x38] sm:$0xff]
      %v279 = vld [vmem:[#allocation2 + $0x40] sm:$0xff]
      %v280 = vld [vmem:[#allocation2 + $0x48] sm:$0xff]
      %v281 = vld [vmem:[#allocation2 + $0x50] sm:$0xff]
      %v282 = vld [vmem:[#allocation2 + $0x58] sm:$0xff]
      %v283 = vld [vmem:[#allocation2 + $0x60] sm:$0xff]
      %v284 = vld [vmem:[#allocation2 + $0x68] sm:$0xff]
      %v285 = vld [vmem:[#allocation2 + $0x70] sm:$0xff]
      %v286 = vld [vmem:[#allocation2 + $0x78] sm:$0xff]
      %287 = vrot.lane.b32.xlu0 %v271, 17
      %v288 = vpop.permute.xlu0 %287
      %289 = vrot.lane.b32.xlu0 %v275, 17
      %v290 = vpop.permute.xlu0 %289
      %291 = vrot.lane.b32.xlu0 %v279, 17
      %v292 = vpop.permute.xlu0 %291
      %293 = vrot.lane.b32.xlu0 %v283, 17
      %v294 = vpop.permute.xlu0 %293
      %295 = vrot.lane.b32.xlu0 %v272, 17
      %v296 = vpop.permute.xlu0 %295
      %297 = vrot.lane.b32.xlu0 %v276, 17
      %v298 = vpop.permute.xlu0 %297
      %299 = vrot.lane.b32.xlu0 %v280, 17
      %v300 = vpop.permute.xlu0 %299
      %301 = vrot.lane.b32.xlu0 %v284, 17
      %v302 = vpop.permute.xlu0 %301
      %303 = vrot.lane.b32.xlu0 %v273, 17
      %v304 = vpop.permute.xlu0 %303
      %305 = vrot.lane.b32.xlu0 %v277, 17
      %v306 = vpop.permute.xlu0 %305
      %307 = vrot.lane.b32.xlu0 %v281, 17
      %v308 = vpop.permute.xlu0 %307
      %309 = vrot.lane.b32.xlu0 %v285, 17
      %v310 = vpop.permute.xlu0 %309
      %311 = vrot.lane.b32.xlu0 %v274, 17
      %v312 = vpop.permute.xlu0 %311
      %313 = vrot.lane.b32.xlu0 %v278, 17
      %v314 = vpop.permute.xlu0 %313
      %315 = vrot.lane.b32.xlu0 %v282, 17
      %v316 = vpop.permute.xlu0 %315
      %317 = vrot.lane.b32.xlu0 %v286, 17
      %v318 = vpop.permute.xlu0 %317
      %v319 = vlaneseq
      %v320 = vand.u32 %v319, 127
      %vm321 = vcmp.lt.s32.totalorder %v320, 17
      %v322 = vsel %vm321, %v304, %v312
      %v323 = vsel %vm321, %v306, %v314
      %v324 = vsel %vm321, %v308, %v316
      %v325 = vsel %vm321, %v310, %v318
      %v326 = vsel %vm321, %v296, %v304
      %v327 = vsel %vm321, %v298, %v306
      %v328 = vsel %vm321, %v300, %v308
      %v329 = vsel %vm321, %v302, %v310
      %v330 = vsel %vm321, %v288, %v296
      %v331 = vsel %vm321, %v290, %v298
      %v332 = vsel %vm321, %v292, %v300
      %v333 = vsel %vm321, %v294, %v302
      %v334 = vsel %vm321, %v312, %v288
      %v335 = vsel %vm321, %v314, %v290
      %v336 = vsel %vm321, %v316, %v292
      %v337 = vsel %vm321, %v318, %v294
      %v338 = vld [vmem:[%s4] sm:$0xf]
      %v340 = vlaneseq
      %v341 = vshrl.u32 %v340, 7
      %v342 = vsub.s32 0, %v341
      %v343 = vrot.slane %v338, %v342
      %v344 = vlaneseq
      %v345 = vshrl.u32 %v344, 7
      %v346 = vsub.s32 1, %v345
      %v347 = vrot.slane %v338, %v346
      %v348 = vlaneseq
      %v349 = vshrl.u32 %v348, 7
      %v350 = vsub.s32 2, %v349
      %v351 = vrot.slane %v338, %v350
      %v352 = vlaneseq
      %v353 = vshrl.u32 %v352, 7
      %v354 = vsub.s32 3, %v353
      %v355 = vrot.slane %v338, %v354
      %v360 = vmul.f32 %v334, %v343
      %v361 = vmul.f32 %v330, %v347
      %v362 = vmul.f32 %v326, %v351
      %v363 = vmul.f32 %v322, %v355
      %v364 = vmul.f32 %v335, %v343
      %v365 = vmul.f32 %v331, %v347
      %v366 = vmul.f32 %v327, %v351
      %v367 = vmul.f32 %v323, %v355
      %v368 = vmul.f32 %v336, %v343
      %v369 = vmul.f32 %v332, %v347
      %v370 = vmul.f32 %v328, %v351
      %v371 = vmul.f32 %v324, %v355
      %v372 = vmul.f32 %v337, %v343
      %v373 = vmul.f32 %v333, %v347
      %v374 = vmul.f32 %v329, %v351
      %v375 = vmul.f32 %v325, %v355
      %376 = vst [vmem:[#allocation3] sm:$0xff] %v360
      %377 = vst [vmem:[#allocation3 + $0x8] sm:$0xff] %v361
      %378 = vst [vmem:[#allocation3 + $0x10] sm:$0xff] %v362
      %379 = vst [vmem:[#allocation3 + $0x18] sm:$0xff] %v363
      %380 = vst [vmem:[#allocation3 + $0x20] sm:$0xff] %v364
      %381 = vst [vmem:[#allocation3 + $0x28] sm:$0xff] %v365
      %382 = vst [vmem:[#allocation3 + $0x30] sm:$0xff] %v366
      %383 = vst [vmem:[#allocation3 + $0x38] sm:$0xff] %v367
      %384 = vst [vmem:[#allocation3 + $0x40] sm:$0xff] %v368
      %385 = vst [vmem:[#allocation3 + $0x48] sm:$0xff] %v369
      %386 = vst [vmem:[#allocation3 + $0x50] sm:$0xff] %v370
      %387 = vst [vmem:[#allocation3 + $0x58] sm:$0xff] %v371
      %388 = vst [vmem:[#allocation3 + $0x60] sm:$0xff] %v372
      %389 = vst [vmem:[#allocation3 + $0x68] sm:$0xff] %v373
      %390 = vst [vmem:[#allocation3 + $0x70] sm:$0xff] %v374
      %391 = vst [vmem:[#allocation3 + $0x78] sm:$0xff] %v375
      %392 = vrot.lane.b32.xlu0 %v271, 16
      %v393 = vpop.permute.xlu0 %392
      %394 = vrot.lane.b32.xlu0 %v275, 16
      %v395 = vpop.permute.xlu0 %394
      %396 = vrot.lane.b32.xlu0 %v279, 16
      %v397 = vpop.permute.xlu0 %396
      %398 = vrot.lane.b32.xlu0 %v283, 16
      %v399 = vpop.permute.xlu0 %398
      %400 = vrot.lane.b32.xlu0 %v272, 16
      %v401 = vpop.permute.xlu0 %400
      %402 = vrot.lane.b32.xlu0 %v276, 16
      %v403 = vpop.permute.xlu0 %402
      %404 = vrot.lane.b32.xlu0 %v280, 16
      %v405 = vpop.permute.xlu0 %404
      %406 = vrot.lane.b32.xlu0 %v284, 16
      %v407 = vpop.permute.xlu0 %406
      %408 = vrot.lane.b32.xlu0 %v273, 16
      %v409 = vpop.permute.xlu0 %408
      %410 = vrot.lane.b32.xlu0 %v277, 16
      %v411 = vpop.permute.xlu0 %410
      %412 = vrot.lane.b32.xlu0 %v281, 16
      %v413 = vpop.permute.xlu0 %412
      %414 = vrot.lane.b32.xlu0 %v285, 16
      %v415 = vpop.permute.xlu0 %414
      %416 = vrot.lane.b32.xlu0 %v274, 16
      %v417 = vpop.permute.xlu0 %416
      %418 = vrot.lane.b32.xlu0 %v278, 16
      %v419 = vpop.permute.xlu0 %418
      %420 = vrot.lane.b32.xlu0 %v282, 16
      %v421 = vpop.permute.xlu0 %420
      %422 = vrot.lane.b32.xlu0 %v286, 16
      %v423 = vpop.permute.xlu0 %422
      %vm424 = vcmp.lt.s32.totalorder %v320, 16
      %v425 = vsel %vm424, %v409, %v417
      %v426 = vsel %vm424, %v411, %v419
      %v427 = vsel %vm424, %v413, %v421
      %v428 = vsel %vm424, %v415, %v423
      %v429 = vsel %vm424, %v401, %v409
      %v430 = vsel %vm424, %v403, %v411
      %v431 = vsel %vm424, %v405, %v413
      %v432 = vsel %vm424, %v407, %v415
      %v433 = vsel %vm424, %v393, %v401
      %v434 = vsel %vm424, %v395, %v403
      %v435 = vsel %vm424, %v397, %v405
      %v436 = vsel %vm424, %v399, %v407
      %v437 = vsel %vm424, %v417, %v393
      %v438 = vsel %vm424, %v419, %v395
      %v439 = vsel %vm424, %v421, %v397
      %v440 = vsel %vm424, %v423, %v399
      %s441 = scalar_lea.vmem %s4, 4
      %v442 = vld [vmem:[%s441] sm:$0xf]
      %v444 = vlaneseq
      %v445 = vshrl.u32 %v444, 7
      %v446 = vsub.s32 0, %v445
      %v447 = vrot.slane %v442, %v446
      %v448 = vlaneseq
      %v449 = vshrl.u32 %v448, 7
      %v450 = vsub.s32 1, %v449
      %v451 = vrot.slane %v442, %v450
      %v452 = vlaneseq
      %v453 = vshrl.u32 %v452, 7
      %v454 = vsub.s32 2, %v453
      %v455 = vrot.slane %v442, %v454
      %v456 = vlaneseq
      %v457 = vshrl.u32 %v456, 7
      %v458 = vsub.s32 3, %v457
      %v459 = vrot.slane %v442, %v458
      %v464 = vmul.f32 %v437, %v447
      %v465 = vmul.f32 %v433, %v451
      %v466 = vmul.f32 %v429, %v455
      %v467 = vmul.f32 %v425, %v459
      %v468 = vmul.f32 %v438, %v447
      %v469 = vmul.f32 %v434, %v451
      %v470 = vmul.f32 %v430, %v455
      %v471 = vmul.f32 %v426, %v459
      %v472 = vmul.f32 %v439, %v447
      %v473 = vmul.f32 %v435, %v451
      %v474 = vmul.f32 %v431, %v455
      %v475 = vmul.f32 %v427, %v459
      %v476 = vmul.f32 %v440, %v447
      %v477 = vmul.f32 %v436, %v451
      %v478 = vmul.f32 %v432, %v455
      %v479 = vmul.f32 %v428, %v459
      %480 = vst [vmem:[#allocation3 + $0x80] sm:$0xff] %v464
      %481 = vst [vmem:[#allocation3 + $0x88] sm:$0xff] %v465
      %482 = vst [vmem:[#allocation3 + $0x90] sm:$0xff] %v466
      %483 = vst [vmem:[#allocation3 + $0x98] sm:$0xff] %v467
      %484 = vst [vmem:[#allocation3 + $0xa0] sm:$0xff] %v468
      %485 = vst [vmem:[#allocation3 + $0xa8] sm:$0xff] %v469
      %486 = vst [vmem:[#allocation3 + $0xb0] sm:$0xff] %v470
      %487 = vst [vmem:[#allocation3 + $0xb8] sm:$0xff] %v471
      %488 = vst [vmem:[#allocation3 + $0xc0] sm:$0xff] %v472
      %489 = vst [vmem:[#allocation3 + $0xc8] sm:$0xff] %v473
      %490 = vst [vmem:[#allocation3 + $0xd0] sm:$0xff] %v474
      %491 = vst [vmem:[#allocation3 + $0xd8] sm:$0xff] %v475
      %492 = vst [vmem:[#allocation3 + $0xe0] sm:$0xff] %v476
      %493 = vst [vmem:[#allocation3 + $0xe8] sm:$0xff] %v477
      %494 = vst [vmem:[#allocation3 + $0xf0] sm:$0xff] %v478
      %495 = vst [vmem:[#allocation3 + $0xf8] sm:$0xff] %v479
      %496 = vrot.lane.b32.xlu0 %v271, 15
      %v497 = vpop.permute.xlu0 %496
      %498 = vrot.lane.b32.xlu0 %v275, 15
      %v499 = vpop.permute.xlu0 %498
      %500 = vrot.lane.b32.xlu0 %v279, 15
      %v501 = vpop.permute.xlu0 %500
      %502 = vrot.lane.b32.xlu0 %v283, 15
      %v503 = vpop.permute.xlu0 %502
      %504 = vrot.lane.b32.xlu0 %v272, 15
      %v505 = vpop.permute.xlu0 %504
      %506 = vrot.lane.b32.xlu0 %v276, 15
      %v507 = vpop.permute.xlu0 %506
      %508 = vrot.lane.b32.xlu0 %v280, 15
      %v509 = vpop.permute.xlu0 %508
      %510 = vrot.lane.b32.xlu0 %v284, 15
      %v511 = vpop.permute.xlu0 %510
      %512 = vrot.lane.b32.xlu0 %v273, 15
      %v513 = vpop.permute.xlu0 %512
      %514 = vrot.lane.b32.xlu0 %v277, 15
      %v515 = vpop.permute.xlu0 %514
      %516 = vrot.lane.b32.xlu0 %v281, 15
      %v517 = vpop.permute.xlu0 %516
      %518 = vrot.lane.b32.xlu0 %v285, 15
      %v519 = vpop.permute.xlu0 %518
      %520 = vrot.lane.b32.xlu0 %v274, 15
      %v521 = vpop.permute.xlu0 %520
      %522 = vrot.lane.b32.xlu0 %v278, 15
      %v523 = vpop.permute.xlu0 %522
      %524 = vrot.lane.b32.xlu0 %v282, 15
      %v525 = vpop.permute.xlu0 %524
      %526 = vrot.lane.b32.xlu0 %v286, 15
      %v527 = vpop.permute.xlu0 %526
      %vm528 = vcmp.lt.s32.totalorder %v320, 15
      %v529 = vsel %vm528, %v513, %v521
      %v530 = vsel %vm528, %v515, %v523
      %v531 = vsel %vm528, %v517, %v525
      %v532 = vsel %vm528, %v519, %v527
      %v533 = vsel %vm528, %v505, %v513
      %v534 = vsel %vm528, %v507, %v515
      %v535 = vsel %vm528, %v509, %v517
      %v536 = vsel %vm528, %v511, %v519
      %v537 = vsel %vm528, %v497, %v505
      %v538 = vsel %vm528, %v499, %v507
      %v539 = vsel %vm528, %v501, %v509
      %v540 = vsel %vm528, %v503, %v511
      %v541 = vsel %vm528, %v521, %v497
      %v542 = vsel %vm528, %v523, %v499
      %v543 = vsel %vm528, %v525, %v501
      %v544 = vsel %vm528, %v527, %v503
      %s545 = scalar_lea.vmem %s4, 8
      %v546 = vld [vmem:[%s545] sm:$0xf]
      %v548 = vlaneseq
      %v549 = vshrl.u32 %v548, 7
      %v550 = vsub.s32 0, %v549
      %v551 = vrot.slane %v546, %v550
      %v552 = vlaneseq
      %v553 = vshrl.u32 %v552, 7
      %v554 = vsub.s32 1, %v553
      %v555 = vrot.slane %v546, %v554
      %v556 = vlaneseq
      %v557 = vshrl.u32 %v556, 7
      %v558 = vsub.s32 2, %v557
      %v559 = vrot.slane %v546, %v558
      %v560 = vlaneseq
      %v561 = vshrl.u32 %v560, 7
      %v562 = vsub.s32 3, %v561
      %v563 = vrot.slane %v546, %v562
      %v568 = vmul.f32 %v541, %v551
      %v569 = vmul.f32 %v537, %v555
      %v570 = vmul.f32 %v533, %v559
      %v571 = vmul.f32 %v529, %v563
      %v572 = vmul.f32 %v542, %v551
      %v573 = vmul.f32 %v538, %v555
      %v574 = vmul.f32 %v534, %v559
      %v575 = vmul.f32 %v530, %v563
      %v576 = vmul.f32 %v543, %v551
      %v577 = vmul.f32 %v539, %v555
      %v578 = vmul.f32 %v535, %v559
      %v579 = vmul.f32 %v531, %v563
      %v580 = vmul.f32 %v544, %v551
      %v581 = vmul.f32 %v540, %v555
      %v582 = vmul.f32 %v536, %v559
      %v583 = vmul.f32 %v532, %v563
      %584 = vst [vmem:[#allocation3 + $0x100] sm:$0xff] %v568
      %585 = vst [vmem:[#allocation3 + $0x108] sm:$0xff] %v569
      %586 = vst [vmem:[#allocation3 + $0x110] sm:$0xff] %v570
      %587 = vst [vmem:[#allocation3 + $0x118] sm:$0xff] %v571
      %588 = vst [vmem:[#allocation3 + $0x120] sm:$0xff] %v572
      %589 = vst [vmem:[#allocation3 + $0x128] sm:$0xff] %v573
      %590 = vst [vmem:[#allocation3 + $0x130] sm:$0xff] %v574
      %591 = vst [vmem:[#allocation3 + $0x138] sm:$0xff] %v575
      %592 = vst [vmem:[#allocation3 + $0x140] sm:$0xff] %v576
      %593 = vst [vmem:[#allocation3 + $0x148] sm:$0xff] %v577
      %594 = vst [vmem:[#allocation3 + $0x150] sm:$0xff] %v578
      %595 = vst [vmem:[#allocation3 + $0x158] sm:$0xff] %v579
      %596 = vst [vmem:[#allocation3 + $0x160] sm:$0xff] %v580
      %597 = vst [vmem:[#allocation3 + $0x168] sm:$0xff] %v581
      %598 = vst [vmem:[#allocation3 + $0x170] sm:$0xff] %v582
      %599 = vst [vmem:[#allocation3 + $0x178] sm:$0xff] %v583
      %600 = vrot.lane.b32.xlu0 %v271, 1
      %v601 = vpop.permute.xlu0 %600
      %602 = vrot.lane.b32.xlu0 %v275, 1
      %v603 = vpop.permute.xlu0 %602
      %604 = vrot.lane.b32.xlu0 %v279, 1
      %v605 = vpop.permute.xlu0 %604
      %606 = vrot.lane.b32.xlu0 %v283, 1
      %v607 = vpop.permute.xlu0 %606
      %608 = vrot.lane.b32.xlu0 %v272, 1
      %v609 = vpop.permute.xlu0 %608
      %610 = vrot.lane.b32.xlu0 %v276, 1
      %v611 = vpop.permute.xlu0 %610
      %612 = vrot.lane.b32.xlu0 %v280, 1
      %v613 = vpop.permute.xlu0 %612
      %614 = vrot.lane.b32.xlu0 %v284, 1
      %v615 = vpop.permute.xlu0 %614
      %616 = vrot.lane.b32.xlu0 %v273, 1
      %v617 = vpop.permute.xlu0 %616
      %618 = vrot.lane.b32.xlu0 %v277, 1
      %v619 = vpop.permute.xlu0 %618
      %620 = vrot.lane.b32.xlu0 %v281, 1
      %v621 = vpop.permute.xlu0 %620
      %622 = vrot.lane.b32.xlu0 %v285, 1
      %v623 = vpop.permute.xlu0 %622
      %624 = vrot.lane.b32.xlu0 %v274, 1
      %v625 = vpop.permute.xlu0 %624
      %626 = vrot.lane.b32.xlu0 %v278, 1
      %v627 = vpop.permute.xlu0 %626
      %628 = vrot.lane.b32.xlu0 %v282, 1
      %v629 = vpop.permute.xlu0 %628
      %630 = vrot.lane.b32.xlu0 %v286, 1
      %v631 = vpop.permute.xlu0 %630
      %vm632 = vcmp.lt.s32.totalorder %v320, 1
      %v633 = vsel %vm632, %v617, %v625
      %v634 = vsel %vm632, %v619, %v627
      %v635 = vsel %vm632, %v621, %v629
      %v636 = vsel %vm632, %v623, %v631
      %v637 = vsel %vm632, %v609, %v617
      %v638 = vsel %vm632, %v611, %v619
      %v639 = vsel %vm632, %v613, %v621
      %v640 = vsel %vm632, %v615, %v623
      %v641 = vsel %vm632, %v601, %v609
      %v642 = vsel %vm632, %v603, %v611
      %v643 = vsel %vm632, %v605, %v613
      %v644 = vsel %vm632, %v607, %v615
      %v645 = vsel %vm632, %v625, %v601
      %v646 = vsel %vm632, %v627, %v603
      %v647 = vsel %vm632, %v629, %v605
      %v648 = vsel %vm632, %v631, %v607
      %s649 = scalar_lea.vmem %s4, 12
      %v650 = vld [vmem:[%s649] sm:$0xf]
      %v652 = vlaneseq
      %v653 = vshrl.u32 %v652, 7
      %v654 = vsub.s32 0, %v653
      %v655 = vrot.slane %v650, %v654
      %v656 = vlaneseq
      %v657 = vshrl.u32 %v656, 7
      %v658 = vsub.s32 1, %v657
      %v659 = vrot.slane %v650, %v658
      %v660 = vlaneseq
      %v661 = vshrl.u32 %v660, 7
      %v662 = vsub.s32 2, %v661
      %v663 = vrot.slane %v650, %v662
      %v664 = vlaneseq
      %v665 = vshrl.u32 %v664, 7
      %v666 = vsub.s32 3, %v665
      %v667 = vrot.slane %v650, %v666
      %v672 = vmul.f32 %v645, %v655
      %v673 = vmul.f32 %v641, %v659
      %v674 = vmul.f32 %v637, %v663
      %v675 = vmul.f32 %v633, %v667
      %v676 = vmul.f32 %v646, %v655
      %v677 = vmul.f32 %v642, %v659
      %v678 = vmul.f32 %v638, %v663
      %v679 = vmul.f32 %v634, %v667
      %v680 = vmul.f32 %v647, %v655
      %v681 = vmul.f32 %v643, %v659
      %v682 = vmul.f32 %v639, %v663
      %v683 = vmul.f32 %v635, %v667
      %v684 = vmul.f32 %v648, %v655
      %v685 = vmul.f32 %v644, %v659
      %v686 = vmul.f32 %v640, %v663
      %v687 = vmul.f32 %v636, %v667
      %688 = vst [vmem:[#allocation3 + $0x180] sm:$0xff] %v672
      %689 = vst [vmem:[#allocation3 + $0x188] sm:$0xff] %v673
      %690 = vst [vmem:[#allocation3 + $0x190] sm:$0xff] %v674
      %691 = vst [vmem:[#allocation3 + $0x198] sm:$0xff] %v675
      %692 = vst [vmem:[#allocation3 + $0x1a0] sm:$0xff] %v676
      %693 = vst [vmem:[#allocation3 + $0x1a8] sm:$0xff] %v677
      %694 = vst [vmem:[#allocation3 + $0x1b0] sm:$0xff] %v678
      %695 = vst [vmem:[#allocation3 + $0x1b8] sm:$0xff] %v679
      %696 = vst [vmem:[#allocation3 + $0x1c0] sm:$0xff] %v680
      %697 = vst [vmem:[#allocation3 + $0x1c8] sm:$0xff] %v681
      %698 = vst [vmem:[#allocation3 + $0x1d0] sm:$0xff] %v682
      %699 = vst [vmem:[#allocation3 + $0x1d8] sm:$0xff] %v683
      %700 = vst [vmem:[#allocation3 + $0x1e0] sm:$0xff] %v684
      %701 = vst [vmem:[#allocation3 + $0x1e8] sm:$0xff] %v685
      %702 = vst [vmem:[#allocation3 + $0x1f0] sm:$0xff] %v686
      %703 = vst [vmem:[#allocation3 + $0x1f8] sm:$0xff] %v687
      %704 = vst [vmem:[#allocation3 + $0x200] sm:$0xff] %v271
      %705 = vst [vmem:[#allocation3 + $0x208] sm:$0xff] %v272
      %706 = vst [vmem:[#allocation3 + $0x210] sm:$0xff] %v273
      %707 = vst [vmem:[#allocation3 + $0x218] sm:$0xff] %v274
      %708 = vst [vmem:[#allocation3 + $0x220] sm:$0xff] %v275
      %709 = vst [vmem:[#allocation3 + $0x228] sm:$0xff] %v276
      %710 = vst [vmem:[#allocation3 + $0x230] sm:$0xff] %v277
      %711 = vst [vmem:[#allocation3 + $0x238] sm:$0xff] %v278
      %712 = vst [vmem:[#allocation3 + $0x240] sm:$0xff] %v279
      %713 = vst [vmem:[#allocation3 + $0x248] sm:$0xff] %v280
      %714 = vst [vmem:[#allocation3 + $0x250] sm:$0xff] %v281
      %715 = vst [vmem:[#allocation3 + $0x258] sm:$0xff] %v282
      %716 = vst [vmem:[#allocation3 + $0x260] sm:$0xff] %v283
      %717 = vst [vmem:[#allocation3 + $0x268] sm:$0xff] %v284
      %718 = vst [vmem:[#allocation3 + $0x270] sm:$0xff] %v285
      %719 = vst [vmem:[#allocation3 + $0x278] sm:$0xff] %v286
      %720 = vrot.lane.b32.xlu0 %v271, 127
      %v721 = vpop.permute.xlu0 %720
      %722 = vrot.lane.b32.xlu0 %v275, 127
      %v723 = vpop.permute.xlu0 %722
      %724 = vrot.lane.b32.xlu0 %v279, 127
      %v725 = vpop.permute.xlu0 %724
      %726 = vrot.lane.b32.xlu0 %v283, 127
      %v727 = vpop.permute.xlu0 %726
      %728 = vrot.lane.b32.xlu0 %v272, 127
      %v729 = vpop.permute.xlu0 %728
      %730 = vrot.lane.b32.xlu0 %v276, 127
      %v731 = vpop.permute.xlu0 %730
      %732 = vrot.lane.b32.xlu0 %v280, 127
      %v733 = vpop.permute.xlu0 %732
      %734 = vrot.lane.b32.xlu0 %v284, 127
      %v735 = vpop.permute.xlu0 %734
      %736 = vrot.lane.b32.xlu0 %v273, 127
      %v737 = vpop.permute.xlu0 %736
      %738 = vrot.lane.b32.xlu0 %v277, 127
      %v739 = vpop.permute.xlu0 %738
      %740 = vrot.lane.b32.xlu0 %v281, 127
      %v741 = vpop.permute.xlu0 %740
      %742 = vrot.lane.b32.xlu0 %v285, 127
      %v743 = vpop.permute.xlu0 %742
      %744 = vrot.lane.b32.xlu0 %v274, 127
      %v745 = vpop.permute.xlu0 %744
      %746 = vrot.lane.b32.xlu0 %v278, 127
      %v747 = vpop.permute.xlu0 %746
      %748 = vrot.lane.b32.xlu0 %v282, 127
      %v749 = vpop.permute.xlu0 %748
      %750 = vrot.lane.b32.xlu0 %v286, 127
      %v751 = vpop.permute.xlu0 %750
      %vm752 = vcmp.lt.s32.totalorder %v320, 127
      %v753 = vsel %vm752, %v737, %v745
      %v754 = vsel %vm752, %v739, %v747
      %v755 = vsel %vm752, %v741, %v749
      %v756 = vsel %vm752, %v743, %v751
      %v757 = vsel %vm752, %v729, %v737
      %v758 = vsel %vm752, %v731, %v739
      %v759 = vsel %vm752, %v733, %v741
      %v760 = vsel %vm752, %v735, %v743
      %v761 = vsel %vm752, %v721, %v729
      %v762 = vsel %vm752, %v723, %v731
      %v763 = vsel %vm752, %v725, %v733
      %v764 = vsel %vm752, %v727, %v735
      %v765 = vsel %vm752, %v745, %v721
      %v766 = vsel %vm752, %v747, %v723
      %v767 = vsel %vm752, %v749, %v725
      %v768 = vsel %vm752, %v751, %v727
      %s769 = scalar_lea.vmem %s4, 20
      %v770 = vld [vmem:[%s769] sm:$0xf]
      %v772 = vlaneseq
      %v773 = vshrl.u32 %v772, 7
      %v774 = vsub.s32 0, %v773
      %v775 = vrot.slane %v770, %v774
      %v776 = vlaneseq
      %v777 = vshrl.u32 %v776, 7
      %v778 = vsub.s32 1, %v777
      %v779 = vrot.slane %v770, %v778
      %v780 = vlaneseq
      %v781 = vshrl.u32 %v780, 7
      %v782 = vsub.s32 2, %v781
      %v783 = vrot.slane %v770, %v782
      %v784 = vlaneseq
      %v785 = vshrl.u32 %v784, 7
      %v786 = vsub.s32 3, %v785
      %v787 = vrot.slane %v770, %v786
      %v792 = vmul.f32 %v761, %v775
      %v793 = vmul.f32 %v757, %v779
      %v794 = vmul.f32 %v753, %v783
      %v795 = vmul.f32 %v765, %v787
      %v796 = vmul.f32 %v762, %v775
      %v797 = vmul.f32 %v758, %v779
      %v798 = vmul.f32 %v754, %v783
      %v799 = vmul.f32 %v766, %v787
      %v800 = vmul.f32 %v763, %v775
      %v801 = vmul.f32 %v759, %v779
      %v802 = vmul.f32 %v755, %v783
      %v803 = vmul.f32 %v767, %v787
      %v804 = vmul.f32 %v764, %v775
      %v805 = vmul.f32 %v760, %v779
      %v806 = vmul.f32 %v756, %v783
      %v807 = vmul.f32 %v768, %v787
      %808 = vst [vmem:[#allocation3 + $0x280] sm:$0xff] %v792
      %809 = vst [vmem:[#allocation3 + $0x288] sm:$0xff] %v793
      %810 = vst [vmem:[#allocation3 + $0x290] sm:$0xff] %v794
      %811 = vst [vmem:[#allocation3 + $0x298] sm:$0xff] %v795
      %812 = vst [vmem:[#allocation3 + $0x2a0] sm:$0xff] %v796
      %813 = vst [vmem:[#allocation3 + $0x2a8] sm:$0xff] %v797
      %814 = vst [vmem:[#allocation3 + $0x2b0] sm:$0xff] %v798
      %815 = vst [vmem:[#allocation3 + $0x2b8] sm:$0xff] %v799
      %816 = vst [vmem:[#allocation3 + $0x2c0] sm:$0xff] %v800
      %817 = vst [vmem:[#allocation3 + $0x2c8] sm:$0xff] %v801
      %818 = vst [vmem:[#allocation3 + $0x2d0] sm:$0xff] %v802
      %819 = vst [vmem:[#allocation3 + $0x2d8] sm:$0xff] %v803
      %820 = vst [vmem:[#allocation3 + $0x2e0] sm:$0xff] %v804
      %821 = vst [vmem:[#allocation3 + $0x2e8] sm:$0xff] %v805
      %822 = vst [vmem:[#allocation3 + $0x2f0] sm:$0xff] %v806
      %823 = vst [vmem:[#allocation3 + $0x2f8] sm:$0xff] %v807
      %824 = vrot.lane.b32.xlu0 %v271, 113
      %v825 = vpop.permute.xlu0 %824
      %826 = vrot.lane.b32.xlu0 %v275, 113
      %v827 = vpop.permute.xlu0 %826
      %828 = vrot.lane.b32.xlu0 %v279, 113
      %v829 = vpop.permute.xlu0 %828
      %830 = vrot.lane.b32.xlu0 %v283, 113
      %v831 = vpop.permute.xlu0 %830
      %832 = vrot.lane.b32.xlu0 %v272, 113
      %v833 = vpop.permute.xlu0 %832
      %834 = vrot.lane.b32.xlu0 %v276, 113
      %v835 = vpop.permute.xlu0 %834
      %836 = vrot.lane.b32.xlu0 %v280, 113
      %v837 = vpop.permute.xlu0 %836
      %838 = vrot.lane.b32.xlu0 %v284, 113
      %v839 = vpop.permute.xlu0 %838
      %840 = vrot.lane.b32.xlu0 %v273, 113
      %v841 = vpop.permute.xlu0 %840
      %842 = vrot.lane.b32.xlu0 %v277, 113
      %v843 = vpop.permute.xlu0 %842
      %844 = vrot.lane.b32.xlu0 %v281, 113
      %v845 = vpop.permute.xlu0 %844
      %846 = vrot.lane.b32.xlu0 %v285, 113
      %v847 = vpop.permute.xlu0 %846
      %848 = vrot.lane.b32.xlu0 %v274, 113
      %v849 = vpop.permute.xlu0 %848
      %850 = vrot.lane.b32.xlu0 %v278, 113
      %v851 = vpop.permute.xlu0 %850
      %852 = vrot.lane.b32.xlu0 %v282, 113
      %v853 = vpop.permute.xlu0 %852
      %854 = vrot.lane.b32.xlu0 %v286, 113
      %v855 = vpop.permute.xlu0 %854
      %vm856 = vcmp.lt.s32.totalorder %v320, 113
      %v857 = vsel %vm856, %v841, %v849
      %v858 = vsel %vm856, %v843, %v851
      %v859 = vsel %vm856, %v845, %v853
      %v860 = vsel %vm856, %v847, %v855
      %v861 = vsel %vm856, %v833, %v841
      %v862 = vsel %vm856, %v835, %v843
      %v863 = vsel %vm856, %v837, %v845
      %v864 = vsel %vm856, %v839, %v847
      %v865 = vsel %vm856, %v825, %v833
      %v866 = vsel %vm856, %v827, %v835
      %v867 = vsel %vm856, %v829, %v837
      %v868 = vsel %vm856, %v831, %v839
      %v869 = vsel %vm856, %v849, %v825
      %v870 = vsel %vm856, %v851, %v827
      %v871 = vsel %vm856, %v853, %v829
      %v872 = vsel %vm856, %v855, %v831
      %s873 = scalar_lea.vmem %s4, 24
      %v874 = vld [vmem:[%s873] sm:$0xf]
      %v876 = vlaneseq
      %v877 = vshrl.u32 %v876, 7
      %v878 = vsub.s32 0, %v877
      %v879 = vrot.slane %v874, %v878
      %v880 = vlaneseq
      %v881 = vshrl.u32 %v880, 7
      %v882 = vsub.s32 1, %v881
      %v883 = vrot.slane %v874, %v882
      %v884 = vlaneseq
      %v885 = vshrl.u32 %v884, 7
      %v886 = vsub.s32 2, %v885
      %v887 = vrot.slane %v874, %v886
      %v888 = vlaneseq
      %v889 = vshrl.u32 %v888, 7
      %v890 = vsub.s32 3, %v889
      %v891 = vrot.slane %v874, %v890
      %v896 = vmul.f32 %v865, %v879
      %v897 = vmul.f32 %v861, %v883
      %v898 = vmul.f32 %v857, %v887
      %v899 = vmul.f32 %v869, %v891
      %v900 = vmul.f32 %v866, %v879
      %v901 = vmul.f32 %v862, %v883
      %v902 = vmul.f32 %v858, %v887
      %v903 = vmul.f32 %v870, %v891
      %v904 = vmul.f32 %v867, %v879
      %v905 = vmul.f32 %v863, %v883
      %v906 = vmul.f32 %v859, %v887
      %v907 = vmul.f32 %v871, %v891
      %v908 = vmul.f32 %v868, %v879
      %v909 = vmul.f32 %v864, %v883
      %v910 = vmul.f32 %v860, %v887
      %v911 = vmul.f32 %v872, %v891
      %912 = vst [vmem:[#allocation3 + $0x300] sm:$0xff] %v896
      %913 = vst [vmem:[#allocation3 + $0x308] sm:$0xff] %v897
      %914 = vst [vmem:[#allocation3 + $0x310] sm:$0xff] %v898
      %915 = vst [vmem:[#allocation3 + $0x318] sm:$0xff] %v899
      %916 = vst [vmem:[#allocation3 + $0x320] sm:$0xff] %v900
      %917 = vst [vmem:[#allocation3 + $0x328] sm:$0xff] %v901
      %918 = vst [vmem:[#allocation3 + $0x330] sm:$0xff] %v902
      %919 = vst [vmem:[#allocation3 + $0x338] sm:$0xff] %v903
      %920 = vst [vmem:[#allocation3 + $0x340] sm:$0xff] %v904
      %921 = vst [vmem:[#allocation3 + $0x348] sm:$0xff] %v905
      %922 = vst [vmem:[#allocation3 + $0x350] sm:$0xff] %v906
      %923 = vst [vmem:[#allocation3 + $0x358] sm:$0xff] %v907
      %924 = vst [vmem:[#allocation3 + $0x360] sm:$0xff] %v908
      %925 = vst [vmem:[#allocation3 + $0x368] sm:$0xff] %v909
      %926 = vst [vmem:[#allocation3 + $0x370] sm:$0xff] %v910
      %927 = vst [vmem:[#allocation3 + $0x378] sm:$0xff] %v911
      %928 = vrot.lane.b32.xlu0 %v271, 112
      %v929 = vpop.permute.xlu0 %928
      %930 = vrot.lane.b32.xlu0 %v275, 112
      %v931 = vpop.permute.xlu0 %930
      %932 = vrot.lane.b32.xlu0 %v279, 112
      %v933 = vpop.permute.xlu0 %932
      %934 = vrot.lane.b32.xlu0 %v283, 112
      %v935 = vpop.permute.xlu0 %934
      %936 = vrot.lane.b32.xlu0 %v272, 112
      %v937 = vpop.permute.xlu0 %936
      %938 = vrot.lane.b32.xlu0 %v276, 112
      %v939 = vpop.permute.xlu0 %938
      %940 = vrot.lane.b32.xlu0 %v280, 112
      %v941 = vpop.permute.xlu0 %940
      %942 = vrot.lane.b32.xlu0 %v284, 112
      %v943 = vpop.permute.xlu0 %942
      %944 = vrot.lane.b32.xlu0 %v273, 112
      %v945 = vpop.permute.xlu0 %944
      %946 = vrot.lane.b32.xlu0 %v277, 112
      %v947 = vpop.permute.xlu0 %946
      %948 = vrot.lane.b32.xlu0 %v281, 112
      %v949 = vpop.permute.xlu0 %948
      %950 = vrot.lane.b32.xlu0 %v285, 112
      %v951 = vpop.permute.xlu0 %950
      %952 = vrot.lane.b32.xlu0 %v274, 112
      %v953 = vpop.permute.xlu0 %952
      %954 = vrot.lane.b32.xlu0 %v278, 112
      %v955 = vpop.permute.xlu0 %954
      %956 = vrot.lane.b32.xlu0 %v282, 112
      %v957 = vpop.permute.xlu0 %956
      %958 = vrot.lane.b32.xlu0 %v286, 112
      %v959 = vpop.permute.xlu0 %958
      %vm960 = vcmp.lt.s32.totalorder %v320, 112
      %v961 = vsel %vm960, %v945, %v953
      %v962 = vsel %vm960, %v947, %v955
      %v963 = vsel %vm960, %v949, %v957
      %v964 = vsel %vm960, %v951, %v959
      %v965 = vsel %vm960, %v937, %v945
      %v966 = vsel %vm960, %v939, %v947
      %v967 = vsel %vm960, %v941, %v949
      %v968 = vsel %vm960, %v943, %v951
      %v969 = vsel %vm960, %v929, %v937
      %v970 = vsel %vm960, %v931, %v939
      %v971 = vsel %vm960, %v933, %v941
      %v972 = vsel %vm960, %v935, %v943
      %v973 = vsel %vm960, %v953, %v929
      %v974 = vsel %vm960, %v955, %v931
      %v975 = vsel %vm960, %v957, %v933
      %v976 = vsel %vm960, %v959, %v935
      %s977 = scalar_lea.vmem %s4, 28
      %v978 = vld [vmem:[%s977] sm:$0xf]
      %v980 = vlaneseq
      %v981 = vshrl.u32 %v980, 7
      %v982 = vsub.s32 0, %v981
      %v983 = vrot.slane %v978, %v982
      %v984 = vlaneseq
      %v985 = vshrl.u32 %v984, 7
      %v986 = vsub.s32 1, %v985
      %v987 = vrot.slane %v978, %v986
      %v988 = vlaneseq
      %v989 = vshrl.u32 %v988, 7
      %v990 = vsub.s32 2, %v989
      %v991 = vrot.slane %v978, %v990
      %v992 = vlaneseq
      %v993 = vshrl.u32 %v992, 7
      %v994 = vsub.s32 3, %v993
      %v995 = vrot.slane %v978, %v994
      %v1000 = vmul.f32 %v969, %v983
      %v1001 = vmul.f32 %v965, %v987
      %v1002 = vmul.f32 %v961, %v991
      %v1003 = vmul.f32 %v973, %v995
      %v1004 = vmul.f32 %v970, %v983
      %v1005 = vmul.f32 %v966, %v987
      %v1006 = vmul.f32 %v962, %v991
      %v1007 = vmul.f32 %v974, %v995
      %v1008 = vmul.f32 %v971, %v983
      %v1009 = vmul.f32 %v967, %v987
      %v1010 = vmul.f32 %v963, %v991
      %v1011 = vmul.f32 %v975, %v995
      %v1012 = vmul.f32 %v972, %v983
      %v1013 = vmul.f32 %v968, %v987
      %v1014 = vmul.f32 %v964, %v991
      %v1015 = vmul.f32 %v976, %v995
      %1016 = vst [vmem:[#allocation3 + $0x380] sm:$0xff] %v1000
      %1017 = vst [vmem:[#allocation3 + $0x388] sm:$0xff] %v1001
      %1018 = vst [vmem:[#allocation3 + $0x390] sm:$0xff] %v1002
      %1019 = vst [vmem:[#allocation3 + $0x398] sm:$0xff] %v1003
      %1020 = vst [vmem:[#allocation3 + $0x3a0] sm:$0xff] %v1004
      %1021 = vst [vmem:[#allocation3 + $0x3a8] sm:$0xff] %v1005
      %1022 = vst [vmem:[#allocation3 + $0x3b0] sm:$0xff] %v1006
      %1023 = vst [vmem:[#allocation3 + $0x3b8] sm:$0xff] %v1007
      %1024 = vst [vmem:[#allocation3 + $0x3c0] sm:$0xff] %v1008
      %1025 = vst [vmem:[#allocation3 + $0x3c8] sm:$0xff] %v1009
      %1026 = vst [vmem:[#allocation3 + $0x3d0] sm:$0xff] %v1010
      %1027 = vst [vmem:[#allocation3 + $0x3d8] sm:$0xff] %v1011
      %1028 = vst [vmem:[#allocation3 + $0x3e0] sm:$0xff] %v1012
      %1029 = vst [vmem:[#allocation3 + $0x3e8] sm:$0xff] %v1013
      %1030 = vst [vmem:[#allocation3 + $0x3f0] sm:$0xff] %v1014
      %1031 = vst [vmem:[#allocation3 + $0x3f8] sm:$0xff] %v1015
      %1032 = vrot.lane.b32.xlu0 %v271, 111
      %v1033 = vpop.permute.xlu0 %1032
      %1034 = vrot.lane.b32.xlu0 %v275, 111
      %v1035 = vpop.permute.xlu0 %1034
      %1036 = vrot.lane.b32.xlu0 %v279, 111
      %v1037 = vpop.permute.xlu0 %1036
      %1038 = vrot.lane.b32.xlu0 %v283, 111
      %v1039 = vpop.permute.xlu0 %1038
      %1040 = vrot.lane.b32.xlu0 %v272, 111
      %v1041 = vpop.permute.xlu0 %1040
      %1042 = vrot.lane.b32.xlu0 %v276, 111
      %v1043 = vpop.permute.xlu0 %1042
      %1044 = vrot.lane.b32.xlu0 %v280, 111
      %v1045 = vpop.permute.xlu0 %1044
      %1046 = vrot.lane.b32.xlu0 %v284, 111
      %v1047 = vpop.permute.xlu0 %1046
      %1048 = vrot.lane.b32.xlu0 %v273, 111
      %v1049 = vpop.permute.xlu0 %1048
      %1050 = vrot.lane.b32.xlu0 %v277, 111
      %v1051 = vpop.permute.xlu0 %1050
      %1052 = vrot.lane.b32.xlu0 %v281, 111
      %v1053 = vpop.permute.xlu0 %1052
      %1054 = vrot.lane.b32.xlu0 %v285, 111
      %v1055 = vpop.permute.xlu0 %1054
      %1056 = vrot.lane.b32.xlu0 %v274, 111
      %v1057 = vpop.permute.xlu0 %1056
      %1058 = vrot.lane.b32.xlu0 %v278, 111
      %v1059 = vpop.permute.xlu0 %1058
      %1060 = vrot.lane.b32.xlu0 %v282, 111
      %v1061 = vpop.permute.xlu0 %1060
      %1062 = vrot.lane.b32.xlu0 %v286, 111
      %v1063 = vpop.permute.xlu0 %1062
      %vm1064 = vcmp.lt.s32.totalorder %v320, 111
      %v1065 = vsel %vm1064, %v1049, %v1057
      %v1066 = vsel %vm1064, %v1051, %v1059
      %v1067 = vsel %vm1064, %v1053, %v1061
      %v1068 = vsel %vm1064, %v1055, %v1063
      %v1069 = vsel %vm1064, %v1041, %v1049
      %v1070 = vsel %vm1064, %v1043, %v1051
      %v1071 = vsel %vm1064, %v1045, %v1053
      %v1072 = vsel %vm1064, %v1047, %v1055
      %v1073 = vsel %vm1064, %v1033, %v1041
      %v1074 = vsel %vm1064, %v1035, %v1043
      %v1075 = vsel %vm1064, %v1037, %v1045
      %v1076 = vsel %vm1064, %v1039, %v1047
      %v1077 = vsel %vm1064, %v1057, %v1033
      %v1078 = vsel %vm1064, %v1059, %v1035
      %v1079 = vsel %vm1064, %v1061, %v1037
      %v1080 = vsel %vm1064, %v1063, %v1039
      %s1081 = scalar_lea.vmem %s4, 32
      %v1082 = vld [vmem:[%s1081] sm:$0xf]
      %v1084 = vlaneseq
      %v1085 = vshrl.u32 %v1084, 7
      %v1086 = vsub.s32 0, %v1085
      %v1087 = vrot.slane %v1082, %v1086
      %v1088 = vlaneseq
      %v1089 = vshrl.u32 %v1088, 7
      %v1090 = vsub.s32 1, %v1089
      %v1091 = vrot.slane %v1082, %v1090
      %v1092 = vlaneseq
      %v1093 = vshrl.u32 %v1092, 7
      %v1094 = vsub.s32 2, %v1093
      %v1095 = vrot.slane %v1082, %v1094
      %v1096 = vlaneseq
      %v1097 = vshrl.u32 %v1096, 7
      %v1098 = vsub.s32 3, %v1097
      %v1099 = vrot.slane %v1082, %v1098
      %v1104 = vmul.f32 %v1073, %v1087
      %v1105 = vmul.f32 %v1069, %v1091
      %v1106 = vmul.f32 %v1065, %v1095
      %v1107 = vmul.f32 %v1077, %v1099
      %v1108 = vmul.f32 %v1074, %v1087
      %v1109 = vmul.f32 %v1070, %v1091
      %v1110 = vmul.f32 %v1066, %v1095
      %v1111 = vmul.f32 %v1078, %v1099
      %v1112 = vmul.f32 %v1075, %v1087
      %v1113 = vmul.f32 %v1071, %v1091
      %v1114 = vmul.f32 %v1067, %v1095
      %v1115 = vmul.f32 %v1079, %v1099
      %v1116 = vmul.f32 %v1076, %v1087
      %v1117 = vmul.f32 %v1072, %v1091
      %v1118 = vmul.f32 %v1068, %v1095
      %v1119 = vmul.f32 %v1080, %v1099
      %1120 = vst [vmem:[#allocation3 + $0x400] sm:$0xff] %v1104
      %1121 = vst [vmem:[#allocation3 + $0x408] sm:$0xff] %v1105
      %1122 = vst [vmem:[#allocation3 + $0x410] sm:$0xff] %v1106
      %1123 = vst [vmem:[#allocation3 + $0x418] sm:$0xff] %v1107
      %1124 = vst [vmem:[#allocation3 + $0x420] sm:$0xff] %v1108
      %1125 = vst [vmem:[#allocation3 + $0x428] sm:$0xff] %v1109
      %1126 = vst [vmem:[#allocation3 + $0x430] sm:$0xff] %v1110
      %1127 = vst [vmem:[#allocation3 + $0x438] sm:$0xff] %v1111
      %1128 = vst [vmem:[#allocation3 + $0x440] sm:$0xff] %v1112
      %1129 = vst [vmem:[#allocation3 + $0x448] sm:$0xff] %v1113
      %1130 = vst [vmem:[#allocation3 + $0x450] sm:$0xff] %v1114
      %1131 = vst [vmem:[#allocation3 + $0x458] sm:$0xff] %v1115
      %1132 = vst [vmem:[#allocation3 + $0x460] sm:$0xff] %v1116
      %1133 = vst [vmem:[#allocation3 + $0x468] sm:$0xff] %v1117
      %1134 = vst [vmem:[#allocation3 + $0x470] sm:$0xff] %v1118
      %1135 = vst [vmem:[#allocation3 + $0x478] sm:$0xff] %v1119
      %v1136 = vld [vmem:[%s2] sm:$0xff]
      %v1137 = vld [vmem:[%s2 + $0x8] sm:$0xff]
      %v1138 = vld [vmem:[%s2 + $0x10] sm:$0xff]
      %v1139 = vld [vmem:[%s2 + $0x18] sm:$0xff]
      %v1140 = vld [vmem:[%s2 + $0x20] sm:$0xff]
      %v1141 = vld [vmem:[%s2 + $0x28] sm:$0xff]
      %v1142 = vld [vmem:[%s2 + $0x30] sm:$0xff]
      %v1143 = vld [vmem:[%s2 + $0x38] sm:$0xff]
      %v1144 = vld [vmem:[%s2 + $0x40] sm:$0xff]
      %v1145 = vld [vmem:[%s2 + $0x48] sm:$0xff]
      %v1146 = vld [vmem:[%s2 + $0x50] sm:$0xff]
      %v1147 = vld [vmem:[%s2 + $0x58] sm:$0xff]
      %v1148 = vld [vmem:[#allocation3] sm:$0xff]
      %v1149 = vld [vmem:[#allocation3 + $0x8] sm:$0xff]
      %v1150 = vld [vmem:[#allocation3 + $0x10] sm:$0xff]
      %v1151 = vld [vmem:[#allocation3 + $0x18] sm:$0xff]
      %v1152 = vld [vmem:[#allocation3 + $0x20] sm:$0xff]
      %v1153 = vld [vmem:[#allocation3 + $0x28] sm:$0xff]
      %v1154 = vld [vmem:[#allocation3 + $0x30] sm:$0xff]
      %v1155 = vld [vmem:[#allocation3 + $0x38] sm:$0xff]
      %v1156 = vld [vmem:[#allocation3 + $0x40] sm:$0xff]
      %v1157 = vld [vmem:[#allocation3 + $0x48] sm:$0xff]
      %v1158 = vld [vmem:[#allocation3 + $0x50] sm:$0xff]
      %v1159 = vld [vmem:[#allocation3 + $0x58] sm:$0xff]
      %v1160 = vld [vmem:[#allocation3 + $0x60] sm:$0xff]
      %v1161 = vld [vmem:[#allocation3 + $0x68] sm:$0xff]
      %v1162 = vld [vmem:[#allocation3 + $0x70] sm:$0xff]
      %v1163 = vld [vmem:[#allocation3 + $0x78] sm:$0xff]
      %v1164 = vld [vmem:[#allocation3 + $0x80] sm:$0xff]
      %v1165 = vld [vmem:[#allocation3 + $0x88] sm:$0xff]
      %v1166 = vld [vmem:[#allocation3 + $0x90] sm:$0xff]
      %v1167 = vld [vmem:[#allocation3 + $0x98] sm:$0xff]
      %v1168 = vld [vmem:[#allocation3 + $0xa0] sm:$0xff]
      %v1169 = vld [vmem:[#allocation3 + $0xa8] sm:$0xff]
      %v1170 = vld [vmem:[#allocation3 + $0xb0] sm:$0xff]
      %v1171 = vld [vmem:[#allocation3 + $0xb8] sm:$0xff]
      %v1172 = vld [vmem:[#allocation3 + $0xc0] sm:$0xff]
      %v1173 = vld [vmem:[#allocation3 + $0xc8] sm:$0xff]
      %v1174 = vld [vmem:[#allocation3 + $0xd0] sm:$0xff]
      %v1175 = vld [vmem:[#allocation3 + $0xd8] sm:$0xff]
      %v1176 = vld [vmem:[#allocation3 + $0xe0] sm:$0xff]
      %v1177 = vld [vmem:[#allocation3 + $0xe8] sm:$0xff]
      %v1178 = vld [vmem:[#allocation3 + $0xf0] sm:$0xff]
      %v1179 = vld [vmem:[#allocation3 + $0xf8] sm:$0xff]
      %v1180 = vld [vmem:[#allocation3 + $0x100] sm:$0xff]
      %v1181 = vld [vmem:[#allocation3 + $0x108] sm:$0xff]
      %v1182 = vld [vmem:[#allocation3 + $0x110] sm:$0xff]
      %v1183 = vld [vmem:[#allocation3 + $0x118] sm:$0xff]
      %v1184 = vld [vmem:[#allocation3 + $0x120] sm:$0xff]
      %v1185 = vld [vmem:[#allocation3 + $0x128] sm:$0xff]
      %v1186 = vld [vmem:[#allocation3 + $0x130] sm:$0xff]
      %v1187 = vld [vmem:[#allocation3 + $0x138] sm:$0xff]
      %v1188 = vld [vmem:[#allocation3 + $0x140] sm:$0xff]
      %v1189 = vld [vmem:[#allocation3 + $0x148] sm:$0xff]
      %v1190 = vld [vmem:[#allocation3 + $0x150] sm:$0xff]
      %v1191 = vld [vmem:[#allocation3 + $0x158] sm:$0xff]
      %v1192 = vld [vmem:[#allocation3 + $0x160] sm:$0xff]
      %v1193 = vld [vmem:[#allocation3 + $0x168] sm:$0xff]
      %v1194 = vld [vmem:[#allocation3 + $0x170] sm:$0xff]
      %v1195 = vld [vmem:[#allocation3 + $0x178] sm:$0xff]
      %v1196 = vld [vmem:[#allocation3 + $0x180] sm:$0xff]
      %v1197 = vld [vmem:[#allocation3 + $0x188] sm:$0xff]
      %v1198 = vld [vmem:[#allocation3 + $0x190] sm:$0xff]
      %v1199 = vld [vmem:[#allocation3 + $0x198] sm:$0xff]
      %v1200 = vld [vmem:[#allocation3 + $0x1a0] sm:$0xff]
      %v1201 = vld [vmem:[#allocation3 + $0x1a8] sm:$0xff]
      %v1202 = vld [vmem:[#allocation3 + $0x1b0] sm:$0xff]
      %v1203 = vld [vmem:[#allocation3 + $0x1b8] sm:$0xff]
      %v1204 = vld [vmem:[#allocation3 + $0x1c0] sm:$0xff]
      %v1205 = vld [vmem:[#allocation3 + $0x1c8] sm:$0xff]
      %v1206 = vld [vmem:[#allocation3 + $0x1d0] sm:$0xff]
      %v1207 = vld [vmem:[#allocation3 + $0x1d8] sm:$0xff]
      %v1208 = vld [vmem:[#allocation3 + $0x1e0] sm:$0xff]
      %v1209 = vld [vmem:[#allocation3 + $0x1e8] sm:$0xff]
      %v1210 = vld [vmem:[#allocation3 + $0x1f0] sm:$0xff]
      %v1211 = vld [vmem:[#allocation3 + $0x1f8] sm:$0xff]
      %v1212 = vld [vmem:[#allocation3 + $0x200] sm:$0xff]
      %v1213 = vld [vmem:[#allocation3 + $0x208] sm:$0xff]
      %v1214 = vld [vmem:[#allocation3 + $0x210] sm:$0xff]
      %v1215 = vld [vmem:[#allocation3 + $0x218] sm:$0xff]
      %v1216 = vld [vmem:[#allocation3 + $0x220] sm:$0xff]
      %v1217 = vld [vmem:[#allocation3 + $0x228] sm:$0xff]
      %v1218 = vld [vmem:[#allocation3 + $0x230] sm:$0xff]
      %v1219 = vld [vmem:[#allocation3 + $0x238] sm:$0xff]
      %v1220 = vld [vmem:[#allocation3 + $0x240] sm:$0xff]
      %v1221 = vld [vmem:[#allocation3 + $0x248] sm:$0xff]
      %v1222 = vld [vmem:[#allocation3 + $0x250] sm:$0xff]
      %v1223 = vld [vmem:[#allocation3 + $0x258] sm:$0xff]
      %v1224 = vld [vmem:[#allocation3 + $0x260] sm:$0xff]
      %v1225 = vld [vmem:[#allocation3 + $0x268] sm:$0xff]
      %v1226 = vld [vmem:[#allocation3 + $0x270] sm:$0xff]
      %v1227 = vld [vmem:[#allocation3 + $0x278] sm:$0xff]
      %v1228 = vld [vmem:[#allocation3 + $0x280] sm:$0xff]
      %v1229 = vld [vmem:[#allocation3 + $0x288] sm:$0xff]
      %v1230 = vld [vmem:[#allocation3 + $0x290] sm:$0xff]
      %v1231 = vld [vmem:[#allocation3 + $0x298] sm:$0xff]
      %v1232 = vld [vmem:[#allocation3 + $0x2a0] sm:$0xff]
      %v1233 = vld [vmem:[#allocation3 + $0x2a8] sm:$0xff]
      %v1234 = vld [vmem:[#allocation3 + $0x2b0] sm:$0xff]
      %v1235 = vld [vmem:[#allocation3 + $0x2b8] sm:$0xff]
      %v1236 = vld [vmem:[#allocation3 + $0x2c0] sm:$0xff]
      %v1237 = vld [vmem:[#allocation3 + $0x2c8] sm:$0xff]
      %v1238 = vld [vmem:[#allocation3 + $0x2d0] sm:$0xff]
      %v1239 = vld [vmem:[#allocation3 + $0x2d8] sm:$0xff]
      %v1240 = vld [vmem:[#allocation3 + $0x2e0] sm:$0xff]
      %v1241 = vld [vmem:[#allocation3 + $0x2e8] sm:$0xff]
      %v1242 = vld [vmem:[#allocation3 + $0x2f0] sm:$0xff]
      %v1243 = vld [vmem:[#allocation3 + $0x2f8] sm:$0xff]
      %v1244 = vld [vmem:[#allocation3 + $0x300] sm:$0xff]
      %v1245 = vld [vmem:[#allocation3 + $0x308] sm:$0xff]
      %v1246 = vld [vmem:[#allocation3 + $0x310] sm:$0xff]
      %v1247 = vld [vmem:[#allocation3 + $0x318] sm:$0xff]
      %v1248 = vld [vmem:[#allocation3 + $0x320] sm:$0xff]
      %v1249 = vld [vmem:[#allocation3 + $0x328] sm:$0xff]
      %v1250 = vld [vmem:[#allocation3 + $0x330] sm:$0xff]
      %v1251 = vld [vmem:[#allocation3 + $0x338] sm:$0xff]
      %v1252 = vld [vmem:[#allocation3 + $0x340] sm:$0xff]
      %v1253 = vld [vmem:[#allocation3 + $0x348] sm:$0xff]
      %v1254 = vld [vmem:[#allocation3 + $0x350] sm:$0xff]
      %v1255 = vld [vmem:[#allocation3 + $0x358] sm:$0xff]
      %v1256 = vld [vmem:[#allocation3 + $0x360] sm:$0xff]
      %v1257 = vld [vmem:[#allocation3 + $0x368] sm:$0xff]
      %v1258 = vld [vmem:[#allocation3 + $0x370] sm:$0xff]
      %v1259 = vld [vmem:[#allocation3 + $0x378] sm:$0xff]
      %v1260 = vld [vmem:[#allocation3 + $0x380] sm:$0xff]
      %v1261 = vld [vmem:[#allocation3 + $0x388] sm:$0xff]
      %v1262 = vld [vmem:[#allocation3 + $0x390] sm:$0xff]
      %v1263 = vld [vmem:[#allocation3 + $0x398] sm:$0xff]
      %v1264 = vld [vmem:[#allocation3 + $0x3a0] sm:$0xff]
      %v1265 = vld [vmem:[#allocation3 + $0x3a8] sm:$0xff]
      %v1266 = vld [vmem:[#allocation3 + $0x3b0] sm:$0xff]
      %v1267 = vld [vmem:[#allocation3 + $0x3b8] sm:$0xff]
      %v1268 = vld [vmem:[#allocation3 + $0x3c0] sm:$0xff]
      %v1269 = vld [vmem:[#allocation3 + $0x3c8] sm:$0xff]
      %v1270 = vld [vmem:[#allocation3 + $0x3d0] sm:$0xff]
      %v1271 = vld [vmem:[#allocation3 + $0x3d8] sm:$0xff]
      %v1272 = vld [vmem:[#allocation3 + $0x3e0] sm:$0xff]
      %v1273 = vld [vmem:[#allocation3 + $0x3e8] sm:$0xff]
      %v1274 = vld [vmem:[#allocation3 + $0x3f0] sm:$0xff]
      %v1275 = vld [vmem:[#allocation3 + $0x3f8] sm:$0xff]
      %v1276 = vld [vmem:[#allocation3 + $0x400] sm:$0xff]
      %v1277 = vld [vmem:[#allocation3 + $0x408] sm:$0xff]
      %v1278 = vld [vmem:[#allocation3 + $0x410] sm:$0xff]
      %v1279 = vld [vmem:[#allocation3 + $0x418] sm:$0xff]
      %v1280 = vld [vmem:[#allocation3 + $0x420] sm:$0xff]
      %v1281 = vld [vmem:[#allocation3 + $0x428] sm:$0xff]
      %v1282 = vld [vmem:[#allocation3 + $0x430] sm:$0xff]
      %v1283 = vld [vmem:[#allocation3 + $0x438] sm:$0xff]
      %v1284 = vld [vmem:[#allocation3 + $0x440] sm:$0xff]
      %v1285 = vld [vmem:[#allocation3 + $0x448] sm:$0xff]
      %v1286 = vld [vmem:[#allocation3 + $0x450] sm:$0xff]
      %v1287 = vld [vmem:[#allocation3 + $0x458] sm:$0xff]
      %v1288 = vld [vmem:[#allocation3 + $0x460] sm:$0xff]
      %v1289 = vld [vmem:[#allocation3 + $0x468] sm:$0xff]
      %v1290 = vld [vmem:[#allocation3 + $0x470] sm:$0xff]
      %v1291 = vld [vmem:[#allocation3 + $0x478] sm:$0xff]
      %vm1292 = vcmask 261120
      %v1294 = vsel %vm1292, %v1138, 0
      %v1297 = vsel %vm1292, %v1141, 0
      %v1300 = vsel %vm1292, %v1144, 0
      %v1303 = vsel %vm1292, %v1147, 0
      %1305 = vmatprep.subr.mxu0 %v1149
      %1306 = vmatpush1.msra.mxu0 %v1148
      %1307 = vmatprep.subr.mxu0 %v1153
      %1308 = vmatpush1.msra.mxu0 %v1152
      %1309 = vmatprep.subr.mxu0 %v1157
      %1310 = vmatpush1.msra.mxu0 %v1156
      %1311 = vmatprep.subr.mxu0 %v1161
      %1312 = vmatpush1.msra.mxu0 %v1160
      %1313 = vmatprep.subr.mxu0 %v1165
      %1314 = vmatpush1.msra.mxu0 %v1164
      %1315 = vmatprep.subr.mxu0 %v1169
      %1316 = vmatpush1.msra.mxu0 %v1168
      %1317 = vmatprep.subr.mxu0 %v1173
      %1318 = vmatpush1.msra.mxu0 %v1172
      %1319 = vmatprep.subr.mxu0 %v1177
      %1320 = vmatpush1.msra.mxu0 %v1176
      %1321 = vmatprep.subr.mxu0 %v1181
      %1322 = vmatpush1.msra.mxu0 %v1180
      %1323 = vmatprep.subr.mxu0 %v1185
      %1324 = vmatpush1.msra.mxu0 %v1184
      %1325 = vmatprep.subr.mxu0 %v1189
      %1326 = vmatpush1.msra.mxu0 %v1188
      %1327 = vmatprep.subr.mxu0 %v1193
      %1328 = vmatpush1.msra.mxu0 %v1192
      %1329 = vmatprep.subr.mxu0 %v1197
      %1330 = vmatpush1.msra.mxu0 %v1196
      %1331 = vmatprep.subr.mxu0 %v1201
      %1332 = vmatpush1.msra.mxu0 %v1200
      %1333 = vmatprep.subr.mxu0 %v1205
      %1334 = vmatpush1.msra.mxu0 %v1204
      %1335 = vmatprep.subr.mxu0 %v1209
      %1336 = vmatpush1.msra.mxu0 %v1208
      %1337 = vmatprep.subr.mxu0 %v1213
      %1338 = vmatpush1.msra.mxu0 %v1212
      %1339 = vmatprep.subr.mxu0 %v1217
      %1340 = vmatpush1.msra.mxu0 %v1216
      %1341 = vmatprep.subr.mxu0 %v1221
      %1342 = vmatpush1.msra.mxu0 %v1220
      %1343 = vmatprep.subr.mxu0 %v1225
      %1344 = vmatpush1.msra.mxu0 %v1224
      %1345 = vmatprep.subr.mxu0 %v1229
      %1346 = vmatpush1.msra.mxu0 %v1228
      %1347 = vmatprep.subr.mxu0 %v1233
      %1348 = vmatpush1.msra.mxu0 %v1232
      %1349 = vmatprep.subr.mxu0 %v1237
      %1350 = vmatpush1.msra.mxu0 %v1236
      %1351 = vmatprep.subr.mxu0 %v1241
      %1352 = vmatpush1.msra.mxu0 %v1240
      %1353 = vmatprep.subr.mxu0 %v1245
      %1354 = vmatpush1.msra.mxu0 %v1244
      %1355 = vmatprep.subr.mxu0 %v1249
      %1356 = vmatpush1.msra.mxu0 %v1248
      %1357 = vmatprep.subr.mxu0 %v1253
      %1358 = vmatpush1.msra.mxu0 %v1252
      %1359 = vmatprep.subr.mxu0 %v1257
      %1360 = vmatpush1.msra.mxu0 %v1256
      %1361 = vmatprep.subr.mxu0 %v1261
      %1362 = vmatpush1.msra.mxu0 %v1260
      %1363 = vmatprep.subr.mxu0 %v1265
      %1364 = vmatpush1.msra.mxu0 %v1264
      %1365 = vmatprep.subr.mxu0 %v1269
      %1366 = vmatpush1.msra.mxu0 %v1268
      %1367 = vmatprep.subr.mxu0 %v1273
      %1368 = vmatpush1.msra.mxu0 %v1272
      %1369 = vmatprep.mubr.f32.mxu0 %v1137
      %1370 = vmatmul.mubr.f32.gmra.mrb[0].mxu0 %v1136
      %v1371 = vpop.f32.mrb[0].mxu0
      %v1372 = vadd.f32 0.0, %v1371
      %v1373 = vpop.f32.mrb[0].mxu0
      %v1374 = vadd.f32 0.0, %v1373
      %1375 = vmatprep.mubr.f32.mxu0 %v1140
      %1376 = vmatmul.mubr.f32.gmra.mrb[0].mxu0 %v1139
      %v1377 = vpop.f32.mrb[0].mxu0
      %v1378 = vadd.f32 0.0, %v1377
      %v1379 = vpop.f32.mrb[0].mxu0
      %v1380 = vadd.f32 0.0, %v1379
      %1381 = vmatprep.mubr.f32.mxu0 %v1143
      %1382 = vmatmul.mubr.f32.gmra.mrb[0].mxu0 %v1142
      %v1383 = vpop.f32.mrb[0].mxu0
      %v1384 = vadd.f32 0.0, %v1383
      %v1385 = vpop.f32.mrb[0].mxu0
      %v1386 = vadd.f32 0.0, %v1385
      %1387 = vmatprep.mubr.f32.mxu0 %v1146
      %1388 = vmatmul.mubr.f32.gmra.mrb[0].mxu0 %v1145
      %v1389 = vpop.f32.mrb[0].mxu0
      %v1390 = vadd.f32 0.0, %v1389
      %v1391 = vpop.f32.mrb[0].mxu0
      %v1392 = vadd.f32 0.0, %v1391
      %1393 = vdwg.mxu0
      %1394 = vmatprep.subr.mxu0 %v1277
      %1395 = vmatpush1.msra.mxu0 %v1276
      %1396 = vmatprep.subr.mxu0 %v1281
      %1397 = vmatpush1.msra.mxu0 %v1280
      %1398 = vmatprep.subr.mxu0 %v1285
      %1399 = vmatpush1.msra.mxu0 %v1284
      %1400 = vmatprep.subr.mxu0 %v1289
      %1401 = vmatpush1.msra.mxu0 %v1288
      %1402 = vmatprep.subr.mxu0 0.0
      %1403 = vmatpush1.msra.mxu0 0.0
      %1404 = vmatprep.subr.mxu0 0.0
      %1405 = vmatpush1.msra.mxu0 0.0
      %1406 = vmatprep.subr.mxu0 0.0
      %1407 = vmatpush1.msra.mxu0 0.0
      %1408 = vmatprep.subr.mxu0 0.0
      %1409 = vmatpush1.msra.mxu0 0.0
      %1410 = vmatprep.subr.mxu0 0.0
      %1411 = vmatpush1.msra.mxu0 0.0
      %1412 = vmatprep.subr.mxu0 0.0
      %1413 = vmatpush1.msra.mxu0 0.0
      %1414 = vmatprep.subr.mxu0 0.0
      %1415 = vmatpush1.msra.mxu0 0.0
      %1416 = vmatprep.subr.mxu0 0.0
      %1417 = vmatpush1.msra.mxu0 0.0
      %1418 = vmatprep.subr.mxu0 0.0
      %1419 = vmatpush1.msra.mxu0 0.0
      %1420 = vmatprep.subr.mxu0 0.0
      %1421 = vmatpush1.msra.mxu0 0.0
      %1422 = vmatprep.subr.mxu0 0.0
      %1423 = vmatpush1.msra.mxu0 0.0
      %1424 = vmatprep.subr.mxu0 0.0
      %1425 = vmatpush1.msra.mxu0 0.0
      %1426 = vmatprep.subr.mxu0 0.0
      %1427 = vmatpush1.msra.mxu0 0.0
      %1428 = vmatprep.subr.mxu0 0.0
      %1429 = vmatpush1.msra.mxu0 0.0
      %1430 = vmatprep.subr.mxu0 0.0
      %1431 = vmatpush1.msra.mxu0 0.0
      %1432 = vmatprep.subr.mxu0 0.0
      %1433 = vmatpush1.msra.mxu0 0.0
      %1434 = vmatprep.subr.mxu0 0.0
      %1435 = vmatpush1.msra.mxu0 0.0
      %1436 = vmatprep.subr.mxu0 0.0
      %1437 = vmatpush1.msra.mxu0 0.0
      %1438 = vmatprep.subr.mxu0 0.0
      %1439 = vmatpush1.msra.mxu0 0.0
      %1440 = vmatprep.subr.mxu0 0.0
      %1441 = vmatpush1.msra.mxu0 0.0
      %1442 = vmatprep.subr.mxu0 0.0
      %1443 = vmatpush1.msra.mxu0 0.0
      %1444 = vmatprep.subr.mxu0 0.0
      %1445 = vmatpush1.msra.mxu0 0.0
      %1446 = vmatprep.subr.mxu0 0.0
      %1447 = vmatpush1.msra.mxu0 0.0
      %1448 = vmatprep.subr.mxu0 0.0
      %1449 = vmatpush1.msra.mxu0 0.0
      %1450 = vmatprep.subr.mxu0 0.0
      %1451 = vmatpush1.msra.mxu0 0.0
      %1452 = vmatprep.subr.mxu0 0.0
      %1453 = vmatpush1.msra.mxu0 0.0
      %1454 = vmatprep.subr.mxu0 0.0
      %1455 = vmatpush1.msra.mxu0 0.0
      %1456 = vmatprep.subr.mxu0 0.0
      %1457 = vmatpush1.msra.mxu0 0.0
      %1458 = vmatprep.mubr.f32.mxu0 0.0
      %1459 = vmatmul.mubr.f32.gmra.mrb[0].mxu0 %v1294
      %v1460 = vpop.f32.mrb[0].mxu0
      %v1461 = vadd.f32 %v1372, %v1460
      %v1462 = vpop.f32.mrb[0].mxu0
      %v1463 = vadd.f32 %v1374, %v1462
      %1464 = vmatprep.mubr.f32.mxu0 0.0
      %1465 = vmatmul.mubr.f32.gmra.mrb[0].mxu0 %v1297
      %v1466 = vpop.f32.mrb[0].mxu0
      %v1467 = vadd.f32 %v1378, %v1466
      %v1468 = vpop.f32.mrb[0].mxu0
      %v1469 = vadd.f32 %v1380, %v1468
      %1470 = vmatprep.mubr.f32.mxu0 0.0
      %1471 = vmatmul.mubr.f32.gmra.mrb[0].mxu0 %v1300
      %v1472 = vpop.f32.mrb[0].mxu0
      %v1473 = vadd.f32 %v1384, %v1472
      %v1474 = vpop.f32.mrb[0].mxu0
      %v1475 = vadd.f32 %v1386, %v1474
      %1476 = vmatprep.mubr.f32.mxu0 0.0
      %1477 = vmatmul.mubr.f32.gmra.mrb[0].mxu0 %v1303
      %v1478 = vpop.f32.mrb[0].mxu0
      %v1479 = vadd.f32 %v1390, %v1478
      %v1480 = vpop.f32.mrb[0].mxu0
      %v1481 = vadd.f32 %v1392, %v1480
      %1482 = vdwg.mxu0
      %1483 = vmatprep.subr.mxu0 %v1151
      %1484 = vmatpush1.msra.mxu0 %v1150
      %1485 = vmatprep.subr.mxu0 %v1155
      %1486 = vmatpush1.msra.mxu0 %v1154
      %1487 = vmatprep.subr.mxu0 %v1159
      %1488 = vmatpush1.msra.mxu0 %v1158
      %1489 = vmatprep.subr.mxu0 %v1163
      %1490 = vmatpush1.msra.mxu0 %v1162
      %1491 = vmatprep.subr.mxu0 %v1167
      %1492 = vmatpush1.msra.mxu0 %v1166
      %1493 = vmatprep.subr.mxu0 %v1171
      %1494 = vmatpush1.msra.mxu0 %v1170
      %1495 = vmatprep.subr.mxu0 %v1175
      %1496 = vmatpush1.msra.mxu0 %v1174
      %1497 = vmatprep.subr.mxu0 %v1179
      %1498 = vmatpush1.msra.mxu0 %v1178
      %1499 = vmatprep.subr.mxu0 %v1183
      %1500 = vmatpush1.msra.mxu0 %v1182
      %1501 = vmatprep.subr.mxu0 %v1187
      %1502 = vmatpush1.msra.mxu0 %v1186
      %1503 = vmatprep.subr.mxu0 %v1191
      %1504 = vmatpush1.msra.mxu0 %v1190
      %1505 = vmatprep.subr.mxu0 %v1195
      %1506 = vmatpush1.msra.mxu0 %v1194
      %1507 = vmatprep.subr.mxu0 %v1199
      %1508 = vmatpush1.msra.mxu0 %v1198
      %1509 = vmatprep.subr.mxu0 %v1203
      %1510 = vmatpush1.msra.mxu0 %v1202
      %1511 = vmatprep.subr.mxu0 %v1207
      %1512 = vmatpush1.msra.mxu0 %v1206
      %1513 = vmatprep.subr.mxu0 %v1211
      %1514 = vmatpush1.msra.mxu0 %v1210
      %1515 = vmatprep.subr.mxu0 %v1215
      %1516 = vmatpush1.msra.mxu0 %v1214
      %1517 = vmatprep.subr.mxu0 %v1219
      %1518 = vmatpush1.msra.mxu0 %v1218
      %1519 = vmatprep.subr.mxu0 %v1223
      %1520 = vmatpush1.msra.mxu0 %v1222
      %1521 = vmatprep.subr.mxu0 %v1227
      %1522 = vmatpush1.msra.mxu0 %v1226
      %1523 = vmatprep.subr.mxu0 %v1231
      %1524 = vmatpush1.msra.mxu0 %v1230
      %1525 = vmatprep.subr.mxu0 %v1235
      %1526 = vmatpush1.msra.mxu0 %v1234
      %1527 = vmatprep.subr.mxu0 %v1239
      %1528 = vmatpush1.msra.mxu0 %v1238
      %1529 = vmatprep.subr.mxu0 %v1243
      %1530 = vmatpush1.msra.mxu0 %v1242
      %1531 = vmatprep.subr.mxu0 %v1247
      %1532 = vmatpush1.msra.mxu0 %v1246
      %1533 = vmatprep.subr.mxu0 %v1251
      %1534 = vmatpush1.msra.mxu0 %v1250
      %1535 = vmatprep.subr.mxu0 %v1255
      %1536 = vmatpush1.msra.mxu0 %v1254
      %1537 = vmatprep.subr.mxu0 %v1259
      %1538 = vmatpush1.msra.mxu0 %v1258
      %1539 = vmatprep.subr.mxu0 %v1263
      %1540 = vmatpush1.msra.mxu0 %v1262
      %1541 = vmatprep.subr.mxu0 %v1267
      %1542 = vmatpush1.msra.mxu0 %v1266
      %1543 = vmatprep.subr.mxu0 %v1271
      %1544 = vmatpush1.msra.mxu0 %v1270
      %1545 = vmatprep.subr.mxu0 %v1275
      %1546 = vmatpush1.msra.mxu0 %v1274
      %1547 = vmatprep.mubr.f32.mxu0 %v1137
      %1548 = vmatmul.mubr.f32.gmra.mrb[0].mxu0 %v1136
      %v1549 = vpop.f32.mrb[0].mxu0
      %v1550 = vadd.f32 0.0, %v1549
      %v1551 = vpop.f32.mrb[0].mxu0
      %v1552 = vadd.f32 0.0, %v1551
      %1553 = vmatprep.mubr.f32.mxu0 %v1140
      %1554 = vmatmul.mubr.f32.gmra.mrb[0].mxu0 %v1139
      %v1555 = vpop.f32.mrb[0].mxu0
      %v1556 = vadd.f32 0.0, %v1555
      %v1557 = vpop.f32.mrb[0].mxu0
      %v1558 = vadd.f32 0.0, %v1557
      %1559 = vmatprep.mubr.f32.mxu0 %v1143
      %1560 = vmatmul.mubr.f32.gmra.mrb[0].mxu0 %v1142
      %v1561 = vpop.f32.mrb[0].mxu0
      %v1562 = vadd.f32 0.0, %v1561
      %v1563 = vpop.f32.mrb[0].mxu0
      %v1564 = vadd.f32 0.0, %v1563
      %1565 = vmatprep.mubr.f32.mxu0 %v1146
      %1566 = vmatmul.mubr.f32.gmra.mrb[0].mxu0 %v1145
      %v1567 = vpop.f32.mrb[0].mxu0
      %v1568 = vadd.f32 0.0, %v1567
      %v1569 = vpop.f32.mrb[0].mxu0
      %v1570 = vadd.f32 0.0, %v1569
      %1571 = vdwg.mxu0
      %1572 = vmatprep.subr.mxu0 %v1279
      %1573 = vmatpush1.msra.mxu0 %v1278
      %1574 = vmatprep.subr.mxu0 %v1283
      %1575 = vmatpush1.msra.mxu0 %v1282
      %1576 = vmatprep.subr.mxu0 %v1287
      %1577 = vmatpush1.msra.mxu0 %v1286
      %1578 = vmatprep.subr.mxu0 %v1291
      %1579 = vmatpush1.msra.mxu0 %v1290
      %1580 = vmatprep.subr.mxu0 0.0
      %1581 = vmatpush1.msra.mxu0 0.0
      %1582 = vmatprep.subr.mxu0 0.0
      %1583 = vmatpush1.msra.mxu0 0.0
      %1584 = vmatprep.subr.mxu0 0.0
      %1585 = vmatpush1.msra.mxu0 0.0
      %1586 = vmatprep.subr.mxu0 0.0
      %1587 = vmatpush1.msra.mxu0 0.0
      %1588 = vmatprep.subr.mxu0 0.0
      %1589 = vmatpush1.msra.mxu0 0.0
      %1590 = vmatprep.subr.mxu0 0.0
      %1591 = vmatpush1.msra.mxu0 0.0
      %1592 = vmatprep.subr.mxu0 0.0
      %1593 = vmatpush1.msra.mxu0 0.0
      %1594 = vmatprep.subr.mxu0 0.0
      %1595 = vmatpush1.msra.mxu0 0.0
      %1596 = vmatprep.subr.mxu0 0.0
      %1597 = vmatpush1.msra.mxu0 0.0
      %1598 = vmatprep.subr.mxu0 0.0
      %1599 = vmatpush1.msra.mxu0 0.0
      %1600 = vmatprep.subr.mxu0 0.0
      %1601 = vmatpush1.msra.mxu0 0.0
      %1602 = vmatprep.subr.mxu0 0.0
      %1603 = vmatpush1.msra.mxu0 0.0
      %1604 = vmatprep.subr.mxu0 0.0
      %1605 = vmatpush1.msra.mxu0 0.0
      %1606 = vmatprep.subr.mxu0 0.0
      %1607 = vmatpush1.msra.mxu0 0.0
      %1608 = vmatprep.subr.mxu0 0.0
      %1609 = vmatpush1.msra.mxu0 0.0
      %1610 = vmatprep.subr.mxu0 0.0
      %1611 = vmatpush1.msra.mxu0 0.0
      %1612 = vmatprep.subr.mxu0 0.0
      %1613 = vmatpush1.msra.mxu0 0.0
      %1614 = vmatprep.subr.mxu0 0.0
      %1615 = vmatpush1.msra.mxu0 0.0
      %1616 = vmatprep.subr.mxu0 0.0
      %1617 = vmatpush1.msra.mxu0 0.0
      %1618 = vmatprep.subr.mxu0 0.0
      %1619 = vmatpush1.msra.mxu0 0.0
      %1620 = vmatprep.subr.mxu0 0.0
      %1621 = vmatpush1.msra.mxu0 0.0
      %1622 = vmatprep.subr.mxu0 0.0
      %1623 = vmatpush1.msra.mxu0 0.0
      %1624 = vmatprep.subr.mxu0 0.0
      %1625 = vmatpush1.msra.mxu0 0.0
      %1626 = vmatprep.subr.mxu0 0.0
      %1627 = vmatpush1.msra.mxu0 0.0
      %1628 = vmatprep.subr.mxu0 0.0
      %1629 = vmatpush1.msra.mxu0 0.0
      %1630 = vmatprep.subr.mxu0 0.0
      %1631 = vmatpush1.msra.mxu0 0.0
      %1632 = vmatprep.subr.mxu0 0.0
      %1633 = vmatpush1.msra.mxu0 0.0
      %1634 = vmatprep.subr.mxu0 0.0
      %1635 = vmatpush1.msra.mxu0 0.0
      %1636 = vmatprep.mubr.f32.mxu0 0.0
      %1637 = vmatmul.mubr.f32.gmra.mrb[0].mxu0 %v1294
      %v1638 = vpop.f32.mrb[0].mxu0
      %v1639 = vadd.f32 %v1550, %v1638
      %v1640 = vpop.f32.mrb[0].mxu0
      %v1641 = vadd.f32 %v1552, %v1640
      %1642 = vmatprep.mubr.f32.mxu0 0.0
      %1643 = vmatmul.mubr.f32.gmra.mrb[0].mxu0 %v1297
      %v1644 = vpop.f32.mrb[0].mxu0
      %v1645 = vadd.f32 %v1556, %v1644
      %v1646 = vpop.f32.mrb[0].mxu0
      %v1647 = vadd.f32 %v1558, %v1646
      %1648 = vmatprep.mubr.f32.mxu0 0.0
      %1649 = vmatmul.mubr.f32.gmra.mrb[0].mxu0 %v1300
      %v1650 = vpop.f32.mrb[0].mxu0
      %v1651 = vadd.f32 %v1562, %v1650
      %v1652 = vpop.f32.mrb[0].mxu0
      %v1653 = vadd.f32 %v1564, %v1652
      %1654 = vmatprep.mubr.f32.mxu0 0.0
      %1655 = vmatmul.mubr.f32.gmra.mrb[0].mxu0 %v1303
      %v1656 = vpop.f32.mrb[0].mxu0
      %v1657 = vadd.f32 %v1568, %v1656
      %v1658 = vpop.f32.mrb[0].mxu0
      %v1659 = vadd.f32 %v1570, %v1658
      %1660 = vdwg.mxu0
      %v1661 = vsub.f32 %v1461, %v1639
      %v1662 = vsub.f32 %v1463, %v1641
      %v1663 = vsub.f32 %v1467, %v1645
      %v1664 = vsub.f32 %v1469, %v1647
      %v1665 = vsub.f32 %v1473, %v1651
      %v1666 = vsub.f32 %v1475, %v1653
      %v1667 = vsub.f32 %v1479, %v1657
      %v1668 = vsub.f32 %v1481, %v1659
      %v1669 = vmul.f32 %v1661, %v1661
      %v1670 = vmul.f32 %v1662, %v1662
      %v1671 = vmul.f32 %v1663, %v1663
      %v1672 = vmul.f32 %v1664, %v1664
      %v1673 = vmul.f32 %v1665, %v1665
      %v1674 = vmul.f32 %v1666, %v1666
      %v1675 = vmul.f32 %v1667, %v1667
      %v1676 = vmul.f32 %v1668, %v1668
      %v1677 = vmul.f32 %v1669, 0.00024414063
      %v1678 = vmul.f32 %v1670, 0.00024414063
      %v1679 = vmul.f32 %v1671, 0.00024414063
      %v1680 = vmul.f32 %v1672, 0.00024414063
      %v1681 = vmul.f32 %v1673, 0.00024414063
      %v1682 = vmul.f32 %v1674, 0.00024414063
      %v1683 = vmul.f32 %v1675, 0.00024414063
      %v1684 = vmul.f32 %v1676, 0.00024414063
      %v1685 = vadd.f32 %v1677, 0.0
      %v1686 = vadd.f32 %v1678, 0.0
      %v1687 = vadd.f32 %v1679, 0.0
      %v1688 = vadd.f32 %v1680, 0.0
      %v1689 = vadd.f32 %v1681, 0.0
      %v1690 = vadd.f32 %v1682, 0.0
      %v1691 = vadd.f32 %v1683, 0.0
      %v1692 = vadd.f32 %v1684, 0.0
      %v1693 = vld [vmem:[%s3] sm:$0xff]
      %v1694 = vld [vmem:[%s3 + $0x8] sm:$0xff]
      %v1695 = vld [vmem:[%s3 + $0x10] sm:$0xff]
      %v1696 = vld [vmem:[%s3 + $0x18] sm:$0xff]
      %1698 = vset.pattern.permute.xlu0 0
      %1699 = vperm.xlu0 %1698, %v1693
      %v1700 = vpop.permute.xlu0 %1699
      %1703 = vset.pattern.permute.xlu0 0
      %1704 = vperm.xlu0 %1703, %v1694
      %v1705 = vpop.permute.xlu0 %1704
      %1708 = vset.pattern.permute.xlu0 0
      %1709 = vperm.xlu0 %1708, %v1695
      %v1710 = vpop.permute.xlu0 %1709
      %1713 = vset.pattern.permute.xlu0 0
      %1714 = vperm.xlu0 %1713, %v1696
      %v1715 = vpop.permute.xlu0 %1714
      %v1717 = vadd.f32 %v1461, %v1700
      %v1718 = vadd.f32 %v1463, %v1700
      %v1719 = vadd.f32 %v1639, %v1700
      %v1720 = vadd.f32 %v1641, %v1700
      %v1721 = vadd.f32 %v1467, %v1705
      %v1722 = vadd.f32 %v1469, %v1705
      %v1723 = vadd.f32 %v1645, %v1705
      %v1724 = vadd.f32 %v1647, %v1705
      %v1725 = vadd.f32 %v1473, %v1710
      %v1726 = vadd.f32 %v1475, %v1710
      %v1727 = vadd.f32 %v1651, %v1710
      %v1728 = vadd.f32 %v1653, %v1710
      %v1729 = vadd.f32 %v1479, %v1715
      %v1730 = vadd.f32 %v1481, %v1715
      %v1731 = vadd.f32 %v1657, %v1715
      %v1732 = vadd.f32 %v1659, %v1715
      %v1733 = vmax.f32 %v1717, 0.0
      %v1734 = vmax.f32 %v1718, 0.0
      %v1735 = vmax.f32 %v1719, 0.0
      %v1736 = vmax.f32 %v1720, 0.0
      %v1737 = vmax.f32 %v1721, 0.0
      %v1738 = vmax.f32 %v1722, 0.0
      %v1739 = vmax.f32 %v1723, 0.0
      %v1740 = vmax.f32 %v1724, 0.0
      %v1741 = vmax.f32 %v1725, 0.0
      %v1742 = vmax.f32 %v1726, 0.0
      %v1743 = vmax.f32 %v1727, 0.0
      %v1744 = vmax.f32 %v1728, 0.0
      %v1745 = vmax.f32 %v1729, 0.0
      %v1746 = vmax.f32 %v1730, 0.0
      %v1747 = vmax.f32 %v1731, 0.0
      %v1748 = vmax.f32 %v1732, 0.0
      %1749 = vst [vmem:[#allocation2] sm:$0xff] %v1733
      %1750 = vst [vmem:[#allocation2 + $0x8] sm:$0xff] %v1734
      %1751 = vst [vmem:[#allocation2 + $0x10] sm:$0xff] %v1735
      %1752 = vst [vmem:[#allocation2 + $0x18] sm:$0xff] %v1736
      %1753 = vst [vmem:[#allocation2 + $0x20] sm:$0xff] %v1737
      %1754 = vst [vmem:[#allocation2 + $0x28] sm:$0xff] %v1738
      %1755 = vst [vmem:[#allocation2 + $0x30] sm:$0xff] %v1739
      %1756 = vst [vmem:[#allocation2 + $0x38] sm:$0xff] %v1740
      %1757 = vst [vmem:[#allocation2 + $0x40] sm:$0xff] %v1741
      %1758 = vst [vmem:[#allocation2 + $0x48] sm:$0xff] %v1742
      %1759 = vst [vmem:[#allocation2 + $0x50] sm:$0xff] %v1743
      %1760 = vst [vmem:[#allocation2 + $0x58] sm:$0xff] %v1744
      %1761 = vst [vmem:[#allocation2 + $0x60] sm:$0xff] %v1745
      %1762 = vst [vmem:[#allocation2 + $0x68] sm:$0xff] %v1746
      %1763 = vst [vmem:[#allocation2 + $0x70] sm:$0xff] %v1747
      %1764 = vst [vmem:[#allocation2 + $0x78] sm:$0xff] %v1748
      %v1765 = vld [vmem:[#allocation2] sm:$0xff]
      %v1766 = vld [vmem:[#allocation2 + $0x8] sm:$0xff]
      %v1767 = vld [vmem:[#allocation2 + $0x10] sm:$0xff]
      %v1768 = vld [vmem:[#allocation2 + $0x18] sm:$0xff]
      %v1769 = vld [vmem:[#allocation2 + $0x20] sm:$0xff]
      %v1770 = vld [vmem:[#allocation2 + $0x28] sm:$0xff]
      %v1771 = vld [vmem:[#allocation2 + $0x30] sm:$0xff]
      %v1772 = vld [vmem:[#allocation2 + $0x38] sm:$0xff]
      %v1773 = vld [vmem:[#allocation2 + $0x40] sm:$0xff]
      %v1774 = vld [vmem:[#allocation2 + $0x48] sm:$0xff]
      %v1775 = vld [vmem:[#allocation2 + $0x50] sm:$0xff]
      %v1776 = vld [vmem:[#allocation2 + $0x58] sm:$0xff]
      %v1777 = vld [vmem:[#allocation2 + $0x60] sm:$0xff]
      %v1778 = vld [vmem:[#allocation2 + $0x68] sm:$0xff]
      %v1779 = vld [vmem:[#allocation2 + $0x70] sm:$0xff]
      %v1780 = vld [vmem:[#allocation2 + $0x78] sm:$0xff]
      %1781 = vrot.lane.b32.xlu0 %v1765, 17
      %v1782 = vpop.permute.xlu0 %1781
      %1783 = vrot.lane.b32.xlu0 %v1769, 17
      %v1784 = vpop.permute.xlu0 %1783
      %1785 = vrot.lane.b32.xlu0 %v1773, 17
      %v1786 = vpop.permute.xlu0 %1785
      %1787 = vrot.lane.b32.xlu0 %v1777, 17
      %v1788 = vpop.permute.xlu0 %1787
      %1789 = vrot.lane.b32.xlu0 %v1766, 17
      %v1790 = vpop.permute.xlu0 %1789
      %1791 = vrot.lane.b32.xlu0 %v1770, 17
      %v1792 = vpop.permute.xlu0 %1791
      %1793 = vrot.lane.b32.xlu0 %v1774, 17
      %v1794 = vpop.permute.xlu0 %1793
      %1795 = vrot.lane.b32.xlu0 %v1778, 17
      %v1796 = vpop.permute.xlu0 %1795
      %1797 = vrot.lane.b32.xlu0 %v1767, 17
      %v1798 = vpop.permute.xlu0 %1797
      %1799 = vrot.lane.b32.xlu0 %v1771, 17
      %v1800 = vpop.permute.xlu0 %1799
      %1801 = vrot.lane.b32.xlu0 %v1775, 17
      %v1802 = vpop.permute.xlu0 %1801
      %1803 = vrot.lane.b32.xlu0 %v1779, 17
      %v1804 = vpop.permute.xlu0 %1803
      %1805 = vrot.lane.b32.xlu0 %v1768, 17
      %v1806 = vpop.permute.xlu0 %1805
      %1807 = vrot.lane.b32.xlu0 %v1772, 17
      %v1808 = vpop.permute.xlu0 %1807
      %1809 = vrot.lane.b32.xlu0 %v1776, 17
      %v1810 = vpop.permute.xlu0 %1809
      %1811 = vrot.lane.b32.xlu0 %v1780, 17
      %v1812 = vpop.permute.xlu0 %1811
      %v1813 = vsel %vm321, %v1798, %v1806
      %v1814 = vsel %vm321, %v1800, %v1808
      %v1815 = vsel %vm321, %v1802, %v1810
      %v1816 = vsel %vm321, %v1804, %v1812
      %v1817 = vsel %vm321, %v1790, %v1798
      %v1818 = vsel %vm321, %v1792, %v1800
      %v1819 = vsel %vm321, %v1794, %v1802
      %v1820 = vsel %vm321, %v1796, %v1804
      %v1821 = vsel %vm321, %v1782, %v1790
      %v1822 = vsel %vm321, %v1784, %v1792
      %v1823 = vsel %vm321, %v1786, %v1794
      %v1824 = vsel %vm321, %v1788, %v1796
      %v1825 = vsel %vm321, %v1806, %v1782
      %v1826 = vsel %vm321, %v1808, %v1784
      %v1827 = vsel %vm321, %v1810, %v1786
      %v1828 = vsel %vm321, %v1812, %v1788
      %v1829 = vld [vmem:[%s4] sm:$0xf]
      %v1831 = vlaneseq
      %v1832 = vshrl.u32 %v1831, 7
      %v1833 = vsub.s32 0, %v1832
      %v1834 = vrot.slane %v1829, %v1833
      %v1835 = vlaneseq
      %v1836 = vshrl.u32 %v1835, 7
      %v1837 = vsub.s32 1, %v1836
      %v1838 = vrot.slane %v1829, %v1837
      %v1839 = vlaneseq
      %v1840 = vshrl.u32 %v1839, 7
      %v1841 = vsub.s32 2, %v1840
      %v1842 = vrot.slane %v1829, %v1841
      %v1843 = vlaneseq
      %v1844 = vshrl.u32 %v1843, 7
      %v1845 = vsub.s32 3, %v1844
      %v1846 = vrot.slane %v1829, %v1845
      %v1851 = vmul.f32 %v1825, %v1834
      %v1852 = vmul.f32 %v1821, %v1838
      %v1853 = vmul.f32 %v1817, %v1842
      %v1854 = vmul.f32 %v1813, %v1846
      %v1855 = vmul.f32 %v1826, %v1834
      %v1856 = vmul.f32 %v1822, %v1838
      %v1857 = vmul.f32 %v1818, %v1842
      %v1858 = vmul.f32 %v1814, %v1846
      %v1859 = vmul.f32 %v1827, %v1834
      %v1860 = vmul.f32 %v1823, %v1838
      %v1861 = vmul.f32 %v1819, %v1842
      %v1862 = vmul.f32 %v1815, %v1846
      %v1863 = vmul.f32 %v1828, %v1834
      %v1864 = vmul.f32 %v1824, %v1838
      %v1865 = vmul.f32 %v1820, %v1842
      %v1866 = vmul.f32 %v1816, %v1846
      %1867 = vst [vmem:[#allocation3] sm:$0xff] %v1851
      %1868 = vst [vmem:[#allocation3 + $0x8] sm:$0xff] %v1852
      %1869 = vst [vmem:[#allocation3 + $0x10] sm:$0xff] %v1853
      %1870 = vst [vmem:[#allocation3 + $0x18] sm:$0xff] %v1854
      %1871 = vst [vmem:[#allocation3 + $0x20] sm:$0xff] %v1855
      %1872 = vst [vmem:[#allocation3 + $0x28] sm:$0xff] %v1856
      %1873 = vst [vmem:[#allocation3 + $0x30] sm:$0xff] %v1857
      %1874 = vst [vmem:[#allocation3 + $0x38] sm:$0xff] %v1858
      %1875 = vst [vmem:[#allocation3 + $0x40] sm:$0xff] %v1859
      %1876 = vst [vmem:[#allocation3 + $0x48] sm:$0xff] %v1860
      %1877 = vst [vmem:[#allocation3 + $0x50] sm:$0xff] %v1861
      %1878 = vst [vmem:[#allocation3 + $0x58] sm:$0xff] %v1862
      %1879 = vst [vmem:[#allocation3 + $0x60] sm:$0xff] %v1863
      %1880 = vst [vmem:[#allocation3 + $0x68] sm:$0xff] %v1864
      %1881 = vst [vmem:[#allocation3 + $0x70] sm:$0xff] %v1865
      %1882 = vst [vmem:[#allocation3 + $0x78] sm:$0xff] %v1866
      %1883 = vrot.lane.b32.xlu0 %v1765, 16
      %v1884 = vpop.permute.xlu0 %1883
      %1885 = vrot.lane.b32.xlu0 %v1769, 16
      %v1886 = vpop.permute.xlu0 %1885
      %1887 = vrot.lane.b32.xlu0 %v1773, 16
      %v1888 = vpop.permute.xlu0 %1887
      %1889 = vrot.lane.b32.xlu0 %v1777, 16
      %v1890 = vpop.permute.xlu0 %1889
      %1891 = vrot.lane.b32.xlu0 %v1766, 16
      %v1892 = vpop.permute.xlu0 %1891
      %1893 = vrot.lane.b32.xlu0 %v1770, 16
      %v1894 = vpop.permute.xlu0 %1893
      %1895 = vrot.lane.b32.xlu0 %v1774, 16
      %v1896 = vpop.permute.xlu0 %1895
      %1897 = vrot.lane.b32.xlu0 %v1778, 16
      %v1898 = vpop.permute.xlu0 %1897
      %1899 = vrot.lane.b32.xlu0 %v1767, 16
      %v1900 = vpop.permute.xlu0 %1899
      %1901 = vrot.lane.b32.xlu0 %v1771, 16
      %v1902 = vpop.permute.xlu0 %1901
      %1903 = vrot.lane.b32.xlu0 %v1775, 16
      %v1904 = vpop.permute.xlu0 %1903
      %1905 = vrot.lane.b32.xlu0 %v1779, 16
      %v1906 = vpop.permute.xlu0 %1905
      %1907 = vrot.lane.b32.xlu0 %v1768, 16
      %v1908 = vpop.permute.xlu0 %1907
      %1909 = vrot.lane.b32.xlu0 %v1772, 16
      %v1910 = vpop.permute.xlu0 %1909
      %1911 = vrot.lane.b32.xlu0 %v1776, 16
      %v1912 = vpop.permute.xlu0 %1911
      %1913 = vrot.lane.b32.xlu0 %v1780, 16
      %v1914 = vpop.permute.xlu0 %1913
      %v1915 = vsel %vm424, %v1900, %v1908
      %v1916 = vsel %vm424, %v1902, %v1910
      %v1917 = vsel %vm424, %v1904, %v1912
      %v1918 = vsel %vm424, %v1906, %v1914
      %v1919 = vsel %vm424, %v1892, %v1900
      %v1920 = vsel %vm424, %v1894, %v1902
      %v1921 = vsel %vm424, %v1896, %v1904
      %v1922 = vsel %vm424, %v1898, %v1906
      %v1923 = vsel %vm424, %v1884, %v1892
      %v1924 = vsel %vm424, %v1886, %v1894
      %v1925 = vsel %vm424, %v1888, %v1896
      %v1926 = vsel %vm424, %v1890, %v1898
      %v1927 = vsel %vm424, %v1908, %v1884
      %v1928 = vsel %vm424, %v1910, %v1886
      %v1929 = vsel %vm424, %v1912, %v1888
      %v1930 = vsel %vm424, %v1914, %v1890
      %v1931 = vld [vmem:[%s441] sm:$0xf]
      %v1933 = vlaneseq
      %v1934 = vshrl.u32 %v1933, 7
      %v1935 = vsub.s32 0, %v1934
      %v1936 = vrot.slane %v1931, %v1935
      %v1937 = vlaneseq
      %v1938 = vshrl.u32 %v1937, 7
      %v1939 = vsub.s32 1, %v1938
      %v1940 = vrot.slane %v1931, %v1939
      %v1941 = vlaneseq
      %v1942 = vshrl.u32 %v1941, 7
      %v1943 = vsub.s32 2, %v1942
      %v1944 = vrot.slane %v1931, %v1943
      %v1945 = vlaneseq
      %v1946 = vshrl.u32 %v1945, 7
      %v1947 = vsub.s32 3, %v1946
      %v1948 = vrot.slane %v1931, %v1947
      %v1953 = vmul.f32 %v1927, %v1936
      %v1954 = vmul.f32 %v1923, %v1940
      %v1955 = vmul.f32 %v1919, %v1944
      %v1956 = vmul.f32 %v1915, %v1948
      %v1957 = vmul.f32 %v1928, %v1936
      %v1958 = vmul.f32 %v1924, %v1940
      %v1959 = vmul.f32 %v1920, %v1944
      %v1960 = vmul.f32 %v1916, %v1948
      %v1961 = vmul.f32 %v1929, %v1936
      %v1962 = vmul.f32 %v1925, %v1940
      %v1963 = vmul.f32 %v1921, %v1944
      %v1964 = vmul.f32 %v1917, %v1948
      %v1965 = vmul.f32 %v1930, %v1936
      %v1966 = vmul.f32 %v1926, %v1940
      %v1967 = vmul.f32 %v1922, %v1944
      %v1968 = vmul.f32 %v1918, %v1948
      %1969 = vst [vmem:[#allocation3 + $0x80] sm:$0xff] %v1953
      %1970 = vst [vmem:[#allocation3 + $0x88] sm:$0xff] %v1954
      %1971 = vst [vmem:[#allocation3 + $0x90] sm:$0xff] %v1955
      %1972 = vst [vmem:[#allocation3 + $0x98] sm:$0xff] %v1956
      %1973 = vst [vmem:[#allocation3 + $0xa0] sm:$0xff] %v1957
      %1974 = vst [vmem:[#allocation3 + $0xa8] sm:$0xff] %v1958
      %1975 = vst [vmem:[#allocation3 + $0xb0] sm:$0xff] %v1959
      %1976 = vst [vmem:[#allocation3 + $0xb8] sm:$0xff] %v1960
      %1977 = vst [vmem:[#allocation3 + $0xc0] sm:$0xff] %v1961
      %1978 = vst [vmem:[#allocation3 + $0xc8] sm:$0xff] %v1962
      %1979 = vst [vmem:[#allocation3 + $0xd0] sm:$0xff] %v1963
      %1980 = vst [vmem:[#allocation3 + $0xd8] sm:$0xff] %v1964
      %1981 = vst [vmem:[#allocation3 + $0xe0] sm:$0xff] %v1965
      %1982 = vst [vmem:[#allocation3 + $0xe8] sm:$0xff] %v1966
      %1983 = vst [vmem:[#allocation3 + $0xf0] sm:$0xff] %v1967
      %1984 = vst [vmem:[#allocation3 + $0xf8] sm:$0xff] %v1968
      %1985 = vrot.lane.b32.xlu0 %v1765, 15
      %v1986 = vpop.permute.xlu0 %1985
      %1987 = vrot.lane.b32.xlu0 %v1769, 15
      %v1988 = vpop.permute.xlu0 %1987
      %1989 = vrot.lane.b32.xlu0 %v1773, 15
      %v1990 = vpop.permute.xlu0 %1989
      %1991 = vrot.lane.b32.xlu0 %v1777, 15
      %v1992 = vpop.permute.xlu0 %1991
      %1993 = vrot.lane.b32.xlu0 %v1766, 15
      %v1994 = vpop.permute.xlu0 %1993
      %1995 = vrot.lane.b32.xlu0 %v1770, 15
      %v1996 = vpop.permute.xlu0 %1995
      %1997 = vrot.lane.b32.xlu0 %v1774, 15
      %v1998 = vpop.permute.xlu0 %1997
      %1999 = vrot.lane.b32.xlu0 %v1778, 15
      %v2000 = vpop.permute.xlu0 %1999
      %2001 = vrot.lane.b32.xlu0 %v1767, 15
      %v2002 = vpop.permute.xlu0 %2001
      %2003 = vrot.lane.b32.xlu0 %v1771, 15
      %v2004 = vpop.permute.xlu0 %2003
      %2005 = vrot.lane.b32.xlu0 %v1775, 15
      %v2006 = vpop.permute.xlu0 %2005
      %2007 = vrot.lane.b32.xlu0 %v1779, 15
      %v2008 = vpop.permute.xlu0 %2007
      %2009 = vrot.lane.b32.xlu0 %v1768, 15
      %v2010 = vpop.permute.xlu0 %2009
      %2011 = vrot.lane.b32.xlu0 %v1772, 15
      %v2012 = vpop.permute.xlu0 %2011
      %2013 = vrot.lane.b32.xlu0 %v1776, 15
      %v2014 = vpop.permute.xlu0 %2013
      %2015 = vrot.lane.b32.xlu0 %v1780, 15
      %v2016 = vpop.permute.xlu0 %2015
      %v2017 = vsel %vm528, %v2002, %v2010
      %v2018 = vsel %vm528, %v2004, %v2012
      %v2019 = vsel %vm528, %v2006, %v2014
      %v2020 = vsel %vm528, %v2008, %v2016
      %v2021 = vsel %vm528, %v1994, %v2002
      %v2022 = vsel %vm528, %v1996, %v2004
      %v2023 = vsel %vm528, %v1998, %v2006
      %v2024 = vsel %vm528, %v2000, %v2008
      %v2025 = vsel %vm528, %v1986, %v1994
      %v2026 = vsel %vm528, %v1988, %v1996
      %v2027 = vsel %vm528, %v1990, %v1998
      %v2028 = vsel %vm528, %v1992, %v2000
      %v2029 = vsel %vm528, %v2010, %v1986
      %v2030 = vsel %vm528, %v2012, %v1988
      %v2031 = vsel %vm528, %v2014, %v1990
      %v2032 = vsel %vm528, %v2016, %v1992
      %v2033 = vld [vmem:[%s545] sm:$0xf]
      %v2035 = vlaneseq
      %v2036 = vshrl.u32 %v2035, 7
      %v2037 = vsub.s32 0, %v2036
      %v2038 = vrot.slane %v2033, %v2037
      %v2039 = vlaneseq
      %v2040 = vshrl.u32 %v2039, 7
      %v2041 = vsub.s32 1, %v2040
      %v2042 = vrot.slane %v2033, %v2041
      %v2043 = vlaneseq
      %v2044 = vshrl.u32 %v2043, 7
      %v2045 = vsub.s32 2, %v2044
      %v2046 = vrot.slane %v2033, %v2045
      %v2047 = vlaneseq
      %v2048 = vshrl.u32 %v2047, 7
      %v2049 = vsub.s32 3, %v2048
      %v2050 = vrot.slane %v2033, %v2049
      %v2055 = vmul.f32 %v2029, %v2038
      %v2056 = vmul.f32 %v2025, %v2042
      %v2057 = vmul.f32 %v2021, %v2046
      %v2058 = vmul.f32 %v2017, %v2050
      %v2059 = vmul.f32 %v2030, %v2038
      %v2060 = vmul.f32 %v2026, %v2042
      %v2061 = vmul.f32 %v2022, %v2046
      %v2062 = vmul.f32 %v2018, %v2050
      %v2063 = vmul.f32 %v2031, %v2038
      %v2064 = vmul.f32 %v2027, %v2042
      %v2065 = vmul.f32 %v2023, %v2046
      %v2066 = vmul.f32 %v2019, %v2050
      %v2067 = vmul.f32 %v2032, %v2038
      %v2068 = vmul.f32 %v2028, %v2042
      %v2069 = vmul.f32 %v2024, %v2046
      %v2070 = vmul.f32 %v2020, %v2050
      %2071 = vst [vmem:[#allocation3 + $0x100] sm:$0xff] %v2055
      %2072 = vst [vmem:[#allocation3 + $0x108] sm:$0xff] %v2056
      %2073 = vst [vmem:[#allocation3 + $0x110] sm:$0xff] %v2057
      %2074 = vst [vmem:[#allocation3 + $0x118] sm:$0xff] %v2058
      %2075 = vst [vmem:[#allocation3 + $0x120] sm:$0xff] %v2059
      %2076 = vst [vmem:[#allocation3 + $0x128] sm:$0xff] %v2060
      %2077 = vst [vmem:[#allocation3 + $0x130] sm:$0xff] %v2061
      %2078 = vst [vmem:[#allocation3 + $0x138] sm:$0xff] %v2062
      %2079 = vst [vmem:[#allocation3 + $0x140] sm:$0xff] %v2063
      %2080 = vst [vmem:[#allocation3 + $0x148] sm:$0xff] %v2064
      %2081 = vst [vmem:[#allocation3 + $0x150] sm:$0xff] %v2065
      %2082 = vst [vmem:[#allocation3 + $0x158] sm:$0xff] %v2066
      %2083 = vst [vmem:[#allocation3 + $0x160] sm:$0xff] %v2067
      %2084 = vst [vmem:[#allocation3 + $0x168] sm:$0xff] %v2068
      %2085 = vst [vmem:[#allocation3 + $0x170] sm:$0xff] %v2069
      %2086 = vst [vmem:[#allocation3 + $0x178] sm:$0xff] %v2070
      %2087 = vrot.lane.b32.xlu0 %v1765, 1
      %v2088 = vpop.permute.xlu0 %2087
      %2089 = vrot.lane.b32.xlu0 %v1769, 1
      %v2090 = vpop.permute.xlu0 %2089
      %2091 = vrot.lane.b32.xlu0 %v1773, 1
      %v2092 = vpop.permute.xlu0 %2091
      %2093 = vrot.lane.b32.xlu0 %v1777, 1
      %v2094 = vpop.permute.xlu0 %2093
      %2095 = vrot.lane.b32.xlu0 %v1766, 1
      %v2096 = vpop.permute.xlu0 %2095
      %2097 = vrot.lane.b32.xlu0 %v1770, 1
      %v2098 = vpop.permute.xlu0 %2097
      %2099 = vrot.lane.b32.xlu0 %v1774, 1
      %v2100 = vpop.permute.xlu0 %2099
      %2101 = vrot.lane.b32.xlu0 %v1778, 1
      %v2102 = vpop.permute.xlu0 %2101
      %2103 = vrot.lane.b32.xlu0 %v1767, 1
      %v2104 = vpop.permute.xlu0 %2103
      %2105 = vrot.lane.b32.xlu0 %v1771, 1
      %v2106 = vpop.permute.xlu0 %2105
      %2107 = vrot.lane.b32.xlu0 %v1775, 1
      %v2108 = vpop.permute.xlu0 %2107
      %2109 = vrot.lane.b32.xlu0 %v1779, 1
      %v2110 = vpop.permute.xlu0 %2109
      %2111 = vrot.lane.b32.xlu0 %v1768, 1
      %v2112 = vpop.permute.xlu0 %2111
      %2113 = vrot.lane.b32.xlu0 %v1772, 1
      %v2114 = vpop.permute.xlu0 %2113
      %2115 = vrot.lane.b32.xlu0 %v1776, 1
      %v2116 = vpop.permute.xlu0 %2115
      %2117 = vrot.lane.b32.xlu0 %v1780, 1
      %v2118 = vpop.permute.xlu0 %2117
      %v2119 = vsel %vm632, %v2104, %v2112
      %v2120 = vsel %vm632, %v2106, %v2114
      %v2121 = vsel %vm632, %v2108, %v2116
      %v2122 = vsel %vm632, %v2110, %v2118
      %v2123 = vsel %vm632, %v2096, %v2104
      %v2124 = vsel %vm632, %v2098, %v2106
      %v2125 = vsel %vm632, %v2100, %v2108
      %v2126 = vsel %vm632, %v2102, %v2110
      %v2127 = vsel %vm632, %v2088, %v2096
      %v2128 = vsel %vm632, %v2090, %v2098
      %v2129 = vsel %vm632, %v2092, %v2100
      %v2130 = vsel %vm632, %v2094, %v2102
      %v2131 = vsel %vm632, %v2112, %v2088
      %v2132 = vsel %vm632, %v2114, %v2090
      %v2133 = vsel %vm632, %v2116, %v2092
      %v2134 = vsel %vm632, %v2118, %v2094
      %v2135 = vld [vmem:[%s649] sm:$0xf]
      %v2137 = vlaneseq
      %v2138 = vshrl.u32 %v2137, 7
      %v2139 = vsub.s32 0, %v2138
      %v2140 = vrot.slane %v2135, %v2139
      %v2141 = vlaneseq
      %v2142 = vshrl.u32 %v2141, 7
      %v2143 = vsub.s32 1, %v2142
      %v2144 = vrot.slane %v2135, %v2143
      %v2145 = vlaneseq
      %v2146 = vshrl.u32 %v2145, 7
      %v2147 = vsub.s32 2, %v2146
      %v2148 = vrot.slane %v2135, %v2147
      %v2149 = vlaneseq
      %v2150 = vshrl.u32 %v2149, 7
      %v2151 = vsub.s32 3, %v2150
      %v2152 = vrot.slane %v2135, %v2151
      %v2157 = vmul.f32 %v2131, %v2140
      %v2158 = vmul.f32 %v2127, %v2144
      %v2159 = vmul.f32 %v2123, %v2148
      %v2160 = vmul.f32 %v2119, %v2152
      %v2161 = vmul.f32 %v2132, %v2140
      %v2162 = vmul.f32 %v2128, %v2144
      %v2163 = vmul.f32 %v2124, %v2148
      %v2164 = vmul.f32 %v2120, %v2152
      %v2165 = vmul.f32 %v2133, %v2140
      %v2166 = vmul.f32 %v2129, %v2144
      %v2167 = vmul.f32 %v2125, %v2148
      %v2168 = vmul.f32 %v2121, %v2152
      %v2169 = vmul.f32 %v2134, %v2140
      %v2170 = vmul.f32 %v2130, %v2144
      %v2171 = vmul.f32 %v2126, %v2148
      %v2172 = vmul.f32 %v2122, %v2152
      %2173 = vst [vmem:[#allocation3 + $0x180] sm:$0xff] %v2157
      %2174 = vst [vmem:[#allocation3 + $0x188] sm:$0xff] %v2158
      %2175 = vst [vmem:[#allocation3 + $0x190] sm:$0xff] %v2159
      %2176 = vst [vmem:[#allocation3 + $0x198] sm:$0xff] %v2160
      %2177 = vst [vmem:[#allocation3 + $0x1a0] sm:$0xff] %v2161
      %2178 = vst [vmem:[#allocation3 + $0x1a8] sm:$0xff] %v2162
      %2179 = vst [vmem:[#allocation3 + $0x1b0] sm:$0xff] %v2163
      %2180 = vst [vmem:[#allocation3 + $0x1b8] sm:$0xff] %v2164
      %2181 = vst [vmem:[#allocation3 + $0x1c0] sm:$0xff] %v2165
      %2182 = vst [vmem:[#allocation3 + $0x1c8] sm:$0xff] %v2166
      %2183 = vst [vmem:[#allocation3 + $0x1d0] sm:$0xff] %v2167
      %2184 = vst [vmem:[#allocation3 + $0x1d8] sm:$0xff] %v2168
      %2185 = vst [vmem:[#allocation3 + $0x1e0] sm:$0xff] %v2169
      %2186 = vst [vmem:[#allocation3 + $0x1e8] sm:$0xff] %v2170
      %2187 = vst [vmem:[#allocation3 + $0x1f0] sm:$0xff] %v2171
      %2188 = vst [vmem:[#allocation3 + $0x1f8] sm:$0xff] %v2172
      %2189 = vst [vmem:[#allocation3 + $0x200] sm:$0xff] %v1765
      %2190 = vst [vmem:[#allocation3 + $0x208] sm:$0xff] %v1766
      %2191 = vst [vmem:[#allocation3 + $0x210] sm:$0xff] %v1767
      %2192 = vst [vmem:[#allocation3 + $0x218] sm:$0xff] %v1768
      %2193 = vst [vmem:[#allocation3 + $0x220] sm:$0xff] %v1769
      %2194 = vst [vmem:[#allocation3 + $0x228] sm:$0xff] %v1770
      %2195 = vst [vmem:[#allocation3 + $0x230] sm:$0xff] %v1771
      %2196 = vst [vmem:[#allocation3 + $0x238] sm:$0xff] %v1772
      %2197 = vst [vmem:[#allocation3 + $0x240] sm:$0xff] %v1773
      %2198 = vst [vmem:[#allocation3 + $0x248] sm:$0xff] %v1774
      %2199 = vst [vmem:[#allocation3 + $0x250] sm:$0xff] %v1775
      %2200 = vst [vmem:[#allocation3 + $0x258] sm:$0xff] %v1776
      %2201 = vst [vmem:[#allocation3 + $0x260] sm:$0xff] %v1777
      %2202 = vst [vmem:[#allocation3 + $0x268] sm:$0xff] %v1778
      %2203 = vst [vmem:[#allocation3 + $0x270] sm:$0xff] %v1779
      %2204 = vst [vmem:[#allocation3 + $0x278] sm:$0xff] %v1780
      %2205 = vrot.lane.b32.xlu0 %v1765, 127
      %v2206 = vpop.permute.xlu0 %2205
      %2207 = vrot.lane.b32.xlu0 %v1769, 127
      %v2208 = vpop.permute.xlu0 %2207
      %2209 = vrot.lane.b32.xlu0 %v1773, 127
      %v2210 = vpop.permute.xlu0 %2209
      %2211 = vrot.lane.b32.xlu0 %v1777, 127
      %v2212 = vpop.permute.xlu0 %2211
      %2213 = vrot.lane.b32.xlu0 %v1766, 127
      %v2214 = vpop.permute.xlu0 %2213
      %2215 = vrot.lane.b32.xlu0 %v1770, 127
      %v2216 = vpop.permute.xlu0 %2215
      %2217 = vrot.lane.b32.xlu0 %v1774, 127
      %v2218 = vpop.permute.xlu0 %2217
      %2219 = vrot.lane.b32.xlu0 %v1778, 127
      %v2220 = vpop.permute.xlu0 %2219
      %2221 = vrot.lane.b32.xlu0 %v1767, 127
      %v2222 = vpop.permute.xlu0 %2221
      %2223 = vrot.lane.b32.xlu0 %v1771, 127
      %v2224 = vpop.permute.xlu0 %2223
      %2225 = vrot.lane.b32.xlu0 %v1775, 127
      %v2226 = vpop.permute.xlu0 %2225
      %2227 = vrot.lane.b32.xlu0 %v1779, 127
      %v2228 = vpop.permute.xlu0 %2227
      %2229 = vrot.lane.b32.xlu0 %v1768, 127
      %v2230 = vpop.permute.xlu0 %2229
      %2231 = vrot.lane.b32.xlu0 %v1772, 127
      %v2232 = vpop.permute.xlu0 %2231
      %2233 = vrot.lane.b32.xlu0 %v1776, 127
      %v2234 = vpop.permute.xlu0 %2233
      %2235 = vrot.lane.b32.xlu0 %v1780, 127
      %v2236 = vpop.permute.xlu0 %2235
      %v2237 = vsel %vm752, %v2222, %v2230
      %v2238 = vsel %vm752, %v2224, %v2232
      %v2239 = vsel %vm752, %v2226, %v2234
      %v2240 = vsel %vm752, %v2228, %v2236
      %v2241 = vsel %vm752, %v2214, %v2222
      %v2242 = vsel %vm752, %v2216, %v2224
      %v2243 = vsel %vm752, %v2218, %v2226
      %v2244 = vsel %vm752, %v2220, %v2228
      %v2245 = vsel %vm752, %v2206, %v2214
      %v2246 = vsel %vm752, %v2208, %v2216
      %v2247 = vsel %vm752, %v2210, %v2218
      %v2248 = vsel %vm752, %v2212, %v2220
      %v2249 = vsel %vm752, %v2230, %v2206
      %v2250 = vsel %vm752, %v2232, %v2208
      %v2251 = vsel %vm752, %v2234, %v2210
      %v2252 = vsel %vm752, %v2236, %v2212
      %v2253 = vld [vmem:[%s769] sm:$0xf]
      %v2255 = vlaneseq
      %v2256 = vshrl.u32 %v2255, 7
      %v2257 = vsub.s32 0, %v2256
      %v2258 = vrot.slane %v2253, %v2257
      %v2259 = vlaneseq
      %v2260 = vshrl.u32 %v2259, 7
      %v2261 = vsub.s32 1, %v2260
      %v2262 = vrot.slane %v2253, %v2261
      %v2263 = vlaneseq
      %v2264 = vshrl.u32 %v2263, 7
      %v2265 = vsub.s32 2, %v2264
      %v2266 = vrot.slane %v2253, %v2265
      %v2267 = vlaneseq
      %v2268 = vshrl.u32 %v2267, 7
      %v2269 = vsub.s32 3, %v2268
      %v2270 = vrot.slane %v2253, %v2269
      %v2275 = vmul.f32 %v2245, %v2258
      %v2276 = vmul.f32 %v2241, %v2262
      %v2277 = vmul.f32 %v2237, %v2266
      %v2278 = vmul.f32 %v2249, %v2270
      %v2279 = vmul.f32 %v2246, %v2258
      %v2280 = vmul.f32 %v2242, %v2262
      %v2281 = vmul.f32 %v2238, %v2266
      %v2282 = vmul.f32 %v2250, %v2270
      %v2283 = vmul.f32 %v2247, %v2258
      %v2284 = vmul.f32 %v2243, %v2262
      %v2285 = vmul.f32 %v2239, %v2266
      %v2286 = vmul.f32 %v2251, %v2270
      %v2287 = vmul.f32 %v2248, %v2258
      %v2288 = vmul.f32 %v2244, %v2262
      %v2289 = vmul.f32 %v2240, %v2266
      %v2290 = vmul.f32 %v2252, %v2270
      %2291 = vst [vmem:[#allocation3 + $0x280] sm:$0xff] %v2275
      %2292 = vst [vmem:[#allocation3 + $0x288] sm:$0xff] %v2276
      %2293 = vst [vmem:[#allocation3 + $0x290] sm:$0xff] %v2277
      %2294 = vst [vmem:[#allocation3 + $0x298] sm:$0xff] %v2278
      %2295 = vst [vmem:[#allocation3 + $0x2a0] sm:$0xff] %v2279
      %2296 = vst [vmem:[#allocation3 + $0x2a8] sm:$0xff] %v2280
      %2297 = vst [vmem:[#allocation3 + $0x2b0] sm:$0xff] %v2281
      %2298 = vst [vmem:[#allocation3 + $0x2b8] sm:$0xff] %v2282
      %2299 = vst [vmem:[#allocation3 + $0x2c0] sm:$0xff] %v2283
      %2300 = vst [vmem:[#allocation3 + $0x2c8] sm:$0xff] %v2284
      %2301 = vst [vmem:[#allocation3 + $0x2d0] sm:$0xff] %v2285
      %2302 = vst [vmem:[#allocation3 + $0x2d8] sm:$0xff] %v2286
      %2303 = vst [vmem:[#allocation3 + $0x2e0] sm:$0xff] %v2287
      %2304 = vst [vmem:[#allocation3 + $0x2e8] sm:$0xff] %v2288
      %2305 = vst [vmem:[#allocation3 + $0x2f0] sm:$0xff] %v2289
      %2306 = vst [vmem:[#allocation3 + $0x2f8] sm:$0xff] %v2290
      %2307 = vrot.lane.b32.xlu0 %v1765, 113
      %v2308 = vpop.permute.xlu0 %2307
      %2309 = vrot.lane.b32.xlu0 %v1769, 113
      %v2310 = vpop.permute.xlu0 %2309
      %2311 = vrot.lane.b32.xlu0 %v1773, 113
      %v2312 = vpop.permute.xlu0 %2311
      %2313 = vrot.lane.b32.xlu0 %v1777, 113
      %v2314 = vpop.permute.xlu0 %2313
      %2315 = vrot.lane.b32.xlu0 %v1766, 113
      %v2316 = vpop.permute.xlu0 %2315
      %2317 = vrot.lane.b32.xlu0 %v1770, 113
      %v2318 = vpop.permute.xlu0 %2317
      %2319 = vrot.lane.b32.xlu0 %v1774, 113
      %v2320 = vpop.permute.xlu0 %2319
      %2321 = vrot.lane.b32.xlu0 %v1778, 113
      %v2322 = vpop.permute.xlu0 %2321
      %2323 = vrot.lane.b32.xlu0 %v1767, 113
      %v2324 = vpop.permute.xlu0 %2323
      %2325 = vrot.lane.b32.xlu0 %v1771, 113
      %v2326 = vpop.permute.xlu0 %2325
      %2327 = vrot.lane.b32.xlu0 %v1775, 113
      %v2328 = vpop.permute.xlu0 %2327
      %2329 = vrot.lane.b32.xlu0 %v1779, 113
      %v2330 = vpop.permute.xlu0 %2329
      %2331 = vrot.lane.b32.xlu0 %v1768, 113
      %v2332 = vpop.permute.xlu0 %2331
      %2333 = vrot.lane.b32.xlu0 %v1772, 113
      %v2334 = vpop.permute.xlu0 %2333
      %2335 = vrot.lane.b32.xlu0 %v1776, 113
      %v2336 = vpop.permute.xlu0 %2335
      %2337 = vrot.lane.b32.xlu0 %v1780, 113
      %v2338 = vpop.permute.xlu0 %2337
      %v2339 = vsel %vm856, %v2324, %v2332
      %v2340 = vsel %vm856, %v2326, %v2334
      %v2341 = vsel %vm856, %v2328, %v2336
      %v2342 = vsel %vm856, %v2330, %v2338
      %v2343 = vsel %vm856, %v2316, %v2324
      %v2344 = vsel %vm856, %v2318, %v2326
      %v2345 = vsel %vm856, %v2320, %v2328
      %v2346 = vsel %vm856, %v2322, %v2330
      %v2347 = vsel %vm856, %v2308, %v2316
      %v2348 = vsel %vm856, %v2310, %v2318
      %v2349 = vsel %vm856, %v2312, %v2320
      %v2350 = vsel %vm856, %v2314, %v2322
      %v2351 = vsel %vm856, %v2332, %v2308
      %v2352 = vsel %vm856, %v2334, %v2310
      %v2353 = vsel %vm856, %v2336, %v2312
      %v2354 = vsel %vm856, %v2338, %v2314
      %v2355 = vld [vmem:[%s873] sm:$0xf]
      %v2357 = vlaneseq
      %v2358 = vshrl.u32 %v2357, 7
      %v2359 = vsub.s32 0, %v2358
      %v2360 = vrot.slane %v2355, %v2359
      %v2361 = vlaneseq
      %v2362 = vshrl.u32 %v2361, 7
      %v2363 = vsub.s32 1, %v2362
      %v2364 = vrot.slane %v2355, %v2363
      %v2365 = vlaneseq
      %v2366 = vshrl.u32 %v2365, 7
      %v2367 = vsub.s32 2, %v2366
      %v2368 = vrot.slane %v2355, %v2367
      %v2369 = vlaneseq
      %v2370 = vshrl.u32 %v2369, 7
      %v2371 = vsub.s32 3, %v2370
      %v2372 = vrot.slane %v2355, %v2371
      %v2377 = vmul.f32 %v2347, %v2360
      %v2378 = vmul.f32 %v2343, %v2364
      %v2379 = vmul.f32 %v2339, %v2368
      %v2380 = vmul.f32 %v2351, %v2372
      %v2381 = vmul.f32 %v2348, %v2360
      %v2382 = vmul.f32 %v2344, %v2364
      %v2383 = vmul.f32 %v2340, %v2368
      %v2384 = vmul.f32 %v2352, %v2372
      %v2385 = vmul.f32 %v2349, %v2360
      %v2386 = vmul.f32 %v2345, %v2364
      %v2387 = vmul.f32 %v2341, %v2368
      %v2388 = vmul.f32 %v2353, %v2372
      %v2389 = vmul.f32 %v2350, %v2360
      %v2390 = vmul.f32 %v2346, %v2364
      %v2391 = vmul.f32 %v2342, %v2368
      %v2392 = vmul.f32 %v2354, %v2372
      %2393 = vst [vmem:[#allocation3 + $0x300] sm:$0xff] %v2377
      %2394 = vst [vmem:[#allocation3 + $0x308] sm:$0xff] %v2378
      %2395 = vst [vmem:[#allocation3 + $0x310] sm:$0xff] %v2379
      %2396 = vst [vmem:[#allocation3 + $0x318] sm:$0xff] %v2380
      %2397 = vst [vmem:[#allocation3 + $0x320] sm:$0xff] %v2381
      %2398 = vst [vmem:[#allocation3 + $0x328] sm:$0xff] %v2382
      %2399 = vst [vmem:[#allocation3 + $0x330] sm:$0xff] %v2383
      %2400 = vst [vmem:[#allocation3 + $0x338] sm:$0xff] %v2384
      %2401 = vst [vmem:[#allocation3 + $0x340] sm:$0xff] %v2385
      %2402 = vst [vmem:[#allocation3 + $0x348] sm:$0xff] %v2386
      %2403 = vst [vmem:[#allocation3 + $0x350] sm:$0xff] %v2387
      %2404 = vst [vmem:[#allocation3 + $0x358] sm:$0xff] %v2388
      %2405 = vst [vmem:[#allocation3 + $0x360] sm:$0xff] %v2389
      %2406 = vst [vmem:[#allocation3 + $0x368] sm:$0xff] %v2390
      %2407 = vst [vmem:[#allocation3 + $0x370] sm:$0xff] %v2391
      %2408 = vst [vmem:[#allocation3 + $0x378] sm:$0xff] %v2392
      %2409 = vrot.lane.b32.xlu0 %v1765, 112
      %v2410 = vpop.permute.xlu0 %2409
      %2411 = vrot.lane.b32.xlu0 %v1769, 112
      %v2412 = vpop.permute.xlu0 %2411
      %2413 = vrot.lane.b32.xlu0 %v1773, 112
      %v2414 = vpop.permute.xlu0 %2413
      %2415 = vrot.lane.b32.xlu0 %v1777, 112
      %v2416 = vpop.permute.xlu0 %2415
      %2417 = vrot.lane.b32.xlu0 %v1766, 112
      %v2418 = vpop.permute.xlu0 %2417
      %2419 = vrot.lane.b32.xlu0 %v1770, 112
      %v2420 = vpop.permute.xlu0 %2419
      %2421 = vrot.lane.b32.xlu0 %v1774, 112
      %v2422 = vpop.permute.xlu0 %2421
      %2423 = vrot.lane.b32.xlu0 %v1778, 112
      %v2424 = vpop.permute.xlu0 %2423
      %2425 = vrot.lane.b32.xlu0 %v1767, 112
      %v2426 = vpop.permute.xlu0 %2425
      %2427 = vrot.lane.b32.xlu0 %v1771, 112
      %v2428 = vpop.permute.xlu0 %2427
      %2429 = vrot.lane.b32.xlu0 %v1775, 112
      %v2430 = vpop.permute.xlu0 %2429
      %2431 = vrot.lane.b32.xlu0 %v1779, 112
      %v2432 = vpop.permute.xlu0 %2431
      %2433 = vrot.lane.b32.xlu0 %v1768, 112
      %v2434 = vpop.permute.xlu0 %2433
      %2435 = vrot.lane.b32.xlu0 %v1772, 112
      %v2436 = vpop.permute.xlu0 %2435
      %2437 = vrot.lane.b32.xlu0 %v1776, 112
      %v2438 = vpop.permute.xlu0 %2437
      %2439 = vrot.lane.b32.xlu0 %v1780, 112
      %v2440 = vpop.permute.xlu0 %2439
      %v2441 = vsel %vm960, %v2426, %v2434
      %v2442 = vsel %vm960, %v2428, %v2436
      %v2443 = vsel %vm960, %v2430, %v2438
      %v2444 = vsel %vm960, %v2432, %v2440
      %v2445 = vsel %vm960, %v2418, %v2426
      %v2446 = vsel %vm960, %v2420, %v2428
      %v2447 = vsel %vm960, %v2422, %v2430
      %v2448 = vsel %vm960, %v2424, %v2432
      %v2449 = vsel %vm960, %v2410, %v2418
      %v2450 = vsel %vm960, %v2412, %v2420
      %v2451 = vsel %vm960, %v2414, %v2422
      %v2452 = vsel %vm960, %v2416, %v2424
      %v2453 = vsel %vm960, %v2434, %v2410
      %v2454 = vsel %vm960, %v2436, %v2412
      %v2455 = vsel %vm960, %v2438, %v2414
      %v2456 = vsel %vm960, %v2440, %v2416
      %v2457 = vld [vmem:[%s977] sm:$0xf]
      %v2459 = vlaneseq
      %v2460 = vshrl.u32 %v2459, 7
      %v2461 = vsub.s32 0, %v2460
      %v2462 = vrot.slane %v2457, %v2461
      %v2463 = vlaneseq
      %v2464 = vshrl.u32 %v2463, 7
      %v2465 = vsub.s32 1, %v2464
      %v2466 = vrot.slane %v2457, %v2465
      %v2467 = vlaneseq
      %v2468 = vshrl.u32 %v2467, 7
      %v2469 = vsub.s32 2, %v2468
      %v2470 = vrot.slane %v2457, %v2469
      %v2471 = vlaneseq
      %v2472 = vshrl.u32 %v2471, 7
      %v2473 = vsub.s32 3, %v2472
      %v2474 = vrot.slane %v2457, %v2473
      %v2479 = vmul.f32 %v2449, %v2462
      %v2480 = vmul.f32 %v2445, %v2466
      %v2481 = vmul.f32 %v2441, %v2470
      %v2482 = vmul.f32 %v2453, %v2474
      %v2483 = vmul.f32 %v2450, %v2462
      %v2484 = vmul.f32 %v2446, %v2466
      %v2485 = vmul.f32 %v2442, %v2470
      %v2486 = vmul.f32 %v2454, %v2474
      %v2487 = vmul.f32 %v2451, %v2462
      %v2488 = vmul.f32 %v2447, %v2466
      %v2489 = vmul.f32 %v2443, %v2470
      %v2490 = vmul.f32 %v2455, %v2474
      %v2491 = vmul.f32 %v2452, %v2462
      %v2492 = vmul.f32 %v2448, %v2466
      %v2493 = vmul.f32 %v2444, %v2470
      %v2494 = vmul.f32 %v2456, %v2474
      %2495 = vst [vmem:[#allocation3 + $0x380] sm:$0xff] %v2479
      %2496 = vst [vmem:[#allocation3 + $0x388] sm:$0xff] %v2480
      %2497 = vst [vmem:[#allocation3 + $0x390] sm:$0xff] %v2481
      %2498 = vst [vmem:[#allocation3 + $0x398] sm:$0xff] %v2482
      %2499 = vst [vmem:[#allocation3 + $0x3a0] sm:$0xff] %v2483
      %2500 = vst [vmem:[#allocation3 + $0x3a8] sm:$0xff] %v2484
      %2501 = vst [vmem:[#allocation3 + $0x3b0] sm:$0xff] %v2485
      %2502 = vst [vmem:[#allocation3 + $0x3b8] sm:$0xff] %v2486
      %2503 = vst [vmem:[#allocation3 + $0x3c0] sm:$0xff] %v2487
      %2504 = vst [vmem:[#allocation3 + $0x3c8] sm:$0xff] %v2488
      %2505 = vst [vmem:[#allocation3 + $0x3d0] sm:$0xff] %v2489
      %2506 = vst [vmem:[#allocation3 + $0x3d8] sm:$0xff] %v2490
      %2507 = vst [vmem:[#allocation3 + $0x3e0] sm:$0xff] %v2491
      %2508 = vst [vmem:[#allocation3 + $0x3e8] sm:$0xff] %v2492
      %2509 = vst [vmem:[#allocation3 + $0x3f0] sm:$0xff] %v2493
      %2510 = vst [vmem:[#allocation3 + $0x3f8] sm:$0xff] %v2494
      %2511 = vrot.lane.b32.xlu0 %v1765, 111
      %v2512 = vpop.permute.xlu0 %2511
      %2513 = vrot.lane.b32.xlu0 %v1769, 111
      %v2514 = vpop.permute.xlu0 %2513
      %2515 = vrot.lane.b32.xlu0 %v1773, 111
      %v2516 = vpop.permute.xlu0 %2515
      %2517 = vrot.lane.b32.xlu0 %v1777, 111
      %v2518 = vpop.permute.xlu0 %2517
      %2519 = vrot.lane.b32.xlu0 %v1766, 111
      %v2520 = vpop.permute.xlu0 %2519
      %2521 = vrot.lane.b32.xlu0 %v1770, 111
      %v2522 = vpop.permute.xlu0 %2521
      %2523 = vrot.lane.b32.xlu0 %v1774, 111
      %v2524 = vpop.permute.xlu0 %2523
      %2525 = vrot.lane.b32.xlu0 %v1778, 111
      %v2526 = vpop.permute.xlu0 %2525
      %2527 = vrot.lane.b32.xlu0 %v1767, 111
      %v2528 = vpop.permute.xlu0 %2527
      %2529 = vrot.lane.b32.xlu0 %v1771, 111
      %v2530 = vpop.permute.xlu0 %2529
      %2531 = vrot.lane.b32.xlu0 %v1775, 111
      %v2532 = vpop.permute.xlu0 %2531
      %2533 = vrot.lane.b32.xlu0 %v1779, 111
      %v2534 = vpop.permute.xlu0 %2533
      %2535 = vrot.lane.b32.xlu0 %v1768, 111
      %v2536 = vpop.permute.xlu0 %2535
      %2537 = vrot.lane.b32.xlu0 %v1772, 111
      %v2538 = vpop.permute.xlu0 %2537
      %2539 = vrot.lane.b32.xlu0 %v1776, 111
      %v2540 = vpop.permute.xlu0 %2539
      %2541 = vrot.lane.b32.xlu0 %v1780, 111
      %v2542 = vpop.permute.xlu0 %2541
      %v2543 = vsel %vm1064, %v2528, %v2536
      %v2544 = vsel %vm1064, %v2530, %v2538
      %v2545 = vsel %vm1064, %v2532, %v2540
      %v2546 = vsel %vm1064, %v2534, %v2542
      %v2547 = vsel %vm1064, %v2520, %v2528
      %v2548 = vsel %vm1064, %v2522, %v2530
      %v2549 = vsel %vm1064, %v2524, %v2532
      %v2550 = vsel %vm1064, %v2526, %v2534
      %v2551 = vsel %vm1064, %v2512, %v2520
      %v2552 = vsel %vm1064, %v2514, %v2522
      %v2553 = vsel %vm1064, %v2516, %v2524
      %v2554 = vsel %vm1064, %v2518, %v2526
      %v2555 = vsel %vm1064, %v2536, %v2512
      %v2556 = vsel %vm1064, %v2538, %v2514
      %v2557 = vsel %vm1064, %v2540, %v2516
      %v2558 = vsel %vm1064, %v2542, %v2518
      %v2559 = vld [vmem:[%s1081] sm:$0xf]
      %v2561 = vlaneseq
      %v2562 = vshrl.u32 %v2561, 7
      %v2563 = vsub.s32 0, %v2562
      %v2564 = vrot.slane %v2559, %v2563
      %v2565 = vlaneseq
      %v2566 = vshrl.u32 %v2565, 7
      %v2567 = vsub.s32 1, %v2566
      %v2568 = vrot.slane %v2559, %v2567
      %v2569 = vlaneseq
      %v2570 = vshrl.u32 %v2569, 7
      %v2571 = vsub.s32 2, %v2570
      %v2572 = vrot.slane %v2559, %v2571
      %v2573 = vlaneseq
      %v2574 = vshrl.u32 %v2573, 7
      %v2575 = vsub.s32 3, %v2574
      %v2576 = vrot.slane %v2559, %v2575
      %v2581 = vmul.f32 %v2551, %v2564
      %v2582 = vmul.f32 %v2547, %v2568
      %v2583 = vmul.f32 %v2543, %v2572
      %v2584 = vmul.f32 %v2555, %v2576
      %v2585 = vmul.f32 %v2552, %v2564
      %v2586 = vmul.f32 %v2548, %v2568
      %v2587 = vmul.f32 %v2544, %v2572
      %v2588 = vmul.f32 %v2556, %v2576
      %v2589 = vmul.f32 %v2553, %v2564
      %v2590 = vmul.f32 %v2549, %v2568
      %v2591 = vmul.f32 %v2545, %v2572
      %v2592 = vmul.f32 %v2557, %v2576
      %v2593 = vmul.f32 %v2554, %v2564
      %v2594 = vmul.f32 %v2550, %v2568
      %v2595 = vmul.f32 %v2546, %v2572
      %v2596 = vmul.f32 %v2558, %v2576
      %2597 = vst [vmem:[#allocation3 + $0x400] sm:$0xff] %v2581
      %2598 = vst [vmem:[#allocation3 + $0x408] sm:$0xff] %v2582
      %2599 = vst [vmem:[#allocation3 + $0x410] sm:$0xff] %v2583
      %2600 = vst [vmem:[#allocation3 + $0x418] sm:$0xff] %v2584
      %2601 = vst [vmem:[#allocation3 + $0x420] sm:$0xff] %v2585
      %2602 = vst [vmem:[#allocation3 + $0x428] sm:$0xff] %v2586
      %2603 = vst [vmem:[#allocation3 + $0x430] sm:$0xff] %v2587
      %2604 = vst [vmem:[#allocation3 + $0x438] sm:$0xff] %v2588
      %2605 = vst [vmem:[#allocation3 + $0x440] sm:$0xff] %v2589
      %2606 = vst [vmem:[#allocation3 + $0x448] sm:$0xff] %v2590
      %2607 = vst [vmem:[#allocation3 + $0x450] sm:$0xff] %v2591
      %2608 = vst [vmem:[#allocation3 + $0x458] sm:$0xff] %v2592
      %2609 = vst [vmem:[#allocation3 + $0x460] sm:$0xff] %v2593
      %2610 = vst [vmem:[#allocation3 + $0x468] sm:$0xff] %v2594
      %2611 = vst [vmem:[#allocation3 + $0x470] sm:$0xff] %v2595
      %2612 = vst [vmem:[#allocation3 + $0x478] sm:$0xff] %v2596
      %s2613 = scalar_lea.vmem %s2, 96
      %v2614 = vld [vmem:[%s2613] sm:$0xff]
      %v2615 = vld [vmem:[%s2613 + $0x8] sm:$0xff]
      %v2616 = vld [vmem:[%s2613 + $0x10] sm:$0xff]
      %v2617 = vld [vmem:[%s2613 + $0x18] sm:$0xff]
      %v2618 = vld [vmem:[%s2613 + $0x20] sm:$0xff]
      %v2619 = vld [vmem:[%s2613 + $0x28] sm:$0xff]
      %v2620 = vld [vmem:[%s2613 + $0x30] sm:$0xff]
      %v2621 = vld [vmem:[%s2613 + $0x38] sm:$0xff]
      %v2622 = vld [vmem:[%s2613 + $0x40] sm:$0xff]
      %v2623 = vld [vmem:[%s2613 + $0x48] sm:$0xff]
      %v2624 = vld [vmem:[%s2613 + $0x50] sm:$0xff]
      %v2625 = vld [vmem:[%s2613 + $0x58] sm:$0xff]
      %v2626 = vld [vmem:[#allocation3] sm:$0xff]
      %v2627 = vld [vmem:[#allocation3 + $0x8] sm:$0xff]
      %v2628 = vld [vmem:[#allocation3 + $0x10] sm:$0xff]
      %v2629 = vld [vmem:[#allocation3 + $0x18] sm:$0xff]
      %v2630 = vld [vmem:[#allocation3 + $0x20] sm:$0xff]
      %v2631 = vld [vmem:[#allocation3 + $0x28] sm:$0xff]
      %v2632 = vld [vmem:[#allocation3 + $0x30] sm:$0xff]
      %v2633 = vld [vmem:[#allocation3 + $0x38] sm:$0xff]
      %v2634 = vld [vmem:[#allocation3 + $0x40] sm:$0xff]
      %v2635 = vld [vmem:[#allocation3 + $0x48] sm:$0xff]
      %v2636 = vld [vmem:[#allocation3 + $0x50] sm:$0xff]
      %v2637 = vld [vmem:[#allocation3 + $0x58] sm:$0xff]
      %v2638 = vld [vmem:[#allocation3 + $0x60] sm:$0xff]
      %v2639 = vld [vmem:[#allocation3 + $0x68] sm:$0xff]
      %v2640 = vld [vmem:[#allocation3 + $0x70] sm:$0xff]
      %v2641 = vld [vmem:[#allocation3 + $0x78] sm:$0xff]
      %v2642 = vld [vmem:[#allocation3 + $0x80] sm:$0xff]
      %v2643 = vld [vmem:[#allocation3 + $0x88] sm:$0xff]
      %v2644 = vld [vmem:[#allocation3 + $0x90] sm:$0xff]
      %v2645 = vld [vmem:[#allocation3 + $0x98] sm:$0xff]
      %v2646 = vld [vmem:[#allocation3 + $0xa0] sm:$0xff]
      %v2647 = vld [vmem:[#allocation3 + $0xa8] sm:$0xff]
      %v2648 = vld [vmem:[#allocation3 + $0xb0] sm:$0xff]
      %v2649 = vld [vmem:[#allocation3 + $0xb8] sm:$0xff]
      %v2650 = vld [vmem:[#allocation3 + $0xc0] sm:$0xff]
      %v2651 = vld [vmem:[#allocation3 + $0xc8] sm:$0xff]
      %v2652 = vld [vmem:[#allocation3 + $0xd0] sm:$0xff]
      %v2653 = vld [vmem:[#allocation3 + $0xd8] sm:$0xff]
      %v2654 = vld [vmem:[#allocation3 + $0xe0] sm:$0xff]
      %v2655 = vld [vmem:[#allocation3 + $0xe8] sm:$0xff]
      %v2656 = vld [vmem:[#allocation3 + $0xf0] sm:$0xff]
      %v2657 = vld [vmem:[#allocation3 + $0xf8] sm:$0xff]
      %v2658 = vld [vmem:[#allocation3 + $0x100] sm:$0xff]
      %v2659 = vld [vmem:[#allocation3 + $0x108] sm:$0xff]
      %v2660 = vld [vmem:[#allocation3 + $0x110] sm:$0xff]
      %v2661 = vld [vmem:[#allocation3 + $0x118] sm:$0xff]
      %v2662 = vld [vmem:[#allocation3 + $0x120] sm:$0xff]
      %v2663 = vld [vmem:[#allocation3 + $0x128] sm:$0xff]
      %v2664 = vld [vmem:[#allocation3 + $0x130] sm:$0xff]
      %v2665 = vld [vmem:[#allocation3 + $0x138] sm:$0xff]
      %v2666 = vld [vmem:[#allocation3 + $0x140] sm:$0xff]
      %v2667 = vld [vmem:[#allocation3 + $0x148] sm:$0xff]
      %v2668 = vld [vmem:[#allocation3 + $0x150] sm:$0xff]
      %v2669 = vld [vmem:[#allocation3 + $0x158] sm:$0xff]
      %v2670 = vld [vmem:[#allocation3 + $0x160] sm:$0xff]
      %v2671 = vld [vmem:[#allocation3 + $0x168] sm:$0xff]
      %v2672 = vld [vmem:[#allocation3 + $0x170] sm:$0xff]
      %v2673 = vld [vmem:[#allocation3 + $0x178] sm:$0xff]
      %v2674 = vld [vmem:[#allocation3 + $0x180] sm:$0xff]
      %v2675 = vld [vmem:[#allocation3 + $0x188] sm:$0xff]
      %v2676 = vld [vmem:[#allocation3 + $0x190] sm:$0xff]
      %v2677 = vld [vmem:[#allocation3 + $0x198] sm:$0xff]
      %v2678 = vld [vmem:[#allocation3 + $0x1a0] sm:$0xff]
      %v2679 = vld [vmem:[#allocation3 + $0x1a8] sm:$0xff]
      %v2680 = vld [vmem:[#allocation3 + $0x1b0] sm:$0xff]
      %v2681 = vld [vmem:[#allocation3 + $0x1b8] sm:$0xff]
      %v2682 = vld [vmem:[#allocation3 + $0x1c0] sm:$0xff]
      %v2683 = vld [vmem:[#allocation3 + $0x1c8] sm:$0xff]
      %v2684 = vld [vmem:[#allocation3 + $0x1d0] sm:$0xff]
      %v2685 = vld [vmem:[#allocation3 + $0x1d8] sm:$0xff]
      %v2686 = vld [vmem:[#allocation3 + $0x1e0] sm:$0xff]
      %v2687 = vld [vmem:[#allocation3 + $0x1e8] sm:$0xff]
      %v2688 = vld [vmem:[#allocation3 + $0x1f0] sm:$0xff]
      %v2689 = vld [vmem:[#allocation3 + $0x1f8] sm:$0xff]
      %v2690 = vld [vmem:[#allocation3 + $0x200] sm:$0xff]
      %v2691 = vld [vmem:[#allocation3 + $0x208] sm:$0xff]
      %v2692 = vld [vmem:[#allocation3 + $0x210] sm:$0xff]
      %v2693 = vld [vmem:[#allocation3 + $0x218] sm:$0xff]
      %v2694 = vld [vmem:[#allocation3 + $0x220] sm:$0xff]
      %v2695 = vld [vmem:[#allocation3 + $0x228] sm:$0xff]
      %v2696 = vld [vmem:[#allocation3 + $0x230] sm:$0xff]
      %v2697 = vld [vmem:[#allocation3 + $0x238] sm:$0xff]
      %v2698 = vld [vmem:[#allocation3 + $0x240] sm:$0xff]
      %v2699 = vld [vmem:[#allocation3 + $0x248] sm:$0xff]
      %v2700 = vld [vmem:[#allocation3 + $0x250] sm:$0xff]
      %v2701 = vld [vmem:[#allocation3 + $0x258] sm:$0xff]
      %v2702 = vld [vmem:[#allocation3 + $0x260] sm:$0xff]
      %v2703 = vld [vmem:[#allocation3 + $0x268] sm:$0xff]
      %v2704 = vld [vmem:[#allocation3 + $0x270] sm:$0xff]
      %v2705 = vld [vmem:[#allocation3 + $0x278] sm:$0xff]
      %v2706 = vld [vmem:[#allocation3 + $0x280] sm:$0xff]
      %v2707 = vld [vmem:[#allocation3 + $0x288] sm:$0xff]
      %v2708 = vld [vmem:[#allocation3 + $0x290] sm:$0xff]
      %v2709 = vld [vmem:[#allocation3 + $0x298] sm:$0xff]
      %v2710 = vld [vmem:[#allocation3 + $0x2a0] sm:$0xff]
      %v2711 = vld [vmem:[#allocation3 + $0x2a8] sm:$0xff]
      %v2712 = vld [vmem:[#allocation3 + $0x2b0] sm:$0xff]
      %v2713 = vld [vmem:[#allocation3 + $0x2b8] sm:$0xff]
      %v2714 = vld [vmem:[#allocation3 + $0x2c0] sm:$0xff]
      %v2715 = vld [vmem:[#allocation3 + $0x2c8] sm:$0xff]
      %v2716 = vld [vmem:[#allocation3 + $0x2d0] sm:$0xff]
      %v2717 = vld [vmem:[#allocation3 + $0x2d8] sm:$0xff]
      %v2718 = vld [vmem:[#allocation3 + $0x2e0] sm:$0xff]
      %v2719 = vld [vmem:[#allocation3 + $0x2e8] sm:$0xff]
      %v2720 = vld [vmem:[#allocation3 + $0x2f0] sm:$0xff]
      %v2721 = vld [vmem:[#allocation3 + $0x2f8] sm:$0xff]
      %v2722 = vld [vmem:[#allocation3 + $0x300] sm:$0xff]
      %v2723 = vld [vmem:[#allocation3 + $0x308] sm:$0xff]
      %v2724 = vld [vmem:[#allocation3 + $0x310] sm:$0xff]
      %v2725 = vld [vmem:[#allocation3 + $0x318] sm:$0xff]
      %v2726 = vld [vmem:[#allocation3 + $0x320] sm:$0xff]
      %v2727 = vld [vmem:[#allocation3 + $0x328] sm:$0xff]
      %v2728 = vld [vmem:[#allocation3 + $0x330] sm:$0xff]
      %v2729 = vld [vmem:[#allocation3 + $0x338] sm:$0xff]
      %v2730 = vld [vmem:[#allocation3 + $0x340] sm:$0xff]
      %v2731 = vld [vmem:[#allocation3 + $0x348] sm:$0xff]
      %v2732 = vld [vmem:[#allocation3 + $0x350] sm:$0xff]
      %v2733 = vld [vmem:[#allocation3 + $0x358] sm:$0xff]
      %v2734 = vld [vmem:[#allocation3 + $0x360] sm:$0xff]
      %v2735 = vld [vmem:[#allocation3 + $0x368] sm:$0xff]
      %v2736 = vld [vmem:[#allocation3 + $0x370] sm:$0xff]
      %v2737 = vld [vmem:[#allocation3 + $0x378] sm:$0xff]
      %v2738 = vld [vmem:[#allocation3 + $0x380] sm:$0xff]
      %v2739 = vld [vmem:[#allocation3 + $0x388] sm:$0xff]
      %v2740 = vld [vmem:[#allocation3 + $0x390] sm:$0xff]
      %v2741 = vld [vmem:[#allocation3 + $0x398] sm:$0xff]
      %v2742 = vld [vmem:[#allocation3 + $0x3a0] sm:$0xff]
      %v2743 = vld [vmem:[#allocation3 + $0x3a8] sm:$0xff]
      %v2744 = vld [vmem:[#allocation3 + $0x3b0] sm:$0xff]
      %v2745 = vld [vmem:[#allocation3 + $0x3b8] sm:$0xff]
      %v2746 = vld [vmem:[#allocation3 + $0x3c0] sm:$0xff]
      %v2747 = vld [vmem:[#allocation3 + $0x3c8] sm:$0xff]
      %v2748 = vld [vmem:[#allocation3 + $0x3d0] sm:$0xff]
      %v2749 = vld [vmem:[#allocation3 + $0x3d8] sm:$0xff]
      %v2750 = vld [vmem:[#allocation3 + $0x3e0] sm:$0xff]
      %v2751 = vld [vmem:[#allocation3 + $0x3e8] sm:$0xff]
      %v2752 = vld [vmem:[#allocation3 + $0x3f0] sm:$0xff]
      %v2753 = vld [vmem:[#allocation3 + $0x3f8] sm:$0xff]
      %v2754 = vld [vmem:[#allocation3 + $0x400] sm:$0xff]
      %v2755 = vld [vmem:[#allocation3 + $0x408] sm:$0xff]
      %v2756 = vld [vmem:[#allocation3 + $0x410] sm:$0xff]
      %v2757 = vld [vmem:[#allocation3 + $0x418] sm:$0xff]
      %v2758 = vld [vmem:[#allocation3 + $0x420] sm:$0xff]
      %v2759 = vld [vmem:[#allocation3 + $0x428] sm:$0xff]
      %v2760 = vld [vmem:[#allocation3 + $0x430] sm:$0xff]
      %v2761 = vld [vmem:[#allocation3 + $0x438] sm:$0xff]
      %v2762 = vld [vmem:[#allocation3 + $0x440] sm:$0xff]
      %v2763 = vld [vmem:[#allocation3 + $0x448] sm:$0xff]
      %v2764 = vld [vmem:[#allocation3 + $0x450] sm:$0xff]
      %v2765 = vld [vmem:[#allocation3 + $0x458] sm:$0xff]
      %v2766 = vld [vmem:[#allocation3 + $0x460] sm:$0xff]
      %v2767 = vld [vmem:[#allocation3 + $0x468] sm:$0xff]
      %v2768 = vld [vmem:[#allocation3 + $0x470] sm:$0xff]
      %v2769 = vld [vmem:[#allocation3 + $0x478] sm:$0xff]
      %v2771 = vsel %vm1292, %v2616, 0
      %v2774 = vsel %vm1292, %v2619, 0
      %v2777 = vsel %vm1292, %v2622, 0
      %v2780 = vsel %vm1292, %v2625, 0
      %2782 = vmatprep.subr.mxu0 %v2627
      %2783 = vmatpush1.msra.mxu0 %v2626
      %2784 = vmatprep.subr.mxu0 %v2631
      %2785 = vmatpush1.msra.mxu0 %v2630
      %2786 = vmatprep.subr.mxu0 %v2635
      %2787 = vmatpush1.msra.mxu0 %v2634
      %2788 = vmatprep.subr.mxu0 %v2639
      %2789 = vmatpush1.msra.mxu0 %v2638
      %2790 = vmatprep.subr.mxu0 %v2643
      %2791 = vmatpush1.msra.mxu0 %v2642
      %2792 = vmatprep.subr.mxu0 %v2647
      %2793 = vmatpush1.msra.mxu0 %v2646
      %2794 = vmatprep.subr.mxu0 %v2651
      %2795 = vmatpush1.msra.mxu0 %v2650
      %2796 = vmatprep.subr.mxu0 %v2655
      %2797 = vmatpush1.msra.mxu0 %v2654
      %2798 = vmatprep.subr.mxu0 %v2659
      %2799 = vmatpush1.msra.mxu0 %v2658
      %2800 = vmatprep.subr.mxu0 %v2663
      %2801 = vmatpush1.msra.mxu0 %v2662
      %2802 = vmatprep.subr.mxu0 %v2667
      %2803 = vmatpush1.msra.mxu0 %v2666
      %2804 = vmatprep.subr.mxu0 %v2671
      %2805 = vmatpush1.msra.mxu0 %v2670
      %2806 = vmatprep.subr.mxu0 %v2675
      %2807 = vmatpush1.msra.mxu0 %v2674
      %2808 = vmatprep.subr.mxu0 %v2679
      %2809 = vmatpush1.msra.mxu0 %v2678
      %2810 = vmatprep.subr.mxu0 %v2683
      %2811 = vmatpush1.msra.mxu0 %v2682
      %2812 = vmatprep.subr.mxu0 %v2687
      %2813 = vmatpush1.msra.mxu0 %v2686
      %2814 = vmatprep.subr.mxu0 %v2691
      %2815 = vmatpush1.msra.mxu0 %v2690
      %2816 = vmatprep.subr.mxu0 %v2695
      %2817 = vmatpush1.msra.mxu0 %v2694
      %2818 = vmatprep.subr.mxu0 %v2699
      %2819 = vmatpush1.msra.mxu0 %v2698
      %2820 = vmatprep.subr.mxu0 %v2703
      %2821 = vmatpush1.msra.mxu0 %v2702
      %2822 = vmatprep.subr.mxu0 %v2707
      %2823 = vmatpush1.msra.mxu0 %v2706
      %2824 = vmatprep.subr.mxu0 %v2711
      %2825 = vmatpush1.msra.mxu0 %v2710
      %2826 = vmatprep.subr.mxu0 %v2715
      %2827 = vmatpush1.msra.mxu0 %v2714
      %2828 = vmatprep.subr.mxu0 %v2719
      %2829 = vmatpush1.msra.mxu0 %v2718
      %2830 = vmatprep.subr.mxu0 %v2723
      %2831 = vmatpush1.msra.mxu0 %v2722
      %2832 = vmatprep.subr.mxu0 %v2727
      %2833 = vmatpush1.msra.mxu0 %v2726
      %2834 = vmatprep.subr.mxu0 %v2731
      %2835 = vmatpush1.msra.mxu0 %v2730
      %2836 = vmatprep.subr.mxu0 %v2735
      %2837 = vmatpush1.msra.mxu0 %v2734
      %2838 = vmatprep.subr.mxu0 %v2739
      %2839 = vmatpush1.msra.mxu0 %v2738
      %2840 = vmatprep.subr.mxu0 %v2743
      %2841 = vmatpush1.msra.mxu0 %v2742
      %2842 = vmatprep.subr.mxu0 %v2747
      %2843 = vmatpush1.msra.mxu0 %v2746
      %2844 = vmatprep.subr.mxu0 %v2751
      %2845 = vmatpush1.msra.mxu0 %v2750
      %2846 = vmatprep.mubr.f32.mxu0 %v2615
      %2847 = vmatmul.mubr.f32.gmra.mrb[0].mxu0 %v2614
      %v2848 = vpop.f32.mrb[0].mxu0
      %v2849 = vadd.f32 0.0, %v2848
      %v2850 = vpop.f32.mrb[0].mxu0
      %v2851 = vadd.f32 0.0, %v2850
      %2852 = vmatprep.mubr.f32.mxu0 %v2618
      %2853 = vmatmul.mubr.f32.gmra.mrb[0].mxu0 %v2617
      %v2854 = vpop.f32.mrb[0].mxu0
      %v2855 = vadd.f32 0.0, %v2854
      %v2856 = vpop.f32.mrb[0].mxu0
      %v2857 = vadd.f32 0.0, %v2856
      %2858 = vmatprep.mubr.f32.mxu0 %v2621
      %2859 = vmatmul.mubr.f32.gmra.mrb[0].mxu0 %v2620
      %v2860 = vpop.f32.mrb[0].mxu0
      %v2861 = vadd.f32 0.0, %v2860
      %v2862 = vpop.f32.mrb[0].mxu0
      %v2863 = vadd.f32 0.0, %v2862
      %2864 = vmatprep.mubr.f32.mxu0 %v2624
      %2865 = vmatmul.mubr.f32.gmra.mrb[0].mxu0 %v2623
      %v2866 = vpop.f32.mrb[0].mxu0
      %v2867 = vadd.f32 0.0, %v2866
      %v2868 = vpop.f32.mrb[0].mxu0
      %v2869 = vadd.f32 0.0, %v2868
      %2870 = vdwg.mxu0
      %2871 = vmatprep.subr.mxu0 %v2755
      %2872 = vmatpush1.msra.mxu0 %v2754
      %2873 = vmatprep.subr.mxu0 %v2759
      %2874 = vmatpush1.msra.mxu0 %v2758
      %2875 = vmatprep.subr.mxu0 %v2763
      %2876 = vmatpush1.msra.mxu0 %v2762
      %2877 = vmatprep.subr.mxu0 %v2767
      %2878 = vmatpush1.msra.mxu0 %v2766
      %2879 = vmatprep.subr.mxu0 0.0
      %2880 = vmatpush1.msra.mxu0 0.0
      %2881 = vmatprep.subr.mxu0 0.0
      %2882 = vmatpush1.msra.mxu0 0.0
      %2883 = vmatprep.subr.mxu0 0.0
      %2884 = vmatpush1.msra.mxu0 0.0
      %2885 = vmatprep.subr.mxu0 0.0
      %2886 = vmatpush1.msra.mxu0 0.0
      %2887 = vmatprep.subr.mxu0 0.0
      %2888 = vmatpush1.msra.mxu0 0.0
      %2889 = vmatprep.subr.mxu0 0.0
      %2890 = vmatpush1.msra.mxu0 0.0
      %2891 = vmatprep.subr.mxu0 0.0
      %2892 = vmatpush1.msra.mxu0 0.0
      %2893 = vmatprep.subr.mxu0 0.0
      %2894 = vmatpush1.msra.mxu0 0.0
      %2895 = vmatprep.subr.mxu0 0.0
      %2896 = vmatpush1.msra.mxu0 0.0
      %2897 = vmatprep.subr.mxu0 0.0
      %2898 = vmatpush1.msra.mxu0 0.0
      %2899 = vmatprep.subr.mxu0 0.0
      %2900 = vmatpush1.msra.mxu0 0.0
      %2901 = vmatprep.subr.mxu0 0.0
      %2902 = vmatpush1.msra.mxu0 0.0
      %2903 = vmatprep.subr.mxu0 0.0
      %2904 = vmatpush1.msra.mxu0 0.0
      %2905 = vmatprep.subr.mxu0 0.0
      %2906 = vmatpush1.msra.mxu0 0.0
      %2907 = vmatprep.subr.mxu0 0.0
      %2908 = vmatpush1.msra.mxu0 0.0
      %2909 = vmatprep.subr.mxu0 0.0
      %2910 = vmatpush1.msra.mxu0 0.0
      %2911 = vmatprep.subr.mxu0 0.0
      %2912 = vmatpush1.msra.mxu0 0.0
      %2913 = vmatprep.subr.mxu0 0.0
      %2914 = vmatpush1.msra.mxu0 0.0
      %2915 = vmatprep.subr.mxu0 0.0
      %2916 = vmatpush1.msra.mxu0 0.0
      %2917 = vmatprep.subr.mxu0 0.0
      %2918 = vmatpush1.msra.mxu0 0.0
      %2919 = vmatprep.subr.mxu0 0.0
      %2920 = vmatpush1.msra.mxu0 0.0
      %2921 = vmatprep.subr.mxu0 0.0
      %2922 = vmatpush1.msra.mxu0 0.0
      %2923 = vmatprep.subr.mxu0 0.0
      %2924 = vmatpush1.msra.mxu0 0.0
      %2925 = vmatprep.subr.mxu0 0.0
      %2926 = vmatpush1.msra.mxu0 0.0
      %2927 = vmatprep.subr.mxu0 0.0
      %2928 = vmatpush1.msra.mxu0 0.0
      %2929 = vmatprep.subr.mxu0 0.0
      %2930 = vmatpush1.msra.mxu0 0.0
      %2931 = vmatprep.subr.mxu0 0.0
      %2932 = vmatpush1.msra.mxu0 0.0
      %2933 = vmatprep.subr.mxu0 0.0
      %2934 = vmatpush1.msra.mxu0 0.0
      %2935 = vmatprep.mubr.f32.mxu0 0.0
      %2936 = vmatmul.mubr.f32.gmra.mrb[0].mxu0 %v2771
      %v2937 = vpop.f32.mrb[0].mxu0
      %v2938 = vadd.f32 %v2849, %v2937
      %v2939 = vpop.f32.mrb[0].mxu0
      %v2940 = vadd.f32 %v2851, %v2939
      %2941 = vmatprep.mubr.f32.mxu0 0.0
      %2942 = vmatmul.mubr.f32.gmra.mrb[0].mxu0 %v2774
      %v2943 = vpop.f32.mrb[0].mxu0
      %v2944 = vadd.f32 %v2855, %v2943
      %v2945 = vpop.f32.mrb[0].mxu0
      %v2946 = vadd.f32 %v2857, %v2945
      %2947 = vmatprep.mubr.f32.mxu0 0.0
      %2948 = vmatmul.mubr.f32.gmra.mrb[0].mxu0 %v2777
      %v2949 = vpop.f32.mrb[0].mxu0
      %v2950 = vadd.f32 %v2861, %v2949
      %v2951 = vpop.f32.mrb[0].mxu0
      %v2952 = vadd.f32 %v2863, %v2951
      %2953 = vmatprep.mubr.f32.mxu0 0.0
      %2954 = vmatmul.mubr.f32.gmra.mrb[0].mxu0 %v2780
      %v2955 = vpop.f32.mrb[0].mxu0
      %v2956 = vadd.f32 %v2867, %v2955
      %v2957 = vpop.f32.mrb[0].mxu0
      %v2958 = vadd.f32 %v2869, %v2957
      %2959 = vdwg.mxu0
      %2960 = vmatprep.subr.mxu0 %v2629
      %2961 = vmatpush1.msra.mxu0 %v2628
      %2962 = vmatprep.subr.mxu0 %v2633
      %2963 = vmatpush1.msra.mxu0 %v2632
      %2964 = vmatprep.subr.mxu0 %v2637
      %2965 = vmatpush1.msra.mxu0 %v2636
      %2966 = vmatprep.subr.mxu0 %v2641
      %2967 = vmatpush1.msra.mxu0 %v2640
      %2968 = vmatprep.subr.mxu0 %v2645
      %2969 = vmatpush1.msra.mxu0 %v2644
      %2970 = vmatprep.subr.mxu0 %v2649
      %2971 = vmatpush1.msra.mxu0 %v2648
      %2972 = vmatprep.subr.mxu0 %v2653
      %2973 = vmatpush1.msra.mxu0 %v2652
      %2974 = vmatprep.subr.mxu0 %v2657
      %2975 = vmatpush1.msra.mxu0 %v2656
      %2976 = vmatprep.subr.mxu0 %v2661
      %2977 = vmatpush1.msra.mxu0 %v2660
      %2978 = vmatprep.subr.mxu0 %v2665
      %2979 = vmatpush1.msra.mxu0 %v2664
      %2980 = vmatprep.subr.mxu0 %v2669
      %2981 = vmatpush1.msra.mxu0 %v2668
      %2982 = vmatprep.subr.mxu0 %v2673
      %2983 = vmatpush1.msra.mxu0 %v2672
      %2984 = vmatprep.subr.mxu0 %v2677
      %2985 = vmatpush1.msra.mxu0 %v2676
      %2986 = vmatprep.subr.mxu0 %v2681
      %2987 = vmatpush1.msra.mxu0 %v2680
      %2988 = vmatprep.subr.mxu0 %v2685
      %2989 = vmatpush1.msra.mxu0 %v2684
      %2990 = vmatprep.subr.mxu0 %v2689
      %2991 = vmatpush1.msra.mxu0 %v2688
      %2992 = vmatprep.subr.mxu0 %v2693
      %2993 = vmatpush1.msra.mxu0 %v2692
      %2994 = vmatprep.subr.mxu0 %v2697
      %2995 = vmatpush1.msra.mxu0 %v2696
      %2996 = vmatprep.subr.mxu0 %v2701
      %2997 = vmatpush1.msra.mxu0 %v2700
      %2998 = vmatprep.subr.mxu0 %v2705
      %2999 = vmatpush1.msra.mxu0 %v2704
      %3000 = vmatprep.subr.mxu0 %v2709
      %3001 = vmatpush1.msra.mxu0 %v2708
      %3002 = vmatprep.subr.mxu0 %v2713
      %3003 = vmatpush1.msra.mxu0 %v2712
      %3004 = vmatprep.subr.mxu0 %v2717
      %3005 = vmatpush1.msra.mxu0 %v2716
      %3006 = vmatprep.subr.mxu0 %v2721
      %3007 = vmatpush1.msra.mxu0 %v2720
      %3008 = vmatprep.subr.mxu0 %v2725
      %3009 = vmatpush1.msra.mxu0 %v2724
      %3010 = vmatprep.subr.mxu0 %v2729
      %3011 = vmatpush1.msra.mxu0 %v2728
      %3012 = vmatprep.subr.mxu0 %v2733
      %3013 = vmatpush1.msra.mxu0 %v2732
      %3014 = vmatprep.subr.mxu0 %v2737
      %3015 = vmatpush1.msra.mxu0 %v2736
      %3016 = vmatprep.subr.mxu0 %v2741
      %3017 = vmatpush1.msra.mxu0 %v2740
      %3018 = vmatprep.subr.mxu0 %v2745
      %3019 = vmatpush1.msra.mxu0 %v2744
      %3020 = vmatprep.subr.mxu0 %v2749
      %3021 = vmatpush1.msra.mxu0 %v2748
      %3022 = vmatprep.subr.mxu0 %v2753
      %3023 = vmatpush1.msra.mxu0 %v2752
      %3024 = vmatprep.mubr.f32.mxu0 %v2615
      %3025 = vmatmul.mubr.f32.gmra.mrb[0].mxu0 %v2614
      %v3026 = vpop.f32.mrb[0].mxu0
      %v3027 = vadd.f32 0.0, %v3026
      %v3028 = vpop.f32.mrb[0].mxu0
      %v3029 = vadd.f32 0.0, %v3028
      %3030 = vmatprep.mubr.f32.mxu0 %v2618
      %3031 = vmatmul.mubr.f32.gmra.mrb[0].mxu0 %v2617
      %v3032 = vpop.f32.mrb[0].mxu0
      %v3033 = vadd.f32 0.0, %v3032
      %v3034 = vpop.f32.mrb[0].mxu0
      %v3035 = vadd.f32 0.0, %v3034
      %3036 = vmatprep.mubr.f32.mxu0 %v2621
      %3037 = vmatmul.mubr.f32.gmra.mrb[0].mxu0 %v2620
      %v3038 = vpop.f32.mrb[0].mxu0
      %v3039 = vadd.f32 0.0, %v3038
      %v3040 = vpop.f32.mrb[0].mxu0
      %v3041 = vadd.f32 0.0, %v3040
      %3042 = vmatprep.mubr.f32.mxu0 %v2624
      %3043 = vmatmul.mubr.f32.gmra.mrb[0].mxu0 %v2623
      %v3044 = vpop.f32.mrb[0].mxu0
      %v3045 = vadd.f32 0.0, %v3044
      %v3046 = vpop.f32.mrb[0].mxu0
      %v3047 = vadd.f32 0.0, %v3046
      %3048 = vdwg.mxu0
      %3049 = vmatprep.subr.mxu0 %v2757
      %3050 = vmatpush1.msra.mxu0 %v2756
      %3051 = vmatprep.subr.mxu0 %v2761
      %3052 = vmatpush1.msra.mxu0 %v2760
      %3053 = vmatprep.subr.mxu0 %v2765
      %3054 = vmatpush1.msra.mxu0 %v2764
      %3055 = vmatprep.subr.mxu0 %v2769
      %3056 = vmatpush1.msra.mxu0 %v2768
      %3057 = vmatprep.subr.mxu0 0.0
      %3058 = vmatpush1.msra.mxu0 0.0
      %3059 = vmatprep.subr.mxu0 0.0
      %3060 = vmatpush1.msra.mxu0 0.0
      %3061 = vmatprep.subr.mxu0 0.0
      %3062 = vmatpush1.msra.mxu0 0.0
      %3063 = vmatprep.subr.mxu0 0.0
      %3064 = vmatpush1.msra.mxu0 0.0
      %3065 = vmatprep.subr.mxu0 0.0
      %3066 = vmatpush1.msra.mxu0 0.0
      %3067 = vmatprep.subr.mxu0 0.0
      %3068 = vmatpush1.msra.mxu0 0.0
      %3069 = vmatprep.subr.mxu0 0.0
      %3070 = vmatpush1.msra.mxu0 0.0
      %3071 = vmatprep.subr.mxu0 0.0
      %3072 = vmatpush1.msra.mxu0 0.0
      %3073 = vmatprep.subr.mxu0 0.0
      %3074 = vmatpush1.msra.mxu0 0.0
      %3075 = vmatprep.subr.mxu0 0.0
      %3076 = vmatpush1.msra.mxu0 0.0
      %3077 = vmatprep.subr.mxu0 0.0
      %3078 = vmatpush1.msra.mxu0 0.0
      %3079 = vmatprep.subr.mxu0 0.0
      %3080 = vmatpush1.msra.mxu0 0.0
      %3081 = vmatprep.subr.mxu0 0.0
      %3082 = vmatpush1.msra.mxu0 0.0
      %3083 = vmatprep.subr.mxu0 0.0
      %3084 = vmatpush1.msra.mxu0 0.0
      %3085 = vmatprep.subr.mxu0 0.0
      %3086 = vmatpush1.msra.mxu0 0.0
      %3087 = vmatprep.subr.mxu0 0.0
      %3088 = vmatpush1.msra.mxu0 0.0
      %3089 = vmatprep.subr.mxu0 0.0
      %3090 = vmatpush1.msra.mxu0 0.0
      %3091 = vmatprep.subr.mxu0 0.0
      %3092 = vmatpush1.msra.mxu0 0.0
      %3093 = vmatprep.subr.mxu0 0.0
      %3094 = vmatpush1.msra.mxu0 0.0
      %3095 = vmatprep.subr.mxu0 0.0
      %3096 = vmatpush1.msra.mxu0 0.0
      %3097 = vmatprep.subr.mxu0 0.0
      %3098 = vmatpush1.msra.mxu0 0.0
      %3099 = vmatprep.subr.mxu0 0.0
      %3100 = vmatpush1.msra.mxu0 0.0
      %3101 = vmatprep.subr.mxu0 0.0
      %3102 = vmatpush1.msra.mxu0 0.0
      %3103 = vmatprep.subr.mxu0 0.0
      %3104 = vmatpush1.msra.mxu0 0.0
      %3105 = vmatprep.subr.mxu0 0.0
      %3106 = vmatpush1.msra.mxu0 0.0
      %3107 = vmatprep.subr.mxu0 0.0
      %3108 = vmatpush1.msra.mxu0 0.0
      %3109 = vmatprep.subr.mxu0 0.0
      %3110 = vmatpush1.msra.mxu0 0.0
      %3111 = vmatprep.subr.mxu0 0.0
      %3112 = vmatpush1.msra.mxu0 0.0
      %3113 = vmatprep.mubr.f32.mxu0 0.0
      %3114 = vmatmul.mubr.f32.gmra.mrb[0].mxu0 %v2771
      %v3115 = vpop.f32.mrb[0].mxu0
      %v3116 = vadd.f32 %v3027, %v3115
      %v3117 = vpop.f32.mrb[0].mxu0
      %v3118 = vadd.f32 %v3029, %v3117
      %3119 = vmatprep.mubr.f32.mxu0 0.0
      %3120 = vmatmul.mubr.f32.gmra.mrb[0].mxu0 %v2774
      %v3121 = vpop.f32.mrb[0].mxu0
      %v3122 = vadd.f32 %v3033, %v3121
      %v3123 = vpop.f32.mrb[0].mxu0
      %v3124 = vadd.f32 %v3035, %v3123
      %3125 = vmatprep.mubr.f32.mxu0 0.0
      %3126 = vmatmul.mubr.f32.gmra.mrb[0].mxu0 %v2777
      %v3127 = vpop.f32.mrb[0].mxu0
      %v3128 = vadd.f32 %v3039, %v3127
      %v3129 = vpop.f32.mrb[0].mxu0
      %v3130 = vadd.f32 %v3041, %v3129
      %3131 = vmatprep.mubr.f32.mxu0 0.0
      %3132 = vmatmul.mubr.f32.gmra.mrb[0].mxu0 %v2780
      %v3133 = vpop.f32.mrb[0].mxu0
      %v3134 = vadd.f32 %v3045, %v3133
      %v3135 = vpop.f32.mrb[0].mxu0
      %v3136 = vadd.f32 %v3047, %v3135
      %3137 = vdwg.mxu0
      %v3138 = vsub.f32 %v2938, %v3116
      %v3139 = vsub.f32 %v2940, %v3118
      %v3140 = vsub.f32 %v2944, %v3122
      %v3141 = vsub.f32 %v2946, %v3124
      %v3142 = vsub.f32 %v2950, %v3128
      %v3143 = vsub.f32 %v2952, %v3130
      %v3144 = vsub.f32 %v2956, %v3134
      %v3145 = vsub.f32 %v2958, %v3136
      %v3146 = vmul.f32 %v3138, %v3138
      %v3147 = vmul.f32 %v3139, %v3139
      %v3148 = vmul.f32 %v3140, %v3140
      %v3149 = vmul.f32 %v3141, %v3141
      %v3150 = vmul.f32 %v3142, %v3142
      %v3151 = vmul.f32 %v3143, %v3143
      %v3152 = vmul.f32 %v3144, %v3144
      %v3153 = vmul.f32 %v3145, %v3145
      %v3154 = vmul.f32 %v3146, 0.00012207031
      %v3155 = vmul.f32 %v3147, 0.00012207031
      %v3156 = vmul.f32 %v3148, 0.00012207031
      %v3157 = vmul.f32 %v3149, 0.00012207031
      %v3158 = vmul.f32 %v3150, 0.00012207031
      %v3159 = vmul.f32 %v3151, 0.00012207031
      %v3160 = vmul.f32 %v3152, 0.00012207031
      %v3161 = vmul.f32 %v3153, 0.00012207031
      %v3162 = vadd.f32 %v1685, %v3154
      %v3163 = vadd.f32 %v1686, %v3155
      %v3164 = vadd.f32 %v1687, %v3156
      %v3165 = vadd.f32 %v1688, %v3157
      %v3166 = vadd.f32 %v1689, %v3158
      %v3167 = vadd.f32 %v1690, %v3159
      %v3168 = vadd.f32 %v1691, %v3160
      %v3169 = vadd.f32 %v1692, %v3161
      %s3170 = scalar_lea.vmem %s3, 32
      %v3171 = vld [vmem:[%s3170] sm:$0xff]
      %v3172 = vld [vmem:[%s3170 + $0x8] sm:$0xff]
      %v3173 = vld [vmem:[%s3170 + $0x10] sm:$0xff]
      %v3174 = vld [vmem:[%s3170 + $0x18] sm:$0xff]
      %3176 = vset.pattern.permute.xlu0 0
      %3177 = vperm.xlu0 %3176, %v3171
      %v3178 = vpop.permute.xlu0 %3177
      %3181 = vset.pattern.permute.xlu0 0
      %3182 = vperm.xlu0 %3181, %v3172
      %v3183 = vpop.permute.xlu0 %3182
      %3186 = vset.pattern.permute.xlu0 0
      %3187 = vperm.xlu0 %3186, %v3173
      %v3188 = vpop.permute.xlu0 %3187
      %3191 = vset.pattern.permute.xlu0 0
      %3192 = vperm.xlu0 %3191, %v3174
      %v3193 = vpop.permute.xlu0 %3192
      %v3195 = vadd.f32 %v2938, %v3178
      %v3196 = vadd.f32 %v2940, %v3178
      %v3197 = vadd.f32 %v3116, %v3178
      %v3198 = vadd.f32 %v3118, %v3178
      %v3199 = vadd.f32 %v2944, %v3183
      %v3200 = vadd.f32 %v2946, %v3183
      %v3201 = vadd.f32 %v3122, %v3183
      %v3202 = vadd.f32 %v3124, %v3183
      %v3203 = vadd.f32 %v2950, %v3188
      %v3204 = vadd.f32 %v2952, %v3188
      %v3205 = vadd.f32 %v3128, %v3188
      %v3206 = vadd.f32 %v3130, %v3188
      %v3207 = vadd.f32 %v2956, %v3193
      %v3208 = vadd.f32 %v2958, %v3193
      %v3209 = vadd.f32 %v3134, %v3193
      %v3210 = vadd.f32 %v3136, %v3193
      %v3211 = vmax.f32 %v3195, 0.0
      %v3212 = vmax.f32 %v3196, 0.0
      %v3213 = vmax.f32 %v3197, 0.0
      %v3214 = vmax.f32 %v3198, 0.0
      %v3215 = vmax.f32 %v3199, 0.0
      %v3216 = vmax.f32 %v3200, 0.0
      %v3217 = vmax.f32 %v3201, 0.0
      %v3218 = vmax.f32 %v3202, 0.0
      %v3219 = vmax.f32 %v3203, 0.0
      %v3220 = vmax.f32 %v3204, 0.0
      %v3221 = vmax.f32 %v3205, 0.0
      %v3222 = vmax.f32 %v3206, 0.0
      %v3223 = vmax.f32 %v3207, 0.0
      %v3224 = vmax.f32 %v3208, 0.0
      %v3225 = vmax.f32 %v3209, 0.0
      %v3226 = vmax.f32 %v3210, 0.0
      %3227 = vst [vmem:[#allocation2] sm:$0xff] %v3211
      %3228 = vst [vmem:[#allocation2 + $0x8] sm:$0xff] %v3212
      %3229 = vst [vmem:[#allocation2 + $0x10] sm:$0xff] %v3213
      %3230 = vst [vmem:[#allocation2 + $0x18] sm:$0xff] %v3214
      %3231 = vst [vmem:[#allocation2 + $0x20] sm:$0xff] %v3215
      %3232 = vst [vmem:[#allocation2 + $0x28] sm:$0xff] %v3216
      %3233 = vst [vmem:[#allocation2 + $0x30] sm:$0xff] %v3217
      %3234 = vst [vmem:[#allocation2 + $0x38] sm:$0xff] %v3218
      %3235 = vst [vmem:[#allocation2 + $0x40] sm:$0xff] %v3219
      %3236 = vst [vmem:[#allocation2 + $0x48] sm:$0xff] %v3220
      %3237 = vst [vmem:[#allocation2 + $0x50] sm:$0xff] %v3221
      %3238 = vst [vmem:[#allocation2 + $0x58] sm:$0xff] %v3222
      %3239 = vst [vmem:[#allocation2 + $0x60] sm:$0xff] %v3223
      %3240 = vst [vmem:[#allocation2 + $0x68] sm:$0xff] %v3224
      %3241 = vst [vmem:[#allocation2 + $0x70] sm:$0xff] %v3225
      %3242 = vst [vmem:[#allocation2 + $0x78] sm:$0xff] %v3226
      %v3243 = vld [vmem:[#allocation2] sm:$0xff]
      %v3244 = vld [vmem:[#allocation2 + $0x8] sm:$0xff]
      %v3245 = vld [vmem:[#allocation2 + $0x10] sm:$0xff]
      %v3246 = vld [vmem:[#allocation2 + $0x18] sm:$0xff]
      %v3247 = vld [vmem:[#allocation2 + $0x20] sm:$0xff]
      %v3248 = vld [vmem:[#allocation2 + $0x28] sm:$0xff]
      %v3249 = vld [vmem:[#allocation2 + $0x30] sm:$0xff]
      %v3250 = vld [vmem:[#allocation2 + $0x38] sm:$0xff]
      %v3251 = vld [vmem:[#allocation2 + $0x40] sm:$0xff]
      %v3252 = vld [vmem:[#allocation2 + $0x48] sm:$0xff]
      %v3253 = vld [vmem:[#allocation2 + $0x50] sm:$0xff]
      %v3254 = vld [vmem:[#allocation2 + $0x58] sm:$0xff]
      %v3255 = vld [vmem:[#allocation2 + $0x60] sm:$0xff]
      %v3256 = vld [vmem:[#allocation2 + $0x68] sm:$0xff]
      %v3257 = vld [vmem:[#allocation2 + $0x70] sm:$0xff]
      %v3258 = vld [vmem:[#allocation2 + $0x78] sm:$0xff]
      %3259 = vrot.lane.b32.xlu0 %v3243, 17
      %v3260 = vpop.permute.xlu0 %3259
      %3261 = vrot.lane.b32.xlu0 %v3247, 17
      %v3262 = vpop.permute.xlu0 %3261
      %3263 = vrot.lane.b32.xlu0 %v3251, 17
      %v3264 = vpop.permute.xlu0 %3263
      %3265 = vrot.lane.b32.xlu0 %v3255, 17
      %v3266 = vpop.permute.xlu0 %3265
      %3267 = vrot.lane.b32.xlu0 %v3244, 17
      %v3268 = vpop.permute.xlu0 %3267
      %3269 = vrot.lane.b32.xlu0 %v3248, 17
      %v3270 = vpop.permute.xlu0 %3269
      %3271 = vrot.lane.b32.xlu0 %v3252, 17
      %v3272 = vpop.permute.xlu0 %3271
      %3273 = vrot.lane.b32.xlu0 %v3256, 17
      %v3274 = vpop.permute.xlu0 %3273
      %3275 = vrot.lane.b32.xlu0 %v3245, 17
      %v3276 = vpop.permute.xlu0 %3275
      %3277 = vrot.lane.b32.xlu0 %v3249, 17
      %v3278 = vpop.permute.xlu0 %3277
      %3279 = vrot.lane.b32.xlu0 %v3253, 17
      %v3280 = vpop.permute.xlu0 %3279
      %3281 = vrot.lane.b32.xlu0 %v3257, 17
      %v3282 = vpop.permute.xlu0 %3281
      %3283 = vrot.lane.b32.xlu0 %v3246, 17
      %v3284 = vpop.permute.xlu0 %3283
      %3285 = vrot.lane.b32.xlu0 %v3250, 17
      %v3286 = vpop.permute.xlu0 %3285
      %3287 = vrot.lane.b32.xlu0 %v3254, 17
      %v3288 = vpop.permute.xlu0 %3287
      %3289 = vrot.lane.b32.xlu0 %v3258, 17
      %v3290 = vpop.permute.xlu0 %3289
      %v3291 = vsel %vm321, %v3276, %v3284
      %v3292 = vsel %vm321, %v3278, %v3286
      %v3293 = vsel %vm321, %v3280, %v3288
      %v3294 = vsel %vm321, %v3282, %v3290
      %v3295 = vsel %vm321, %v3268, %v3276
      %v3296 = vsel %vm321, %v3270, %v3278
      %v3297 = vsel %vm321, %v3272, %v3280
      %v3298 = vsel %vm321, %v3274, %v3282
      %v3299 = vsel %vm321, %v3260, %v3268
      %v3300 = vsel %vm321, %v3262, %v3270
      %v3301 = vsel %vm321, %v3264, %v3272
      %v3302 = vsel %vm321, %v3266, %v3274
      %v3303 = vsel %vm321, %v3284, %v3260
      %v3304 = vsel %vm321, %v3286, %v3262
      %v3305 = vsel %vm321, %v3288, %v3264
      %v3306 = vsel %vm321, %v3290, %v3266
      %v3307 = vld [vmem:[%s4] sm:$0xf]
      %v3309 = vlaneseq
      %v3310 = vshrl.u32 %v3309, 7
      %v3311 = vsub.s32 0, %v3310
      %v3312 = vrot.slane %v3307, %v3311
      %v3313 = vlaneseq
      %v3314 = vshrl.u32 %v3313, 7
      %v3315 = vsub.s32 1, %v3314
      %v3316 = vrot.slane %v3307, %v3315
      %v3317 = vlaneseq
      %v3318 = vshrl.u32 %v3317, 7
      %v3319 = vsub.s32 2, %v3318
      %v3320 = vrot.slane %v3307, %v3319
      %v3321 = vlaneseq
      %v3322 = vshrl.u32 %v3321, 7
      %v3323 = vsub.s32 3, %v3322
      %v3324 = vrot.slane %v3307, %v3323
      %v3329 = vmul.f32 %v3303, %v3312
      %v3330 = vmul.f32 %v3299, %v3316
      %v3331 = vmul.f32 %v3295, %v3320
      %v3332 = vmul.f32 %v3291, %v3324
      %v3333 = vmul.f32 %v3304, %v3312
      %v3334 = vmul.f32 %v3300, %v3316
      %v3335 = vmul.f32 %v3296, %v3320
      %v3336 = vmul.f32 %v3292, %v3324
      %v3337 = vmul.f32 %v3305, %v3312
      %v3338 = vmul.f32 %v3301, %v3316
      %v3339 = vmul.f32 %v3297, %v3320
      %v3340 = vmul.f32 %v3293, %v3324
      %v3341 = vmul.f32 %v3306, %v3312
      %v3342 = vmul.f32 %v3302, %v3316
      %v3343 = vmul.f32 %v3298, %v3320
      %v3344 = vmul.f32 %v3294, %v3324
      %3345 = vst [vmem:[#allocation3] sm:$0xff] %v3329
      %3346 = vst [vmem:[#allocation3 + $0x8] sm:$0xff] %v3330
      %3347 = vst [vmem:[#allocation3 + $0x10] sm:$0xff] %v3331
      %3348 = vst [vmem:[#allocation3 + $0x18] sm:$0xff] %v3332
      %3349 = vst [vmem:[#allocation3 + $0x20] sm:$0xff] %v3333
      %3350 = vst [vmem:[#allocation3 + $0x28] sm:$0xff] %v3334
      %3351 = vst [vmem:[#allocation3 + $0x30] sm:$0xff] %v3335
      %3352 = vst [vmem:[#allocation3 + $0x38] sm:$0xff] %v3336
      %3353 = vst [vmem:[#allocation3 + $0x40] sm:$0xff] %v3337
      %3354 = vst [vmem:[#allocation3 + $0x48] sm:$0xff] %v3338
      %3355 = vst [vmem:[#allocation3 + $0x50] sm:$0xff] %v3339
      %3356 = vst [vmem:[#allocation3 + $0x58] sm:$0xff] %v3340
      %3357 = vst [vmem:[#allocation3 + $0x60] sm:$0xff] %v3341
      %3358 = vst [vmem:[#allocation3 + $0x68] sm:$0xff] %v3342
      %3359 = vst [vmem:[#allocation3 + $0x70] sm:$0xff] %v3343
      %3360 = vst [vmem:[#allocation3 + $0x78] sm:$0xff] %v3344
      %3361 = vrot.lane.b32.xlu0 %v3243, 16
      %v3362 = vpop.permute.xlu0 %3361
      %3363 = vrot.lane.b32.xlu0 %v3247, 16
      %v3364 = vpop.permute.xlu0 %3363
      %3365 = vrot.lane.b32.xlu0 %v3251, 16
      %v3366 = vpop.permute.xlu0 %3365
      %3367 = vrot.lane.b32.xlu0 %v3255, 16
      %v3368 = vpop.permute.xlu0 %3367
      %3369 = vrot.lane.b32.xlu0 %v3244, 16
      %v3370 = vpop.permute.xlu0 %3369
      %3371 = vrot.lane.b32.xlu0 %v3248, 16
      %v3372 = vpop.permute.xlu0 %3371
      %3373 = vrot.lane.b32.xlu0 %v3252, 16
      %v3374 = vpop.permute.xlu0 %3373
      %3375 = vrot.lane.b32.xlu0 %v3256, 16
      %v3376 = vpop.permute.xlu0 %3375
      %3377 = vrot.lane.b32.xlu0 %v3245, 16
      %v3378 = vpop.permute.xlu0 %3377
      %3379 = vrot.lane.b32.xlu0 %v3249, 16
      %v3380 = vpop.permute.xlu0 %3379
      %3381 = vrot.lane.b32.xlu0 %v3253, 16
      %v3382 = vpop.permute.xlu0 %3381
      %3383 = vrot.lane.b32.xlu0 %v3257, 16
      %v3384 = vpop.permute.xlu0 %3383
      %3385 = vrot.lane.b32.xlu0 %v3246, 16
      %v3386 = vpop.permute.xlu0 %3385
      %3387 = vrot.lane.b32.xlu0 %v3250, 16
      %v3388 = vpop.permute.xlu0 %3387
      %3389 = vrot.lane.b32.xlu0 %v3254, 16
      %v3390 = vpop.permute.xlu0 %3389
      %3391 = vrot.lane.b32.xlu0 %v3258, 16
      %v3392 = vpop.permute.xlu0 %3391
      %v3393 = vsel %vm424, %v3378, %v3386
      %v3394 = vsel %vm424, %v3380, %v3388
      %v3395 = vsel %vm424, %v3382, %v3390
      %v3396 = vsel %vm424, %v3384, %v3392
      %v3397 = vsel %vm424, %v3370, %v3378
      %v3398 = vsel %vm424, %v3372, %v3380
      %v3399 = vsel %vm424, %v3374, %v3382
      %v3400 = vsel %vm424, %v3376, %v3384
      %v3401 = vsel %vm424, %v3362, %v3370
      %v3402 = vsel %vm424, %v3364, %v3372
      %v3403 = vsel %vm424, %v3366, %v3374
      %v3404 = vsel %vm424, %v3368, %v3376
      %v3405 = vsel %vm424, %v3386, %v3362
      %v3406 = vsel %vm424, %v3388, %v3364
      %v3407 = vsel %vm424, %v3390, %v3366
      %v3408 = vsel %vm424, %v3392, %v3368
      %v3409 = vld [vmem:[%s441] sm:$0xf]
      %v3411 = vlaneseq
      %v3412 = vshrl.u32 %v3411, 7
      %v3413 = vsub.s32 0, %v3412
      %v3414 = vrot.slane %v3409, %v3413
      %v3415 = vlaneseq
      %v3416 = vshrl.u32 %v3415, 7
      %v3417 = vsub.s32 1, %v3416
      %v3418 = vrot.slane %v3409, %v3417
      %v3419 = vlaneseq
      %v3420 = vshrl.u32 %v3419, 7
      %v3421 = vsub.s32 2, %v3420
      %v3422 = vrot.slane %v3409, %v3421
      %v3423 = vlaneseq
      %v3424 = vshrl.u32 %v3423, 7
      %v3425 = vsub.s32 3, %v3424
      %v3426 = vrot.slane %v3409, %v3425
      %v3431 = vmul.f32 %v3405, %v3414
      %v3432 = vmul.f32 %v3401, %v3418
      %v3433 = vmul.f32 %v3397, %v3422
      %v3434 = vmul.f32 %v3393, %v3426
      %v3435 = vmul.f32 %v3406, %v3414
      %v3436 = vmul.f32 %v3402, %v3418
      %v3437 = vmul.f32 %v3398, %v3422
      %v3438 = vmul.f32 %v3394, %v3426
      %v3439 = vmul.f32 %v3407, %v3414
      %v3440 = vmul.f32 %v3403, %v3418
      %v3441 = vmul.f32 %v3399, %v3422
      %v3442 = vmul.f32 %v3395, %v3426
      %v3443 = vmul.f32 %v3408, %v3414
      %v3444 = vmul.f32 %v3404, %v3418
      %v3445 = vmul.f32 %v3400, %v3422
      %v3446 = vmul.f32 %v3396, %v3426
      %3447 = vst [vmem:[#allocation3 + $0x80] sm:$0xff] %v3431
      %3448 = vst [vmem:[#allocation3 + $0x88] sm:$0xff] %v3432
      %3449 = vst [vmem:[#allocation3 + $0x90] sm:$0xff] %v3433
      %3450 = vst [vmem:[#allocation3 + $0x98] sm:$0xff] %v3434
      %3451 = vst [vmem:[#allocation3 + $0xa0] sm:$0xff] %v3435
      %3452 = vst [vmem:[#allocation3 + $0xa8] sm:$0xff] %v3436
      %3453 = vst [vmem:[#allocation3 + $0xb0] sm:$0xff] %v3437
      %3454 = vst [vmem:[#allocation3 + $0xb8] sm:$0xff] %v3438
      %3455 = vst [vmem:[#allocation3 + $0xc0] sm:$0xff] %v3439
      %3456 = vst [vmem:[#allocation3 + $0xc8] sm:$0xff] %v3440
      %3457 = vst [vmem:[#allocation3 + $0xd0] sm:$0xff] %v3441
      %3458 = vst [vmem:[#allocation3 + $0xd8] sm:$0xff] %v3442
      %3459 = vst [vmem:[#allocation3 + $0xe0] sm:$0xff] %v3443
      %3460 = vst [vmem:[#allocation3 + $0xe8] sm:$0xff] %v3444
      %3461 = vst [vmem:[#allocation3 + $0xf0] sm:$0xff] %v3445
      %3462 = vst [vmem:[#allocation3 + $0xf8] sm:$0xff] %v3446
      %3463 = vrot.lane.b32.xlu0 %v3243, 15
      %v3464 = vpop.permute.xlu0 %3463
      %3465 = vrot.lane.b32.xlu0 %v3247, 15
      %v3466 = vpop.permute.xlu0 %3465
      %3467 = vrot.lane.b32.xlu0 %v3251, 15
      %v3468 = vpop.permute.xlu0 %3467
      %3469 = vrot.lane.b32.xlu0 %v3255, 15
      %v3470 = vpop.permute.xlu0 %3469
      %3471 = vrot.lane.b32.xlu0 %v3244, 15
      %v3472 = vpop.permute.xlu0 %3471
      %3473 = vrot.lane.b32.xlu0 %v3248, 15
      %v3474 = vpop.permute.xlu0 %3473
      %3475 = vrot.lane.b32.xlu0 %v3252, 15
      %v3476 = vpop.permute.xlu0 %3475
      %3477 = vrot.lane.b32.xlu0 %v3256, 15
      %v3478 = vpop.permute.xlu0 %3477
      %3479 = vrot.lane.b32.xlu0 %v3245, 15
      %v3480 = vpop.permute.xlu0 %3479
      %3481 = vrot.lane.b32.xlu0 %v3249, 15
      %v3482 = vpop.permute.xlu0 %3481
      %3483 = vrot.lane.b32.xlu0 %v3253, 15
      %v3484 = vpop.permute.xlu0 %3483
      %3485 = vrot.lane.b32.xlu0 %v3257, 15
      %v3486 = vpop.permute.xlu0 %3485
      %3487 = vrot.lane.b32.xlu0 %v3246, 15
      %v3488 = vpop.permute.xlu0 %3487
      %3489 = vrot.lane.b32.xlu0 %v3250, 15
      %v3490 = vpop.permute.xlu0 %3489
      %3491 = vrot.lane.b32.xlu0 %v3254, 15
      %v3492 = vpop.permute.xlu0 %3491
      %3493 = vrot.lane.b32.xlu0 %v3258, 15
      %v3494 = vpop.permute.xlu0 %3493
      %v3495 = vsel %vm528, %v3480, %v3488
      %v3496 = vsel %vm528, %v3482, %v3490
      %v3497 = vsel %vm528, %v3484, %v3492
      %v3498 = vsel %vm528, %v3486, %v3494
      %v3499 = vsel %vm528, %v3472, %v3480
      %v3500 = vsel %vm528, %v3474, %v3482
      %v3501 = vsel %vm528, %v3476, %v3484
      %v3502 = vsel %vm528, %v3478, %v3486
      %v3503 = vsel %vm528, %v3464, %v3472
      %v3504 = vsel %vm528, %v3466, %v3474
      %v3505 = vsel %vm528, %v3468, %v3476
      %v3506 = vsel %vm528, %v3470, %v3478
      %v3507 = vsel %vm528, %v3488, %v3464
      %v3508 = vsel %vm528, %v3490, %v3466
      %v3509 = vsel %vm528, %v3492, %v3468
      %v3510 = vsel %vm528, %v3494, %v3470
      %v3511 = vld [vmem:[%s545] sm:$0xf]
      %v3513 = vlaneseq
      %v3514 = vshrl.u32 %v3513, 7
      %v3515 = vsub.s32 0, %v3514
      %v3516 = vrot.slane %v3511, %v3515
      %v3517 = vlaneseq
      %v3518 = vshrl.u32 %v3517, 7
      %v3519 = vsub.s32 1, %v3518
      %v3520 = vrot.slane %v3511, %v3519
      %v3521 = vlaneseq
      %v3522 = vshrl.u32 %v3521, 7
      %v3523 = vsub.s32 2, %v3522
      %v3524 = vrot.slane %v3511, %v3523
      %v3525 = vlaneseq
      %v3526 = vshrl.u32 %v3525, 7
      %v3527 = vsub.s32 3, %v3526
      %v3528 = vrot.slane %v3511, %v3527
      %v3533 = vmul.f32 %v3507, %v3516
      %v3534 = vmul.f32 %v3503, %v3520
      %v3535 = vmul.f32 %v3499, %v3524
      %v3536 = vmul.f32 %v3495, %v3528
      %v3537 = vmul.f32 %v3508, %v3516
      %v3538 = vmul.f32 %v3504, %v3520
      %v3539 = vmul.f32 %v3500, %v3524
      %v3540 = vmul.f32 %v3496, %v3528
      %v3541 = vmul.f32 %v3509, %v3516
      %v3542 = vmul.f32 %v3505, %v3520
      %v3543 = vmul.f32 %v3501, %v3524
      %v3544 = vmul.f32 %v3497, %v3528
      %v3545 = vmul.f32 %v3510, %v3516
      %v3546 = vmul.f32 %v3506, %v3520
      %v3547 = vmul.f32 %v3502, %v3524
      %v3548 = vmul.f32 %v3498, %v3528
      %3549 = vst [vmem:[#allocation3 + $0x100] sm:$0xff] %v3533
      %3550 = vst [vmem:[#allocation3 + $0x108] sm:$0xff] %v3534
      %3551 = vst [vmem:[#allocation3 + $0x110] sm:$0xff] %v3535
      %3552 = vst [vmem:[#allocation3 + $0x118] sm:$0xff] %v3536
      %3553 = vst [vmem:[#allocation3 + $0x120] sm:$0xff] %v3537
      %3554 = vst [vmem:[#allocation3 + $0x128] sm:$0xff] %v3538
      %3555 = vst [vmem:[#allocation3 + $0x130] sm:$0xff] %v3539
      %3556 = vst [vmem:[#allocation3 + $0x138] sm:$0xff] %v3540
      %3557 = vst [vmem:[#allocation3 + $0x140] sm:$0xff] %v3541
      %3558 = vst [vmem:[#allocation3 + $0x148] sm:$0xff] %v3542
      %3559 = vst [vmem:[#allocation3 + $0x150] sm:$0xff] %v3543
      %3560 = vst [vmem:[#allocation3 + $0x158] sm:$0xff] %v3544
      %3561 = vst [vmem:[#allocation3 + $0x160] sm:$0xff] %v3545
      %3562 = vst [vmem:[#allocation3 + $0x168] sm:$0xff] %v3546
      %3563 = vst [vmem:[#allocation3 + $0x170] sm:$0xff] %v3547
      %3564 = vst [vmem:[#allocation3 + $0x178] sm:$0xff] %v3548
      %3565 = vrot.lane.b32.xlu0 %v3243, 1
      %v3566 = vpop.permute.xlu0 %3565
      %3567 = vrot.lane.b32.xlu0 %v3247, 1
      %v3568 = vpop.permute.xlu0 %3567
      %3569 = vrot.lane.b32.xlu0 %v3251, 1
      %v3570 = vpop.permute.xlu0 %3569
      %3571 = vrot.lane.b32.xlu0 %v3255, 1
      %v3572 = vpop.permute.xlu0 %3571
      %3573 = vrot.lane.b32.xlu0 %v3244, 1
      %v3574 = vpop.permute.xlu0 %3573
      %3575 = vrot.lane.b32.xlu0 %v3248, 1
      %v3576 = vpop.permute.xlu0 %3575
      %3577 = vrot.lane.b32.xlu0 %v3252, 1
      %v3578 = vpop.permute.xlu0 %3577
      %3579 = vrot.lane.b32.xlu0 %v3256, 1
      %v3580 = vpop.permute.xlu0 %3579
      %3581 = vrot.lane.b32.xlu0 %v3245, 1
      %v3582 = vpop.permute.xlu0 %3581
      %3583 = vrot.lane.b32.xlu0 %v3249, 1
      %v3584 = vpop.permute.xlu0 %3583
      %3585 = vrot.lane.b32.xlu0 %v3253, 1
      %v3586 = vpop.permute.xlu0 %3585
      %3587 = vrot.lane.b32.xlu0 %v3257, 1
      %v3588 = vpop.permute.xlu0 %3587
      %3589 = vrot.lane.b32.xlu0 %v3246, 1
      %v3590 = vpop.permute.xlu0 %3589
      %3591 = vrot.lane.b32.xlu0 %v3250, 1
      %v3592 = vpop.permute.xlu0 %3591
      %3593 = vrot.lane.b32.xlu0 %v3254, 1
      %v3594 = vpop.permute.xlu0 %3593
      %3595 = vrot.lane.b32.xlu0 %v3258, 1
      %v3596 = vpop.permute.xlu0 %3595
      %v3597 = vsel %vm632, %v3582, %v3590
      %v3598 = vsel %vm632, %v3584, %v3592
      %v3599 = vsel %vm632, %v3586, %v3594
      %v3600 = vsel %vm632, %v3588, %v3596
      %v3601 = vsel %vm632, %v3574, %v3582
      %v3602 = vsel %vm632, %v3576, %v3584
      %v3603 = vsel %vm632, %v3578, %v3586
      %v3604 = vsel %vm632, %v3580, %v3588
      %v3605 = vsel %vm632, %v3566, %v3574
      %v3606 = vsel %vm632, %v3568, %v3576
      %v3607 = vsel %vm632, %v3570, %v3578
      %v3608 = vsel %vm632, %v3572, %v3580
      %v3609 = vsel %vm632, %v3590, %v3566
      %v3610 = vsel %vm632, %v3592, %v3568
      %v3611 = vsel %vm632, %v3594, %v3570
      %v3612 = vsel %vm632, %v3596, %v3572
      %v3613 = vld [vmem:[%s649] sm:$0xf]
      %v3615 = vlaneseq
      %v3616 = vshrl.u32 %v3615, 7
      %v3617 = vsub.s32 0, %v3616
      %v3618 = vrot.slane %v3613, %v3617
      %v3619 = vlaneseq
      %v3620 = vshrl.u32 %v3619, 7
      %v3621 = vsub.s32 1, %v3620
      %v3622 = vrot.slane %v3613, %v3621
      %v3623 = vlaneseq
      %v3624 = vshrl.u32 %v3623, 7
      %v3625 = vsub.s32 2, %v3624
      %v3626 = vrot.slane %v3613, %v3625
      %v3627 = vlaneseq
      %v3628 = vshrl.u32 %v3627, 7
      %v3629 = vsub.s32 3, %v3628
      %v3630 = vrot.slane %v3613, %v3629
      %v3635 = vmul.f32 %v3609, %v3618
      %v3636 = vmul.f32 %v3605, %v3622
      %v3637 = vmul.f32 %v3601, %v3626
      %v3638 = vmul.f32 %v3597, %v3630
      %v3639 = vmul.f32 %v3610, %v3618
      %v3640 = vmul.f32 %v3606, %v3622
      %v3641 = vmul.f32 %v3602, %v3626
      %v3642 = vmul.f32 %v3598, %v3630
      %v3643 = vmul.f32 %v3611, %v3618
      %v3644 = vmul.f32 %v3607, %v3622
      %v3645 = vmul.f32 %v3603, %v3626
      %v3646 = vmul.f32 %v3599, %v3630
      %v3647 = vmul.f32 %v3612, %v3618
      %v3648 = vmul.f32 %v3608, %v3622
      %v3649 = vmul.f32 %v3604, %v3626
      %v3650 = vmul.f32 %v3600, %v3630
      %3651 = vst [vmem:[#allocation3 + $0x180] sm:$0xff] %v3635
      %3652 = vst [vmem:[#allocation3 + $0x188] sm:$0xff] %v3636
      %3653 = vst [vmem:[#allocation3 + $0x190] sm:$0xff] %v3637
      %3654 = vst [vmem:[#allocation3 + $0x198] sm:$0xff] %v3638
      %3655 = vst [vmem:[#allocation3 + $0x1a0] sm:$0xff] %v3639
      %3656 = vst [vmem:[#allocation3 + $0x1a8] sm:$0xff] %v3640
      %3657 = vst [vmem:[#allocation3 + $0x1b0] sm:$0xff] %v3641
      %3658 = vst [vmem:[#allocation3 + $0x1b8] sm:$0xff] %v3642
      %3659 = vst [vmem:[#allocation3 + $0x1c0] sm:$0xff] %v3643
      %3660 = vst [vmem:[#allocation3 + $0x1c8] sm:$0xff] %v3644
      %3661 = vst [vmem:[#allocation3 + $0x1d0] sm:$0xff] %v3645
      %3662 = vst [vmem:[#allocation3 + $0x1d8] sm:$0xff] %v3646
      %3663 = vst [vmem:[#allocation3 + $0x1e0] sm:$0xff] %v3647
      %3664 = vst [vmem:[#allocation3 + $0x1e8] sm:$0xff] %v3648
      %3665 = vst [vmem:[#allocation3 + $0x1f0] sm:$0xff] %v3649
      %3666 = vst [vmem:[#allocation3 + $0x1f8] sm:$0xff] %v3650
      %3667 = vst [vmem:[#allocation3 + $0x200] sm:$0xff] %v3243
      %3668 = vst [vmem:[#allocation3 + $0x208] sm:$0xff] %v3244
      %3669 = vst [vmem:[#allocation3 + $0x210] sm:$0xff] %v3245
      %3670 = vst [vmem:[#allocation3 + $0x218] sm:$0xff] %v3246
      %3671 = vst [vmem:[#allocation3 + $0x220] sm:$0xff] %v3247
      %3672 = vst [vmem:[#allocation3 + $0x228] sm:$0xff] %v3248
      %3673 = vst [vmem:[#allocation3 + $0x230] sm:$0xff] %v3249
      %3674 = vst [vmem:[#allocation3 + $0x238] sm:$0xff] %v3250
      %3675 = vst [vmem:[#allocation3 + $0x240] sm:$0xff] %v3251
      %3676 = vst [vmem:[#allocation3 + $0x248] sm:$0xff] %v3252
      %3677 = vst [vmem:[#allocation3 + $0x250] sm:$0xff] %v3253
      %3678 = vst [vmem:[#allocation3 + $0x258] sm:$0xff] %v3254
      %3679 = vst [vmem:[#allocation3 + $0x260] sm:$0xff] %v3255
      %3680 = vst [vmem:[#allocation3 + $0x268] sm:$0xff] %v3256
      %3681 = vst [vmem:[#allocation3 + $0x270] sm:$0xff] %v3257
      %3682 = vst [vmem:[#allocation3 + $0x278] sm:$0xff] %v3258
      %3683 = vrot.lane.b32.xlu0 %v3243, 127
      %v3684 = vpop.permute.xlu0 %3683
      %3685 = vrot.lane.b32.xlu0 %v3247, 127
      %v3686 = vpop.permute.xlu0 %3685
      %3687 = vrot.lane.b32.xlu0 %v3251, 127
      %v3688 = vpop.permute.xlu0 %3687
      %3689 = vrot.lane.b32.xlu0 %v3255, 127
      %v3690 = vpop.permute.xlu0 %3689
      %3691 = vrot.lane.b32.xlu0 %v3244, 127
      %v3692 = vpop.permute.xlu0 %3691
      %3693 = vrot.lane.b32.xlu0 %v3248, 127
      %v3694 = vpop.permute.xlu0 %3693
      %3695 = vrot.lane.b32.xlu0 %v3252, 127
      %v3696 = vpop.permute.xlu0 %3695
      %3697 = vrot.lane.b32.xlu0 %v3256, 127
      %v3698 = vpop.permute.xlu0 %3697
      %3699 = vrot.lane.b32.xlu0 %v3245, 127
      %v3700 = vpop.permute.xlu0 %3699
      %3701 = vrot.lane.b32.xlu0 %v3249, 127
      %v3702 = vpop.permute.xlu0 %3701
      %3703 = vrot.lane.b32.xlu0 %v3253, 127
      %v3704 = vpop.permute.xlu0 %3703
      %3705 = vrot.lane.b32.xlu0 %v3257, 127
      %v3706 = vpop.permute.xlu0 %3705
      %3707 = vrot.lane.b32.xlu0 %v3246, 127
      %v3708 = vpop.permute.xlu0 %3707
      %3709 = vrot.lane.b32.xlu0 %v3250, 127
      %v3710 = vpop.permute.xlu0 %3709
      %3711 = vrot.lane.b32.xlu0 %v3254, 127
      %v3712 = vpop.permute.xlu0 %3711
      %3713 = vrot.lane.b32.xlu0 %v3258, 127
      %v3714 = vpop.permute.xlu0 %3713
      %v3715 = vsel %vm752, %v3700, %v3708
      %v3716 = vsel %vm752, %v3702, %v3710
      %v3717 = vsel %vm752, %v3704, %v3712
      %v3718 = vsel %vm752, %v3706, %v3714
      %v3719 = vsel %vm752, %v3692, %v3700
      %v3720 = vsel %vm752, %v3694, %v3702
      %v3721 = vsel %vm752, %v3696, %v3704
      %v3722 = vsel %vm752, %v3698, %v3706
      %v3723 = vsel %vm752, %v3684, %v3692
      %v3724 = vsel %vm752, %v3686, %v3694
      %v3725 = vsel %vm752, %v3688, %v3696
      %v3726 = vsel %vm752, %v3690, %v3698
      %v3727 = vsel %vm752, %v3708, %v3684
      %v3728 = vsel %vm752, %v3710, %v3686
      %v3729 = vsel %vm752, %v3712, %v3688
      %v3730 = vsel %vm752, %v3714, %v3690
      %v3731 = vld [vmem:[%s769] sm:$0xf]
      %v3733 = vlaneseq
      %v3734 = vshrl.u32 %v3733, 7
      %v3735 = vsub.s32 0, %v3734
      %v3736 = vrot.slane %v3731, %v3735
      %v3737 = vlaneseq
      %v3738 = vshrl.u32 %v3737, 7
      %v3739 = vsub.s32 1, %v3738
      %v3740 = vrot.slane %v3731, %v3739
      %v3741 = vlaneseq
      %v3742 = vshrl.u32 %v3741, 7
      %v3743 = vsub.s32 2, %v3742
      %v3744 = vrot.slane %v3731, %v3743
      %v3745 = vlaneseq
      %v3746 = vshrl.u32 %v3745, 7
      %v3747 = vsub.s32 3, %v3746
      %v3748 = vrot.slane %v3731, %v3747
      %v3753 = vmul.f32 %v3723, %v3736
      %v3754 = vmul.f32 %v3719, %v3740
      %v3755 = vmul.f32 %v3715, %v3744
      %v3756 = vmul.f32 %v3727, %v3748
      %v3757 = vmul.f32 %v3724, %v3736
      %v3758 = vmul.f32 %v3720, %v3740
      %v3759 = vmul.f32 %v3716, %v3744
      %v3760 = vmul.f32 %v3728, %v3748
      %v3761 = vmul.f32 %v3725, %v3736
      %v3762 = vmul.f32 %v3721, %v3740
      %v3763 = vmul.f32 %v3717, %v3744
      %v3764 = vmul.f32 %v3729, %v3748
      %v3765 = vmul.f32 %v3726, %v3736
      %v3766 = vmul.f32 %v3722, %v3740
      %v3767 = vmul.f32 %v3718, %v3744
      %v3768 = vmul.f32 %v3730, %v3748
      %3769 = vst [vmem:[#allocation3 + $0x280] sm:$0xff] %v3753
      %3770 = vst [vmem:[#allocation3 + $0x288] sm:$0xff] %v3754
      %3771 = vst [vmem:[#allocation3 + $0x290] sm:$0xff] %v3755
      %3772 = vst [vmem:[#allocation3 + $0x298] sm:$0xff] %v3756
      %3773 = vst [vmem:[#allocation3 + $0x2a0] sm:$0xff] %v3757
      %3774 = vst [vmem:[#allocation3 + $0x2a8] sm:$0xff] %v3758
      %3775 = vst [vmem:[#allocation3 + $0x2b0] sm:$0xff] %v3759
      %3776 = vst [vmem:[#allocation3 + $0x2b8] sm:$0xff] %v3760
      %3777 = vst [vmem:[#allocation3 + $0x2c0] sm:$0xff] %v3761
      %3778 = vst [vmem:[#allocation3 + $0x2c8] sm:$0xff] %v3762
      %3779 = vst [vmem:[#allocation3 + $0x2d0] sm:$0xff] %v3763
      %3780 = vst [vmem:[#allocation3 + $0x2d8] sm:$0xff] %v3764
      %3781 = vst [vmem:[#allocation3 + $0x2e0] sm:$0xff] %v3765
      %3782 = vst [vmem:[#allocation3 + $0x2e8] sm:$0xff] %v3766
      %3783 = vst [vmem:[#allocation3 + $0x2f0] sm:$0xff] %v3767
      %3784 = vst [vmem:[#allocation3 + $0x2f8] sm:$0xff] %v3768
      %3785 = vrot.lane.b32.xlu0 %v3243, 113
      %v3786 = vpop.permute.xlu0 %3785
      %3787 = vrot.lane.b32.xlu0 %v3247, 113
      %v3788 = vpop.permute.xlu0 %3787
      %3789 = vrot.lane.b32.xlu0 %v3251, 113
      %v3790 = vpop.permute.xlu0 %3789
      %3791 = vrot.lane.b32.xlu0 %v3255, 113
      %v3792 = vpop.permute.xlu0 %3791
      %3793 = vrot.lane.b32.xlu0 %v3244, 113
      %v3794 = vpop.permute.xlu0 %3793
      %3795 = vrot.lane.b32.xlu0 %v3248, 113
      %v3796 = vpop.permute.xlu0 %3795
      %3797 = vrot.lane.b32.xlu0 %v3252, 113
      %v3798 = vpop.permute.xlu0 %3797
      %3799 = vrot.lane.b32.xlu0 %v3256, 113
      %v3800 = vpop.permute.xlu0 %3799
      %3801 = vrot.lane.b32.xlu0 %v3245, 113
      %v3802 = vpop.permute.xlu0 %3801
      %3803 = vrot.lane.b32.xlu0 %v3249, 113
      %v3804 = vpop.permute.xlu0 %3803
      %3805 = vrot.lane.b32.xlu0 %v3253, 113
      %v3806 = vpop.permute.xlu0 %3805
      %3807 = vrot.lane.b32.xlu0 %v3257, 113
      %v3808 = vpop.permute.xlu0 %3807
      %3809 = vrot.lane.b32.xlu0 %v3246, 113
      %v3810 = vpop.permute.xlu0 %3809
      %3811 = vrot.lane.b32.xlu0 %v3250, 113
      %v3812 = vpop.permute.xlu0 %3811
      %3813 = vrot.lane.b32.xlu0 %v3254, 113
      %v3814 = vpop.permute.xlu0 %3813
      %3815 = vrot.lane.b32.xlu0 %v3258, 113
      %v3816 = vpop.permute.xlu0 %3815
      %v3817 = vsel %vm856, %v3802, %v3810
      %v3818 = vsel %vm856, %v3804, %v3812
      %v3819 = vsel %vm856, %v3806, %v3814
      %v3820 = vsel %vm856, %v3808, %v3816
      %v3821 = vsel %vm856, %v3794, %v3802
      %v3822 = vsel %vm856, %v3796, %v3804
      %v3823 = vsel %vm856, %v3798, %v3806
      %v3824 = vsel %vm856, %v3800, %v3808
      %v3825 = vsel %vm856, %v3786, %v3794
      %v3826 = vsel %vm856, %v3788, %v3796
      %v3827 = vsel %vm856, %v3790, %v3798
      %v3828 = vsel %vm856, %v3792, %v3800
      %v3829 = vsel %vm856, %v3810, %v3786
      %v3830 = vsel %vm856, %v3812, %v3788
      %v3831 = vsel %vm856, %v3814, %v3790
      %v3832 = vsel %vm856, %v3816, %v3792
      %v3833 = vld [vmem:[%s873] sm:$0xf]
      %v3835 = vlaneseq
      %v3836 = vshrl.u32 %v3835, 7
      %v3837 = vsub.s32 0, %v3836
      %v3838 = vrot.slane %v3833, %v3837
      %v3839 = vlaneseq
      %v3840 = vshrl.u32 %v3839, 7
      %v3841 = vsub.s32 1, %v3840
      %v3842 = vrot.slane %v3833, %v3841
      %v3843 = vlaneseq
      %v3844 = vshrl.u32 %v3843, 7
      %v3845 = vsub.s32 2, %v3844
      %v3846 = vrot.slane %v3833, %v3845
      %v3847 = vlaneseq
      %v3848 = vshrl.u32 %v3847, 7
      %v3849 = vsub.s32 3, %v3848
      %v3850 = vrot.slane %v3833, %v3849
      %v3855 = vmul.f32 %v3825, %v3838
      %v3856 = vmul.f32 %v3821, %v3842
      %v3857 = vmul.f32 %v3817, %v3846
      %v3858 = vmul.f32 %v3829, %v3850
      %v3859 = vmul.f32 %v3826, %v3838
      %v3860 = vmul.f32 %v3822, %v3842
      %v3861 = vmul.f32 %v3818, %v3846
      %v3862 = vmul.f32 %v3830, %v3850
      %v3863 = vmul.f32 %v3827, %v3838
      %v3864 = vmul.f32 %v3823, %v3842
      %v3865 = vmul.f32 %v3819, %v3846
      %v3866 = vmul.f32 %v3831, %v3850
      %v3867 = vmul.f32 %v3828, %v3838
      %v3868 = vmul.f32 %v3824, %v3842
      %v3869 = vmul.f32 %v3820, %v3846
      %v3870 = vmul.f32 %v3832, %v3850
      %3871 = vst [vmem:[#allocation3 + $0x300] sm:$0xff] %v3855
      %3872 = vst [vmem:[#allocation3 + $0x308] sm:$0xff] %v3856
      %3873 = vst [vmem:[#allocation3 + $0x310] sm:$0xff] %v3857
      %3874 = vst [vmem:[#allocation3 + $0x318] sm:$0xff] %v3858
      %3875 = vst [vmem:[#allocation3 + $0x320] sm:$0xff] %v3859
      %3876 = vst [vmem:[#allocation3 + $0x328] sm:$0xff] %v3860
      %3877 = vst [vmem:[#allocation3 + $0x330] sm:$0xff] %v3861
      %3878 = vst [vmem:[#allocation3 + $0x338] sm:$0xff] %v3862
      %3879 = vst [vmem:[#allocation3 + $0x340] sm:$0xff] %v3863
      %3880 = vst [vmem:[#allocation3 + $0x348] sm:$0xff] %v3864
      %3881 = vst [vmem:[#allocation3 + $0x350] sm:$0xff] %v3865
      %3882 = vst [vmem:[#allocation3 + $0x358] sm:$0xff] %v3866
      %3883 = vst [vmem:[#allocation3 + $0x360] sm:$0xff] %v3867
      %3884 = vst [vmem:[#allocation3 + $0x368] sm:$0xff] %v3868
      %3885 = vst [vmem:[#allocation3 + $0x370] sm:$0xff] %v3869
      %3886 = vst [vmem:[#allocation3 + $0x378] sm:$0xff] %v3870
      %3887 = vrot.lane.b32.xlu0 %v3243, 112
      %v3888 = vpop.permute.xlu0 %3887
      %3889 = vrot.lane.b32.xlu0 %v3247, 112
      %v3890 = vpop.permute.xlu0 %3889
      %3891 = vrot.lane.b32.xlu0 %v3251, 112
      %v3892 = vpop.permute.xlu0 %3891
      %3893 = vrot.lane.b32.xlu0 %v3255, 112
      %v3894 = vpop.permute.xlu0 %3893
      %3895 = vrot.lane.b32.xlu0 %v3244, 112
      %v3896 = vpop.permute.xlu0 %3895
      %3897 = vrot.lane.b32.xlu0 %v3248, 112
      %v3898 = vpop.permute.xlu0 %3897
      %3899 = vrot.lane.b32.xlu0 %v3252, 112
      %v3900 = vpop.permute.xlu0 %3899
      %3901 = vrot.lane.b32.xlu0 %v3256, 112
      %v3902 = vpop.permute.xlu0 %3901
      %3903 = vrot.lane.b32.xlu0 %v3245, 112
      %v3904 = vpop.permute.xlu0 %3903
      %3905 = vrot.lane.b32.xlu0 %v3249, 112
      %v3906 = vpop.permute.xlu0 %3905
      %3907 = vrot.lane.b32.xlu0 %v3253, 112
      %v3908 = vpop.permute.xlu0 %3907
      %3909 = vrot.lane.b32.xlu0 %v3257, 112
      %v3910 = vpop.permute.xlu0 %3909
      %3911 = vrot.lane.b32.xlu0 %v3246, 112
      %v3912 = vpop.permute.xlu0 %3911
      %3913 = vrot.lane.b32.xlu0 %v3250, 112
      %v3914 = vpop.permute.xlu0 %3913
      %3915 = vrot.lane.b32.xlu0 %v3254, 112
      %v3916 = vpop.permute.xlu0 %3915
      %3917 = vrot.lane.b32.xlu0 %v3258, 112
      %v3918 = vpop.permute.xlu0 %3917
      %v3919 = vsel %vm960, %v3904, %v3912
      %v3920 = vsel %vm960, %v3906, %v3914
      %v3921 = vsel %vm960, %v3908, %v3916
      %v3922 = vsel %vm960, %v3910, %v3918
      %v3923 = vsel %vm960, %v3896, %v3904
      %v3924 = vsel %vm960, %v3898, %v3906
      %v3925 = vsel %vm960, %v3900, %v3908
      %v3926 = vsel %vm960, %v3902, %v3910
      %v3927 = vsel %vm960, %v3888, %v3896
      %v3928 = vsel %vm960, %v3890, %v3898
      %v3929 = vsel %vm960, %v3892, %v3900
      %v3930 = vsel %vm960, %v3894, %v3902
      %v3931 = vsel %vm960, %v3912, %v3888
      %v3932 = vsel %vm960, %v3914, %v3890
      %v3933 = vsel %vm960, %v3916, %v3892
      %v3934 = vsel %vm960, %v3918, %v3894
      %v3935 = vld [vmem:[%s977] sm:$0xf]
      %v3937 = vlaneseq
      %v3938 = vshrl.u32 %v3937, 7
      %v3939 = vsub.s32 0, %v3938
      %v3940 = vrot.slane %v3935, %v3939
      %v3941 = vlaneseq
      %v3942 = vshrl.u32 %v3941, 7
      %v3943 = vsub.s32 1, %v3942
      %v3944 = vrot.slane %v3935, %v3943
      %v3945 = vlaneseq
      %v3946 = vshrl.u32 %v3945, 7
      %v3947 = vsub.s32 2, %v3946
      %v3948 = vrot.slane %v3935, %v3947
      %v3949 = vlaneseq
      %v3950 = vshrl.u32 %v3949, 7
      %v3951 = vsub.s32 3, %v3950
      %v3952 = vrot.slane %v3935, %v3951
      %v3957 = vmul.f32 %v3927, %v3940
      %v3958 = vmul.f32 %v3923, %v3944
      %v3959 = vmul.f32 %v3919, %v3948
      %v3960 = vmul.f32 %v3931, %v3952
      %v3961 = vmul.f32 %v3928, %v3940
      %v3962 = vmul.f32 %v3924, %v3944
      %v3963 = vmul.f32 %v3920, %v3948
      %v3964 = vmul.f32 %v3932, %v3952
      %v3965 = vmul.f32 %v3929, %v3940
      %v3966 = vmul.f32 %v3925, %v3944
      %v3967 = vmul.f32 %v3921, %v3948
      %v3968 = vmul.f32 %v3933, %v3952
      %v3969 = vmul.f32 %v3930, %v3940
      %v3970 = vmul.f32 %v3926, %v3944
      %v3971 = vmul.f32 %v3922, %v3948
      %v3972 = vmul.f32 %v3934, %v3952
      %3973 = vst [vmem:[#allocation3 + $0x380] sm:$0xff] %v3957
      %3974 = vst [vmem:[#allocation3 + $0x388] sm:$0xff] %v3958
      %3975 = vst [vmem:[#allocation3 + $0x390] sm:$0xff] %v3959
      %3976 = vst [vmem:[#allocation3 + $0x398] sm:$0xff] %v3960
      %3977 = vst [vmem:[#allocation3 + $0x3a0] sm:$0xff] %v3961
      %3978 = vst [vmem:[#allocation3 + $0x3a8] sm:$0xff] %v3962
      %3979 = vst [vmem:[#allocation3 + $0x3b0] sm:$0xff] %v3963
      %3980 = vst [vmem:[#allocation3 + $0x3b8] sm:$0xff] %v3964
      %3981 = vst [vmem:[#allocation3 + $0x3c0] sm:$0xff] %v3965
      %3982 = vst [vmem:[#allocation3 + $0x3c8] sm:$0xff] %v3966
      %3983 = vst [vmem:[#allocation3 + $0x3d0] sm:$0xff] %v3967
      %3984 = vst [vmem:[#allocation3 + $0x3d8] sm:$0xff] %v3968
      %3985 = vst [vmem:[#allocation3 + $0x3e0] sm:$0xff] %v3969
      %3986 = vst [vmem:[#allocation3 + $0x3e8] sm:$0xff] %v3970
      %3987 = vst [vmem:[#allocation3 + $0x3f0] sm:$0xff] %v3971
      %3988 = vst [vmem:[#allocation3 + $0x3f8] sm:$0xff] %v3972
      %3989 = vrot.lane.b32.xlu0 %v3243, 111
      %v3990 = vpop.permute.xlu0 %3989
      %3991 = vrot.lane.b32.xlu0 %v3247, 111
      %v3992 = vpop.permute.xlu0 %3991
      %3993 = vrot.lane.b32.xlu0 %v3251, 111
      %v3994 = vpop.permute.xlu0 %3993
      %3995 = vrot.lane.b32.xlu0 %v3255, 111
      %v3996 = vpop.permute.xlu0 %3995
      %3997 = vrot.lane.b32.xlu0 %v3244, 111
      %v3998 = vpop.permute.xlu0 %3997
      %3999 = vrot.lane.b32.xlu0 %v3248, 111
      %v4000 = vpop.permute.xlu0 %3999
      %4001 = vrot.lane.b32.xlu0 %v3252, 111
      %v4002 = vpop.permute.xlu0 %4001
      %4003 = vrot.lane.b32.xlu0 %v3256, 111
      %v4004 = vpop.permute.xlu0 %4003
      %4005 = vrot.lane.b32.xlu0 %v3245, 111
      %v4006 = vpop.permute.xlu0 %4005
      %4007 = vrot.lane.b32.xlu0 %v3249, 111
      %v4008 = vpop.permute.xlu0 %4007
      %4009 = vrot.lane.b32.xlu0 %v3253, 111
      %v4010 = vpop.permute.xlu0 %4009
      %4011 = vrot.lane.b32.xlu0 %v3257, 111
      %v4012 = vpop.permute.xlu0 %4011
      %4013 = vrot.lane.b32.xlu0 %v3246, 111
      %v4014 = vpop.permute.xlu0 %4013
      %4015 = vrot.lane.b32.xlu0 %v3250, 111
      %v4016 = vpop.permute.xlu0 %4015
      %4017 = vrot.lane.b32.xlu0 %v3254, 111
      %v4018 = vpop.permute.xlu0 %4017
      %4019 = vrot.lane.b32.xlu0 %v3258, 111
      %v4020 = vpop.permute.xlu0 %4019
      %v4021 = vsel %vm1064, %v4006, %v4014
      %v4022 = vsel %vm1064, %v4008, %v4016
      %v4023 = vsel %vm1064, %v4010, %v4018
      %v4024 = vsel %vm1064, %v4012, %v4020
      %v4025 = vsel %vm1064, %v3998, %v4006
      %v4026 = vsel %vm1064, %v4000, %v4008
      %v4027 = vsel %vm1064, %v4002, %v4010
      %v4028 = vsel %vm1064, %v4004, %v4012
      %v4029 = vsel %vm1064, %v3990, %v3998
      %v4030 = vsel %vm1064, %v3992, %v4000
      %v4031 = vsel %vm1064, %v3994, %v4002
      %v4032 = vsel %vm1064, %v3996, %v4004
      %v4033 = vsel %vm1064, %v4014, %v3990
      %v4034 = vsel %vm1064, %v4016, %v3992
      %v4035 = vsel %vm1064, %v4018, %v3994
      %v4036 = vsel %vm1064, %v4020, %v3996
      %v4037 = vld [vmem:[%s1081] sm:$0xf]
      %v4039 = vlaneseq
      %v4040 = vshrl.u32 %v4039, 7
      %v4041 = vsub.s32 0, %v4040
      %v4042 = vrot.slane %v4037, %v4041
      %v4043 = vlaneseq
      %v4044 = vshrl.u32 %v4043, 7
      %v4045 = vsub.s32 1, %v4044
      %v4046 = vrot.slane %v4037, %v4045
      %v4047 = vlaneseq
      %v4048 = vshrl.u32 %v4047, 7
      %v4049 = vsub.s32 2, %v4048
      %v4050 = vrot.slane %v4037, %v4049
      %v4051 = vlaneseq
      %v4052 = vshrl.u32 %v4051, 7
      %v4053 = vsub.s32 3, %v4052
      %v4054 = vrot.slane %v4037, %v4053
      %v4059 = vmul.f32 %v4029, %v4042
      %v4060 = vmul.f32 %v4025, %v4046
      %v4061 = vmul.f32 %v4021, %v4050
      %v4062 = vmul.f32 %v4033, %v4054
      %v4063 = vmul.f32 %v4030, %v4042
      %v4064 = vmul.f32 %v4026, %v4046
      %v4065 = vmul.f32 %v4022, %v4050
      %v4066 = vmul.f32 %v4034, %v4054
      %v4067 = vmul.f32 %v4031, %v4042
      %v4068 = vmul.f32 %v4027, %v4046
      %v4069 = vmul.f32 %v4023, %v4050
      %v4070 = vmul.f32 %v4035, %v4054
      %v4071 = vmul.f32 %v4032, %v4042
      %v4072 = vmul.f32 %v4028, %v4046
      %v4073 = vmul.f32 %v4024, %v4050
      %v4074 = vmul.f32 %v4036, %v4054
      %4075 = vst [vmem:[#allocation3 + $0x400] sm:$0xff] %v4059
      %4076 = vst [vmem:[#allocation3 + $0x408] sm:$0xff] %v4060
      %4077 = vst [vmem:[#allocation3 + $0x410] sm:$0xff] %v4061
      %4078 = vst [vmem:[#allocation3 + $0x418] sm:$0xff] %v4062
      %4079 = vst [vmem:[#allocation3 + $0x420] sm:$0xff] %v4063
      %4080 = vst [vmem:[#allocation3 + $0x428] sm:$0xff] %v4064
      %4081 = vst [vmem:[#allocation3 + $0x430] sm:$0xff] %v4065
      %4082 = vst [vmem:[#allocation3 + $0x438] sm:$0xff] %v4066
      %4083 = vst [vmem:[#allocation3 + $0x440] sm:$0xff] %v4067
      %4084 = vst [vmem:[#allocation3 + $0x448] sm:$0xff] %v4068
      %4085 = vst [vmem:[#allocation3 + $0x450] sm:$0xff] %v4069
      %4086 = vst [vmem:[#allocation3 + $0x458] sm:$0xff] %v4070
      %4087 = vst [vmem:[#allocation3 + $0x460] sm:$0xff] %v4071
      %4088 = vst [vmem:[#allocation3 + $0x468] sm:$0xff] %v4072
      %4089 = vst [vmem:[#allocation3 + $0x470] sm:$0xff] %v4073
      %4090 = vst [vmem:[#allocation3 + $0x478] sm:$0xff] %v4074
      %s4091 = scalar_lea.vmem %s2, 192
      %v4092 = vld [vmem:[%s4091] sm:$0xff]
      %v4093 = vld [vmem:[%s4091 + $0x8] sm:$0xff]
      %v4094 = vld [vmem:[%s4091 + $0x10] sm:$0xff]
      %v4095 = vld [vmem:[%s4091 + $0x18] sm:$0xff]
      %v4096 = vld [vmem:[%s4091 + $0x20] sm:$0xff]
      %v4097 = vld [vmem:[%s4091 + $0x28] sm:$0xff]
      %v4098 = vld [vmem:[%s4091 + $0x30] sm:$0xff]
      %v4099 = vld [vmem:[%s4091 + $0x38] sm:$0xff]
      %v4100 = vld [vmem:[%s4091 + $0x40] sm:$0xff]
      %v4101 = vld [vmem:[%s4091 + $0x48] sm:$0xff]
      %v4102 = vld [vmem:[%s4091 + $0x50] sm:$0xff]
      %v4103 = vld [vmem:[%s4091 + $0x58] sm:$0xff]
      %v4104 = vld [vmem:[#allocation3] sm:$0xff]
      %v4105 = vld [vmem:[#allocation3 + $0x8] sm:$0xff]
      %v4106 = vld [vmem:[#allocation3 + $0x10] sm:$0xff]
      %v4107 = vld [vmem:[#allocation3 + $0x18] sm:$0xff]
      %v4108 = vld [vmem:[#allocation3 + $0x20] sm:$0xff]
      %v4109 = vld [vmem:[#allocation3 + $0x28] sm:$0xff]
      %v4110 = vld [vmem:[#allocation3 + $0x30] sm:$0xff]
      %v4111 = vld [vmem:[#allocation3 + $0x38] sm:$0xff]
      %v4112 = vld [vmem:[#allocation3 + $0x40] sm:$0xff]
      %v4113 = vld [vmem:[#allocation3 + $0x48] sm:$0xff]
      %v4114 = vld [vmem:[#allocation3 + $0x50] sm:$0xff]
      %v4115 = vld [vmem:[#allocation3 + $0x58] sm:$0xff]
      %v4116 = vld [vmem:[#allocation3 + $0x60] sm:$0xff]
      %v4117 = vld [vmem:[#allocation3 + $0x68] sm:$0xff]
      %v4118 = vld [vmem:[#allocation3 + $0x70] sm:$0xff]
      %v4119 = vld [vmem:[#allocation3 + $0x78] sm:$0xff]
      %v4120 = vld [vmem:[#allocation3 + $0x80] sm:$0xff]
      %v4121 = vld [vmem:[#allocation3 + $0x88] sm:$0xff]
      %v4122 = vld [vmem:[#allocation3 + $0x90] sm:$0xff]
      %v4123 = vld [vmem:[#allocation3 + $0x98] sm:$0xff]
      %v4124 = vld [vmem:[#allocation3 + $0xa0] sm:$0xff]
      %v4125 = vld [vmem:[#allocation3 + $0xa8] sm:$0xff]
      %v4126 = vld [vmem:[#allocation3 + $0xb0] sm:$0xff]
      %v4127 = vld [vmem:[#allocation3 + $0xb8] sm:$0xff]
      %v4128 = vld [vmem:[#allocation3 + $0xc0] sm:$0xff]
      %v4129 = vld [vmem:[#allocation3 + $0xc8] sm:$0xff]
      %v4130 = vld [vmem:[#allocation3 + $0xd0] sm:$0xff]
      %v4131 = vld [vmem:[#allocation3 + $0xd8] sm:$0xff]
      %v4132 = vld [vmem:[#allocation3 + $0xe0] sm:$0xff]
      %v4133 = vld [vmem:[#allocation3 + $0xe8] sm:$0xff]
      %v4134 = vld [vmem:[#allocation3 + $0xf0] sm:$0xff]
      %v4135 = vld [vmem:[#allocation3 + $0xf8] sm:$0xff]
      %v4136 = vld [vmem:[#allocation3 + $0x100] sm:$0xff]
      %v4137 = vld [vmem:[#allocation3 + $0x108] sm:$0xff]
      %v4138 = vld [vmem:[#allocation3 + $0x110] sm:$0xff]
      %v4139 = vld [vmem:[#allocation3 + $0x118] sm:$0xff]
      %v4140 = vld [vmem:[#allocation3 + $0x120] sm:$0xff]
      %v4141 = vld [vmem:[#allocation3 + $0x128] sm:$0xff]
      %v4142 = vld [vmem:[#allocation3 + $0x130] sm:$0xff]
      %v4143 = vld [vmem:[#allocation3 + $0x138] sm:$0xff]
      %v4144 = vld [vmem:[#allocation3 + $0x140] sm:$0xff]
      %v4145 = vld [vmem:[#allocation3 + $0x148] sm:$0xff]
      %v4146 = vld [vmem:[#allocation3 + $0x150] sm:$0xff]
      %v4147 = vld [vmem:[#allocation3 + $0x158] sm:$0xff]
      %v4148 = vld [vmem:[#allocation3 + $0x160] sm:$0xff]
      %v4149 = vld [vmem:[#allocation3 + $0x168] sm:$0xff]
      %v4150 = vld [vmem:[#allocation3 + $0x170] sm:$0xff]
      %v4151 = vld [vmem:[#allocation3 + $0x178] sm:$0xff]
      %v4152 = vld [vmem:[#allocation3 + $0x180] sm:$0xff]
      %v4153 = vld [vmem:[#allocation3 + $0x188] sm:$0xff]
      %v4154 = vld [vmem:[#allocation3 + $0x190] sm:$0xff]
      %v4155 = vld [vmem:[#allocation3 + $0x198] sm:$0xff]
      %v4156 = vld [vmem:[#allocation3 + $0x1a0] sm:$0xff]
      %v4157 = vld [vmem:[#allocation3 + $0x1a8] sm:$0xff]
      %v4158 = vld [vmem:[#allocation3 + $0x1b0] sm:$0xff]
      %v4159 = vld [vmem:[#allocation3 + $0x1b8] sm:$0xff]
      %v4160 = vld [vmem:[#allocation3 + $0x1c0] sm:$0xff]
      %v4161 = vld [vmem:[#allocation3 + $0x1c8] sm:$0xff]
      %v4162 = vld [vmem:[#allocation3 + $0x1d0] sm:$0xff]
      %v4163 = vld [vmem:[#allocation3 + $0x1d8] sm:$0xff]
      %v4164 = vld [vmem:[#allocation3 + $0x1e0] sm:$0xff]
      %v4165 = vld [vmem:[#allocation3 + $0x1e8] sm:$0xff]
      %v4166 = vld [vmem:[#allocation3 + $0x1f0] sm:$0xff]
      %v4167 = vld [vmem:[#allocation3 + $0x1f8] sm:$0xff]
      %v4168 = vld [vmem:[#allocation3 + $0x200] sm:$0xff]
      %v4169 = vld [vmem:[#allocation3 + $0x208] sm:$0xff]
      %v4170 = vld [vmem:[#allocation3 + $0x210] sm:$0xff]
      %v4171 = vld [vmem:[#allocation3 + $0x218] sm:$0xff]
      %v4172 = vld [vmem:[#allocation3 + $0x220] sm:$0xff]
      %v4173 = vld [vmem:[#allocation3 + $0x228] sm:$0xff]
      %v4174 = vld [vmem:[#allocation3 + $0x230] sm:$0xff]
      %v4175 = vld [vmem:[#allocation3 + $0x238] sm:$0xff]
      %v4176 = vld [vmem:[#allocation3 + $0x240] sm:$0xff]
      %v4177 = vld [vmem:[#allocation3 + $0x248] sm:$0xff]
      %v4178 = vld [vmem:[#allocation3 + $0x250] sm:$0xff]
      %v4179 = vld [vmem:[#allocation3 + $0x258] sm:$0xff]
      %v4180 = vld [vmem:[#allocation3 + $0x260] sm:$0xff]
      %v4181 = vld [vmem:[#allocation3 + $0x268] sm:$0xff]
      %v4182 = vld [vmem:[#allocation3 + $0x270] sm:$0xff]
      %v4183 = vld [vmem:[#allocation3 + $0x278] sm:$0xff]
      %v4184 = vld [vmem:[#allocation3 + $0x280] sm:$0xff]
      %v4185 = vld [vmem:[#allocation3 + $0x288] sm:$0xff]
      %v4186 = vld [vmem:[#allocation3 + $0x290] sm:$0xff]
      %v4187 = vld [vmem:[#allocation3 + $0x298] sm:$0xff]
      %v4188 = vld [vmem:[#allocation3 + $0x2a0] sm:$0xff]
      %v4189 = vld [vmem:[#allocation3 + $0x2a8] sm:$0xff]
      %v4190 = vld [vmem:[#allocation3 + $0x2b0] sm:$0xff]
      %v4191 = vld [vmem:[#allocation3 + $0x2b8] sm:$0xff]
      %v4192 = vld [vmem:[#allocation3 + $0x2c0] sm:$0xff]
      %v4193 = vld [vmem:[#allocation3 + $0x2c8] sm:$0xff]
      %v4194 = vld [vmem:[#allocation3 + $0x2d0] sm:$0xff]
      %v4195 = vld [vmem:[#allocation3 + $0x2d8] sm:$0xff]
      %v4196 = vld [vmem:[#allocation3 + $0x2e0] sm:$0xff]
      %v4197 = vld [vmem:[#allocation3 + $0x2e8] sm:$0xff]
      %v4198 = vld [vmem:[#allocation3 + $0x2f0] sm:$0xff]
      %v4199 = vld [vmem:[#allocation3 + $0x2f8] sm:$0xff]
      %v4200 = vld [vmem:[#allocation3 + $0x300] sm:$0xff]
      %v4201 = vld [vmem:[#allocation3 + $0x308] sm:$0xff]
      %v4202 = vld [vmem:[#allocation3 + $0x310] sm:$0xff]
      %v4203 = vld [vmem:[#allocation3 + $0x318] sm:$0xff]
      %v4204 = vld [vmem:[#allocation3 + $0x320] sm:$0xff]
      %v4205 = vld [vmem:[#allocation3 + $0x328] sm:$0xff]
      %v4206 = vld [vmem:[#allocation3 + $0x330] sm:$0xff]
      %v4207 = vld [vmem:[#allocation3 + $0x338] sm:$0xff]
      %v4208 = vld [vmem:[#allocation3 + $0x340] sm:$0xff]
      %v4209 = vld [vmem:[#allocation3 + $0x348] sm:$0xff]
      %v4210 = vld [vmem:[#allocation3 + $0x350] sm:$0xff]
      %v4211 = vld [vmem:[#allocation3 + $0x358] sm:$0xff]
      %v4212 = vld [vmem:[#allocation3 + $0x360] sm:$0xff]
      %v4213 = vld [vmem:[#allocation3 + $0x368] sm:$0xff]
      %v4214 = vld [vmem:[#allocation3 + $0x370] sm:$0xff]
      %v4215 = vld [vmem:[#allocation3 + $0x378] sm:$0xff]
      %v4216 = vld [vmem:[#allocation3 + $0x380] sm:$0xff]
      %v4217 = vld [vmem:[#allocation3 + $0x388] sm:$0xff]
      %v4218 = vld [vmem:[#allocation3 + $0x390] sm:$0xff]
      %v4219 = vld [vmem:[#allocation3 + $0x398] sm:$0xff]
      %v4220 = vld [vmem:[#allocation3 + $0x3a0] sm:$0xff]
      %v4221 = vld [vmem:[#allocation3 + $0x3a8] sm:$0xff]
      %v4222 = vld [vmem:[#allocation3 + $0x3b0] sm:$0xff]
      %v4223 = vld [vmem:[#allocation3 + $0x3b8] sm:$0xff]
      %v4224 = vld [vmem:[#allocation3 + $0x3c0] sm:$0xff]
      %v4225 = vld [vmem:[#allocation3 + $0x3c8] sm:$0xff]
      %v4226 = vld [vmem:[#allocation3 + $0x3d0] sm:$0xff]
      %v4227 = vld [vmem:[#allocation3 + $0x3d8] sm:$0xff]
      %v4228 = vld [vmem:[#allocation3 + $0x3e0] sm:$0xff]
      %v4229 = vld [vmem:[#allocation3 + $0x3e8] sm:$0xff]
      %v4230 = vld [vmem:[#allocation3 + $0x3f0] sm:$0xff]
      %v4231 = vld [vmem:[#allocation3 + $0x3f8] sm:$0xff]
      %v4232 = vld [vmem:[#allocation3 + $0x400] sm:$0xff]
      %v4233 = vld [vmem:[#allocation3 + $0x408] sm:$0xff]
      %v4234 = vld [vmem:[#allocation3 + $0x410] sm:$0xff]
      %v4235 = vld [vmem:[#allocation3 + $0x418] sm:$0xff]
      %v4236 = vld [vmem:[#allocation3 + $0x420] sm:$0xff]
      %v4237 = vld [vmem:[#allocation3 + $0x428] sm:$0xff]
      %v4238 = vld [vmem:[#allocation3 + $0x430] sm:$0xff]
      %v4239 = vld [vmem:[#allocation3 + $0x438] sm:$0xff]
      %v4240 = vld [vmem:[#allocation3 + $0x440] sm:$0xff]
      %v4241 = vld [vmem:[#allocation3 + $0x448] sm:$0xff]
      %v4242 = vld [vmem:[#allocation3 + $0x450] sm:$0xff]
      %v4243 = vld [vmem:[#allocation3 + $0x458] sm:$0xff]
      %v4244 = vld [vmem:[#allocation3 + $0x460] sm:$0xff]
      %v4245 = vld [vmem:[#allocation3 + $0x468] sm:$0xff]
      %v4246 = vld [vmem:[#allocation3 + $0x470] sm:$0xff]
      %v4247 = vld [vmem:[#allocation3 + $0x478] sm:$0xff]
      %v4249 = vsel %vm1292, %v4094, 0
      %v4252 = vsel %vm1292, %v4097, 0
      %v4255 = vsel %vm1292, %v4100, 0
      %v4258 = vsel %vm1292, %v4103, 0
      %4260 = vmatprep.subr.mxu0 %v4105
      %4261 = vmatpush1.msra.mxu0 %v4104
      %4262 = vmatprep.subr.mxu0 %v4109
      %4263 = vmatpush1.msra.mxu0 %v4108
      %4264 = vmatprep.subr.mxu0 %v4113
      %4265 = vmatpush1.msra.mxu0 %v4112
      %4266 = vmatprep.subr.mxu0 %v4117
      %4267 = vmatpush1.msra.mxu0 %v4116
      %4268 = vmatprep.subr.mxu0 %v4121
      %4269 = vmatpush1.msra.mxu0 %v4120
      %4270 = vmatprep.subr.mxu0 %v4125
      %4271 = vmatpush1.msra.mxu0 %v4124
      %4272 = vmatprep.subr.mxu0 %v4129
      %4273 = vmatpush1.msra.mxu0 %v4128
      %4274 = vmatprep.subr.mxu0 %v4133
      %4275 = vmatpush1.msra.mxu0 %v4132
      %4276 = vmatprep.subr.mxu0 %v4137
      %4277 = vmatpush1.msra.mxu0 %v4136
      %4278 = vmatprep.subr.mxu0 %v4141
      %4279 = vmatpush1.msra.mxu0 %v4140
      %4280 = vmatprep.subr.mxu0 %v4145
      %4281 = vmatpush1.msra.mxu0 %v4144
      %4282 = vmatprep.subr.mxu0 %v4149
      %4283 = vmatpush1.msra.mxu0 %v4148
      %4284 = vmatprep.subr.mxu0 %v4153
      %4285 = vmatpush1.msra.mxu0 %v4152
      %4286 = vmatprep.subr.mxu0 %v4157
      %4287 = vmatpush1.msra.mxu0 %v4156
      %4288 = vmatprep.subr.mxu0 %v4161
      %4289 = vmatpush1.msra.mxu0 %v4160
      %4290 = vmatprep.subr.mxu0 %v4165
      %4291 = vmatpush1.msra.mxu0 %v4164
      %4292 = vmatprep.subr.mxu0 %v4169
      %4293 = vmatpush1.msra.mxu0 %v4168
      %4294 = vmatprep.subr.mxu0 %v4173
      %4295 = vmatpush1.msra.mxu0 %v4172
      %4296 = vmatprep.subr.mxu0 %v4177
      %4297 = vmatpush1.msra.mxu0 %v4176
      %4298 = vmatprep.subr.mxu0 %v4181
      %4299 = vmatpush1.msra.mxu0 %v4180
      %4300 = vmatprep.subr.mxu0 %v4185
      %4301 = vmatpush1.msra.mxu0 %v4184
      %4302 = vmatprep.subr.mxu0 %v4189
      %4303 = vmatpush1.msra.mxu0 %v4188
      %4304 = vmatprep.subr.mxu0 %v4193
      %4305 = vmatpush1.msra.mxu0 %v4192
      %4306 = vmatprep.subr.mxu0 %v4197
      %4307 = vmatpush1.msra.mxu0 %v4196
      %4308 = vmatprep.subr.mxu0 %v4201
      %4309 = vmatpush1.msra.mxu0 %v4200
      %4310 = vmatprep.subr.mxu0 %v4205
      %4311 = vmatpush1.msra.mxu0 %v4204
      %4312 = vmatprep.subr.mxu0 %v4209
      %4313 = vmatpush1.msra.mxu0 %v4208
      %4314 = vmatprep.subr.mxu0 %v4213
      %4315 = vmatpush1.msra.mxu0 %v4212
      %4316 = vmatprep.subr.mxu0 %v4217
      %4317 = vmatpush1.msra.mxu0 %v4216
      %4318 = vmatprep.subr.mxu0 %v4221
      %4319 = vmatpush1.msra.mxu0 %v4220
      %4320 = vmatprep.subr.mxu0 %v4225
      %4321 = vmatpush1.msra.mxu0 %v4224
      %4322 = vmatprep.subr.mxu0 %v4229
      %4323 = vmatpush1.msra.mxu0 %v4228
      %4324 = vmatprep.mubr.f32.mxu0 %v4093
      %4325 = vmatmul.mubr.f32.gmra.mrb[0].mxu0 %v4092
      %v4326 = vpop.f32.mrb[0].mxu0
      %v4327 = vadd.f32 0.0, %v4326
      %v4328 = vpop.f32.mrb[0].mxu0
      %v4329 = vadd.f32 0.0, %v4328
      %4330 = vmatprep.mubr.f32.mxu0 %v4096
      %4331 = vmatmul.mubr.f32.gmra.mrb[0].mxu0 %v4095
      %v4332 = vpop.f32.mrb[0].mxu0
      %v4333 = vadd.f32 0.0, %v4332
      %v4334 = vpop.f32.mrb[0].mxu0
      %v4335 = vadd.f32 0.0, %v4334
      %4336 = vmatprep.mubr.f32.mxu0 %v4099
      %4337 = vmatmul.mubr.f32.gmra.mrb[0].mxu0 %v4098
      %v4338 = vpop.f32.mrb[0].mxu0
      %v4339 = vadd.f32 0.0, %v4338
      %v4340 = vpop.f32.mrb[0].mxu0
      %v4341 = vadd.f32 0.0, %v4340
      %4342 = vmatprep.mubr.f32.mxu0 %v4102
      %4343 = vmatmul.mubr.f32.gmra.mrb[0].mxu0 %v4101
      %v4344 = vpop.f32.mrb[0].mxu0
      %v4345 = vadd.f32 0.0, %v4344
      %v4346 = vpop.f32.mrb[0].mxu0
      %v4347 = vadd.f32 0.0, %v4346
      %4348 = vdwg.mxu0
      %4349 = vmatprep.subr.mxu0 %v4233
      %4350 = vmatpush1.msra.mxu0 %v4232
      %4351 = vmatprep.subr.mxu0 %v4237
      %4352 = vmatpush1.msra.mxu0 %v4236
      %4353 = vmatprep.subr.mxu0 %v4241
      %4354 = vmatpush1.msra.mxu0 %v4240
      %4355 = vmatprep.subr.mxu0 %v4245
      %4356 = vmatpush1.msra.mxu0 %v4244
      %4357 = vmatprep.subr.mxu0 0.0
      %4358 = vmatpush1.msra.mxu0 0.0
      %4359 = vmatprep.subr.mxu0 0.0
      %4360 = vmatpush1.msra.mxu0 0.0
      %4361 = vmatprep.subr.mxu0 0.0
      %4362 = vmatpush1.msra.mxu0 0.0
      %4363 = vmatprep.subr.mxu0 0.0
      %4364 = vmatpush1.msra.mxu0 0.0
      %4365 = vmatprep.subr.mxu0 0.0
      %4366 = vmatpush1.msra.mxu0 0.0
      %4367 = vmatprep.subr.mxu0 0.0
      %4368 = vmatpush1.msra.mxu0 0.0
      %4369 = vmatprep.subr.mxu0 0.0
      %4370 = vmatpush1.msra.mxu0 0.0
      %4371 = vmatprep.subr.mxu0 0.0
      %4372 = vmatpush1.msra.mxu0 0.0
      %4373 = vmatprep.subr.mxu0 0.0
      %4374 = vmatpush1.msra.mxu0 0.0
      %4375 = vmatprep.subr.mxu0 0.0
      %4376 = vmatpush1.msra.mxu0 0.0
      %4377 = vmatprep.subr.mxu0 0.0
      %4378 = vmatpush1.msra.mxu0 0.0
      %4379 = vmatprep.subr.mxu0 0.0
      %4380 = vmatpush1.msra.mxu0 0.0
      %4381 = vmatprep.subr.mxu0 0.0
      %4382 = vmatpush1.msra.mxu0 0.0
      %4383 = vmatprep.subr.mxu0 0.0
      %4384 = vmatpush1.msra.mxu0 0.0
      %4385 = vmatprep.subr.mxu0 0.0
      %4386 = vmatpush1.msra.mxu0 0.0
      %4387 = vmatprep.subr.mxu0 0.0
      %4388 = vmatpush1.msra.mxu0 0.0
      %4389 = vmatprep.subr.mxu0 0.0
      %4390 = vmatpush1.msra.mxu0 0.0
      %4391 = vmatprep.subr.mxu0 0.0
      %4392 = vmatpush1.msra.mxu0 0.0
      %4393 = vmatprep.subr.mxu0 0.0
      %4394 = vmatpush1.msra.mxu0 0.0
      %4395 = vmatprep.subr.mxu0 0.0
      %4396 = vmatpush1.msra.mxu0 0.0
      %4397 = vmatprep.subr.mxu0 0.0
      %4398 = vmatpush1.msra.mxu0 0.0
      %4399 = vmatprep.subr.mxu0 0.0
      %4400 = vmatpush1.msra.mxu0 0.0
      %4401 = vmatprep.subr.mxu0 0.0
      %4402 = vmatpush1.msra.mxu0 0.0
      %4403 = vmatprep.subr.mxu0 0.0
      %4404 = vmatpush1.msra.mxu0 0.0
      %4405 = vmatprep.subr.mxu0 0.0
      %4406 = vmatpush1.msra.mxu0 0.0
      %4407 = vmatprep.subr.mxu0 0.0
      %4408 = vmatpush1.msra.mxu0 0.0
      %4409 = vmatprep.subr.mxu0 0.0
      %4410 = vmatpush1.msra.mxu0 0.0
      %4411 = vmatprep.subr.mxu0 0.0
      %4412 = vmatpush1.msra.mxu0 0.0
      %4413 = vmatprep.mubr.f32.mxu0 0.0
      %4414 = vmatmul.mubr.f32.gmra.mrb[0].mxu0 %v4249
      %v4415 = vpop.f32.mrb[0].mxu0
      %v4416 = vadd.f32 %v4327, %v4415
      %v4417 = vpop.f32.mrb[0].mxu0
      %v4418 = vadd.f32 %v4329, %v4417
      %4419 = vmatprep.mubr.f32.mxu0 0.0
      %4420 = vmatmul.mubr.f32.gmra.mrb[0].mxu0 %v4252
      %v4421 = vpop.f32.mrb[0].mxu0
      %v4422 = vadd.f32 %v4333, %v4421
      %v4423 = vpop.f32.mrb[0].mxu0
      %v4424 = vadd.f32 %v4335, %v4423
      %4425 = vmatprep.mubr.f32.mxu0 0.0
      %4426 = vmatmul.mubr.f32.gmra.mrb[0].mxu0 %v4255
      %v4427 = vpop.f32.mrb[0].mxu0
      %v4428 = vadd.f32 %v4339, %v4427
      %v4429 = vpop.f32.mrb[0].mxu0
      %v4430 = vadd.f32 %v4341, %v4429
      %4431 = vmatprep.mubr.f32.mxu0 0.0
      %4432 = vmatmul.mubr.f32.gmra.mrb[0].mxu0 %v4258
      %v4433 = vpop.f32.mrb[0].mxu0
      %v4434 = vadd.f32 %v4345, %v4433
      %v4435 = vpop.f32.mrb[0].mxu0
      %v4436 = vadd.f32 %v4347, %v4435
      %4437 = vdwg.mxu0
      %4438 = vmatprep.subr.mxu0 %v4107
      %4439 = vmatpush1.msra.mxu0 %v4106
      %4440 = vmatprep.subr.mxu0 %v4111
      %4441 = vmatpush1.msra.mxu0 %v4110
      %4442 = vmatprep.subr.mxu0 %v4115
      %4443 = vmatpush1.msra.mxu0 %v4114
      %4444 = vmatprep.subr.mxu0 %v4119
      %4445 = vmatpush1.msra.mxu0 %v4118
      %4446 = vmatprep.subr.mxu0 %v4123
      %4447 = vmatpush1.msra.mxu0 %v4122
      %4448 = vmatprep.subr.mxu0 %v4127
      %4449 = vmatpush1.msra.mxu0 %v4126
      %4450 = vmatprep.subr.mxu0 %v4131
      %4451 = vmatpush1.msra.mxu0 %v4130
      %4452 = vmatprep.subr.mxu0 %v4135
      %4453 = vmatpush1.msra.mxu0 %v4134
      %4454 = vmatprep.subr.mxu0 %v4139
      %4455 = vmatpush1.msra.mxu0 %v4138
      %4456 = vmatprep.subr.mxu0 %v4143
      %4457 = vmatpush1.msra.mxu0 %v4142
      %4458 = vmatprep.subr.mxu0 %v4147
      %4459 = vmatpush1.msra.mxu0 %v4146
      %4460 = vmatprep.subr.mxu0 %v4151
      %4461 = vmatpush1.msra.mxu0 %v4150
      %4462 = vmatprep.subr.mxu0 %v4155
      %4463 = vmatpush1.msra.mxu0 %v4154
      %4464 = vmatprep.subr.mxu0 %v4159
      %4465 = vmatpush1.msra.mxu0 %v4158
      %4466 = vmatprep.subr.mxu0 %v4163
      %4467 = vmatpush1.msra.mxu0 %v4162
      %4468 = vmatprep.subr.mxu0 %v4167
      %4469 = vmatpush1.msra.mxu0 %v4166
      %4470 = vmatprep.subr.mxu0 %v4171
      %4471 = vmatpush1.msra.mxu0 %v4170
      %4472 = vmatprep.subr.mxu0 %v4175
      %4473 = vmatpush1.msra.mxu0 %v4174
      %4474 = vmatprep.subr.mxu0 %v4179
      %4475 = vmatpush1.msra.mxu0 %v4178
      %4476 = vmatprep.subr.mxu0 %v4183
      %4477 = vmatpush1.msra.mxu0 %v4182
      %4478 = vmatprep.subr.mxu0 %v4187
      %4479 = vmatpush1.msra.mxu0 %v4186
      %4480 = vmatprep.subr.mxu0 %v4191
      %4481 = vmatpush1.msra.mxu0 %v4190
      %4482 = vmatprep.subr.mxu0 %v4195
      %4483 = vmatpush1.msra.mxu0 %v4194
      %4484 = vmatprep.subr.mxu0 %v4199
      %4485 = vmatpush1.msra.mxu0 %v4198
      %4486 = vmatprep.subr.mxu0 %v4203
      %4487 = vmatpush1.msra.mxu0 %v4202
      %4488 = vmatprep.subr.mxu0 %v4207
      %4489 = vmatpush1.msra.mxu0 %v4206
      %4490 = vmatprep.subr.mxu0 %v4211
      %4491 = vmatpush1.msra.mxu0 %v4210
      %4492 = vmatprep.subr.mxu0 %v4215
      %4493 = vmatpush1.msra.mxu0 %v4214
      %4494 = vmatprep.subr.mxu0 %v4219
      %4495 = vmatpush1.msra.mxu0 %v4218
      %4496 = vmatprep.subr.mxu0 %v4223
      %4497 = vmatpush1.msra.mxu0 %v4222
      %4498 = vmatprep.subr.mxu0 %v4227
      %4499 = vmatpush1.msra.mxu0 %v4226
      %4500 = vmatprep.subr.mxu0 %v4231
      %4501 = vmatpush1.msra.mxu0 %v4230
      %4502 = vmatprep.mubr.f32.mxu0 %v4093
      %4503 = vmatmul.mubr.f32.gmra.mrb[0].mxu0 %v4092
      %v4504 = vpop.f32.mrb[0].mxu0
      %v4505 = vadd.f32 0.0, %v4504
      %v4506 = vpop.f32.mrb[0].mxu0
      %v4507 = vadd.f32 0.0, %v4506
      %4508 = vmatprep.mubr.f32.mxu0 %v4096
      %4509 = vmatmul.mubr.f32.gmra.mrb[0].mxu0 %v4095
      %v4510 = vpop.f32.mrb[0].mxu0
      %v4511 = vadd.f32 0.0, %v4510
      %v4512 = vpop.f32.mrb[0].mxu0
      %v4513 = vadd.f32 0.0, %v4512
      %4514 = vmatprep.mubr.f32.mxu0 %v4099
      %4515 = vmatmul.mubr.f32.gmra.mrb[0].mxu0 %v4098
      %v4516 = vpop.f32.mrb[0].mxu0
      %v4517 = vadd.f32 0.0, %v4516
      %v4518 = vpop.f32.mrb[0].mxu0
      %v4519 = vadd.f32 0.0, %v4518
      %4520 = vmatprep.mubr.f32.mxu0 %v4102
      %4521 = vmatmul.mubr.f32.gmra.mrb[0].mxu0 %v4101
      %v4522 = vpop.f32.mrb[0].mxu0
      %v4523 = vadd.f32 0.0, %v4522
      %v4524 = vpop.f32.mrb[0].mxu0
      %v4525 = vadd.f32 0.0, %v4524
      %4526 = vdwg.mxu0
      %4527 = vmatprep.subr.mxu0 %v4235
      %4528 = vmatpush1.msra.mxu0 %v4234
      %4529 = vmatprep.subr.mxu0 %v4239
      %4530 = vmatpush1.msra.mxu0 %v4238
      %4531 = vmatprep.subr.mxu0 %v4243
      %4532 = vmatpush1.msra.mxu0 %v4242
      %4533 = vmatprep.subr.mxu0 %v4247
      %4534 = vmatpush1.msra.mxu0 %v4246
      %4535 = vmatprep.subr.mxu0 0.0
      %4536 = vmatpush1.msra.mxu0 0.0
      %4537 = vmatprep.subr.mxu0 0.0
      %4538 = vmatpush1.msra.mxu0 0.0
      %4539 = vmatprep.subr.mxu0 0.0
      %4540 = vmatpush1.msra.mxu0 0.0
      %4541 = vmatprep.subr.mxu0 0.0
      %4542 = vmatpush1.msra.mxu0 0.0
      %4543 = vmatprep.subr.mxu0 0.0
      %4544 = vmatpush1.msra.mxu0 0.0
      %4545 = vmatprep.subr.mxu0 0.0
      %4546 = vmatpush1.msra.mxu0 0.0
      %4547 = vmatprep.subr.mxu0 0.0
      %4548 = vmatpush1.msra.mxu0 0.0
      %4549 = vmatprep.subr.mxu0 0.0
      %4550 = vmatpush1.msra.mxu0 0.0
      %4551 = vmatprep.subr.mxu0 0.0
      %4552 = vmatpush1.msra.mxu0 0.0
      %4553 = vmatprep.subr.mxu0 0.0
      %4554 = vmatpush1.msra.mxu0 0.0
      %4555 = vmatprep.subr.mxu0 0.0
      %4556 = vmatpush1.msra.mxu0 0.0
      %4557 = vmatprep.subr.mxu0 0.0
      %4558 = vmatpush1.msra.mxu0 0.0
      %4559 = vmatprep.subr.mxu0 0.0
      %4560 = vmatpush1.msra.mxu0 0.0
      %4561 = vmatprep.subr.mxu0 0.0
      %4562 = vmatpush1.msra.mxu0 0.0
      %4563 = vmatprep.subr.mxu0 0.0
      %4564 = vmatpush1.msra.mxu0 0.0
      %4565 = vmatprep.subr.mxu0 0.0
      %4566 = vmatpush1.msra.mxu0 0.0
      %4567 = vmatprep.subr.mxu0 0.0
      %4568 = vmatpush1.msra.mxu0 0.0
      %4569 = vmatprep.subr.mxu0 0.0
      %4570 = vmatpush1.msra.mxu0 0.0
      %4571 = vmatprep.subr.mxu0 0.0
      %4572 = vmatpush1.msra.mxu0 0.0
      %4573 = vmatprep.subr.mxu0 0.0
      %4574 = vmatpush1.msra.mxu0 0.0
      %4575 = vmatprep.subr.mxu0 0.0
      %4576 = vmatpush1.msra.mxu0 0.0
      %4577 = vmatprep.subr.mxu0 0.0
      %4578 = vmatpush1.msra.mxu0 0.0
      %4579 = vmatprep.subr.mxu0 0.0
      %4580 = vmatpush1.msra.mxu0 0.0
      %4581 = vmatprep.subr.mxu0 0.0
      %4582 = vmatpush1.msra.mxu0 0.0
      %4583 = vmatprep.subr.mxu0 0.0
      %4584 = vmatpush1.msra.mxu0 0.0
      %4585 = vmatprep.subr.mxu0 0.0
      %4586 = vmatpush1.msra.mxu0 0.0
      %4587 = vmatprep.subr.mxu0 0.0
      %4588 = vmatpush1.msra.mxu0 0.0
      %4589 = vmatprep.subr.mxu0 0.0
      %4590 = vmatpush1.msra.mxu0 0.0
      %4591 = vmatprep.mubr.f32.mxu0 0.0
      %4592 = vmatmul.mubr.f32.gmra.mrb[0].mxu0 %v4249
      %v4593 = vpop.f32.mrb[0].mxu0
      %v4594 = vadd.f32 %v4505, %v4593
      %v4595 = vpop.f32.mrb[0].mxu0
      %v4596 = vadd.f32 %v4507, %v4595
      %4597 = vmatprep.mubr.f32.mxu0 0.0
      %4598 = vmatmul.mubr.f32.gmra.mrb[0].mxu0 %v4252
      %v4599 = vpop.f32.mrb[0].mxu0
      %v4600 = vadd.f32 %v4511, %v4599
      %v4601 = vpop.f32.mrb[0].mxu0
      %v4602 = vadd.f32 %v4513, %v4601
      %4603 = vmatprep.mubr.f32.mxu0 0.0
      %4604 = vmatmul.mubr.f32.gmra.mrb[0].mxu0 %v4255
      %v4605 = vpop.f32.mrb[0].mxu0
      %v4606 = vadd.f32 %v4517, %v4605
      %v4607 = vpop.f32.mrb[0].mxu0
      %v4608 = vadd.f32 %v4519, %v4607
      %4609 = vmatprep.mubr.f32.mxu0 0.0
      %4610 = vmatmul.mubr.f32.gmra.mrb[0].mxu0 %v4258
      %v4611 = vpop.f32.mrb[0].mxu0
      %v4612 = vadd.f32 %v4523, %v4611
      %v4613 = vpop.f32.mrb[0].mxu0
      %v4614 = vadd.f32 %v4525, %v4613
      %4615 = vdwg.mxu0
      %v4616 = vsub.f32 %v4416, %v4594
      %v4617 = vsub.f32 %v4418, %v4596
      %v4618 = vsub.f32 %v4422, %v4600
      %v4619 = vsub.f32 %v4424, %v4602
      %v4620 = vsub.f32 %v4428, %v4606
      %v4621 = vsub.f32 %v4430, %v4608
      %v4622 = vsub.f32 %v4434, %v4612
      %v4623 = vsub.f32 %v4436, %v4614
      %v4624 = vmul.f32 %v4616, %v4616
      %v4625 = vmul.f32 %v4617, %v4617
      %v4626 = vmul.f32 %v4618, %v4618
      %v4627 = vmul.f32 %v4619, %v4619
      %v4628 = vmul.f32 %v4620, %v4620
      %v4629 = vmul.f32 %v4621, %v4621
      %v4630 = vmul.f32 %v4622, %v4622
      %v4631 = vmul.f32 %v4623, %v4623
      %v4632 = vmul.f32 %v4624, 0.00012207031
      %v4633 = vmul.f32 %v4625, 0.00012207031
      %v4634 = vmul.f32 %v4626, 0.00012207031
      %v4635 = vmul.f32 %v4627, 0.00012207031
      %v4636 = vmul.f32 %v4628, 0.00012207031
      %v4637 = vmul.f32 %v4629, 0.00012207031
      %v4638 = vmul.f32 %v4630, 0.00012207031
      %v4639 = vmul.f32 %v4631, 0.00012207031
      %v4640 = vadd.f32 %v3162, %v4632
      %v4641 = vadd.f32 %v3163, %v4633
      %v4642 = vadd.f32 %v3164, %v4634
      %v4643 = vadd.f32 %v3165, %v4635
      %v4644 = vadd.f32 %v3166, %v4636
      %v4645 = vadd.f32 %v3167, %v4637
      %v4646 = vadd.f32 %v3168, %v4638
      %v4647 = vadd.f32 %v3169, %v4639
      %s4648 = scalar_lea.vmem %s3, 64
      %v4649 = vld [vmem:[%s4648] sm:$0xff]
      %v4650 = vld [vmem:[%s4648 + $0x8] sm:$0xff]
      %v4651 = vld [vmem:[%s4648 + $0x10] sm:$0xff]
      %v4652 = vld [vmem:[%s4648 + $0x18] sm:$0xff]
      %4654 = vset.pattern.permute.xlu0 0
      %4655 = vperm.xlu0 %4654, %v4649
      %v4656 = vpop.permute.xlu0 %4655
      %4659 = vset.pattern.permute.xlu0 0
      %4660 = vperm.xlu0 %4659, %v4650
      %v4661 = vpop.permute.xlu0 %4660
      %4664 = vset.pattern.permute.xlu0 0
      %4665 = vperm.xlu0 %4664, %v4651
      %v4666 = vpop.permute.xlu0 %4665
      %4669 = vset.pattern.permute.xlu0 0
      %4670 = vperm.xlu0 %4669, %v4652
      %v4671 = vpop.permute.xlu0 %4670
      %v4673 = vadd.f32 %v4416, %v4656
      %v4674 = vadd.f32 %v4418, %v4656
      %v4675 = vadd.f32 %v4594, %v4656
      %v4676 = vadd.f32 %v4596, %v4656
      %v4677 = vadd.f32 %v4422, %v4661
      %v4678 = vadd.f32 %v4424, %v4661
      %v4679 = vadd.f32 %v4600, %v4661
      %v4680 = vadd.f32 %v4602, %v4661
      %v4681 = vadd.f32 %v4428, %v4666
      %v4682 = vadd.f32 %v4430, %v4666
      %v4683 = vadd.f32 %v4606, %v4666
      %v4684 = vadd.f32 %v4608, %v4666
      %v4685 = vadd.f32 %v4434, %v4671
      %v4686 = vadd.f32 %v4436, %v4671
      %v4687 = vadd.f32 %v4612, %v4671
      %v4688 = vadd.f32 %v4614, %v4671
      %v4689 = vmax.f32 %v4673, 0.0
      %v4690 = vmax.f32 %v4674, 0.0
      %v4691 = vmax.f32 %v4675, 0.0
      %v4692 = vmax.f32 %v4676, 0.0
      %v4693 = vmax.f32 %v4677, 0.0
      %v4694 = vmax.f32 %v4678, 0.0
      %v4695 = vmax.f32 %v4679, 0.0
      %v4696 = vmax.f32 %v4680, 0.0
      %v4697 = vmax.f32 %v4681, 0.0
      %v4698 = vmax.f32 %v4682, 0.0
      %v4699 = vmax.f32 %v4683, 0.0
      %v4700 = vmax.f32 %v4684, 0.0
      %v4701 = vmax.f32 %v4685, 0.0
      %v4702 = vmax.f32 %v4686, 0.0
      %v4703 = vmax.f32 %v4687, 0.0
      %v4704 = vmax.f32 %v4688, 0.0
      %4705 = vst [vmem:[#allocation2] sm:$0xff] %v4689
      %4706 = vst [vmem:[#allocation2 + $0x8] sm:$0xff] %v4690
      %4707 = vst [vmem:[#allocation2 + $0x10] sm:$0xff] %v4691
      %4708 = vst [vmem:[#allocation2 + $0x18] sm:$0xff] %v4692
      %4709 = vst [vmem:[#allocation2 + $0x20] sm:$0xff] %v4693
      %4710 = vst [vmem:[#allocation2 + $0x28] sm:$0xff] %v4694
      %4711 = vst [vmem:[#allocation2 + $0x30] sm:$0xff] %v4695
      %4712 = vst [vmem:[#allocation2 + $0x38] sm:$0xff] %v4696
      %4713 = vst [vmem:[#allocation2 + $0x40] sm:$0xff] %v4697
      %4714 = vst [vmem:[#allocation2 + $0x48] sm:$0xff] %v4698
      %4715 = vst [vmem:[#allocation2 + $0x50] sm:$0xff] %v4699
      %4716 = vst [vmem:[#allocation2 + $0x58] sm:$0xff] %v4700
      %4717 = vst [vmem:[#allocation2 + $0x60] sm:$0xff] %v4701
      %4718 = vst [vmem:[#allocation2 + $0x68] sm:$0xff] %v4702
      %4719 = vst [vmem:[#allocation2 + $0x70] sm:$0xff] %v4703
      %4720 = vst [vmem:[#allocation2 + $0x78] sm:$0xff] %v4704
      %v4721 = vld [vmem:[#allocation2] sm:$0xff]
      %v4722 = vld [vmem:[#allocation2 + $0x8] sm:$0xff]
      %v4723 = vld [vmem:[#allocation2 + $0x10] sm:$0xff]
      %v4724 = vld [vmem:[#allocation2 + $0x18] sm:$0xff]
      %v4725 = vld [vmem:[#allocation2 + $0x20] sm:$0xff]
      %v4726 = vld [vmem:[#allocation2 + $0x28] sm:$0xff]
      %v4727 = vld [vmem:[#allocation2 + $0x30] sm:$0xff]
      %v4728 = vld [vmem:[#allocation2 + $0x38] sm:$0xff]
      %v4729 = vld [vmem:[#allocation2 + $0x40] sm:$0xff]
      %v4730 = vld [vmem:[#allocation2 + $0x48] sm:$0xff]
      %v4731 = vld [vmem:[#allocation2 + $0x50] sm:$0xff]
      %v4732 = vld [vmem:[#allocation2 + $0x58] sm:$0xff]
      %v4733 = vld [vmem:[#allocation2 + $0x60] sm:$0xff]
      %v4734 = vld [vmem:[#allocation2 + $0x68] sm:$0xff]
      %v4735 = vld [vmem:[#allocation2 + $0x70] sm:$0xff]
      %v4736 = vld [vmem:[#allocation2 + $0x78] sm:$0xff]
      %4737 = vrot.lane.b32.xlu0 %v4721, 17
      %v4738 = vpop.permute.xlu0 %4737
      %4739 = vrot.lane.b32.xlu0 %v4725, 17
      %v4740 = vpop.permute.xlu0 %4739
      %4741 = vrot.lane.b32.xlu0 %v4729, 17
      %v4742 = vpop.permute.xlu0 %4741
      %4743 = vrot.lane.b32.xlu0 %v4733, 17
      %v4744 = vpop.permute.xlu0 %4743
      %4745 = vrot.lane.b32.xlu0 %v4722, 17
      %v4746 = vpop.permute.xlu0 %4745
      %4747 = vrot.lane.b32.xlu0 %v4726, 17
      %v4748 = vpop.permute.xlu0 %4747
      %4749 = vrot.lane.b32.xlu0 %v4730, 17
      %v4750 = vpop.permute.xlu0 %4749
      %4751 = vrot.lane.b32.xlu0 %v4734, 17
      %v4752 = vpop.permute.xlu0 %4751
      %4753 = vrot.lane.b32.xlu0 %v4723, 17
      %v4754 = vpop.permute.xlu0 %4753
      %4755 = vrot.lane.b32.xlu0 %v4727, 17
      %v4756 = vpop.permute.xlu0 %4755
      %4757 = vrot.lane.b32.xlu0 %v4731, 17
      %v4758 = vpop.permute.xlu0 %4757
      %4759 = vrot.lane.b32.xlu0 %v4735, 17
      %v4760 = vpop.permute.xlu0 %4759
      %4761 = vrot.lane.b32.xlu0 %v4724, 17
      %v4762 = vpop.permute.xlu0 %4761
      %4763 = vrot.lane.b32.xlu0 %v4728, 17
      %v4764 = vpop.permute.xlu0 %4763
      %4765 = vrot.lane.b32.xlu0 %v4732, 17
      %v4766 = vpop.permute.xlu0 %4765
      %4767 = vrot.lane.b32.xlu0 %v4736, 17
      %v4768 = vpop.permute.xlu0 %4767
      %v4769 = vsel %vm321, %v4754, %v4762
      %v4770 = vsel %vm321, %v4756, %v4764
      %v4771 = vsel %vm321, %v4758, %v4766
      %v4772 = vsel %vm321, %v4760, %v4768
      %v4773 = vsel %vm321, %v4746, %v4754
      %v4774 = vsel %vm321, %v4748, %v4756
      %v4775 = vsel %vm321, %v4750, %v4758
      %v4776 = vsel %vm321, %v4752, %v4760
      %v4777 = vsel %vm321, %v4738, %v4746
      %v4778 = vsel %vm321, %v4740, %v4748
      %v4779 = vsel %vm321, %v4742, %v4750
      %v4780 = vsel %vm321, %v4744, %v4752
      %v4781 = vsel %vm321, %v4762, %v4738
      %v4782 = vsel %vm321, %v4764, %v4740
      %v4783 = vsel %vm321, %v4766, %v4742
      %v4784 = vsel %vm321, %v4768, %v4744
      %v4785 = vld [vmem:[%s4] sm:$0xf]
      %v4787 = vlaneseq
      %v4788 = vshrl.u32 %v4787, 7
      %v4789 = vsub.s32 0, %v4788
      %v4790 = vrot.slane %v4785, %v4789
      %v4791 = vlaneseq
      %v4792 = vshrl.u32 %v4791, 7
      %v4793 = vsub.s32 1, %v4792
      %v4794 = vrot.slane %v4785, %v4793
      %v4795 = vlaneseq
      %v4796 = vshrl.u32 %v4795, 7
      %v4797 = vsub.s32 2, %v4796
      %v4798 = vrot.slane %v4785, %v4797
      %v4799 = vlaneseq
      %v4800 = vshrl.u32 %v4799, 7
      %v4801 = vsub.s32 3, %v4800
      %v4802 = vrot.slane %v4785, %v4801
      %v4807 = vmul.f32 %v4781, %v4790
      %v4808 = vmul.f32 %v4777, %v4794
      %v4809 = vmul.f32 %v4773, %v4798
      %v4810 = vmul.f32 %v4769, %v4802
      %v4811 = vmul.f32 %v4782, %v4790
      %v4812 = vmul.f32 %v4778, %v4794
      %v4813 = vmul.f32 %v4774, %v4798
      %v4814 = vmul.f32 %v4770, %v4802
      %v4815 = vmul.f32 %v4783, %v4790
      %v4816 = vmul.f32 %v4779, %v4794
      %v4817 = vmul.f32 %v4775, %v4798
      %v4818 = vmul.f32 %v4771, %v4802
      %v4819 = vmul.f32 %v4784, %v4790
      %v4820 = vmul.f32 %v4780, %v4794
      %v4821 = vmul.f32 %v4776, %v4798
      %v4822 = vmul.f32 %v4772, %v4802
      %4823 = vst [vmem:[#allocation3] sm:$0xff] %v4807
      %4824 = vst [vmem:[#allocation3 + $0x8] sm:$0xff] %v4808
      %4825 = vst [vmem:[#allocation3 + $0x10] sm:$0xff] %v4809
      %4826 = vst [vmem:[#allocation3 + $0x18] sm:$0xff] %v4810
      %4827 = vst [vmem:[#allocation3 + $0x20] sm:$0xff] %v4811
      %4828 = vst [vmem:[#allocation3 + $0x28] sm:$0xff] %v4812
      %4829 = vst [vmem:[#allocation3 + $0x30] sm:$0xff] %v4813
      %4830 = vst [vmem:[#allocation3 + $0x38] sm:$0xff] %v4814
      %4831 = vst [vmem:[#allocation3 + $0x40] sm:$0xff] %v4815
      %4832 = vst [vmem:[#allocation3 + $0x48] sm:$0xff] %v4816
      %4833 = vst [vmem:[#allocation3 + $0x50] sm:$0xff] %v4817
      %4834 = vst [vmem:[#allocation3 + $0x58] sm:$0xff] %v4818
      %4835 = vst [vmem:[#allocation3 + $0x60] sm:$0xff] %v4819
      %4836 = vst [vmem:[#allocation3 + $0x68] sm:$0xff] %v4820
      %4837 = vst [vmem:[#allocation3 + $0x70] sm:$0xff] %v4821
      %4838 = vst [vmem:[#allocation3 + $0x78] sm:$0xff] %v4822
      %4839 = vrot.lane.b32.xlu0 %v4721, 16
      %v4840 = vpop.permute.xlu0 %4839
      %4841 = vrot.lane.b32.xlu0 %v4725, 16
      %v4842 = vpop.permute.xlu0 %4841
      %4843 = vrot.lane.b32.xlu0 %v4729, 16
      %v4844 = vpop.permute.xlu0 %4843
      %4845 = vrot.lane.b32.xlu0 %v4733, 16
      %v4846 = vpop.permute.xlu0 %4845
      %4847 = vrot.lane.b32.xlu0 %v4722, 16
      %v4848 = vpop.permute.xlu0 %4847
      %4849 = vrot.lane.b32.xlu0 %v4726, 16
      %v4850 = vpop.permute.xlu0 %4849
      %4851 = vrot.lane.b32.xlu0 %v4730, 16
      %v4852 = vpop.permute.xlu0 %4851
      %4853 = vrot.lane.b32.xlu0 %v4734, 16
      %v4854 = vpop.permute.xlu0 %4853
      %4855 = vrot.lane.b32.xlu0 %v4723, 16
      %v4856 = vpop.permute.xlu0 %4855
      %4857 = vrot.lane.b32.xlu0 %v4727, 16
      %v4858 = vpop.permute.xlu0 %4857
      %4859 = vrot.lane.b32.xlu0 %v4731, 16
      %v4860 = vpop.permute.xlu0 %4859
      %4861 = vrot.lane.b32.xlu0 %v4735, 16
      %v4862 = vpop.permute.xlu0 %4861
      %4863 = vrot.lane.b32.xlu0 %v4724, 16
      %v4864 = vpop.permute.xlu0 %4863
      %4865 = vrot.lane.b32.xlu0 %v4728, 16
      %v4866 = vpop.permute.xlu0 %4865
      %4867 = vrot.lane.b32.xlu0 %v4732, 16
      %v4868 = vpop.permute.xlu0 %4867
      %4869 = vrot.lane.b32.xlu0 %v4736, 16
      %v4870 = vpop.permute.xlu0 %4869
      %v4871 = vsel %vm424, %v4856, %v4864
      %v4872 = vsel %vm424, %v4858, %v4866
      %v4873 = vsel %vm424, %v4860, %v4868
      %v4874 = vsel %vm424, %v4862, %v4870
      %v4875 = vsel %vm424, %v4848, %v4856
      %v4876 = vsel %vm424, %v4850, %v4858
      %v4877 = vsel %vm424, %v4852, %v4860
      %v4878 = vsel %vm424, %v4854, %v4862
      %v4879 = vsel %vm424, %v4840, %v4848
      %v4880 = vsel %vm424, %v4842, %v4850
      %v4881 = vsel %vm424, %v4844, %v4852
      %v4882 = vsel %vm424, %v4846, %v4854
      %v4883 = vsel %vm424, %v4864, %v4840
      %v4884 = vsel %vm424, %v4866, %v4842
      %v4885 = vsel %vm424, %v4868, %v4844
      %v4886 = vsel %vm424, %v4870, %v4846
      %v4887 = vld [vmem:[%s441] sm:$0xf]
      %v4889 = vlaneseq
      %v4890 = vshrl.u32 %v4889, 7
      %v4891 = vsub.s32 0, %v4890
      %v4892 = vrot.slane %v4887, %v4891
      %v4893 = vlaneseq
      %v4894 = vshrl.u32 %v4893, 7
      %v4895 = vsub.s32 1, %v4894
      %v4896 = vrot.slane %v4887, %v4895
      %v4897 = vlaneseq
      %v4898 = vshrl.u32 %v4897, 7
      %v4899 = vsub.s32 2, %v4898
      %v4900 = vrot.slane %v4887, %v4899
      %v4901 = vlaneseq
      %v4902 = vshrl.u32 %v4901, 7
      %v4903 = vsub.s32 3, %v4902
      %v4904 = vrot.slane %v4887, %v4903
      %v4909 = vmul.f32 %v4883, %v4892
      %v4910 = vmul.f32 %v4879, %v4896
      %v4911 = vmul.f32 %v4875, %v4900
      %v4912 = vmul.f32 %v4871, %v4904
      %v4913 = vmul.f32 %v4884, %v4892
      %v4914 = vmul.f32 %v4880, %v4896
      %v4915 = vmul.f32 %v4876, %v4900
      %v4916 = vmul.f32 %v4872, %v4904
      %v4917 = vmul.f32 %v4885, %v4892
      %v4918 = vmul.f32 %v4881, %v4896
      %v4919 = vmul.f32 %v4877, %v4900
      %v4920 = vmul.f32 %v4873, %v4904
      %v4921 = vmul.f32 %v4886, %v4892
      %v4922 = vmul.f32 %v4882, %v4896
      %v4923 = vmul.f32 %v4878, %v4900
      %v4924 = vmul.f32 %v4874, %v4904
      %4925 = vst [vmem:[#allocation3 + $0x80] sm:$0xff] %v4909
      %4926 = vst [vmem:[#allocation3 + $0x88] sm:$0xff] %v4910
      %4927 = vst [vmem:[#allocation3 + $0x90] sm:$0xff] %v4911
      %4928 = vst [vmem:[#allocation3 + $0x98] sm:$0xff] %v4912
      %4929 = vst [vmem:[#allocation3 + $0xa0] sm:$0xff] %v4913
      %4930 = vst [vmem:[#allocation3 + $0xa8] sm:$0xff] %v4914
      %4931 = vst [vmem:[#allocation3 + $0xb0] sm:$0xff] %v4915
      %4932 = vst [vmem:[#allocation3 + $0xb8] sm:$0xff] %v4916
      %4933 = vst [vmem:[#allocation3 + $0xc0] sm:$0xff] %v4917
      %4934 = vst [vmem:[#allocation3 + $0xc8] sm:$0xff] %v4918
      %4935 = vst [vmem:[#allocation3 + $0xd0] sm:$0xff] %v4919
      %4936 = vst [vmem:[#allocation3 + $0xd8] sm:$0xff] %v4920
      %4937 = vst [vmem:[#allocation3 + $0xe0] sm:$0xff] %v4921
      %4938 = vst [vmem:[#allocation3 + $0xe8] sm:$0xff] %v4922
      %4939 = vst [vmem:[#allocation3 + $0xf0] sm:$0xff] %v4923
      %4940 = vst [vmem:[#allocation3 + $0xf8] sm:$0xff] %v4924
      %4941 = vrot.lane.b32.xlu0 %v4721, 15
      %v4942 = vpop.permute.xlu0 %4941
      %4943 = vrot.lane.b32.xlu0 %v4725, 15
      %v4944 = vpop.permute.xlu0 %4943
      %4945 = vrot.lane.b32.xlu0 %v4729, 15
      %v4946 = vpop.permute.xlu0 %4945
      %4947 = vrot.lane.b32.xlu0 %v4733, 15
      %v4948 = vpop.permute.xlu0 %4947
      %4949 = vrot.lane.b32.xlu0 %v4722, 15
      %v4950 = vpop.permute.xlu0 %4949
      %4951 = vrot.lane.b32.xlu0 %v4726, 15
      %v4952 = vpop.permute.xlu0 %4951
      %4953 = vrot.lane.b32.xlu0 %v4730, 15
      %v4954 = vpop.permute.xlu0 %4953
      %4955 = vrot.lane.b32.xlu0 %v4734, 15
      %v4956 = vpop.permute.xlu0 %4955
      %4957 = vrot.lane.b32.xlu0 %v4723, 15
      %v4958 = vpop.permute.xlu0 %4957
      %4959 = vrot.lane.b32.xlu0 %v4727, 15
      %v4960 = vpop.permute.xlu0 %4959
      %4961 = vrot.lane.b32.xlu0 %v4731, 15
      %v4962 = vpop.permute.xlu0 %4961
      %4963 = vrot.lane.b32.xlu0 %v4735, 15
      %v4964 = vpop.permute.xlu0 %4963
      %4965 = vrot.lane.b32.xlu0 %v4724, 15
      %v4966 = vpop.permute.xlu0 %4965
      %4967 = vrot.lane.b32.xlu0 %v4728, 15
      %v4968 = vpop.permute.xlu0 %4967
      %4969 = vrot.lane.b32.xlu0 %v4732, 15
      %v4970 = vpop.permute.xlu0 %4969
      %4971 = vrot.lane.b32.xlu0 %v4736, 15
      %v4972 = vpop.permute.xlu0 %4971
      %v4973 = vsel %vm528, %v4958, %v4966
      %v4974 = vsel %vm528, %v4960, %v4968
      %v4975 = vsel %vm528, %v4962, %v4970
      %v4976 = vsel %vm528, %v4964, %v4972
      %v4977 = vsel %vm528, %v4950, %v4958
      %v4978 = vsel %vm528, %v4952, %v4960
      %v4979 = vsel %vm528, %v4954, %v4962
      %v4980 = vsel %vm528, %v4956, %v4964
      %v4981 = vsel %vm528, %v4942, %v4950
      %v4982 = vsel %vm528, %v4944, %v4952
      %v4983 = vsel %vm528, %v4946, %v4954
      %v4984 = vsel %vm528, %v4948, %v4956
      %v4985 = vsel %vm528, %v4966, %v4942
      %v4986 = vsel %vm528, %v4968, %v4944
      %v4987 = vsel %vm528, %v4970, %v4946
      %v4988 = vsel %vm528, %v4972, %v4948
      %v4989 = vld [vmem:[%s545] sm:$0xf]
      %v4991 = vlaneseq
      %v4992 = vshrl.u32 %v4991, 7
      %v4993 = vsub.s32 0, %v4992
      %v4994 = vrot.slane %v4989, %v4993
      %v4995 = vlaneseq
      %v4996 = vshrl.u32 %v4995, 7
      %v4997 = vsub.s32 1, %v4996
      %v4998 = vrot.slane %v4989, %v4997
      %v4999 = vlaneseq
      %v5000 = vshrl.u32 %v4999, 7
      %v5001 = vsub.s32 2, %v5000
      %v5002 = vrot.slane %v4989, %v5001
      %v5003 = vlaneseq
      %v5004 = vshrl.u32 %v5003, 7
      %v5005 = vsub.s32 3, %v5004
      %v5006 = vrot.slane %v4989, %v5005
      %v5011 = vmul.f32 %v4985, %v4994
      %v5012 = vmul.f32 %v4981, %v4998
      %v5013 = vmul.f32 %v4977, %v5002
      %v5014 = vmul.f32 %v4973, %v5006
      %v5015 = vmul.f32 %v4986, %v4994
      %v5016 = vmul.f32 %v4982, %v4998
      %v5017 = vmul.f32 %v4978, %v5002
      %v5018 = vmul.f32 %v4974, %v5006
      %v5019 = vmul.f32 %v4987, %v4994
      %v5020 = vmul.f32 %v4983, %v4998
      %v5021 = vmul.f32 %v4979, %v5002
      %v5022 = vmul.f32 %v4975, %v5006
      %v5023 = vmul.f32 %v4988, %v4994
      %v5024 = vmul.f32 %v4984, %v4998
      %v5025 = vmul.f32 %v4980, %v5002
      %v5026 = vmul.f32 %v4976, %v5006
      %5027 = vst [vmem:[#allocation3 + $0x100] sm:$0xff] %v5011
      %5028 = vst [vmem:[#allocation3 + $0x108] sm:$0xff] %v5012
      %5029 = vst [vmem:[#allocation3 + $0x110] sm:$0xff] %v5013
      %5030 = vst [vmem:[#allocation3 + $0x118] sm:$0xff] %v5014
      %5031 = vst [vmem:[#allocation3 + $0x120] sm:$0xff] %v5015
      %5032 = vst [vmem:[#allocation3 + $0x128] sm:$0xff] %v5016
      %5033 = vst [vmem:[#allocation3 + $0x130] sm:$0xff] %v5017
      %5034 = vst [vmem:[#allocation3 + $0x138] sm:$0xff] %v5018
      %5035 = vst [vmem:[#allocation3 + $0x140] sm:$0xff] %v5019
      %5036 = vst [vmem:[#allocation3 + $0x148] sm:$0xff] %v5020
      %5037 = vst [vmem:[#allocation3 + $0x150] sm:$0xff] %v5021
      %5038 = vst [vmem:[#allocation3 + $0x158] sm:$0xff] %v5022
      %5039 = vst [vmem:[#allocation3 + $0x160] sm:$0xff] %v5023
      %5040 = vst [vmem:[#allocation3 + $0x168] sm:$0xff] %v5024
      %5041 = vst [vmem:[#allocation3 + $0x170] sm:$0xff] %v5025
      %5042 = vst [vmem:[#allocation3 + $0x178] sm:$0xff] %v5026
      %5043 = vrot.lane.b32.xlu0 %v4721, 1
      %v5044 = vpop.permute.xlu0 %5043
      %5045 = vrot.lane.b32.xlu0 %v4725, 1
      %v5046 = vpop.permute.xlu0 %5045
      %5047 = vrot.lane.b32.xlu0 %v4729, 1
      %v5048 = vpop.permute.xlu0 %5047
      %5049 = vrot.lane.b32.xlu0 %v4733, 1
      %v5050 = vpop.permute.xlu0 %5049
      %5051 = vrot.lane.b32.xlu0 %v4722, 1
      %v5052 = vpop.permute.xlu0 %5051
      %5053 = vrot.lane.b32.xlu0 %v4726, 1
      %v5054 = vpop.permute.xlu0 %5053
      %5055 = vrot.lane.b32.xlu0 %v4730, 1
      %v5056 = vpop.permute.xlu0 %5055
      %5057 = vrot.lane.b32.xlu0 %v4734, 1
      %v5058 = vpop.permute.xlu0 %5057
      %5059 = vrot.lane.b32.xlu0 %v4723, 1
      %v5060 = vpop.permute.xlu0 %5059
      %5061 = vrot.lane.b32.xlu0 %v4727, 1
      %v5062 = vpop.permute.xlu0 %5061
      %5063 = vrot.lane.b32.xlu0 %v4731, 1
      %v5064 = vpop.permute.xlu0 %5063
      %5065 = vrot.lane.b32.xlu0 %v4735, 1
      %v5066 = vpop.permute.xlu0 %5065
      %5067 = vrot.lane.b32.xlu0 %v4724, 1
      %v5068 = vpop.permute.xlu0 %5067
      %5069 = vrot.lane.b32.xlu0 %v4728, 1
      %v5070 = vpop.permute.xlu0 %5069
      %5071 = vrot.lane.b32.xlu0 %v4732, 1
      %v5072 = vpop.permute.xlu0 %5071
      %5073 = vrot.lane.b32.xlu0 %v4736, 1
      %v5074 = vpop.permute.xlu0 %5073
      %v5075 = vsel %vm632, %v5060, %v5068
      %v5076 = vsel %vm632, %v5062, %v5070
      %v5077 = vsel %vm632, %v5064, %v5072
      %v5078 = vsel %vm632, %v5066, %v5074
      %v5079 = vsel %vm632, %v5052, %v5060
      %v5080 = vsel %vm632, %v5054, %v5062
      %v5081 = vsel %vm632, %v5056, %v5064
      %v5082 = vsel %vm632, %v5058, %v5066
      %v5083 = vsel %vm632, %v5044, %v5052
      %v5084 = vsel %vm632, %v5046, %v5054
      %v5085 = vsel %vm632, %v5048, %v5056
      %v5086 = vsel %vm632, %v5050, %v5058
      %v5087 = vsel %vm632, %v5068, %v5044
      %v5088 = vsel %vm632, %v5070, %v5046
      %v5089 = vsel %vm632, %v5072, %v5048
      %v5090 = vsel %vm632, %v5074, %v5050
      %v5091 = vld [vmem:[%s649] sm:$0xf]
      %v5093 = vlaneseq
      %v5094 = vshrl.u32 %v5093, 7
      %v5095 = vsub.s32 0, %v5094
      %v5096 = vrot.slane %v5091, %v5095
      %v5097 = vlaneseq
      %v5098 = vshrl.u32 %v5097, 7
      %v5099 = vsub.s32 1, %v5098
      %v5100 = vrot.slane %v5091, %v5099
      %v5101 = vlaneseq
      %v5102 = vshrl.u32 %v5101, 7
      %v5103 = vsub.s32 2, %v5102
      %v5104 = vrot.slane %v5091, %v5103
      %v5105 = vlaneseq
      %v5106 = vshrl.u32 %v5105, 7
      %v5107 = vsub.s32 3, %v5106
      %v5108 = vrot.slane %v5091, %v5107
      %v5113 = vmul.f32 %v5087, %v5096
      %v5114 = vmul.f32 %v5083, %v5100
      %v5115 = vmul.f32 %v5079, %v5104
      %v5116 = vmul.f32 %v5075, %v5108
      %v5117 = vmul.f32 %v5088, %v5096
      %v5118 = vmul.f32 %v5084, %v5100
      %v5119 = vmul.f32 %v5080, %v5104
      %v5120 = vmul.f32 %v5076, %v5108
      %v5121 = vmul.f32 %v5089, %v5096
      %v5122 = vmul.f32 %v5085, %v5100
      %v5123 = vmul.f32 %v5081, %v5104
      %v5124 = vmul.f32 %v5077, %v5108
      %v5125 = vmul.f32 %v5090, %v5096
      %v5126 = vmul.f32 %v5086, %v5100
      %v5127 = vmul.f32 %v5082, %v5104
      %v5128 = vmul.f32 %v5078, %v5108
      %5129 = vst [vmem:[#allocation3 + $0x180] sm:$0xff] %v5113
      %5130 = vst [vmem:[#allocation3 + $0x188] sm:$0xff] %v5114
      %5131 = vst [vmem:[#allocation3 + $0x190] sm:$0xff] %v5115
      %5132 = vst [vmem:[#allocation3 + $0x198] sm:$0xff] %v5116
      %5133 = vst [vmem:[#allocation3 + $0x1a0] sm:$0xff] %v5117
      %5134 = vst [vmem:[#allocation3 + $0x1a8] sm:$0xff] %v5118
      %5135 = vst [vmem:[#allocation3 + $0x1b0] sm:$0xff] %v5119
      %5136 = vst [vmem:[#allocation3 + $0x1b8] sm:$0xff] %v5120
      %5137 = vst [vmem:[#allocation3 + $0x1c0] sm:$0xff] %v5121
      %5138 = vst [vmem:[#allocation3 + $0x1c8] sm:$0xff] %v5122
      %5139 = vst [vmem:[#allocation3 + $0x1d0] sm:$0xff] %v5123
      %5140 = vst [vmem:[#allocation3 + $0x1d8] sm:$0xff] %v5124
      %5141 = vst [vmem:[#allocation3 + $0x1e0] sm:$0xff] %v5125
      %5142 = vst [vmem:[#allocation3 + $0x1e8] sm:$0xff] %v5126
      %5143 = vst [vmem:[#allocation3 + $0x1f0] sm:$0xff] %v5127
      %5144 = vst [vmem:[#allocation3 + $0x1f8] sm:$0xff] %v5128
      %5145 = vst [vmem:[#allocation3 + $0x200] sm:$0xff] %v4721
      %5146 = vst [vmem:[#allocation3 + $0x208] sm:$0xff] %v4722
      %5147 = vst [vmem:[#allocation3 + $0x210] sm:$0xff] %v4723
      %5148 = vst [vmem:[#allocation3 + $0x218] sm:$0xff] %v4724
      %5149 = vst [vmem:[#allocation3 + $0x220] sm:$0xff] %v4725
      %5150 = vst [vmem:[#allocation3 + $0x228] sm:$0xff] %v4726
      %5151 = vst [vmem:[#allocation3 + $0x230] sm:$0xff] %v4727
      %5152 = vst [vmem:[#allocation3 + $0x238] sm:$0xff] %v4728
      %5153 = vst [vmem:[#allocation3 + $0x240] sm:$0xff] %v4729
      %5154 = vst [vmem:[#allocation3 + $0x248] sm:$0xff] %v4730
      %5155 = vst [vmem:[#allocation3 + $0x250] sm:$0xff] %v4731
      %5156 = vst [vmem:[#allocation3 + $0x258] sm:$0xff] %v4732
      %5157 = vst [vmem:[#allocation3 + $0x260] sm:$0xff] %v4733
      %5158 = vst [vmem:[#allocation3 + $0x268] sm:$0xff] %v4734
      %5159 = vst [vmem:[#allocation3 + $0x270] sm:$0xff] %v4735
      %5160 = vst [vmem:[#allocation3 + $0x278] sm:$0xff] %v4736
      %5161 = vrot.lane.b32.xlu0 %v4721, 127
      %v5162 = vpop.permute.xlu0 %5161
      %5163 = vrot.lane.b32.xlu0 %v4725, 127
      %v5164 = vpop.permute.xlu0 %5163
      %5165 = vrot.lane.b32.xlu0 %v4729, 127
      %v5166 = vpop.permute.xlu0 %5165
      %5167 = vrot.lane.b32.xlu0 %v4733, 127
      %v5168 = vpop.permute.xlu0 %5167
      %5169 = vrot.lane.b32.xlu0 %v4722, 127
      %v5170 = vpop.permute.xlu0 %5169
      %5171 = vrot.lane.b32.xlu0 %v4726, 127
      %v5172 = vpop.permute.xlu0 %5171
      %5173 = vrot.lane.b32.xlu0 %v4730, 127
      %v5174 = vpop.permute.xlu0 %5173
      %5175 = vrot.lane.b32.xlu0 %v4734, 127
      %v5176 = vpop.permute.xlu0 %5175
      %5177 = vrot.lane.b32.xlu0 %v4723, 127
      %v5178 = vpop.permute.xlu0 %5177
      %5179 = vrot.lane.b32.xlu0 %v4727, 127
      %v5180 = vpop.permute.xlu0 %5179
      %5181 = vrot.lane.b32.xlu0 %v4731, 127
      %v5182 = vpop.permute.xlu0 %5181
      %5183 = vrot.lane.b32.xlu0 %v4735, 127
      %v5184 = vpop.permute.xlu0 %5183
      %5185 = vrot.lane.b32.xlu0 %v4724, 127
      %v5186 = vpop.permute.xlu0 %5185
      %5187 = vrot.lane.b32.xlu0 %v4728, 127
      %v5188 = vpop.permute.xlu0 %5187
      %5189 = vrot.lane.b32.xlu0 %v4732, 127
      %v5190 = vpop.permute.xlu0 %5189
      %5191 = vrot.lane.b32.xlu0 %v4736, 127
      %v5192 = vpop.permute.xlu0 %5191
      %v5193 = vsel %vm752, %v5178, %v5186
      %v5194 = vsel %vm752, %v5180, %v5188
      %v5195 = vsel %vm752, %v5182, %v5190
      %v5196 = vsel %vm752, %v5184, %v5192
      %v5197 = vsel %vm752, %v5170, %v5178
      %v5198 = vsel %vm752, %v5172, %v5180
      %v5199 = vsel %vm752, %v5174, %v5182
      %v5200 = vsel %vm752, %v5176, %v5184
      %v5201 = vsel %vm752, %v5162, %v5170
      %v5202 = vsel %vm752, %v5164, %v5172
      %v5203 = vsel %vm752, %v5166, %v5174
      %v5204 = vsel %vm752, %v5168, %v5176
      %v5205 = vsel %vm752, %v5186, %v5162
      %v5206 = vsel %vm752, %v5188, %v5164
      %v5207 = vsel %vm752, %v5190, %v5166
      %v5208 = vsel %vm752, %v5192, %v5168
      %v5209 = vld [vmem:[%s769] sm:$0xf]
      %v5211 = vlaneseq
      %v5212 = vshrl.u32 %v5211, 7
      %v5213 = vsub.s32 0, %v5212
      %v5214 = vrot.slane %v5209, %v5213
      %v5215 = vlaneseq
      %v5216 = vshrl.u32 %v5215, 7
      %v5217 = vsub.s32 1, %v5216
      %v5218 = vrot.slane %v5209, %v5217
      %v5219 = vlaneseq
      %v5220 = vshrl.u32 %v5219, 7
      %v5221 = vsub.s32 2, %v5220
      %v5222 = vrot.slane %v5209, %v5221
      %v5223 = vlaneseq
      %v5224 = vshrl.u32 %v5223, 7
      %v5225 = vsub.s32 3, %v5224
      %v5226 = vrot.slane %v5209, %v5225
      %v5231 = vmul.f32 %v5201, %v5214
      %v5232 = vmul.f32 %v5197, %v5218
      %v5233 = vmul.f32 %v5193, %v5222
      %v5234 = vmul.f32 %v5205, %v5226
      %v5235 = vmul.f32 %v5202, %v5214
      %v5236 = vmul.f32 %v5198, %v5218
      %v5237 = vmul.f32 %v5194, %v5222
      %v5238 = vmul.f32 %v5206, %v5226
      %v5239 = vmul.f32 %v5203, %v5214
      %v5240 = vmul.f32 %v5199, %v5218
      %v5241 = vmul.f32 %v5195, %v5222
      %v5242 = vmul.f32 %v5207, %v5226
      %v5243 = vmul.f32 %v5204, %v5214
      %v5244 = vmul.f32 %v5200, %v5218
      %v5245 = vmul.f32 %v5196, %v5222
      %v5246 = vmul.f32 %v5208, %v5226
      %5247 = vst [vmem:[#allocation3 + $0x280] sm:$0xff] %v5231
      %5248 = vst [vmem:[#allocation3 + $0x288] sm:$0xff] %v5232
      %5249 = vst [vmem:[#allocation3 + $0x290] sm:$0xff] %v5233
      %5250 = vst [vmem:[#allocation3 + $0x298] sm:$0xff] %v5234
      %5251 = vst [vmem:[#allocation3 + $0x2a0] sm:$0xff] %v5235
      %5252 = vst [vmem:[#allocation3 + $0x2a8] sm:$0xff] %v5236
      %5253 = vst [vmem:[#allocation3 + $0x2b0] sm:$0xff] %v5237
      %5254 = vst [vmem:[#allocation3 + $0x2b8] sm:$0xff] %v5238
      %5255 = vst [vmem:[#allocation3 + $0x2c0] sm:$0xff] %v5239
      %5256 = vst [vmem:[#allocation3 + $0x2c8] sm:$0xff] %v5240
      %5257 = vst [vmem:[#allocation3 + $0x2d0] sm:$0xff] %v5241
      %5258 = vst [vmem:[#allocation3 + $0x2d8] sm:$0xff] %v5242
      %5259 = vst [vmem:[#allocation3 + $0x2e0] sm:$0xff] %v5243
      %5260 = vst [vmem:[#allocation3 + $0x2e8] sm:$0xff] %v5244
      %5261 = vst [vmem:[#allocation3 + $0x2f0] sm:$0xff] %v5245
      %5262 = vst [vmem:[#allocation3 + $0x2f8] sm:$0xff] %v5246
      %5263 = vrot.lane.b32.xlu0 %v4721, 113
      %v5264 = vpop.permute.xlu0 %5263
      %5265 = vrot.lane.b32.xlu0 %v4725, 113
      %v5266 = vpop.permute.xlu0 %5265
      %5267 = vrot.lane.b32.xlu0 %v4729, 113
      %v5268 = vpop.permute.xlu0 %5267
      %5269 = vrot.lane.b32.xlu0 %v4733, 113
      %v5270 = vpop.permute.xlu0 %5269
      %5271 = vrot.lane.b32.xlu0 %v4722, 113
      %v5272 = vpop.permute.xlu0 %5271
      %5273 = vrot.lane.b32.xlu0 %v4726, 113
      %v5274 = vpop.permute.xlu0 %5273
      %5275 = vrot.lane.b32.xlu0 %v4730, 113
      %v5276 = vpop.permute.xlu0 %5275
      %5277 = vrot.lane.b32.xlu0 %v4734, 113
      %v5278 = vpop.permute.xlu0 %5277
      %5279 = vrot.lane.b32.xlu0 %v4723, 113
      %v5280 = vpop.permute.xlu0 %5279
      %5281 = vrot.lane.b32.xlu0 %v4727, 113
      %v5282 = vpop.permute.xlu0 %5281
      %5283 = vrot.lane.b32.xlu0 %v4731, 113
      %v5284 = vpop.permute.xlu0 %5283
      %5285 = vrot.lane.b32.xlu0 %v4735, 113
      %v5286 = vpop.permute.xlu0 %5285
      %5287 = vrot.lane.b32.xlu0 %v4724, 113
      %v5288 = vpop.permute.xlu0 %5287
      %5289 = vrot.lane.b32.xlu0 %v4728, 113
      %v5290 = vpop.permute.xlu0 %5289
      %5291 = vrot.lane.b32.xlu0 %v4732, 113
      %v5292 = vpop.permute.xlu0 %5291
      %5293 = vrot.lane.b32.xlu0 %v4736, 113
      %v5294 = vpop.permute.xlu0 %5293
      %v5295 = vsel %vm856, %v5280, %v5288
      %v5296 = vsel %vm856, %v5282, %v5290
      %v5297 = vsel %vm856, %v5284, %v5292
      %v5298 = vsel %vm856, %v5286, %v5294
      %v5299 = vsel %vm856, %v5272, %v5280
      %v5300 = vsel %vm856, %v5274, %v5282
      %v5301 = vsel %vm856, %v5276, %v5284
      %v5302 = vsel %vm856, %v5278, %v5286
      %v5303 = vsel %vm856, %v5264, %v5272
      %v5304 = vsel %vm856, %v5266, %v5274
      %v5305 = vsel %vm856, %v5268, %v5276
      %v5306 = vsel %vm856, %v5270, %v5278
      %v5307 = vsel %vm856, %v5288, %v5264
      %v5308 = vsel %vm856, %v5290, %v5266
      %v5309 = vsel %vm856, %v5292, %v5268
      %v5310 = vsel %vm856, %v5294, %v5270
      %v5311 = vld [vmem:[%s873] sm:$0xf]
      %v5313 = vlaneseq
      %v5314 = vshrl.u32 %v5313, 7
      %v5315 = vsub.s32 0, %v5314
      %v5316 = vrot.slane %v5311, %v5315
      %v5317 = vlaneseq
      %v5318 = vshrl.u32 %v5317, 7
      %v5319 = vsub.s32 1, %v5318
      %v5320 = vrot.slane %v5311, %v5319
      %v5321 = vlaneseq
      %v5322 = vshrl.u32 %v5321, 7
      %v5323 = vsub.s32 2, %v5322
      %v5324 = vrot.slane %v5311, %v5323
      %v5325 = vlaneseq
      %v5326 = vshrl.u32 %v5325, 7
      %v5327 = vsub.s32 3, %v5326
      %v5328 = vrot.slane %v5311, %v5327
      %v5333 = vmul.f32 %v5303, %v5316
      %v5334 = vmul.f32 %v5299, %v5320
      %v5335 = vmul.f32 %v5295, %v5324
      %v5336 = vmul.f32 %v5307, %v5328
      %v5337 = vmul.f32 %v5304, %v5316
      %v5338 = vmul.f32 %v5300, %v5320
      %v5339 = vmul.f32 %v5296, %v5324
      %v5340 = vmul.f32 %v5308, %v5328
      %v5341 = vmul.f32 %v5305, %v5316
      %v5342 = vmul.f32 %v5301, %v5320
      %v5343 = vmul.f32 %v5297, %v5324
      %v5344 = vmul.f32 %v5309, %v5328
      %v5345 = vmul.f32 %v5306, %v5316
      %v5346 = vmul.f32 %v5302, %v5320
      %v5347 = vmul.f32 %v5298, %v5324
      %v5348 = vmul.f32 %v5310, %v5328
      %5349 = vst [vmem:[#allocation3 + $0x300] sm:$0xff] %v5333
      %5350 = vst [vmem:[#allocation3 + $0x308] sm:$0xff] %v5334
      %5351 = vst [vmem:[#allocation3 + $0x310] sm:$0xff] %v5335
      %5352 = vst [vmem:[#allocation3 + $0x318] sm:$0xff] %v5336
      %5353 = vst [vmem:[#allocation3 + $0x320] sm:$0xff] %v5337
      %5354 = vst [vmem:[#allocation3 + $0x328] sm:$0xff] %v5338
      %5355 = vst [vmem:[#allocation3 + $0x330] sm:$0xff] %v5339
      %5356 = vst [vmem:[#allocation3 + $0x338] sm:$0xff] %v5340
      %5357 = vst [vmem:[#allocation3 + $0x340] sm:$0xff] %v5341
      %5358 = vst [vmem:[#allocation3 + $0x348] sm:$0xff] %v5342
      %5359 = vst [vmem:[#allocation3 + $0x350] sm:$0xff] %v5343
      %5360 = vst [vmem:[#allocation3 + $0x358] sm:$0xff] %v5344
      %5361 = vst [vmem:[#allocation3 + $0x360] sm:$0xff] %v5345
      %5362 = vst [vmem:[#allocation3 + $0x368] sm:$0xff] %v5346
      %5363 = vst [vmem:[#allocation3 + $0x370] sm:$0xff] %v5347
      %5364 = vst [vmem:[#allocation3 + $0x378] sm:$0xff] %v5348
      %5365 = vrot.lane.b32.xlu0 %v4721, 112
      %v5366 = vpop.permute.xlu0 %5365
      %5367 = vrot.lane.b32.xlu0 %v4725, 112
      %v5368 = vpop.permute.xlu0 %5367
      %5369 = vrot.lane.b32.xlu0 %v4729, 112
      %v5370 = vpop.permute.xlu0 %5369
      %5371 = vrot.lane.b32.xlu0 %v4733, 112
      %v5372 = vpop.permute.xlu0 %5371
      %5373 = vrot.lane.b32.xlu0 %v4722, 112
      %v5374 = vpop.permute.xlu0 %5373
      %5375 = vrot.lane.b32.xlu0 %v4726, 112
      %v5376 = vpop.permute.xlu0 %5375
      %5377 = vrot.lane.b32.xlu0 %v4730, 112
      %v5378 = vpop.permute.xlu0 %5377
      %5379 = vrot.lane.b32.xlu0 %v4734, 112
      %v5380 = vpop.permute.xlu0 %5379
      %5381 = vrot.lane.b32.xlu0 %v4723, 112
      %v5382 = vpop.permute.xlu0 %5381
      %5383 = vrot.lane.b32.xlu0 %v4727, 112
      %v5384 = vpop.permute.xlu0 %5383
      %5385 = vrot.lane.b32.xlu0 %v4731, 112
      %v5386 = vpop.permute.xlu0 %5385
      %5387 = vrot.lane.b32.xlu0 %v4735, 112
      %v5388 = vpop.permute.xlu0 %5387
      %5389 = vrot.lane.b32.xlu0 %v4724, 112
      %v5390 = vpop.permute.xlu0 %5389
      %5391 = vrot.lane.b32.xlu0 %v4728, 112
      %v5392 = vpop.permute.xlu0 %5391
      %5393 = vrot.lane.b32.xlu0 %v4732, 112
      %v5394 = vpop.permute.xlu0 %5393
      %5395 = vrot.lane.b32.xlu0 %v4736, 112
      %v5396 = vpop.permute.xlu0 %5395
      %v5397 = vsel %vm960, %v5382, %v5390
      %v5398 = vsel %vm960, %v5384, %v5392
      %v5399 = vsel %vm960, %v5386, %v5394
      %v5400 = vsel %vm960, %v5388, %v5396
      %v5401 = vsel %vm960, %v5374, %v5382
      %v5402 = vsel %vm960, %v5376, %v5384
      %v5403 = vsel %vm960, %v5378, %v5386
      %v5404 = vsel %vm960, %v5380, %v5388
      %v5405 = vsel %vm960, %v5366, %v5374
      %v5406 = vsel %vm960, %v5368, %v5376
      %v5407 = vsel %vm960, %v5370, %v5378
      %v5408 = vsel %vm960, %v5372, %v5380
      %v5409 = vsel %vm960, %v5390, %v5366
      %v5410 = vsel %vm960, %v5392, %v5368
      %v5411 = vsel %vm960, %v5394, %v5370
      %v5412 = vsel %vm960, %v5396, %v5372
      %v5413 = vld [vmem:[%s977] sm:$0xf]
      %v5415 = vlaneseq
      %v5416 = vshrl.u32 %v5415, 7
      %v5417 = vsub.s32 0, %v5416
      %v5418 = vrot.slane %v5413, %v5417
      %v5419 = vlaneseq
      %v5420 = vshrl.u32 %v5419, 7
      %v5421 = vsub.s32 1, %v5420
      %v5422 = vrot.slane %v5413, %v5421
      %v5423 = vlaneseq
      %v5424 = vshrl.u32 %v5423, 7
      %v5425 = vsub.s32 2, %v5424
      %v5426 = vrot.slane %v5413, %v5425
      %v5427 = vlaneseq
      %v5428 = vshrl.u32 %v5427, 7
      %v5429 = vsub.s32 3, %v5428
      %v5430 = vrot.slane %v5413, %v5429
      %v5435 = vmul.f32 %v5405, %v5418
      %v5436 = vmul.f32 %v5401, %v5422
      %v5437 = vmul.f32 %v5397, %v5426
      %v5438 = vmul.f32 %v5409, %v5430
      %v5439 = vmul.f32 %v5406, %v5418
      %v5440 = vmul.f32 %v5402, %v5422
      %v5441 = vmul.f32 %v5398, %v5426
      %v5442 = vmul.f32 %v5410, %v5430
      %v5443 = vmul.f32 %v5407, %v5418
      %v5444 = vmul.f32 %v5403, %v5422
      %v5445 = vmul.f32 %v5399, %v5426
      %v5446 = vmul.f32 %v5411, %v5430
      %v5447 = vmul.f32 %v5408, %v5418
      %v5448 = vmul.f32 %v5404, %v5422
      %v5449 = vmul.f32 %v5400, %v5426
      %v5450 = vmul.f32 %v5412, %v5430
      %5451 = vst [vmem:[#allocation3 + $0x380] sm:$0xff] %v5435
      %5452 = vst [vmem:[#allocation3 + $0x388] sm:$0xff] %v5436
      %5453 = vst [vmem:[#allocation3 + $0x390] sm:$0xff] %v5437
      %5454 = vst [vmem:[#allocation3 + $0x398] sm:$0xff] %v5438
      %5455 = vst [vmem:[#allocation3 + $0x3a0] sm:$0xff] %v5439
      %5456 = vst [vmem:[#allocation3 + $0x3a8] sm:$0xff] %v5440
      %5457 = vst [vmem:[#allocation3 + $0x3b0] sm:$0xff] %v5441
      %5458 = vst [vmem:[#allocation3 + $0x3b8] sm:$0xff] %v5442
      %5459 = vst [vmem:[#allocation3 + $0x3c0] sm:$0xff] %v5443
      %5460 = vst [vmem:[#allocation3 + $0x3c8] sm:$0xff] %v5444
      %5461 = vst [vmem:[#allocation3 + $0x3d0] sm:$0xff] %v5445
      %5462 = vst [vmem:[#allocation3 + $0x3d8] sm:$0xff] %v5446
      %5463 = vst [vmem:[#allocation3 + $0x3e0] sm:$0xff] %v5447
      %5464 = vst [vmem:[#allocation3 + $0x3e8] sm:$0xff] %v5448
      %5465 = vst [vmem:[#allocation3 + $0x3f0] sm:$0xff] %v5449
      %5466 = vst [vmem:[#allocation3 + $0x3f8] sm:$0xff] %v5450
      %5467 = vrot.lane.b32.xlu0 %v4721, 111
      %v5468 = vpop.permute.xlu0 %5467
      %5469 = vrot.lane.b32.xlu0 %v4725, 111
      %v5470 = vpop.permute.xlu0 %5469
      %5471 = vrot.lane.b32.xlu0 %v4729, 111
      %v5472 = vpop.permute.xlu0 %5471
      %5473 = vrot.lane.b32.xlu0 %v4733, 111
      %v5474 = vpop.permute.xlu0 %5473
      %5475 = vrot.lane.b32.xlu0 %v4722, 111
      %v5476 = vpop.permute.xlu0 %5475
      %5477 = vrot.lane.b32.xlu0 %v4726, 111
      %v5478 = vpop.permute.xlu0 %5477
      %5479 = vrot.lane.b32.xlu0 %v4730, 111
      %v5480 = vpop.permute.xlu0 %5479
      %5481 = vrot.lane.b32.xlu0 %v4734, 111
      %v5482 = vpop.permute.xlu0 %5481
      %5483 = vrot.lane.b32.xlu0 %v4723, 111
      %v5484 = vpop.permute.xlu0 %5483
      %5485 = vrot.lane.b32.xlu0 %v4727, 111
      %v5486 = vpop.permute.xlu0 %5485
      %5487 = vrot.lane.b32.xlu0 %v4731, 111
      %v5488 = vpop.permute.xlu0 %5487
      %5489 = vrot.lane.b32.xlu0 %v4735, 111
      %v5490 = vpop.permute.xlu0 %5489
      %5491 = vrot.lane.b32.xlu0 %v4724, 111
      %v5492 = vpop.permute.xlu0 %5491
      %5493 = vrot.lane.b32.xlu0 %v4728, 111
      %v5494 = vpop.permute.xlu0 %5493
      %5495 = vrot.lane.b32.xlu0 %v4732, 111
      %v5496 = vpop.permute.xlu0 %5495
      %5497 = vrot.lane.b32.xlu0 %v4736, 111
      %v5498 = vpop.permute.xlu0 %5497
      %v5499 = vsel %vm1064, %v5484, %v5492
      %v5500 = vsel %vm1064, %v5486, %v5494
      %v5501 = vsel %vm1064, %v5488, %v5496
      %v5502 = vsel %vm1064, %v5490, %v5498
      %v5503 = vsel %vm1064, %v5476, %v5484
      %v5504 = vsel %vm1064, %v5478, %v5486
      %v5505 = vsel %vm1064, %v5480, %v5488
      %v5506 = vsel %vm1064, %v5482, %v5490
      %v5507 = vsel %vm1064, %v5468, %v5476
      %v5508 = vsel %vm1064, %v5470, %v5478
      %v5509 = vsel %vm1064, %v5472, %v5480
      %v5510 = vsel %vm1064, %v5474, %v5482
      %v5511 = vsel %vm1064, %v5492, %v5468
      %v5512 = vsel %vm1064, %v5494, %v5470
      %v5513 = vsel %vm1064, %v5496, %v5472
      %v5514 = vsel %vm1064, %v5498, %v5474
      %v5515 = vld [vmem:[%s1081] sm:$0xf]
      %v5517 = vlaneseq
      %v5518 = vshrl.u32 %v5517, 7
      %v5519 = vsub.s32 0, %v5518
      %v5520 = vrot.slane %v5515, %v5519
      %v5521 = vlaneseq
      %v5522 = vshrl.u32 %v5521, 7
      %v5523 = vsub.s32 1, %v5522
      %v5524 = vrot.slane %v5515, %v5523
      %v5525 = vlaneseq
      %v5526 = vshrl.u32 %v5525, 7
      %v5527 = vsub.s32 2, %v5526
      %v5528 = vrot.slane %v5515, %v5527
      %v5529 = vlaneseq
      %v5530 = vshrl.u32 %v5529, 7
      %v5531 = vsub.s32 3, %v5530
      %v5532 = vrot.slane %v5515, %v5531
      %v5537 = vmul.f32 %v5507, %v5520
      %v5538 = vmul.f32 %v5503, %v5524
      %v5539 = vmul.f32 %v5499, %v5528
      %v5540 = vmul.f32 %v5511, %v5532
      %v5541 = vmul.f32 %v5508, %v5520
      %v5542 = vmul.f32 %v5504, %v5524
      %v5543 = vmul.f32 %v5500, %v5528
      %v5544 = vmul.f32 %v5512, %v5532
      %v5545 = vmul.f32 %v5509, %v5520
      %v5546 = vmul.f32 %v5505, %v5524
      %v5547 = vmul.f32 %v5501, %v5528
      %v5548 = vmul.f32 %v5513, %v5532
      %v5549 = vmul.f32 %v5510, %v5520
      %v5550 = vmul.f32 %v5506, %v5524
      %v5551 = vmul.f32 %v5502, %v5528
      %v5552 = vmul.f32 %v5514, %v5532
      %5553 = vst [vmem:[#allocation3 + $0x400] sm:$0xff] %v5537
      %5554 = vst [vmem:[#allocation3 + $0x408] sm:$0xff] %v5538
      %5555 = vst [vmem:[#allocation3 + $0x410] sm:$0xff] %v5539
      %5556 = vst [vmem:[#allocation3 + $0x418] sm:$0xff] %v5540
      %5557 = vst [vmem:[#allocation3 + $0x420] sm:$0xff] %v5541
      %5558 = vst [vmem:[#allocation3 + $0x428] sm:$0xff] %v5542
      %5559 = vst [vmem:[#allocation3 + $0x430] sm:$0xff] %v5543
      %5560 = vst [vmem:[#allocation3 + $0x438] sm:$0xff] %v5544
      %5561 = vst [vmem:[#allocation3 + $0x440] sm:$0xff] %v5545
      %5562 = vst [vmem:[#allocation3 + $0x448] sm:$0xff] %v5546
      %5563 = vst [vmem:[#allocation3 + $0x450] sm:$0xff] %v5547
      %5564 = vst [vmem:[#allocation3 + $0x458] sm:$0xff] %v5548
      %5565 = vst [vmem:[#allocation3 + $0x460] sm:$0xff] %v5549
      %5566 = vst [vmem:[#allocation3 + $0x468] sm:$0xff] %v5550
      %5567 = vst [vmem:[#allocation3 + $0x470] sm:$0xff] %v5551
      %5568 = vst [vmem:[#allocation3 + $0x478] sm:$0xff] %v5552
      %s5569 = scalar_lea.vmem %s2, 288
      %v5570 = vld [vmem:[%s5569] sm:$0xff]
      %v5571 = vld [vmem:[%s5569 + $0x8] sm:$0xff]
      %v5572 = vld [vmem:[%s5569 + $0x10] sm:$0xff]
      %v5573 = vld [vmem:[%s5569 + $0x18] sm:$0xff]
      %v5574 = vld [vmem:[%s5569 + $0x20] sm:$0xff]
      %v5575 = vld [vmem:[%s5569 + $0x28] sm:$0xff]
      %v5576 = vld [vmem:[%s5569 + $0x30] sm:$0xff]
      %v5577 = vld [vmem:[%s5569 + $0x38] sm:$0xff]
      %v5578 = vld [vmem:[%s5569 + $0x40] sm:$0xff]
      %v5579 = vld [vmem:[%s5569 + $0x48] sm:$0xff]
      %v5580 = vld [vmem:[%s5569 + $0x50] sm:$0xff]
      %v5581 = vld [vmem:[%s5569 + $0x58] sm:$0xff]
      %v5582 = vld [vmem:[#allocation3] sm:$0xff]
      %v5583 = vld [vmem:[#allocation3 + $0x8] sm:$0xff]
      %v5584 = vld [vmem:[#allocation3 + $0x10] sm:$0xff]
      %v5585 = vld [vmem:[#allocation3 + $0x18] sm:$0xff]
      %v5586 = vld [vmem:[#allocation3 + $0x20] sm:$0xff]
      %v5587 = vld [vmem:[#allocation3 + $0x28] sm:$0xff]
      %v5588 = vld [vmem:[#allocation3 + $0x30] sm:$0xff]
      %v5589 = vld [vmem:[#allocation3 + $0x38] sm:$0xff]
      %v5590 = vld [vmem:[#allocation3 + $0x40] sm:$0xff]
      %v5591 = vld [vmem:[#allocation3 + $0x48] sm:$0xff]
      %v5592 = vld [vmem:[#allocation3 + $0x50] sm:$0xff]
      %v5593 = vld [vmem:[#allocation3 + $0x58] sm:$0xff]
      %v5594 = vld [vmem:[#allocation3 + $0x60] sm:$0xff]
      %v5595 = vld [vmem:[#allocation3 + $0x68] sm:$0xff]
      %v5596 = vld [vmem:[#allocation3 + $0x70] sm:$0xff]
      %v5597 = vld [vmem:[#allocation3 + $0x78] sm:$0xff]
      %v5598 = vld [vmem:[#allocation3 + $0x80] sm:$0xff]
      %v5599 = vld [vmem:[#allocation3 + $0x88] sm:$0xff]
      %v5600 = vld [vmem:[#allocation3 + $0x90] sm:$0xff]
      %v5601 = vld [vmem:[#allocation3 + $0x98] sm:$0xff]
      %v5602 = vld [vmem:[#allocation3 + $0xa0] sm:$0xff]
      %v5603 = vld [vmem:[#allocation3 + $0xa8] sm:$0xff]
      %v5604 = vld [vmem:[#allocation3 + $0xb0] sm:$0xff]
      %v5605 = vld [vmem:[#allocation3 + $0xb8] sm:$0xff]
      %v5606 = vld [vmem:[#allocation3 + $0xc0] sm:$0xff]
      %v5607 = vld [vmem:[#allocation3 + $0xc8] sm:$0xff]
      %v5608 = vld [vmem:[#allocation3 + $0xd0] sm:$0xff]
      %v5609 = vld [vmem:[#allocation3 + $0xd8] sm:$0xff]
      %v5610 = vld [vmem:[#allocation3 + $0xe0] sm:$0xff]
      %v5611 = vld [vmem:[#allocation3 + $0xe8] sm:$0xff]
      %v5612 = vld [vmem:[#allocation3 + $0xf0] sm:$0xff]
      %v5613 = vld [vmem:[#allocation3 + $0xf8] sm:$0xff]
      %v5614 = vld [vmem:[#allocation3 + $0x100] sm:$0xff]
      %v5615 = vld [vmem:[#allocation3 + $0x108] sm:$0xff]
      %v5616 = vld [vmem:[#allocation3 + $0x110] sm:$0xff]
      %v5617 = vld [vmem:[#allocation3 + $0x118] sm:$0xff]
      %v5618 = vld [vmem:[#allocation3 + $0x120] sm:$0xff]
      %v5619 = vld [vmem:[#allocation3 + $0x128] sm:$0xff]
      %v5620 = vld [vmem:[#allocation3 + $0x130] sm:$0xff]
      %v5621 = vld [vmem:[#allocation3 + $0x138] sm:$0xff]
      %v5622 = vld [vmem:[#allocation3 + $0x140] sm:$0xff]
      %v5623 = vld [vmem:[#allocation3 + $0x148] sm:$0xff]
      %v5624 = vld [vmem:[#allocation3 + $0x150] sm:$0xff]
      %v5625 = vld [vmem:[#allocation3 + $0x158] sm:$0xff]
      %v5626 = vld [vmem:[#allocation3 + $0x160] sm:$0xff]
      %v5627 = vld [vmem:[#allocation3 + $0x168] sm:$0xff]
      %v5628 = vld [vmem:[#allocation3 + $0x170] sm:$0xff]
      %v5629 = vld [vmem:[#allocation3 + $0x178] sm:$0xff]
      %v5630 = vld [vmem:[#allocation3 + $0x180] sm:$0xff]
      %v5631 = vld [vmem:[#allocation3 + $0x188] sm:$0xff]
      %v5632 = vld [vmem:[#allocation3 + $0x190] sm:$0xff]
      %v5633 = vld [vmem:[#allocation3 + $0x198] sm:$0xff]
      %v5634 = vld [vmem:[#allocation3 + $0x1a0] sm:$0xff]
      %v5635 = vld [vmem:[#allocation3 + $0x1a8] sm:$0xff]
      %v5636 = vld [vmem:[#allocation3 + $0x1b0] sm:$0xff]
      %v5637 = vld [vmem:[#allocation3 + $0x1b8] sm:$0xff]
      %v5638 = vld [vmem:[#allocation3 + $0x1c0] sm:$0xff]
      %v5639 = vld [vmem:[#allocation3 + $0x1c8] sm:$0xff]
      %v5640 = vld [vmem:[#allocation3 + $0x1d0] sm:$0xff]
      %v5641 = vld [vmem:[#allocation3 + $0x1d8] sm:$0xff]
      %v5642 = vld [vmem:[#allocation3 + $0x1e0] sm:$0xff]
      %v5643 = vld [vmem:[#allocation3 + $0x1e8] sm:$0xff]
      %v5644 = vld [vmem:[#allocation3 + $0x1f0] sm:$0xff]
      %v5645 = vld [vmem:[#allocation3 + $0x1f8] sm:$0xff]
      %v5646 = vld [vmem:[#allocation3 + $0x200] sm:$0xff]
      %v5647 = vld [vmem:[#allocation3 + $0x208] sm:$0xff]
      %v5648 = vld [vmem:[#allocation3 + $0x210] sm:$0xff]
      %v5649 = vld [vmem:[#allocation3 + $0x218] sm:$0xff]
      %v5650 = vld [vmem:[#allocation3 + $0x220] sm:$0xff]
      %v5651 = vld [vmem:[#allocation3 + $0x228] sm:$0xff]
      %v5652 = vld [vmem:[#allocation3 + $0x230] sm:$0xff]
      %v5653 = vld [vmem:[#allocation3 + $0x238] sm:$0xff]
      %v5654 = vld [vmem:[#allocation3 + $0x240] sm:$0xff]
      %v5655 = vld [vmem:[#allocation3 + $0x248] sm:$0xff]
      %v5656 = vld [vmem:[#allocation3 + $0x250] sm:$0xff]
      %v5657 = vld [vmem:[#allocation3 + $0x258] sm:$0xff]
      %v5658 = vld [vmem:[#allocation3 + $0x260] sm:$0xff]
      %v5659 = vld [vmem:[#allocation3 + $0x268] sm:$0xff]
      %v5660 = vld [vmem:[#allocation3 + $0x270] sm:$0xff]
      %v5661 = vld [vmem:[#allocation3 + $0x278] sm:$0xff]
      %v5662 = vld [vmem:[#allocation3 + $0x280] sm:$0xff]
      %v5663 = vld [vmem:[#allocation3 + $0x288] sm:$0xff]
      %v5664 = vld [vmem:[#allocation3 + $0x290] sm:$0xff]
      %v5665 = vld [vmem:[#allocation3 + $0x298] sm:$0xff]
      %v5666 = vld [vmem:[#allocation3 + $0x2a0] sm:$0xff]
      %v5667 = vld [vmem:[#allocation3 + $0x2a8] sm:$0xff]
      %v5668 = vld [vmem:[#allocation3 + $0x2b0] sm:$0xff]
      %v5669 = vld [vmem:[#allocation3 + $0x2b8] sm:$0xff]
      %v5670 = vld [vmem:[#allocation3 + $0x2c0] sm:$0xff]
      %v5671 = vld [vmem:[#allocation3 + $0x2c8] sm:$0xff]
      %v5672 = vld [vmem:[#allocation3 + $0x2d0] sm:$0xff]
      %v5673 = vld [vmem:[#allocation3 + $0x2d8] sm:$0xff]
      %v5674 = vld [vmem:[#allocation3 + $0x2e0] sm:$0xff]
      %v5675 = vld [vmem:[#allocation3 + $0x2e8] sm:$0xff]
      %v5676 = vld [vmem:[#allocation3 + $0x2f0] sm:$0xff]
      %v5677 = vld [vmem:[#allocation3 + $0x2f8] sm:$0xff]
      %v5678 = vld [vmem:[#allocation3 + $0x300] sm:$0xff]
      %v5679 = vld [vmem:[#allocation3 + $0x308] sm:$0xff]
      %v5680 = vld [vmem:[#allocation3 + $0x310] sm:$0xff]
      %v5681 = vld [vmem:[#allocation3 + $0x318] sm:$0xff]
      %v5682 = vld [vmem:[#allocation3 + $0x320] sm:$0xff]
      %v5683 = vld [vmem:[#allocation3 + $0x328] sm:$0xff]
      %v5684 = vld [vmem:[#allocation3 + $0x330] sm:$0xff]
      %v5685 = vld [vmem:[#allocation3 + $0x338] sm:$0xff]
      %v5686 = vld [vmem:[#allocation3 + $0x340] sm:$0xff]
      %v5687 = vld [vmem:[#allocation3 + $0x348] sm:$0xff]
      %v5688 = vld [vmem:[#allocation3 + $0x350] sm:$0xff]
      %v5689 = vld [vmem:[#allocation3 + $0x358] sm:$0xff]
      %v5690 = vld [vmem:[#allocation3 + $0x360] sm:$0xff]
      %v5691 = vld [vmem:[#allocation3 + $0x368] sm:$0xff]
      %v5692 = vld [vmem:[#allocation3 + $0x370] sm:$0xff]
      %v5693 = vld [vmem:[#allocation3 + $0x378] sm:$0xff]
      %v5694 = vld [vmem:[#allocation3 + $0x380] sm:$0xff]
      %v5695 = vld [vmem:[#allocation3 + $0x388] sm:$0xff]
      %v5696 = vld [vmem:[#allocation3 + $0x390] sm:$0xff]
      %v5697 = vld [vmem:[#allocation3 + $0x398] sm:$0xff]
      %v5698 = vld [vmem:[#allocation3 + $0x3a0] sm:$0xff]
      %v5699 = vld [vmem:[#allocation3 + $0x3a8] sm:$0xff]
      %v5700 = vld [vmem:[#allocation3 + $0x3b0] sm:$0xff]
      %v5701 = vld [vmem:[#allocation3 + $0x3b8] sm:$0xff]
      %v5702 = vld [vmem:[#allocation3 + $0x3c0] sm:$0xff]
      %v5703 = vld [vmem:[#allocation3 + $0x3c8] sm:$0xff]
      %v5704 = vld [vmem:[#allocation3 + $0x3d0] sm:$0xff]
      %v5705 = vld [vmem:[#allocation3 + $0x3d8] sm:$0xff]
      %v5706 = vld [vmem:[#allocation3 + $0x3e0] sm:$0xff]
      %v5707 = vld [vmem:[#allocation3 + $0x3e8] sm:$0xff]
      %v5708 = vld [vmem:[#allocation3 + $0x3f0] sm:$0xff]
      %v5709 = vld [vmem:[#allocation3 + $0x3f8] sm:$0xff]
      %v5710 = vld [vmem:[#allocation3 + $0x400] sm:$0xff]
      %v5711 = vld [vmem:[#allocation3 + $0x408] sm:$0xff]
      %v5712 = vld [vmem:[#allocation3 + $0x410] sm:$0xff]
      %v5713 = vld [vmem:[#allocation3 + $0x418] sm:$0xff]
      %v5714 = vld [vmem:[#allocation3 + $0x420] sm:$0xff]
      %v5715 = vld [vmem:[#allocation3 + $0x428] sm:$0xff]
      %v5716 = vld [vmem:[#allocation3 + $0x430] sm:$0xff]
      %v5717 = vld [vmem:[#allocation3 + $0x438] sm:$0xff]
      %v5718 = vld [vmem:[#allocation3 + $0x440] sm:$0xff]
      %v5719 = vld [vmem:[#allocation3 + $0x448] sm:$0xff]
      %v5720 = vld [vmem:[#allocation3 + $0x450] sm:$0xff]
      %v5721 = vld [vmem:[#allocation3 + $0x458] sm:$0xff]
      %v5722 = vld [vmem:[#allocation3 + $0x460] sm:$0xff]
      %v5723 = vld [vmem:[#allocation3 + $0x468] sm:$0xff]
      %v5724 = vld [vmem:[#allocation3 + $0x470] sm:$0xff]
      %v5725 = vld [vmem:[#allocation3 + $0x478] sm:$0xff]
      %v5727 = vsel %vm1292, %v5572, 0
      %v5730 = vsel %vm1292, %v5575, 0
      %v5733 = vsel %vm1292, %v5578, 0
      %v5736 = vsel %vm1292, %v5581, 0
      %5738 = vmatprep.subr.mxu0 %v5583
      %5739 = vmatpush1.msra.mxu0 %v5582
      %5740 = vmatprep.subr.mxu0 %v5587
      %5741 = vmatpush1.msra.mxu0 %v5586
      %5742 = vmatprep.subr.mxu0 %v5591
      %5743 = vmatpush1.msra.mxu0 %v5590
      %5744 = vmatprep.subr.mxu0 %v5595
      %5745 = vmatpush1.msra.mxu0 %v5594
      %5746 = vmatprep.subr.mxu0 %v5599
      %5747 = vmatpush1.msra.mxu0 %v5598
      %5748 = vmatprep.subr.mxu0 %v5603
      %5749 = vmatpush1.msra.mxu0 %v5602
      %5750 = vmatprep.subr.mxu0 %v5607
      %5751 = vmatpush1.msra.mxu0 %v5606
      %5752 = vmatprep.subr.mxu0 %v5611
      %5753 = vmatpush1.msra.mxu0 %v5610
      %5754 = vmatprep.subr.mxu0 %v5615
      %5755 = vmatpush1.msra.mxu0 %v5614
      %5756 = vmatprep.subr.mxu0 %v5619
      %5757 = vmatpush1.msra.mxu0 %v5618
      %5758 = vmatprep.subr.mxu0 %v5623
      %5759 = vmatpush1.msra.mxu0 %v5622
      %5760 = vmatprep.subr.mxu0 %v5627
      %5761 = vmatpush1.msra.mxu0 %v5626
      %5762 = vmatprep.subr.mxu0 %v5631
      %5763 = vmatpush1.msra.mxu0 %v5630
      %5764 = vmatprep.subr.mxu0 %v5635
      %5765 = vmatpush1.msra.mxu0 %v5634
      %5766 = vmatprep.subr.mxu0 %v5639
      %5767 = vmatpush1.msra.mxu0 %v5638
      %5768 = vmatprep.subr.mxu0 %v5643
      %5769 = vmatpush1.msra.mxu0 %v5642
      %5770 = vmatprep.subr.mxu0 %v5647
      %5771 = vmatpush1.msra.mxu0 %v5646
      %5772 = vmatprep.subr.mxu0 %v5651
      %5773 = vmatpush1.msra.mxu0 %v5650
      %5774 = vmatprep.subr.mxu0 %v5655
      %5775 = vmatpush1.msra.mxu0 %v5654
      %5776 = vmatprep.subr.mxu0 %v5659
      %5777 = vmatpush1.msra.mxu0 %v5658
      %5778 = vmatprep.subr.mxu0 %v5663
      %5779 = vmatpush1.msra.mxu0 %v5662
      %5780 = vmatprep.subr.mxu0 %v5667
      %5781 = vmatpush1.msra.mxu0 %v5666
      %5782 = vmatprep.subr.mxu0 %v5671
      %5783 = vmatpush1.msra.mxu0 %v5670
      %5784 = vmatprep.subr.mxu0 %v5675
      %5785 = vmatpush1.msra.mxu0 %v5674
      %5786 = vmatprep.subr.mxu0 %v5679
      %5787 = vmatpush1.msra.mxu0 %v5678
      %5788 = vmatprep.subr.mxu0 %v5683
      %5789 = vmatpush1.msra.mxu0 %v5682
      %5790 = vmatprep.subr.mxu0 %v5687
      %5791 = vmatpush1.msra.mxu0 %v5686
      %5792 = vmatprep.subr.mxu0 %v5691
      %5793 = vmatpush1.msra.mxu0 %v5690
      %5794 = vmatprep.subr.mxu0 %v5695
      %5795 = vmatpush1.msra.mxu0 %v5694
      %5796 = vmatprep.subr.mxu0 %v5699
      %5797 = vmatpush1.msra.mxu0 %v5698
      %5798 = vmatprep.subr.mxu0 %v5703
      %5799 = vmatpush1.msra.mxu0 %v5702
      %5800 = vmatprep.subr.mxu0 %v5707
      %5801 = vmatpush1.msra.mxu0 %v5706
      %5802 = vmatprep.mubr.f32.mxu0 %v5571
      %5803 = vmatmul.mubr.f32.gmra.mrb[0].mxu0 %v5570
      %v5804 = vpop.f32.mrb[0].mxu0
      %v5805 = vadd.f32 0.0, %v5804
      %v5806 = vpop.f32.mrb[0].mxu0
      %v5807 = vadd.f32 0.0, %v5806
      %5808 = vmatprep.mubr.f32.mxu0 %v5574
      %5809 = vmatmul.mubr.f32.gmra.mrb[0].mxu0 %v5573
      %v5810 = vpop.f32.mrb[0].mxu0
      %v5811 = vadd.f32 0.0, %v5810
      %v5812 = vpop.f32.mrb[0].mxu0
      %v5813 = vadd.f32 0.0, %v5812
      %5814 = vmatprep.mubr.f32.mxu0 %v5577
      %5815 = vmatmul.mubr.f32.gmra.mrb[0].mxu0 %v5576
      %v5816 = vpop.f32.mrb[0].mxu0
      %v5817 = vadd.f32 0.0, %v5816
      %v5818 = vpop.f32.mrb[0].mxu0
      %v5819 = vadd.f32 0.0, %v5818
      %5820 = vmatprep.mubr.f32.mxu0 %v5580
      %5821 = vmatmul.mubr.f32.gmra.mrb[0].mxu0 %v5579
      %v5822 = vpop.f32.mrb[0].mxu0
      %v5823 = vadd.f32 0.0, %v5822
      %v5824 = vpop.f32.mrb[0].mxu0
      %v5825 = vadd.f32 0.0, %v5824
      %5826 = vdwg.mxu0
      %5827 = vmatprep.subr.mxu0 %v5711
      %5828 = vmatpush1.msra.mxu0 %v5710
      %5829 = vmatprep.subr.mxu0 %v5715
      %5830 = vmatpush1.msra.mxu0 %v5714
      %5831 = vmatprep.subr.mxu0 %v5719
      %5832 = vmatpush1.msra.mxu0 %v5718
      %5833 = vmatprep.subr.mxu0 %v5723
      %5834 = vmatpush1.msra.mxu0 %v5722
      %5835 = vmatprep.subr.mxu0 0.0
      %5836 = vmatpush1.msra.mxu0 0.0
      %5837 = vmatprep.subr.mxu0 0.0
      %5838 = vmatpush1.msra.mxu0 0.0
      %5839 = vmatprep.subr.mxu0 0.0
      %5840 = vmatpush1.msra.mxu0 0.0
      %5841 = vmatprep.subr.mxu0 0.0
      %5842 = vmatpush1.msra.mxu0 0.0
      %5843 = vmatprep.subr.mxu0 0.0
      %5844 = vmatpush1.msra.mxu0 0.0
      %5845 = vmatprep.subr.mxu0 0.0
      %5846 = vmatpush1.msra.mxu0 0.0
      %5847 = vmatprep.subr.mxu0 0.0
      %5848 = vmatpush1.msra.mxu0 0.0
      %5849 = vmatprep.subr.mxu0 0.0
      %5850 = vmatpush1.msra.mxu0 0.0
      %5851 = vmatprep.subr.mxu0 0.0
      %5852 = vmatpush1.msra.mxu0 0.0
      %5853 = vmatprep.subr.mxu0 0.0
      %5854 = vmatpush1.msra.mxu0 0.0
      %5855 = vmatprep.subr.mxu0 0.0
      %5856 = vmatpush1.msra.mxu0 0.0
      %5857 = vmatprep.subr.mxu0 0.0
      %5858 = vmatpush1.msra.mxu0 0.0
      %5859 = vmatprep.subr.mxu0 0.0
      %5860 = vmatpush1.msra.mxu0 0.0
      %5861 = vmatprep.subr.mxu0 0.0
      %5862 = vmatpush1.msra.mxu0 0.0
      %5863 = vmatprep.subr.mxu0 0.0
      %5864 = vmatpush1.msra.mxu0 0.0
      %5865 = vmatprep.subr.mxu0 0.0
      %5866 = vmatpush1.msra.mxu0 0.0
      %5867 = vmatprep.subr.mxu0 0.0
      %5868 = vmatpush1.msra.mxu0 0.0
      %5869 = vmatprep.subr.mxu0 0.0
      %5870 = vmatpush1.msra.mxu0 0.0
      %5871 = vmatprep.subr.mxu0 0.0
      %5872 = vmatpush1.msra.mxu0 0.0
      %5873 = vmatprep.subr.mxu0 0.0
      %5874 = vmatpush1.msra.mxu0 0.0
      %5875 = vmatprep.subr.mxu0 0.0
      %5876 = vmatpush1.msra.mxu0 0.0
      %5877 = vmatprep.subr.mxu0 0.0
      %5878 = vmatpush1.msra.mxu0 0.0
      %5879 = vmatprep.subr.mxu0 0.0
      %5880 = vmatpush1.msra.mxu0 0.0
      %5881 = vmatprep.subr.mxu0 0.0
      %5882 = vmatpush1.msra.mxu0 0.0
      %5883 = vmatprep.subr.mxu0 0.0
      %5884 = vmatpush1.msra.mxu0 0.0
      %5885 = vmatprep.subr.mxu0 0.0
      %5886 = vmatpush1.msra.mxu0 0.0
      %5887 = vmatprep.subr.mxu0 0.0
      %5888 = vmatpush1.msra.mxu0 0.0
      %5889 = vmatprep.subr.mxu0 0.0
      %5890 = vmatpush1.msra.mxu0 0.0
      %5891 = vmatprep.mubr.f32.mxu0 0.0
      %5892 = vmatmul.mubr.f32.gmra.mrb[0].mxu0 %v5727
      %v5893 = vpop.f32.mrb[0].mxu0
      %v5894 = vadd.f32 %v5805, %v5893
      %v5895 = vpop.f32.mrb[0].mxu0
      %v5896 = vadd.f32 %v5807, %v5895
      %5897 = vmatprep.mubr.f32.mxu0 0.0
      %5898 = vmatmul.mubr.f32.gmra.mrb[0].mxu0 %v5730
      %v5899 = vpop.f32.mrb[0].mxu0
      %v5900 = vadd.f32 %v5811, %v5899
      %v5901 = vpop.f32.mrb[0].mxu0
      %v5902 = vadd.f32 %v5813, %v5901
      %5903 = vmatprep.mubr.f32.mxu0 0.0
      %5904 = vmatmul.mubr.f32.gmra.mrb[0].mxu0 %v5733
      %v5905 = vpop.f32.mrb[0].mxu0
      %v5906 = vadd.f32 %v5817, %v5905
      %v5907 = vpop.f32.mrb[0].mxu0
      %v5908 = vadd.f32 %v5819, %v5907
      %5909 = vmatprep.mubr.f32.mxu0 0.0
      %5910 = vmatmul.mubr.f32.gmra.mrb[0].mxu0 %v5736
      %v5911 = vpop.f32.mrb[0].mxu0
      %v5912 = vadd.f32 %v5823, %v5911
      %v5913 = vpop.f32.mrb[0].mxu0
      %v5914 = vadd.f32 %v5825, %v5913
      %5915 = vdwg.mxu0
      %5916 = vmatprep.subr.mxu0 %v5585
      %5917 = vmatpush1.msra.mxu0 %v5584
      %5918 = vmatprep.subr.mxu0 %v5589
      %5919 = vmatpush1.msra.mxu0 %v5588
      %5920 = vmatprep.subr.mxu0 %v5593
      %5921 = vmatpush1.msra.mxu0 %v5592
      %5922 = vmatprep.subr.mxu0 %v5597
      %5923 = vmatpush1.msra.mxu0 %v5596
      %5924 = vmatprep.subr.mxu0 %v5601
      %5925 = vmatpush1.msra.mxu0 %v5600
      %5926 = vmatprep.subr.mxu0 %v5605
      %5927 = vmatpush1.msra.mxu0 %v5604
      %5928 = vmatprep.subr.mxu0 %v5609
      %5929 = vmatpush1.msra.mxu0 %v5608
      %5930 = vmatprep.subr.mxu0 %v5613
      %5931 = vmatpush1.msra.mxu0 %v5612
      %5932 = vmatprep.subr.mxu0 %v5617
      %5933 = vmatpush1.msra.mxu0 %v5616
      %5934 = vmatprep.subr.mxu0 %v5621
      %5935 = vmatpush1.msra.mxu0 %v5620
      %5936 = vmatprep.subr.mxu0 %v5625
      %5937 = vmatpush1.msra.mxu0 %v5624
      %5938 = vmatprep.subr.mxu0 %v5629
      %5939 = vmatpush1.msra.mxu0 %v5628
      %5940 = vmatprep.subr.mxu0 %v5633
      %5941 = vmatpush1.msra.mxu0 %v5632
      %5942 = vmatprep.subr.mxu0 %v5637
      %5943 = vmatpush1.msra.mxu0 %v5636
      %5944 = vmatprep.subr.mxu0 %v5641
      %5945 = vmatpush1.msra.mxu0 %v5640
      %5946 = vmatprep.subr.mxu0 %v5645
      %5947 = vmatpush1.msra.mxu0 %v5644
      %5948 = vmatprep.subr.mxu0 %v5649
      %5949 = vmatpush1.msra.mxu0 %v5648
      %5950 = vmatprep.subr.mxu0 %v5653
      %5951 = vmatpush1.msra.mxu0 %v5652
      %5952 = vmatprep.subr.mxu0 %v5657
      %5953 = vmatpush1.msra.mxu0 %v5656
      %5954 = vmatprep.subr.mxu0 %v5661
      %5955 = vmatpush1.msra.mxu0 %v5660
      %5956 = vmatprep.subr.mxu0 %v5665
      %5957 = vmatpush1.msra.mxu0 %v5664
      %5958 = vmatprep.subr.mxu0 %v5669
      %5959 = vmatpush1.msra.mxu0 %v5668
      %5960 = vmatprep.subr.mxu0 %v5673
      %5961 = vmatpush1.msra.mxu0 %v5672
      %5962 = vmatprep.subr.mxu0 %v5677
      %5963 = vmatpush1.msra.mxu0 %v5676
      %5964 = vmatprep.subr.mxu0 %v5681
      %5965 = vmatpush1.msra.mxu0 %v5680
      %5966 = vmatprep.subr.mxu0 %v5685
      %5967 = vmatpush1.msra.mxu0 %v5684
      %5968 = vmatprep.subr.mxu0 %v5689
      %5969 = vmatpush1.msra.mxu0 %v5688
      %5970 = vmatprep.subr.mxu0 %v5693
      %5971 = vmatpush1.msra.mxu0 %v5692
      %5972 = vmatprep.subr.mxu0 %v5697
      %5973 = vmatpush1.msra.mxu0 %v5696
      %5974 = vmatprep.subr.mxu0 %v5701
      %5975 = vmatpush1.msra.mxu0 %v5700
      %5976 = vmatprep.subr.mxu0 %v5705
      %5977 = vmatpush1.msra.mxu0 %v5704
      %5978 = vmatprep.subr.mxu0 %v5709
      %5979 = vmatpush1.msra.mxu0 %v5708
      %5980 = vmatprep.mubr.f32.mxu0 %v5571
      %5981 = vmatmul.mubr.f32.gmra.mrb[0].mxu0 %v5570
      %v5982 = vpop.f32.mrb[0].mxu0
      %v5983 = vadd.f32 0.0, %v5982
      %v5984 = vpop.f32.mrb[0].mxu0
      %v5985 = vadd.f32 0.0, %v5984
      %5986 = vmatprep.mubr.f32.mxu0 %v5574
      %5987 = vmatmul.mubr.f32.gmra.mrb[0].mxu0 %v5573
      %v5988 = vpop.f32.mrb[0].mxu0
      %v5989 = vadd.f32 0.0, %v5988
      %v5990 = vpop.f32.mrb[0].mxu0
      %v5991 = vadd.f32 0.0, %v5990
      %5992 = vmatprep.mubr.f32.mxu0 %v5577
      %5993 = vmatmul.mubr.f32.gmra.mrb[0].mxu0 %v5576
      %v5994 = vpop.f32.mrb[0].mxu0
      %v5995 = vadd.f32 0.0, %v5994
      %v5996 = vpop.f32.mrb[0].mxu0
      %v5997 = vadd.f32 0.0, %v5996
      %5998 = vmatprep.mubr.f32.mxu0 %v5580
      %5999 = vmatmul.mubr.f32.gmra.mrb[0].mxu0 %v5579
      %v6000 = vpop.f32.mrb[0].mxu0
      %v6001 = vadd.f32 0.0, %v6000
      %v6002 = vpop.f32.mrb[0].mxu0
      %v6003 = vadd.f32 0.0, %v6002
      %6004 = vdwg.mxu0
      %6005 = vmatprep.subr.mxu0 %v5713
      %6006 = vmatpush1.msra.mxu0 %v5712
      %6007 = vmatprep.subr.mxu0 %v5717
      %6008 = vmatpush1.msra.mxu0 %v5716
      %6009 = vmatprep.subr.mxu0 %v5721
      %6010 = vmatpush1.msra.mxu0 %v5720
      %6011 = vmatprep.subr.mxu0 %v5725
      %6012 = vmatpush1.msra.mxu0 %v5724
      %6013 = vmatprep.subr.mxu0 0.0
      %6014 = vmatpush1.msra.mxu0 0.0
      %6015 = vmatprep.subr.mxu0 0.0
      %6016 = vmatpush1.msra.mxu0 0.0
      %6017 = vmatprep.subr.mxu0 0.0
      %6018 = vmatpush1.msra.mxu0 0.0
      %6019 = vmatprep.subr.mxu0 0.0
      %6020 = vmatpush1.msra.mxu0 0.0
      %6021 = vmatprep.subr.mxu0 0.0
      %6022 = vmatpush1.msra.mxu0 0.0
      %6023 = vmatprep.subr.mxu0 0.0
      %6024 = vmatpush1.msra.mxu0 0.0
      %6025 = vmatprep.subr.mxu0 0.0
      %6026 = vmatpush1.msra.mxu0 0.0
      %6027 = vmatprep.subr.mxu0 0.0
      %6028 = vmatpush1.msra.mxu0 0.0
      %6029 = vmatprep.subr.mxu0 0.0
      %6030 = vmatpush1.msra.mxu0 0.0
      %6031 = vmatprep.subr.mxu0 0.0
      %6032 = vmatpush1.msra.mxu0 0.0
      %6033 = vmatprep.subr.mxu0 0.0
      %6034 = vmatpush1.msra.mxu0 0.0
      %6035 = vmatprep.subr.mxu0 0.0
      %6036 = vmatpush1.msra.mxu0 0.0
      %6037 = vmatprep.subr.mxu0 0.0
      %6038 = vmatpush1.msra.mxu0 0.0
      %6039 = vmatprep.subr.mxu0 0.0
      %6040 = vmatpush1.msra.mxu0 0.0
      %6041 = vmatprep.subr.mxu0 0.0
      %6042 = vmatpush1.msra.mxu0 0.0
      %6043 = vmatprep.subr.mxu0 0.0
      %6044 = vmatpush1.msra.mxu0 0.0
      %6045 = vmatprep.subr.mxu0 0.0
      %6046 = vmatpush1.msra.mxu0 0.0
      %6047 = vmatprep.subr.mxu0 0.0
      %6048 = vmatpush1.msra.mxu0 0.0
      %6049 = vmatprep.subr.mxu0 0.0
      %6050 = vmatpush1.msra.mxu0 0.0
      %6051 = vmatprep.subr.mxu0 0.0
      %6052 = vmatpush1.msra.mxu0 0.0
      %6053 = vmatprep.subr.mxu0 0.0
      %6054 = vmatpush1.msra.mxu0 0.0
      %6055 = vmatprep.subr.mxu0 0.0
      %6056 = vmatpush1.msra.mxu0 0.0
      %6057 = vmatprep.subr.mxu0 0.0
      %6058 = vmatpush1.msra.mxu0 0.0
      %6059 = vmatprep.subr.mxu0 0.0
      %6060 = vmatpush1.msra.mxu0 0.0
      %6061 = vmatprep.subr.mxu0 0.0
      %6062 = vmatpush1.msra.mxu0 0.0
      %6063 = vmatprep.subr.mxu0 0.0
      %6064 = vmatpush1.msra.mxu0 0.0
      %6065 = vmatprep.subr.mxu0 0.0
      %6066 = vmatpush1.msra.mxu0 0.0
      %6067 = vmatprep.subr.mxu0 0.0
      %6068 = vmatpush1.msra.mxu0 0.0
      %6069 = vmatprep.mubr.f32.mxu0 0.0
      %6070 = vmatmul.mubr.f32.gmra.mrb[0].mxu0 %v5727
      %v6071 = vpop.f32.mrb[0].mxu0
      %v6072 = vadd.f32 %v5983, %v6071
      %v6073 = vpop.f32.mrb[0].mxu0
      %v6074 = vadd.f32 %v5985, %v6073
      %6075 = vmatprep.mubr.f32.mxu0 0.0
      %6076 = vmatmul.mubr.f32.gmra.mrb[0].mxu0 %v5730
      %v6077 = vpop.f32.mrb[0].mxu0
      %v6078 = vadd.f32 %v5989, %v6077
      %v6079 = vpop.f32.mrb[0].mxu0
      %v6080 = vadd.f32 %v5991, %v6079
      %6081 = vmatprep.mubr.f32.mxu0 0.0
      %6082 = vmatmul.mubr.f32.gmra.mrb[0].mxu0 %v5733
      %v6083 = vpop.f32.mrb[0].mxu0
      %v6084 = vadd.f32 %v5995, %v6083
      %v6085 = vpop.f32.mrb[0].mxu0
      %v6086 = vadd.f32 %v5997, %v6085
      %6087 = vmatprep.mubr.f32.mxu0 0.0
      %6088 = vmatmul.mubr.f32.gmra.mrb[0].mxu0 %v5736
      %v6089 = vpop.f32.mrb[0].mxu0
      %v6090 = vadd.f32 %v6001, %v6089
      %v6091 = vpop.f32.mrb[0].mxu0
      %v6092 = vadd.f32 %v6003, %v6091
      %6093 = vdwg.mxu0
      %v6094 = vsub.f32 %v5894, %v6072
      %v6095 = vsub.f32 %v5896, %v6074
      %v6096 = vsub.f32 %v5900, %v6078
      %v6097 = vsub.f32 %v5902, %v6080
      %v6098 = vsub.f32 %v5906, %v6084
      %v6099 = vsub.f32 %v5908, %v6086
      %v6100 = vsub.f32 %v5912, %v6090
      %v6101 = vsub.f32 %v5914, %v6092
      %v6102 = vmul.f32 %v6094, %v6094
      %v6103 = vmul.f32 %v6095, %v6095
      %v6104 = vmul.f32 %v6096, %v6096
      %v6105 = vmul.f32 %v6097, %v6097
      %v6106 = vmul.f32 %v6098, %v6098
      %v6107 = vmul.f32 %v6099, %v6099
      %v6108 = vmul.f32 %v6100, %v6100
      %v6109 = vmul.f32 %v6101, %v6101
      %v6110 = vmul.f32 %v6102, 6.1035156e-05
      %v6111 = vmul.f32 %v6103, 6.1035156e-05
      %v6112 = vmul.f32 %v6104, 6.1035156e-05
      %v6113 = vmul.f32 %v6105, 6.1035156e-05
      %v6114 = vmul.f32 %v6106, 6.1035156e-05
      %v6115 = vmul.f32 %v6107, 6.1035156e-05
      %v6116 = vmul.f32 %v6108, 6.1035156e-05
      %v6117 = vmul.f32 %v6109, 6.1035156e-05
      %v6118 = vadd.f32 %v4640, %v6110
      %v6119 = vadd.f32 %v4641, %v6111
      %v6120 = vadd.f32 %v4642, %v6112
      %v6121 = vadd.f32 %v4643, %v6113
      %v6122 = vadd.f32 %v4644, %v6114
      %v6123 = vadd.f32 %v4645, %v6115
      %v6124 = vadd.f32 %v4646, %v6116
      %v6125 = vadd.f32 %v4647, %v6117
      %s6126 = scalar_lea.vmem %s3, 96
      %v6127 = vld [vmem:[%s6126] sm:$0xff]
      %v6128 = vld [vmem:[%s6126 + $0x8] sm:$0xff]
      %v6129 = vld [vmem:[%s6126 + $0x10] sm:$0xff]
      %v6130 = vld [vmem:[%s6126 + $0x18] sm:$0xff]
      %6132 = vset.pattern.permute.xlu0 0
      %6133 = vperm.xlu0 %6132, %v6127
      %v6134 = vpop.permute.xlu0 %6133
      %6137 = vset.pattern.permute.xlu0 0
      %6138 = vperm.xlu0 %6137, %v6128
      %v6139 = vpop.permute.xlu0 %6138
      %6142 = vset.pattern.permute.xlu0 0
      %6143 = vperm.xlu0 %6142, %v6129
      %v6144 = vpop.permute.xlu0 %6143
      %6147 = vset.pattern.permute.xlu0 0
      %6148 = vperm.xlu0 %6147, %v6130
      %v6149 = vpop.permute.xlu0 %6148
      %v6151 = vadd.f32 %v5894, %v6134
      %v6152 = vadd.f32 %v5896, %v6134
      %v6153 = vadd.f32 %v6072, %v6134
      %v6154 = vadd.f32 %v6074, %v6134
      %v6155 = vadd.f32 %v5900, %v6139
      %v6156 = vadd.f32 %v5902, %v6139
      %v6157 = vadd.f32 %v6078, %v6139
      %v6158 = vadd.f32 %v6080, %v6139
      %v6159 = vadd.f32 %v5906, %v6144
      %v6160 = vadd.f32 %v5908, %v6144
      %v6161 = vadd.f32 %v6084, %v6144
      %v6162 = vadd.f32 %v6086, %v6144
      %v6163 = vadd.f32 %v5912, %v6149
      %v6164 = vadd.f32 %v5914, %v6149
      %v6165 = vadd.f32 %v6090, %v6149
      %v6166 = vadd.f32 %v6092, %v6149
      %v6167 = vmax.f32 %v6151, 0.0
      %v6168 = vmax.f32 %v6152, 0.0
      %v6169 = vmax.f32 %v6153, 0.0
      %v6170 = vmax.f32 %v6154, 0.0
      %v6171 = vmax.f32 %v6155, 0.0
      %v6172 = vmax.f32 %v6156, 0.0
      %v6173 = vmax.f32 %v6157, 0.0
      %v6174 = vmax.f32 %v6158, 0.0
      %v6175 = vmax.f32 %v6159, 0.0
      %v6176 = vmax.f32 %v6160, 0.0
      %v6177 = vmax.f32 %v6161, 0.0
      %v6178 = vmax.f32 %v6162, 0.0
      %v6179 = vmax.f32 %v6163, 0.0
      %v6180 = vmax.f32 %v6164, 0.0
      %v6181 = vmax.f32 %v6165, 0.0
      %v6182 = vmax.f32 %v6166, 0.0
      %6183 = vst [vmem:[#allocation2] sm:$0xff] %v6167
      %6184 = vst [vmem:[#allocation2 + $0x8] sm:$0xff] %v6168
      %6185 = vst [vmem:[#allocation2 + $0x10] sm:$0xff] %v6169
      %6186 = vst [vmem:[#allocation2 + $0x18] sm:$0xff] %v6170
      %6187 = vst [vmem:[#allocation2 + $0x20] sm:$0xff] %v6171
      %6188 = vst [vmem:[#allocation2 + $0x28] sm:$0xff] %v6172
      %6189 = vst [vmem:[#allocation2 + $0x30] sm:$0xff] %v6173
      %6190 = vst [vmem:[#allocation2 + $0x38] sm:$0xff] %v6174
      %6191 = vst [vmem:[#allocation2 + $0x40] sm:$0xff] %v6175
      %6192 = vst [vmem:[#allocation2 + $0x48] sm:$0xff] %v6176
      %6193 = vst [vmem:[#allocation2 + $0x50] sm:$0xff] %v6177
      %6194 = vst [vmem:[#allocation2 + $0x58] sm:$0xff] %v6178
      %6195 = vst [vmem:[#allocation2 + $0x60] sm:$0xff] %v6179
      %6196 = vst [vmem:[#allocation2 + $0x68] sm:$0xff] %v6180
      %6197 = vst [vmem:[#allocation2 + $0x70] sm:$0xff] %v6181
      %6198 = vst [vmem:[#allocation2 + $0x78] sm:$0xff] %v6182
      %v6199 = vld [vmem:[#allocation2] sm:$0xff]
      %v6200 = vld [vmem:[#allocation2 + $0x8] sm:$0xff]
      %v6201 = vld [vmem:[#allocation2 + $0x10] sm:$0xff]
      %v6202 = vld [vmem:[#allocation2 + $0x18] sm:$0xff]
      %v6203 = vld [vmem:[#allocation2 + $0x20] sm:$0xff]
      %v6204 = vld [vmem:[#allocation2 + $0x28] sm:$0xff]
      %v6205 = vld [vmem:[#allocation2 + $0x30] sm:$0xff]
      %v6206 = vld [vmem:[#allocation2 + $0x38] sm:$0xff]
      %v6207 = vld [vmem:[#allocation2 + $0x40] sm:$0xff]
      %v6208 = vld [vmem:[#allocation2 + $0x48] sm:$0xff]
      %v6209 = vld [vmem:[#allocation2 + $0x50] sm:$0xff]
      %v6210 = vld [vmem:[#allocation2 + $0x58] sm:$0xff]
      %v6211 = vld [vmem:[#allocation2 + $0x60] sm:$0xff]
      %v6212 = vld [vmem:[#allocation2 + $0x68] sm:$0xff]
      %v6213 = vld [vmem:[#allocation2 + $0x70] sm:$0xff]
      %v6214 = vld [vmem:[#allocation2 + $0x78] sm:$0xff]
      %6215 = vrot.lane.b32.xlu0 %v6199, 17
      %v6216 = vpop.permute.xlu0 %6215
      %6217 = vrot.lane.b32.xlu0 %v6203, 17
      %v6218 = vpop.permute.xlu0 %6217
      %6219 = vrot.lane.b32.xlu0 %v6207, 17
      %v6220 = vpop.permute.xlu0 %6219
      %6221 = vrot.lane.b32.xlu0 %v6211, 17
      %v6222 = vpop.permute.xlu0 %6221
      %6223 = vrot.lane.b32.xlu0 %v6200, 17
      %v6224 = vpop.permute.xlu0 %6223
      %6225 = vrot.lane.b32.xlu0 %v6204, 17
      %v6226 = vpop.permute.xlu0 %6225
      %6227 = vrot.lane.b32.xlu0 %v6208, 17
      %v6228 = vpop.permute.xlu0 %6227
      %6229 = vrot.lane.b32.xlu0 %v6212, 17
      %v6230 = vpop.permute.xlu0 %6229
      %6231 = vrot.lane.b32.xlu0 %v6201, 17
      %v6232 = vpop.permute.xlu0 %6231
      %6233 = vrot.lane.b32.xlu0 %v6205, 17
      %v6234 = vpop.permute.xlu0 %6233
      %6235 = vrot.lane.b32.xlu0 %v6209, 17
      %v6236 = vpop.permute.xlu0 %6235
      %6237 = vrot.lane.b32.xlu0 %v6213, 17
      %v6238 = vpop.permute.xlu0 %6237
      %6239 = vrot.lane.b32.xlu0 %v6202, 17
      %v6240 = vpop.permute.xlu0 %6239
      %6241 = vrot.lane.b32.xlu0 %v6206, 17
      %v6242 = vpop.permute.xlu0 %6241
      %6243 = vrot.lane.b32.xlu0 %v6210, 17
      %v6244 = vpop.permute.xlu0 %6243
      %6245 = vrot.lane.b32.xlu0 %v6214, 17
      %v6246 = vpop.permute.xlu0 %6245
      %v6247 = vsel %vm321, %v6232, %v6240
      %v6248 = vsel %vm321, %v6234, %v6242
      %v6249 = vsel %vm321, %v6236, %v6244
      %v6250 = vsel %vm321, %v6238, %v6246
      %v6251 = vsel %vm321, %v6224, %v6232
      %v6252 = vsel %vm321, %v6226, %v6234
      %v6253 = vsel %vm321, %v6228, %v6236
      %v6254 = vsel %vm321, %v6230, %v6238
      %v6255 = vsel %vm321, %v6216, %v6224
      %v6256 = vsel %vm321, %v6218, %v6226
      %v6257 = vsel %vm321, %v6220, %v6228
      %v6258 = vsel %vm321, %v6222, %v6230
      %v6259 = vsel %vm321, %v6240, %v6216
      %v6260 = vsel %vm321, %v6242, %v6218
      %v6261 = vsel %vm321, %v6244, %v6220
      %v6262 = vsel %vm321, %v6246, %v6222
      %v6263 = vld [vmem:[%s4] sm:$0xf]
      %v6265 = vlaneseq
      %v6266 = vshrl.u32 %v6265, 7
      %v6267 = vsub.s32 0, %v6266
      %v6268 = vrot.slane %v6263, %v6267
      %v6269 = vlaneseq
      %v6270 = vshrl.u32 %v6269, 7
      %v6271 = vsub.s32 1, %v6270
      %v6272 = vrot.slane %v6263, %v6271
      %v6273 = vlaneseq
      %v6274 = vshrl.u32 %v6273, 7
      %v6275 = vsub.s32 2, %v6274
      %v6276 = vrot.slane %v6263, %v6275
      %v6277 = vlaneseq
      %v6278 = vshrl.u32 %v6277, 7
      %v6279 = vsub.s32 3, %v6278
      %v6280 = vrot.slane %v6263, %v6279
      %v6285 = vmul.f32 %v6259, %v6268
      %v6286 = vmul.f32 %v6255, %v6272
      %v6287 = vmul.f32 %v6251, %v6276
      %v6288 = vmul.f32 %v6247, %v6280
      %v6289 = vmul.f32 %v6260, %v6268
      %v6290 = vmul.f32 %v6256, %v6272
      %v6291 = vmul.f32 %v6252, %v6276
      %v6292 = vmul.f32 %v6248, %v6280
      %v6293 = vmul.f32 %v6261, %v6268
      %v6294 = vmul.f32 %v6257, %v6272
      %v6295 = vmul.f32 %v6253, %v6276
      %v6296 = vmul.f32 %v6249, %v6280
      %v6297 = vmul.f32 %v6262, %v6268
      %v6298 = vmul.f32 %v6258, %v6272
      %v6299 = vmul.f32 %v6254, %v6276
      %v6300 = vmul.f32 %v6250, %v6280
      %6301 = vst [vmem:[#allocation3] sm:$0xff] %v6285
      %6302 = vst [vmem:[#allocation3 + $0x8] sm:$0xff] %v6286
      %6303 = vst [vmem:[#allocation3 + $0x10] sm:$0xff] %v6287
      %6304 = vst [vmem:[#allocation3 + $0x18] sm:$0xff] %v6288
      %6305 = vst [vmem:[#allocation3 + $0x20] sm:$0xff] %v6289
      %6306 = vst [vmem:[#allocation3 + $0x28] sm:$0xff] %v6290
      %6307 = vst [vmem:[#allocation3 + $0x30] sm:$0xff] %v6291
      %6308 = vst [vmem:[#allocation3 + $0x38] sm:$0xff] %v6292
      %6309 = vst [vmem:[#allocation3 + $0x40] sm:$0xff] %v6293
      %6310 = vst [vmem:[#allocation3 + $0x48] sm:$0xff] %v6294
      %6311 = vst [vmem:[#allocation3 + $0x50] sm:$0xff] %v6295
      %6312 = vst [vmem:[#allocation3 + $0x58] sm:$0xff] %v6296
      %6313 = vst [vmem:[#allocation3 + $0x60] sm:$0xff] %v6297
      %6314 = vst [vmem:[#allocation3 + $0x68] sm:$0xff] %v6298
      %6315 = vst [vmem:[#allocation3 + $0x70] sm:$0xff] %v6299
      %6316 = vst [vmem:[#allocation3 + $0x78] sm:$0xff] %v6300
      %6317 = vrot.lane.b32.xlu0 %v6199, 16
      %v6318 = vpop.permute.xlu0 %6317
      %6319 = vrot.lane.b32.xlu0 %v6203, 16
      %v6320 = vpop.permute.xlu0 %6319
      %6321 = vrot.lane.b32.xlu0 %v6207, 16
      %v6322 = vpop.permute.xlu0 %6321
      %6323 = vrot.lane.b32.xlu0 %v6211, 16
      %v6324 = vpop.permute.xlu0 %6323
      %6325 = vrot.lane.b32.xlu0 %v6200, 16
      %v6326 = vpop.permute.xlu0 %6325
      %6327 = vrot.lane.b32.xlu0 %v6204, 16
      %v6328 = vpop.permute.xlu0 %6327
      %6329 = vrot.lane.b32.xlu0 %v6208, 16
      %v6330 = vpop.permute.xlu0 %6329
      %6331 = vrot.lane.b32.xlu0 %v6212, 16
      %v6332 = vpop.permute.xlu0 %6331
      %6333 = vrot.lane.b32.xlu0 %v6201, 16
      %v6334 = vpop.permute.xlu0 %6333
      %6335 = vrot.lane.b32.xlu0 %v6205, 16
      %v6336 = vpop.permute.xlu0 %6335
      %6337 = vrot.lane.b32.xlu0 %v6209, 16
      %v6338 = vpop.permute.xlu0 %6337
      %6339 = vrot.lane.b32.xlu0 %v6213, 16
      %v6340 = vpop.permute.xlu0 %6339
      %6341 = vrot.lane.b32.xlu0 %v6202, 16
      %v6342 = vpop.permute.xlu0 %6341
      %6343 = vrot.lane.b32.xlu0 %v6206, 16
      %v6344 = vpop.permute.xlu0 %6343
      %6345 = vrot.lane.b32.xlu0 %v6210, 16
      %v6346 = vpop.permute.xlu0 %6345
      %6347 = vrot.lane.b32.xlu0 %v6214, 16
      %v6348 = vpop.permute.xlu0 %6347
      %v6349 = vsel %vm424, %v6334, %v6342
      %v6350 = vsel %vm424, %v6336, %v6344
      %v6351 = vsel %vm424, %v6338, %v6346
      %v6352 = vsel %vm424, %v6340, %v6348
      %v6353 = vsel %vm424, %v6326, %v6334
      %v6354 = vsel %vm424, %v6328, %v6336
      %v6355 = vsel %vm424, %v6330, %v6338
      %v6356 = vsel %vm424, %v6332, %v6340
      %v6357 = vsel %vm424, %v6318, %v6326
      %v6358 = vsel %vm424, %v6320, %v6328
      %v6359 = vsel %vm424, %v6322, %v6330
      %v6360 = vsel %vm424, %v6324, %v6332
      %v6361 = vsel %vm424, %v6342, %v6318
      %v6362 = vsel %vm424, %v6344, %v6320
      %v6363 = vsel %vm424, %v6346, %v6322
      %v6364 = vsel %vm424, %v6348, %v6324
      %v6365 = vld [vmem:[%s441] sm:$0xf]
      %v6367 = vlaneseq
      %v6368 = vshrl.u32 %v6367, 7
      %v6369 = vsub.s32 0, %v6368
      %v6370 = vrot.slane %v6365, %v6369
      %v6371 = vlaneseq
      %v6372 = vshrl.u32 %v6371, 7
      %v6373 = vsub.s32 1, %v6372
      %v6374 = vrot.slane %v6365, %v6373
      %v6375 = vlaneseq
      %v6376 = vshrl.u32 %v6375, 7
      %v6377 = vsub.s32 2, %v6376
      %v6378 = vrot.slane %v6365, %v6377
      %v6379 = vlaneseq
      %v6380 = vshrl.u32 %v6379, 7
      %v6381 = vsub.s32 3, %v6380
      %v6382 = vrot.slane %v6365, %v6381
      %v6387 = vmul.f32 %v6361, %v6370
      %v6388 = vmul.f32 %v6357, %v6374
      %v6389 = vmul.f32 %v6353, %v6378
      %v6390 = vmul.f32 %v6349, %v6382
      %v6391 = vmul.f32 %v6362, %v6370
      %v6392 = vmul.f32 %v6358, %v6374
      %v6393 = vmul.f32 %v6354, %v6378
      %v6394 = vmul.f32 %v6350, %v6382
      %v6395 = vmul.f32 %v6363, %v6370
      %v6396 = vmul.f32 %v6359, %v6374
      %v6397 = vmul.f32 %v6355, %v6378
      %v6398 = vmul.f32 %v6351, %v6382
      %v6399 = vmul.f32 %v6364, %v6370
      %v6400 = vmul.f32 %v6360, %v6374
      %v6401 = vmul.f32 %v6356, %v6378
      %v6402 = vmul.f32 %v6352, %v6382
      %6403 = vst [vmem:[#allocation3 + $0x80] sm:$0xff] %v6387
      %6404 = vst [vmem:[#allocation3 + $0x88] sm:$0xff] %v6388
      %6405 = vst [vmem:[#allocation3 + $0x90] sm:$0xff] %v6389
      %6406 = vst [vmem:[#allocation3 + $0x98] sm:$0xff] %v6390
      %6407 = vst [vmem:[#allocation3 + $0xa0] sm:$0xff] %v6391
      %6408 = vst [vmem:[#allocation3 + $0xa8] sm:$0xff] %v6392
      %6409 = vst [vmem:[#allocation3 + $0xb0] sm:$0xff] %v6393
      %6410 = vst [vmem:[#allocation3 + $0xb8] sm:$0xff] %v6394
      %6411 = vst [vmem:[#allocation3 + $0xc0] sm:$0xff] %v6395
      %6412 = vst [vmem:[#allocation3 + $0xc8] sm:$0xff] %v6396
      %6413 = vst [vmem:[#allocation3 + $0xd0] sm:$0xff] %v6397
      %6414 = vst [vmem:[#allocation3 + $0xd8] sm:$0xff] %v6398
      %6415 = vst [vmem:[#allocation3 + $0xe0] sm:$0xff] %v6399
      %6416 = vst [vmem:[#allocation3 + $0xe8] sm:$0xff] %v6400
      %6417 = vst [vmem:[#allocation3 + $0xf0] sm:$0xff] %v6401
      %6418 = vst [vmem:[#allocation3 + $0xf8] sm:$0xff] %v6402
      %6419 = vrot.lane.b32.xlu0 %v6199, 15
      %v6420 = vpop.permute.xlu0 %6419
      %6421 = vrot.lane.b32.xlu0 %v6203, 15
      %v6422 = vpop.permute.xlu0 %6421
      %6423 = vrot.lane.b32.xlu0 %v6207, 15
      %v6424 = vpop.permute.xlu0 %6423
      %6425 = vrot.lane.b32.xlu0 %v6211, 15
      %v6426 = vpop.permute.xlu0 %6425
      %6427 = vrot.lane.b32.xlu0 %v6200, 15
      %v6428 = vpop.permute.xlu0 %6427
      %6429 = vrot.lane.b32.xlu0 %v6204, 15
      %v6430 = vpop.permute.xlu0 %6429
      %6431 = vrot.lane.b32.xlu0 %v6208, 15
      %v6432 = vpop.permute.xlu0 %6431
      %6433 = vrot.lane.b32.xlu0 %v6212, 15
      %v6434 = vpop.permute.xlu0 %6433
      %6435 = vrot.lane.b32.xlu0 %v6201, 15
      %v6436 = vpop.permute.xlu0 %6435
      %6437 = vrot.lane.b32.xlu0 %v6205, 15
      %v6438 = vpop.permute.xlu0 %6437
      %6439 = vrot.lane.b32.xlu0 %v6209, 15
      %v6440 = vpop.permute.xlu0 %6439
      %6441 = vrot.lane.b32.xlu0 %v6213, 15
      %v6442 = vpop.permute.xlu0 %6441
      %6443 = vrot.lane.b32.xlu0 %v6202, 15
      %v6444 = vpop.permute.xlu0 %6443
      %6445 = vrot.lane.b32.xlu0 %v6206, 15
      %v6446 = vpop.permute.xlu0 %6445
      %6447 = vrot.lane.b32.xlu0 %v6210, 15
      %v6448 = vpop.permute.xlu0 %6447
      %6449 = vrot.lane.b32.xlu0 %v6214, 15
      %v6450 = vpop.permute.xlu0 %6449
      %v6451 = vsel %vm528, %v6436, %v6444
      %v6452 = vsel %vm528, %v6438, %v6446
      %v6453 = vsel %vm528, %v6440, %v6448
      %v6454 = vsel %vm528, %v6442, %v6450
      %v6455 = vsel %vm528, %v6428, %v6436
      %v6456 = vsel %vm528, %v6430, %v6438
      %v6457 = vsel %vm528, %v6432, %v6440
      %v6458 = vsel %vm528, %v6434, %v6442
      %v6459 = vsel %vm528, %v6420, %v6428
      %v6460 = vsel %vm528, %v6422, %v6430
      %v6461 = vsel %vm528, %v6424, %v6432
      %v6462 = vsel %vm528, %v6426, %v6434
      %v6463 = vsel %vm528, %v6444, %v6420
      %v6464 = vsel %vm528, %v6446, %v6422
      %v6465 = vsel %vm528, %v6448, %v6424
      %v6466 = vsel %vm528, %v6450, %v6426
      %v6467 = vld [vmem:[%s545] sm:$0xf]
      %v6469 = vlaneseq
      %v6470 = vshrl.u32 %v6469, 7
      %v6471 = vsub.s32 0, %v6470
      %v6472 = vrot.slane %v6467, %v6471
      %v6473 = vlaneseq
      %v6474 = vshrl.u32 %v6473, 7
      %v6475 = vsub.s32 1, %v6474
      %v6476 = vrot.slane %v6467, %v6475
      %v6477 = vlaneseq
      %v6478 = vshrl.u32 %v6477, 7
      %v6479 = vsub.s32 2, %v6478
      %v6480 = vrot.slane %v6467, %v6479
      %v6481 = vlaneseq
      %v6482 = vshrl.u32 %v6481, 7
      %v6483 = vsub.s32 3, %v6482
      %v6484 = vrot.slane %v6467, %v6483
      %v6489 = vmul.f32 %v6463, %v6472
      %v6490 = vmul.f32 %v6459, %v6476
      %v6491 = vmul.f32 %v6455, %v6480
      %v6492 = vmul.f32 %v6451, %v6484
      %v6493 = vmul.f32 %v6464, %v6472
      %v6494 = vmul.f32 %v6460, %v6476
      %v6495 = vmul.f32 %v6456, %v6480
      %v6496 = vmul.f32 %v6452, %v6484
      %v6497 = vmul.f32 %v6465, %v6472
      %v6498 = vmul.f32 %v6461, %v6476
      %v6499 = vmul.f32 %v6457, %v6480
      %v6500 = vmul.f32 %v6453, %v6484
      %v6501 = vmul.f32 %v6466, %v6472
      %v6502 = vmul.f32 %v6462, %v6476
      %v6503 = vmul.f32 %v6458, %v6480
      %v6504 = vmul.f32 %v6454, %v6484
      %6505 = vst [vmem:[#allocation3 + $0x100] sm:$0xff] %v6489
      %6506 = vst [vmem:[#allocation3 + $0x108] sm:$0xff] %v6490
      %6507 = vst [vmem:[#allocation3 + $0x110] sm:$0xff] %v6491
      %6508 = vst [vmem:[#allocation3 + $0x118] sm:$0xff] %v6492
      %6509 = vst [vmem:[#allocation3 + $0x120] sm:$0xff] %v6493
      %6510 = vst [vmem:[#allocation3 + $0x128] sm:$0xff] %v6494
      %6511 = vst [vmem:[#allocation3 + $0x130] sm:$0xff] %v6495
      %6512 = vst [vmem:[#allocation3 + $0x138] sm:$0xff] %v6496
      %6513 = vst [vmem:[#allocation3 + $0x140] sm:$0xff] %v6497
      %6514 = vst [vmem:[#allocation3 + $0x148] sm:$0xff] %v6498
      %6515 = vst [vmem:[#allocation3 + $0x150] sm:$0xff] %v6499
      %6516 = vst [vmem:[#allocation3 + $0x158] sm:$0xff] %v6500
      %6517 = vst [vmem:[#allocation3 + $0x160] sm:$0xff] %v6501
      %6518 = vst [vmem:[#allocation3 + $0x168] sm:$0xff] %v6502
      %6519 = vst [vmem:[#allocation3 + $0x170] sm:$0xff] %v6503
      %6520 = vst [vmem:[#allocation3 + $0x178] sm:$0xff] %v6504
      %6521 = vrot.lane.b32.xlu0 %v6199, 1
      %v6522 = vpop.permute.xlu0 %6521
      %6523 = vrot.lane.b32.xlu0 %v6203, 1
      %v6524 = vpop.permute.xlu0 %6523
      %6525 = vrot.lane.b32.xlu0 %v6207, 1
      %v6526 = vpop.permute.xlu0 %6525
      %6527 = vrot.lane.b32.xlu0 %v6211, 1
      %v6528 = vpop.permute.xlu0 %6527
      %6529 = vrot.lane.b32.xlu0 %v6200, 1
      %v6530 = vpop.permute.xlu0 %6529
      %6531 = vrot.lane.b32.xlu0 %v6204, 1
      %v6532 = vpop.permute.xlu0 %6531
      %6533 = vrot.lane.b32.xlu0 %v6208, 1
      %v6534 = vpop.permute.xlu0 %6533
      %6535 = vrot.lane.b32.xlu0 %v6212, 1
      %v6536 = vpop.permute.xlu0 %6535
      %6537 = vrot.lane.b32.xlu0 %v6201, 1
      %v6538 = vpop.permute.xlu0 %6537
      %6539 = vrot.lane.b32.xlu0 %v6205, 1
      %v6540 = vpop.permute.xlu0 %6539
      %6541 = vrot.lane.b32.xlu0 %v6209, 1
      %v6542 = vpop.permute.xlu0 %6541
      %6543 = vrot.lane.b32.xlu0 %v6213, 1
      %v6544 = vpop.permute.xlu0 %6543
      %6545 = vrot.lane.b32.xlu0 %v6202, 1
      %v6546 = vpop.permute.xlu0 %6545
      %6547 = vrot.lane.b32.xlu0 %v6206, 1
      %v6548 = vpop.permute.xlu0 %6547
      %6549 = vrot.lane.b32.xlu0 %v6210, 1
      %v6550 = vpop.permute.xlu0 %6549
      %6551 = vrot.lane.b32.xlu0 %v6214, 1
      %v6552 = vpop.permute.xlu0 %6551
      %v6553 = vsel %vm632, %v6538, %v6546
      %v6554 = vsel %vm632, %v6540, %v6548
      %v6555 = vsel %vm632, %v6542, %v6550
      %v6556 = vsel %vm632, %v6544, %v6552
      %v6557 = vsel %vm632, %v6530, %v6538
      %v6558 = vsel %vm632, %v6532, %v6540
      %v6559 = vsel %vm632, %v6534, %v6542
      %v6560 = vsel %vm632, %v6536, %v6544
      %v6561 = vsel %vm632, %v6522, %v6530
      %v6562 = vsel %vm632, %v6524, %v6532
      %v6563 = vsel %vm632, %v6526, %v6534
      %v6564 = vsel %vm632, %v6528, %v6536
      %v6565 = vsel %vm632, %v6546, %v6522
      %v6566 = vsel %vm632, %v6548, %v6524
      %v6567 = vsel %vm632, %v6550, %v6526
      %v6568 = vsel %vm632, %v6552, %v6528
      %v6569 = vld [vmem:[%s649] sm:$0xf]
      %v6571 = vlaneseq
      %v6572 = vshrl.u32 %v6571, 7
      %v6573 = vsub.s32 0, %v6572
      %v6574 = vrot.slane %v6569, %v6573
      %v6575 = vlaneseq
      %v6576 = vshrl.u32 %v6575, 7
      %v6577 = vsub.s32 1, %v6576
      %v6578 = vrot.slane %v6569, %v6577
      %v6579 = vlaneseq
      %v6580 = vshrl.u32 %v6579, 7
      %v6581 = vsub.s32 2, %v6580
      %v6582 = vrot.slane %v6569, %v6581
      %v6583 = vlaneseq
      %v6584 = vshrl.u32 %v6583, 7
      %v6585 = vsub.s32 3, %v6584
      %v6586 = vrot.slane %v6569, %v6585
      %v6591 = vmul.f32 %v6565, %v6574
      %v6592 = vmul.f32 %v6561, %v6578
      %v6593 = vmul.f32 %v6557, %v6582
      %v6594 = vmul.f32 %v6553, %v6586
      %v6595 = vmul.f32 %v6566, %v6574
      %v6596 = vmul.f32 %v6562, %v6578
      %v6597 = vmul.f32 %v6558, %v6582
      %v6598 = vmul.f32 %v6554, %v6586
      %v6599 = vmul.f32 %v6567, %v6574
      %v6600 = vmul.f32 %v6563, %v6578
      %v6601 = vmul.f32 %v6559, %v6582
      %v6602 = vmul.f32 %v6555, %v6586
      %v6603 = vmul.f32 %v6568, %v6574
      %v6604 = vmul.f32 %v6564, %v6578
      %v6605 = vmul.f32 %v6560, %v6582
      %v6606 = vmul.f32 %v6556, %v6586
      %6607 = vst [vmem:[#allocation3 + $0x180] sm:$0xff] %v6591
      %6608 = vst [vmem:[#allocation3 + $0x188] sm:$0xff] %v6592
      %6609 = vst [vmem:[#allocation3 + $0x190] sm:$0xff] %v6593
      %6610 = vst [vmem:[#allocation3 + $0x198] sm:$0xff] %v6594
      %6611 = vst [vmem:[#allocation3 + $0x1a0] sm:$0xff] %v6595
      %6612 = vst [vmem:[#allocation3 + $0x1a8] sm:$0xff] %v6596
      %6613 = vst [vmem:[#allocation3 + $0x1b0] sm:$0xff] %v6597
      %6614 = vst [vmem:[#allocation3 + $0x1b8] sm:$0xff] %v6598
      %6615 = vst [vmem:[#allocation3 + $0x1c0] sm:$0xff] %v6599
      %6616 = vst [vmem:[#allocation3 + $0x1c8] sm:$0xff] %v6600
      %6617 = vst [vmem:[#allocation3 + $0x1d0] sm:$0xff] %v6601
      %6618 = vst [vmem:[#allocation3 + $0x1d8] sm:$0xff] %v6602
      %6619 = vst [vmem:[#allocation3 + $0x1e0] sm:$0xff] %v6603
      %6620 = vst [vmem:[#allocation3 + $0x1e8] sm:$0xff] %v6604
      %6621 = vst [vmem:[#allocation3 + $0x1f0] sm:$0xff] %v6605
      %6622 = vst [vmem:[#allocation3 + $0x1f8] sm:$0xff] %v6606
      %6623 = vst [vmem:[#allocation3 + $0x200] sm:$0xff] %v6199
      %6624 = vst [vmem:[#allocation3 + $0x208] sm:$0xff] %v6200
      %6625 = vst [vmem:[#allocation3 + $0x210] sm:$0xff] %v6201
      %6626 = vst [vmem:[#allocation3 + $0x218] sm:$0xff] %v6202
      %6627 = vst [vmem:[#allocation3 + $0x220] sm:$0xff] %v6203
      %6628 = vst [vmem:[#allocation3 + $0x228] sm:$0xff] %v6204
      %6629 = vst [vmem:[#allocation3 + $0x230] sm:$0xff] %v6205
      %6630 = vst [vmem:[#allocation3 + $0x238] sm:$0xff] %v6206
      %6631 = vst [vmem:[#allocation3 + $0x240] sm:$0xff] %v6207
      %6632 = vst [vmem:[#allocation3 + $0x248] sm:$0xff] %v6208
      %6633 = vst [vmem:[#allocation3 + $0x250] sm:$0xff] %v6209
      %6634 = vst [vmem:[#allocation3 + $0x258] sm:$0xff] %v6210
      %6635 = vst [vmem:[#allocation3 + $0x260] sm:$0xff] %v6211
      %6636 = vst [vmem:[#allocation3 + $0x268] sm:$0xff] %v6212
      %6637 = vst [vmem:[#allocation3 + $0x270] sm:$0xff] %v6213
      %6638 = vst [vmem:[#allocation3 + $0x278] sm:$0xff] %v6214
      %6639 = vrot.lane.b32.xlu0 %v6199, 127
      %v6640 = vpop.permute.xlu0 %6639
      %6641 = vrot.lane.b32.xlu0 %v6203, 127
      %v6642 = vpop.permute.xlu0 %6641
      %6643 = vrot.lane.b32.xlu0 %v6207, 127
      %v6644 = vpop.permute.xlu0 %6643
      %6645 = vrot.lane.b32.xlu0 %v6211, 127
      %v6646 = vpop.permute.xlu0 %6645
      %6647 = vrot.lane.b32.xlu0 %v6200, 127
      %v6648 = vpop.permute.xlu0 %6647
      %6649 = vrot.lane.b32.xlu0 %v6204, 127
      %v6650 = vpop.permute.xlu0 %6649
      %6651 = vrot.lane.b32.xlu0 %v6208, 127
      %v6652 = vpop.permute.xlu0 %6651
      %6653 = vrot.lane.b32.xlu0 %v6212, 127
      %v6654 = vpop.permute.xlu0 %6653
      %6655 = vrot.lane.b32.xlu0 %v6201, 127
      %v6656 = vpop.permute.xlu0 %6655
      %6657 = vrot.lane.b32.xlu0 %v6205, 127
      %v6658 = vpop.permute.xlu0 %6657
      %6659 = vrot.lane.b32.xlu0 %v6209, 127
      %v6660 = vpop.permute.xlu0 %6659
      %6661 = vrot.lane.b32.xlu0 %v6213, 127
      %v6662 = vpop.permute.xlu0 %6661
      %6663 = vrot.lane.b32.xlu0 %v6202, 127
      %v6664 = vpop.permute.xlu0 %6663
      %6665 = vrot.lane.b32.xlu0 %v6206, 127
      %v6666 = vpop.permute.xlu0 %6665
      %6667 = vrot.lane.b32.xlu0 %v6210, 127
      %v6668 = vpop.permute.xlu0 %6667
      %6669 = vrot.lane.b32.xlu0 %v6214, 127
      %v6670 = vpop.permute.xlu0 %6669
      %v6671 = vsel %vm752, %v6656, %v6664
      %v6672 = vsel %vm752, %v6658, %v6666
      %v6673 = vsel %vm752, %v6660, %v6668
      %v6674 = vsel %vm752, %v6662, %v6670
      %v6675 = vsel %vm752, %v6648, %v6656
      %v6676 = vsel %vm752, %v6650, %v6658
      %v6677 = vsel %vm752, %v6652, %v6660
      %v6678 = vsel %vm752, %v6654, %v6662
      %v6679 = vsel %vm752, %v6640, %v6648
      %v6680 = vsel %vm752, %v6642, %v6650
      %v6681 = vsel %vm752, %v6644, %v6652
      %v6682 = vsel %vm752, %v6646, %v6654
      %v6683 = vsel %vm752, %v6664, %v6640
      %v6684 = vsel %vm752, %v6666, %v6642
      %v6685 = vsel %vm752, %v6668, %v6644
      %v6686 = vsel %vm752, %v6670, %v6646
      %v6687 = vld [vmem:[%s769] sm:$0xf]
      %v6689 = vlaneseq
      %v6690 = vshrl.u32 %v6689, 7
      %v6691 = vsub.s32 0, %v6690
      %v6692 = vrot.slane %v6687, %v6691
      %v6693 = vlaneseq
      %v6694 = vshrl.u32 %v6693, 7
      %v6695 = vsub.s32 1, %v6694
      %v6696 = vrot.slane %v6687, %v6695
      %v6697 = vlaneseq
      %v6698 = vshrl.u32 %v6697, 7
      %v6699 = vsub.s32 2, %v6698
      %v6700 = vrot.slane %v6687, %v6699
      %v6701 = vlaneseq
      %v6702 = vshrl.u32 %v6701, 7
      %v6703 = vsub.s32 3, %v6702
      %v6704 = vrot.slane %v6687, %v6703
      %v6709 = vmul.f32 %v6679, %v6692
      %v6710 = vmul.f32 %v6675, %v6696
      %v6711 = vmul.f32 %v6671, %v6700
      %v6712 = vmul.f32 %v6683, %v6704
      %v6713 = vmul.f32 %v6680, %v6692
      %v6714 = vmul.f32 %v6676, %v6696
      %v6715 = vmul.f32 %v6672, %v6700
      %v6716 = vmul.f32 %v6684, %v6704
      %v6717 = vmul.f32 %v6681, %v6692
      %v6718 = vmul.f32 %v6677, %v6696
      %v6719 = vmul.f32 %v6673, %v6700
      %v6720 = vmul.f32 %v6685, %v6704
      %v6721 = vmul.f32 %v6682, %v6692
      %v6722 = vmul.f32 %v6678, %v6696
      %v6723 = vmul.f32 %v6674, %v6700
      %v6724 = vmul.f32 %v6686, %v6704
      %6725 = vst [vmem:[#allocation3 + $0x280] sm:$0xff] %v6709
      %6726 = vst [vmem:[#allocation3 + $0x288] sm:$0xff] %v6710
      %6727 = vst [vmem:[#allocation3 + $0x290] sm:$0xff] %v6711
      %6728 = vst [vmem:[#allocation3 + $0x298] sm:$0xff] %v6712
      %6729 = vst [vmem:[#allocation3 + $0x2a0] sm:$0xff] %v6713
      %6730 = vst [vmem:[#allocation3 + $0x2a8] sm:$0xff] %v6714
      %6731 = vst [vmem:[#allocation3 + $0x2b0] sm:$0xff] %v6715
      %6732 = vst [vmem:[#allocation3 + $0x2b8] sm:$0xff] %v6716
      %6733 = vst [vmem:[#allocation3 + $0x2c0] sm:$0xff] %v6717
      %6734 = vst [vmem:[#allocation3 + $0x2c8] sm:$0xff] %v6718
      %6735 = vst [vmem:[#allocation3 + $0x2d0] sm:$0xff] %v6719
      %6736 = vst [vmem:[#allocation3 + $0x2d8] sm:$0xff] %v6720
      %6737 = vst [vmem:[#allocation3 + $0x2e0] sm:$0xff] %v6721
      %6738 = vst [vmem:[#allocation3 + $0x2e8] sm:$0xff] %v6722
      %6739 = vst [vmem:[#allocation3 + $0x2f0] sm:$0xff] %v6723
      %6740 = vst [vmem:[#allocation3 + $0x2f8] sm:$0xff] %v6724
      %6741 = vrot.lane.b32.xlu0 %v6199, 113
      %v6742 = vpop.permute.xlu0 %6741
      %6743 = vrot.lane.b32.xlu0 %v6203, 113
      %v6744 = vpop.permute.xlu0 %6743
      %6745 = vrot.lane.b32.xlu0 %v6207, 113
      %v6746 = vpop.permute.xlu0 %6745
      %6747 = vrot.lane.b32.xlu0 %v6211, 113
      %v6748 = vpop.permute.xlu0 %6747
      %6749 = vrot.lane.b32.xlu0 %v6200, 113
      %v6750 = vpop.permute.xlu0 %6749
      %6751 = vrot.lane.b32.xlu0 %v6204, 113
      %v6752 = vpop.permute.xlu0 %6751
      %6753 = vrot.lane.b32.xlu0 %v6208, 113
      %v6754 = vpop.permute.xlu0 %6753
      %6755 = vrot.lane.b32.xlu0 %v6212, 113
      %v6756 = vpop.permute.xlu0 %6755
      %6757 = vrot.lane.b32.xlu0 %v6201, 113
      %v6758 = vpop.permute.xlu0 %6757
      %6759 = vrot.lane.b32.xlu0 %v6205, 113
      %v6760 = vpop.permute.xlu0 %6759
      %6761 = vrot.lane.b32.xlu0 %v6209, 113
      %v6762 = vpop.permute.xlu0 %6761
      %6763 = vrot.lane.b32.xlu0 %v6213, 113
      %v6764 = vpop.permute.xlu0 %6763
      %6765 = vrot.lane.b32.xlu0 %v6202, 113
      %v6766 = vpop.permute.xlu0 %6765
      %6767 = vrot.lane.b32.xlu0 %v6206, 113
      %v6768 = vpop.permute.xlu0 %6767
      %6769 = vrot.lane.b32.xlu0 %v6210, 113
      %v6770 = vpop.permute.xlu0 %6769
      %6771 = vrot.lane.b32.xlu0 %v6214, 113
      %v6772 = vpop.permute.xlu0 %6771
      %v6773 = vsel %vm856, %v6758, %v6766
      %v6774 = vsel %vm856, %v6760, %v6768
      %v6775 = vsel %vm856, %v6762, %v6770
      %v6776 = vsel %vm856, %v6764, %v6772
      %v6777 = vsel %vm856, %v6750, %v6758
      %v6778 = vsel %vm856, %v6752, %v6760
      %v6779 = vsel %vm856, %v6754, %v6762
      %v6780 = vsel %vm856, %v6756, %v6764
      %v6781 = vsel %vm856, %v6742, %v6750
      %v6782 = vsel %vm856, %v6744, %v6752
      %v6783 = vsel %vm856, %v6746, %v6754
      %v6784 = vsel %vm856, %v6748, %v6756
      %v6785 = vsel %vm856, %v6766, %v6742
      %v6786 = vsel %vm856, %v6768, %v6744
      %v6787 = vsel %vm856, %v6770, %v6746
      %v6788 = vsel %vm856, %v6772, %v6748
      %v6789 = vld [vmem:[%s873] sm:$0xf]
      %v6791 = vlaneseq
      %v6792 = vshrl.u32 %v6791, 7
      %v6793 = vsub.s32 0, %v6792
      %v6794 = vrot.slane %v6789, %v6793
      %v6795 = vlaneseq
      %v6796 = vshrl.u32 %v6795, 7
      %v6797 = vsub.s32 1, %v6796
      %v6798 = vrot.slane %v6789, %v6797
      %v6799 = vlaneseq
      %v6800 = vshrl.u32 %v6799, 7
      %v6801 = vsub.s32 2, %v6800
      %v6802 = vrot.slane %v6789, %v6801
      %v6803 = vlaneseq
      %v6804 = vshrl.u32 %v6803, 7
      %v6805 = vsub.s32 3, %v6804
      %v6806 = vrot.slane %v6789, %v6805
      %v6811 = vmul.f32 %v6781, %v6794
      %v6812 = vmul.f32 %v6777, %v6798
      %v6813 = vmul.f32 %v6773, %v6802
      %v6814 = vmul.f32 %v6785, %v6806
      %v6815 = vmul.f32 %v6782, %v6794
      %v6816 = vmul.f32 %v6778, %v6798
      %v6817 = vmul.f32 %v6774, %v6802
      %v6818 = vmul.f32 %v6786, %v6806
      %v6819 = vmul.f32 %v6783, %v6794
      %v6820 = vmul.f32 %v6779, %v6798
      %v6821 = vmul.f32 %v6775, %v6802
      %v6822 = vmul.f32 %v6787, %v6806
      %v6823 = vmul.f32 %v6784, %v6794
      %v6824 = vmul.f32 %v6780, %v6798
      %v6825 = vmul.f32 %v6776, %v6802
      %v6826 = vmul.f32 %v6788, %v6806
      %6827 = vst [vmem:[#allocation3 + $0x300] sm:$0xff] %v6811
      %6828 = vst [vmem:[#allocation3 + $0x308] sm:$0xff] %v6812
      %6829 = vst [vmem:[#allocation3 + $0x310] sm:$0xff] %v6813
      %6830 = vst [vmem:[#allocation3 + $0x318] sm:$0xff] %v6814
      %6831 = vst [vmem:[#allocation3 + $0x320] sm:$0xff] %v6815
      %6832 = vst [vmem:[#allocation3 + $0x328] sm:$0xff] %v6816
      %6833 = vst [vmem:[#allocation3 + $0x330] sm:$0xff] %v6817
      %6834 = vst [vmem:[#allocation3 + $0x338] sm:$0xff] %v6818
      %6835 = vst [vmem:[#allocation3 + $0x340] sm:$0xff] %v6819
      %6836 = vst [vmem:[#allocation3 + $0x348] sm:$0xff] %v6820
      %6837 = vst [vmem:[#allocation3 + $0x350] sm:$0xff] %v6821
      %6838 = vst [vmem:[#allocation3 + $0x358] sm:$0xff] %v6822
      %6839 = vst [vmem:[#allocation3 + $0x360] sm:$0xff] %v6823
      %6840 = vst [vmem:[#allocation3 + $0x368] sm:$0xff] %v6824
      %6841 = vst [vmem:[#allocation3 + $0x370] sm:$0xff] %v6825
      %6842 = vst [vmem:[#allocation3 + $0x378] sm:$0xff] %v6826
      %6843 = vrot.lane.b32.xlu0 %v6199, 112
      %v6844 = vpop.permute.xlu0 %6843
      %6845 = vrot.lane.b32.xlu0 %v6203, 112
      %v6846 = vpop.permute.xlu0 %6845
      %6847 = vrot.lane.b32.xlu0 %v6207, 112
      %v6848 = vpop.permute.xlu0 %6847
      %6849 = vrot.lane.b32.xlu0 %v6211, 112
      %v6850 = vpop.permute.xlu0 %6849
      %6851 = vrot.lane.b32.xlu0 %v6200, 112
      %v6852 = vpop.permute.xlu0 %6851
      %6853 = vrot.lane.b32.xlu0 %v6204, 112
      %v6854 = vpop.permute.xlu0 %6853
      %6855 = vrot.lane.b32.xlu0 %v6208, 112
      %v6856 = vpop.permute.xlu0 %6855
      %6857 = vrot.lane.b32.xlu0 %v6212, 112
      %v6858 = vpop.permute.xlu0 %6857
      %6859 = vrot.lane.b32.xlu0 %v6201, 112
      %v6860 = vpop.permute.xlu0 %6859
      %6861 = vrot.lane.b32.xlu0 %v6205, 112
      %v6862 = vpop.permute.xlu0 %6861
      %6863 = vrot.lane.b32.xlu0 %v6209, 112
      %v6864 = vpop.permute.xlu0 %6863
      %6865 = vrot.lane.b32.xlu0 %v6213, 112
      %v6866 = vpop.permute.xlu0 %6865
      %6867 = vrot.lane.b32.xlu0 %v6202, 112
      %v6868 = vpop.permute.xlu0 %6867
      %6869 = vrot.lane.b32.xlu0 %v6206, 112
      %v6870 = vpop.permute.xlu0 %6869
      %6871 = vrot.lane.b32.xlu0 %v6210, 112
      %v6872 = vpop.permute.xlu0 %6871
      %6873 = vrot.lane.b32.xlu0 %v6214, 112
      %v6874 = vpop.permute.xlu0 %6873
      %v6875 = vsel %vm960, %v6860, %v6868
      %v6876 = vsel %vm960, %v6862, %v6870
      %v6877 = vsel %vm960, %v6864, %v6872
      %v6878 = vsel %vm960, %v6866, %v6874
      %v6879 = vsel %vm960, %v6852, %v6860
      %v6880 = vsel %vm960, %v6854, %v6862
      %v6881 = vsel %vm960, %v6856, %v6864
      %v6882 = vsel %vm960, %v6858, %v6866
      %v6883 = vsel %vm960, %v6844, %v6852
      %v6884 = vsel %vm960, %v6846, %v6854
      %v6885 = vsel %vm960, %v6848, %v6856
      %v6886 = vsel %vm960, %v6850, %v6858
      %v6887 = vsel %vm960, %v6868, %v6844
      %v6888 = vsel %vm960, %v6870, %v6846
      %v6889 = vsel %vm960, %v6872, %v6848
      %v6890 = vsel %vm960, %v6874, %v6850
      %v6891 = vld [vmem:[%s977] sm:$0xf]
      %v6893 = vlaneseq
      %v6894 = vshrl.u32 %v6893, 7
      %v6895 = vsub.s32 0, %v6894
      %v6896 = vrot.slane %v6891, %v6895
      %v6897 = vlaneseq
      %v6898 = vshrl.u32 %v6897, 7
      %v6899 = vsub.s32 1, %v6898
      %v6900 = vrot.slane %v6891, %v6899
      %v6901 = vlaneseq
      %v6902 = vshrl.u32 %v6901, 7
      %v6903 = vsub.s32 2, %v6902
      %v6904 = vrot.slane %v6891, %v6903
      %v6905 = vlaneseq
      %v6906 = vshrl.u32 %v6905, 7
      %v6907 = vsub.s32 3, %v6906
      %v6908 = vrot.slane %v6891, %v6907
      %v6913 = vmul.f32 %v6883, %v6896
      %v6914 = vmul.f32 %v6879, %v6900
      %v6915 = vmul.f32 %v6875, %v6904
      %v6916 = vmul.f32 %v6887, %v6908
      %v6917 = vmul.f32 %v6884, %v6896
      %v6918 = vmul.f32 %v6880, %v6900
      %v6919 = vmul.f32 %v6876, %v6904
      %v6920 = vmul.f32 %v6888, %v6908
      %v6921 = vmul.f32 %v6885, %v6896
      %v6922 = vmul.f32 %v6881, %v6900
      %v6923 = vmul.f32 %v6877, %v6904
      %v6924 = vmul.f32 %v6889, %v6908
      %v6925 = vmul.f32 %v6886, %v6896
      %v6926 = vmul.f32 %v6882, %v6900
      %v6927 = vmul.f32 %v6878, %v6904
      %v6928 = vmul.f32 %v6890, %v6908
      %6929 = vst [vmem:[#allocation3 + $0x380] sm:$0xff] %v6913
      %6930 = vst [vmem:[#allocation3 + $0x388] sm:$0xff] %v6914
      %6931 = vst [vmem:[#allocation3 + $0x390] sm:$0xff] %v6915
      %6932 = vst [vmem:[#allocation3 + $0x398] sm:$0xff] %v6916
      %6933 = vst [vmem:[#allocation3 + $0x3a0] sm:$0xff] %v6917
      %6934 = vst [vmem:[#allocation3 + $0x3a8] sm:$0xff] %v6918
      %6935 = vst [vmem:[#allocation3 + $0x3b0] sm:$0xff] %v6919
      %6936 = vst [vmem:[#allocation3 + $0x3b8] sm:$0xff] %v6920
      %6937 = vst [vmem:[#allocation3 + $0x3c0] sm:$0xff] %v6921
      %6938 = vst [vmem:[#allocation3 + $0x3c8] sm:$0xff] %v6922
      %6939 = vst [vmem:[#allocation3 + $0x3d0] sm:$0xff] %v6923
      %6940 = vst [vmem:[#allocation3 + $0x3d8] sm:$0xff] %v6924
      %6941 = vst [vmem:[#allocation3 + $0x3e0] sm:$0xff] %v6925
      %6942 = vst [vmem:[#allocation3 + $0x3e8] sm:$0xff] %v6926
      %6943 = vst [vmem:[#allocation3 + $0x3f0] sm:$0xff] %v6927
      %6944 = vst [vmem:[#allocation3 + $0x3f8] sm:$0xff] %v6928
      %6945 = vrot.lane.b32.xlu0 %v6199, 111
      %v6946 = vpop.permute.xlu0 %6945
      %6947 = vrot.lane.b32.xlu0 %v6203, 111
      %v6948 = vpop.permute.xlu0 %6947
      %6949 = vrot.lane.b32.xlu0 %v6207, 111
      %v6950 = vpop.permute.xlu0 %6949
      %6951 = vrot.lane.b32.xlu0 %v6211, 111
      %v6952 = vpop.permute.xlu0 %6951
      %6953 = vrot.lane.b32.xlu0 %v6200, 111
      %v6954 = vpop.permute.xlu0 %6953
      %6955 = vrot.lane.b32.xlu0 %v6204, 111
      %v6956 = vpop.permute.xlu0 %6955
      %6957 = vrot.lane.b32.xlu0 %v6208, 111
      %v6958 = vpop.permute.xlu0 %6957
      %6959 = vrot.lane.b32.xlu0 %v6212, 111
      %v6960 = vpop.permute.xlu0 %6959
      %6961 = vrot.lane.b32.xlu0 %v6201, 111
      %v6962 = vpop.permute.xlu0 %6961
      %6963 = vrot.lane.b32.xlu0 %v6205, 111
      %v6964 = vpop.permute.xlu0 %6963
      %6965 = vrot.lane.b32.xlu0 %v6209, 111
      %v6966 = vpop.permute.xlu0 %6965
      %6967 = vrot.lane.b32.xlu0 %v6213, 111
      %v6968 = vpop.permute.xlu0 %6967
      %6969 = vrot.lane.b32.xlu0 %v6202, 111
      %v6970 = vpop.permute.xlu0 %6969
      %6971 = vrot.lane.b32.xlu0 %v6206, 111
      %v6972 = vpop.permute.xlu0 %6971
      %6973 = vrot.lane.b32.xlu0 %v6210, 111
      %v6974 = vpop.permute.xlu0 %6973
      %6975 = vrot.lane.b32.xlu0 %v6214, 111
      %v6976 = vpop.permute.xlu0 %6975
      %v6977 = vsel %vm1064, %v6962, %v6970
      %v6978 = vsel %vm1064, %v6964, %v6972
      %v6979 = vsel %vm1064, %v6966, %v6974
      %v6980 = vsel %vm1064, %v6968, %v6976
      %v6981 = vsel %vm1064, %v6954, %v6962
      %v6982 = vsel %vm1064, %v6956, %v6964
      %v6983 = vsel %vm1064, %v6958, %v6966
      %v6984 = vsel %vm1064, %v6960, %v6968
      %v6985 = vsel %vm1064, %v6946, %v6954
      %v6986 = vsel %vm1064, %v6948, %v6956
      %v6987 = vsel %vm1064, %v6950, %v6958
      %v6988 = vsel %vm1064, %v6952, %v6960
      %v6989 = vsel %vm1064, %v6970, %v6946
      %v6990 = vsel %vm1064, %v6972, %v6948
      %v6991 = vsel %vm1064, %v6974, %v6950
      %v6992 = vsel %vm1064, %v6976, %v6952
      %v6993 = vld [vmem:[%s1081] sm:$0xf]
      %v6995 = vlaneseq
      %v6996 = vshrl.u32 %v6995, 7
      %v6997 = vsub.s32 0, %v6996
      %v6998 = vrot.slane %v6993, %v6997
      %v6999 = vlaneseq
      %v7000 = vshrl.u32 %v6999, 7
      %v7001 = vsub.s32 1, %v7000
      %v7002 = vrot.slane %v6993, %v7001
      %v7003 = vlaneseq
      %v7004 = vshrl.u32 %v7003, 7
      %v7005 = vsub.s32 2, %v7004
      %v7006 = vrot.slane %v6993, %v7005
      %v7007 = vlaneseq
      %v7008 = vshrl.u32 %v7007, 7
      %v7009 = vsub.s32 3, %v7008
      %v7010 = vrot.slane %v6993, %v7009
      %v7015 = vmul.f32 %v6985, %v6998
      %v7016 = vmul.f32 %v6981, %v7002
      %v7017 = vmul.f32 %v6977, %v7006
      %v7018 = vmul.f32 %v6989, %v7010
      %v7019 = vmul.f32 %v6986, %v6998
      %v7020 = vmul.f32 %v6982, %v7002
      %v7021 = vmul.f32 %v6978, %v7006
      %v7022 = vmul.f32 %v6990, %v7010
      %v7023 = vmul.f32 %v6987, %v6998
      %v7024 = vmul.f32 %v6983, %v7002
      %v7025 = vmul.f32 %v6979, %v7006
      %v7026 = vmul.f32 %v6991, %v7010
      %v7027 = vmul.f32 %v6988, %v6998
      %v7028 = vmul.f32 %v6984, %v7002
      %v7029 = vmul.f32 %v6980, %v7006
      %v7030 = vmul.f32 %v6992, %v7010
      %7031 = vst [vmem:[#allocation3 + $0x400] sm:$0xff] %v7015
      %7032 = vst [vmem:[#allocation3 + $0x408] sm:$0xff] %v7016
      %7033 = vst [vmem:[#allocation3 + $0x410] sm:$0xff] %v7017
      %7034 = vst [vmem:[#allocation3 + $0x418] sm:$0xff] %v7018
      %7035 = vst [vmem:[#allocation3 + $0x420] sm:$0xff] %v7019
      %7036 = vst [vmem:[#allocation3 + $0x428] sm:$0xff] %v7020
      %7037 = vst [vmem:[#allocation3 + $0x430] sm:$0xff] %v7021
      %7038 = vst [vmem:[#allocation3 + $0x438] sm:$0xff] %v7022
      %7039 = vst [vmem:[#allocation3 + $0x440] sm:$0xff] %v7023
      %7040 = vst [vmem:[#allocation3 + $0x448] sm:$0xff] %v7024
      %7041 = vst [vmem:[#allocation3 + $0x450] sm:$0xff] %v7025
      %7042 = vst [vmem:[#allocation3 + $0x458] sm:$0xff] %v7026
      %7043 = vst [vmem:[#allocation3 + $0x460] sm:$0xff] %v7027
      %7044 = vst [vmem:[#allocation3 + $0x468] sm:$0xff] %v7028
      %7045 = vst [vmem:[#allocation3 + $0x470] sm:$0xff] %v7029
      %7046 = vst [vmem:[#allocation3 + $0x478] sm:$0xff] %v7030
      %s7047 = scalar_lea.vmem %s2, 384
      %v7048 = vld [vmem:[%s7047] sm:$0xff]
      %v7049 = vld [vmem:[%s7047 + $0x8] sm:$0xff]
      %v7050 = vld [vmem:[%s7047 + $0x10] sm:$0xff]
      %v7051 = vld [vmem:[%s7047 + $0x18] sm:$0xff]
      %v7052 = vld [vmem:[%s7047 + $0x20] sm:$0xff]
      %v7053 = vld [vmem:[%s7047 + $0x28] sm:$0xff]
      %v7054 = vld [vmem:[%s7047 + $0x30] sm:$0xff]
      %v7055 = vld [vmem:[%s7047 + $0x38] sm:$0xff]
      %v7056 = vld [vmem:[%s7047 + $0x40] sm:$0xff]
      %v7057 = vld [vmem:[%s7047 + $0x48] sm:$0xff]
      %v7058 = vld [vmem:[%s7047 + $0x50] sm:$0xff]
      %v7059 = vld [vmem:[%s7047 + $0x58] sm:$0xff]
      %v7060 = vld [vmem:[#allocation3] sm:$0xff]
      %v7061 = vld [vmem:[#allocation3 + $0x8] sm:$0xff]
      %v7062 = vld [vmem:[#allocation3 + $0x10] sm:$0xff]
      %v7063 = vld [vmem:[#allocation3 + $0x18] sm:$0xff]
      %v7064 = vld [vmem:[#allocation3 + $0x20] sm:$0xff]
      %v7065 = vld [vmem:[#allocation3 + $0x28] sm:$0xff]
      %v7066 = vld [vmem:[#allocation3 + $0x30] sm:$0xff]
      %v7067 = vld [vmem:[#allocation3 + $0x38] sm:$0xff]
      %v7068 = vld [vmem:[#allocation3 + $0x40] sm:$0xff]
      %v7069 = vld [vmem:[#allocation3 + $0x48] sm:$0xff]
      %v7070 = vld [vmem:[#allocation3 + $0x50] sm:$0xff]
      %v7071 = vld [vmem:[#allocation3 + $0x58] sm:$0xff]
      %v7072 = vld [vmem:[#allocation3 + $0x60] sm:$0xff]
      %v7073 = vld [vmem:[#allocation3 + $0x68] sm:$0xff]
      %v7074 = vld [vmem:[#allocation3 + $0x70] sm:$0xff]
      %v7075 = vld [vmem:[#allocation3 + $0x78] sm:$0xff]
      %v7076 = vld [vmem:[#allocation3 + $0x80] sm:$0xff]
      %v7077 = vld [vmem:[#allocation3 + $0x88] sm:$0xff]
      %v7078 = vld [vmem:[#allocation3 + $0x90] sm:$0xff]
      %v7079 = vld [vmem:[#allocation3 + $0x98] sm:$0xff]
      %v7080 = vld [vmem:[#allocation3 + $0xa0] sm:$0xff]
      %v7081 = vld [vmem:[#allocation3 + $0xa8] sm:$0xff]
      %v7082 = vld [vmem:[#allocation3 + $0xb0] sm:$0xff]
      %v7083 = vld [vmem:[#allocation3 + $0xb8] sm:$0xff]
      %v7084 = vld [vmem:[#allocation3 + $0xc0] sm:$0xff]
      %v7085 = vld [vmem:[#allocation3 + $0xc8] sm:$0xff]
      %v7086 = vld [vmem:[#allocation3 + $0xd0] sm:$0xff]
      %v7087 = vld [vmem:[#allocation3 + $0xd8] sm:$0xff]
      %v7088 = vld [vmem:[#allocation3 + $0xe0] sm:$0xff]
      %v7089 = vld [vmem:[#allocation3 + $0xe8] sm:$0xff]
      %v7090 = vld [vmem:[#allocation3 + $0xf0] sm:$0xff]
      %v7091 = vld [vmem:[#allocation3 + $0xf8] sm:$0xff]
      %v7092 = vld [vmem:[#allocation3 + $0x100] sm:$0xff]
      %v7093 = vld [vmem:[#allocation3 + $0x108] sm:$0xff]
      %v7094 = vld [vmem:[#allocation3 + $0x110] sm:$0xff]
      %v7095 = vld [vmem:[#allocation3 + $0x118] sm:$0xff]
      %v7096 = vld [vmem:[#allocation3 + $0x120] sm:$0xff]
      %v7097 = vld [vmem:[#allocation3 + $0x128] sm:$0xff]
      %v7098 = vld [vmem:[#allocation3 + $0x130] sm:$0xff]
      %v7099 = vld [vmem:[#allocation3 + $0x138] sm:$0xff]
      %v7100 = vld [vmem:[#allocation3 + $0x140] sm:$0xff]
      %v7101 = vld [vmem:[#allocation3 + $0x148] sm:$0xff]
      %v7102 = vld [vmem:[#allocation3 + $0x150] sm:$0xff]
      %v7103 = vld [vmem:[#allocation3 + $0x158] sm:$0xff]
      %v7104 = vld [vmem:[#allocation3 + $0x160] sm:$0xff]
      %v7105 = vld [vmem:[#allocation3 + $0x168] sm:$0xff]
      %v7106 = vld [vmem:[#allocation3 + $0x170] sm:$0xff]
      %v7107 = vld [vmem:[#allocation3 + $0x178] sm:$0xff]
      %v7108 = vld [vmem:[#allocation3 + $0x180] sm:$0xff]
      %v7109 = vld [vmem:[#allocation3 + $0x188] sm:$0xff]
      %v7110 = vld [vmem:[#allocation3 + $0x190] sm:$0xff]
      %v7111 = vld [vmem:[#allocation3 + $0x198] sm:$0xff]
      %v7112 = vld [vmem:[#allocation3 + $0x1a0] sm:$0xff]
      %v7113 = vld [vmem:[#allocation3 + $0x1a8] sm:$0xff]
      %v7114 = vld [vmem:[#allocation3 + $0x1b0] sm:$0xff]
      %v7115 = vld [vmem:[#allocation3 + $0x1b8] sm:$0xff]
      %v7116 = vld [vmem:[#allocation3 + $0x1c0] sm:$0xff]
      %v7117 = vld [vmem:[#allocation3 + $0x1c8] sm:$0xff]
      %v7118 = vld [vmem:[#allocation3 + $0x1d0] sm:$0xff]
      %v7119 = vld [vmem:[#allocation3 + $0x1d8] sm:$0xff]
      %v7120 = vld [vmem:[#allocation3 + $0x1e0] sm:$0xff]
      %v7121 = vld [vmem:[#allocation3 + $0x1e8] sm:$0xff]
      %v7122 = vld [vmem:[#allocation3 + $0x1f0] sm:$0xff]
      %v7123 = vld [vmem:[#allocation3 + $0x1f8] sm:$0xff]
      %v7124 = vld [vmem:[#allocation3 + $0x200] sm:$0xff]
      %v7125 = vld [vmem:[#allocation3 + $0x208] sm:$0xff]
      %v7126 = vld [vmem:[#allocation3 + $0x210] sm:$0xff]
      %v7127 = vld [vmem:[#allocation3 + $0x218] sm:$0xff]
      %v7128 = vld [vmem:[#allocation3 + $0x220] sm:$0xff]
      %v7129 = vld [vmem:[#allocation3 + $0x228] sm:$0xff]
      %v7130 = vld [vmem:[#allocation3 + $0x230] sm:$0xff]
      %v7131 = vld [vmem:[#allocation3 + $0x238] sm:$0xff]
      %v7132 = vld [vmem:[#allocation3 + $0x240] sm:$0xff]
      %v7133 = vld [vmem:[#allocation3 + $0x248] sm:$0xff]
      %v7134 = vld [vmem:[#allocation3 + $0x250] sm:$0xff]
      %v7135 = vld [vmem:[#allocation3 + $0x258] sm:$0xff]
      %v7136 = vld [vmem:[#allocation3 + $0x260] sm:$0xff]
      %v7137 = vld [vmem:[#allocation3 + $0x268] sm:$0xff]
      %v7138 = vld [vmem:[#allocation3 + $0x270] sm:$0xff]
      %v7139 = vld [vmem:[#allocation3 + $0x278] sm:$0xff]
      %v7140 = vld [vmem:[#allocation3 + $0x280] sm:$0xff]
      %v7141 = vld [vmem:[#allocation3 + $0x288] sm:$0xff]
      %v7142 = vld [vmem:[#allocation3 + $0x290] sm:$0xff]
      %v7143 = vld [vmem:[#allocation3 + $0x298] sm:$0xff]
      %v7144 = vld [vmem:[#allocation3 + $0x2a0] sm:$0xff]
      %v7145 = vld [vmem:[#allocation3 + $0x2a8] sm:$0xff]
      %v7146 = vld [vmem:[#allocation3 + $0x2b0] sm:$0xff]
      %v7147 = vld [vmem:[#allocation3 + $0x2b8] sm:$0xff]
      %v7148 = vld [vmem:[#allocation3 + $0x2c0] sm:$0xff]
      %v7149 = vld [vmem:[#allocation3 + $0x2c8] sm:$0xff]
      %v7150 = vld [vmem:[#allocation3 + $0x2d0] sm:$0xff]
      %v7151 = vld [vmem:[#allocation3 + $0x2d8] sm:$0xff]
      %v7152 = vld [vmem:[#allocation3 + $0x2e0] sm:$0xff]
      %v7153 = vld [vmem:[#allocation3 + $0x2e8] sm:$0xff]
      %v7154 = vld [vmem:[#allocation3 + $0x2f0] sm:$0xff]
      %v7155 = vld [vmem:[#allocation3 + $0x2f8] sm:$0xff]
      %v7156 = vld [vmem:[#allocation3 + $0x300] sm:$0xff]
      %v7157 = vld [vmem:[#allocation3 + $0x308] sm:$0xff]
      %v7158 = vld [vmem:[#allocation3 + $0x310] sm:$0xff]
      %v7159 = vld [vmem:[#allocation3 + $0x318] sm:$0xff]
      %v7160 = vld [vmem:[#allocation3 + $0x320] sm:$0xff]
      %v7161 = vld [vmem:[#allocation3 + $0x328] sm:$0xff]
      %v7162 = vld [vmem:[#allocation3 + $0x330] sm:$0xff]
      %v7163 = vld [vmem:[#allocation3 + $0x338] sm:$0xff]
      %v7164 = vld [vmem:[#allocation3 + $0x340] sm:$0xff]
      %v7165 = vld [vmem:[#allocation3 + $0x348] sm:$0xff]
      %v7166 = vld [vmem:[#allocation3 + $0x350] sm:$0xff]
      %v7167 = vld [vmem:[#allocation3 + $0x358] sm:$0xff]
      %v7168 = vld [vmem:[#allocation3 + $0x360] sm:$0xff]
      %v7169 = vld [vmem:[#allocation3 + $0x368] sm:$0xff]
      %v7170 = vld [vmem:[#allocation3 + $0x370] sm:$0xff]
      %v7171 = vld [vmem:[#allocation3 + $0x378] sm:$0xff]
      %v7172 = vld [vmem:[#allocation3 + $0x380] sm:$0xff]
      %v7173 = vld [vmem:[#allocation3 + $0x388] sm:$0xff]
      %v7174 = vld [vmem:[#allocation3 + $0x390] sm:$0xff]
      %v7175 = vld [vmem:[#allocation3 + $0x398] sm:$0xff]
      %v7176 = vld [vmem:[#allocation3 + $0x3a0] sm:$0xff]
      %v7177 = vld [vmem:[#allocation3 + $0x3a8] sm:$0xff]
      %v7178 = vld [vmem:[#allocation3 + $0x3b0] sm:$0xff]
      %v7179 = vld [vmem:[#allocation3 + $0x3b8] sm:$0xff]
      %v7180 = vld [vmem:[#allocation3 + $0x3c0] sm:$0xff]
      %v7181 = vld [vmem:[#allocation3 + $0x3c8] sm:$0xff]
      %v7182 = vld [vmem:[#allocation3 + $0x3d0] sm:$0xff]
      %v7183 = vld [vmem:[#allocation3 + $0x3d8] sm:$0xff]
      %v7184 = vld [vmem:[#allocation3 + $0x3e0] sm:$0xff]
      %v7185 = vld [vmem:[#allocation3 + $0x3e8] sm:$0xff]
      %v7186 = vld [vmem:[#allocation3 + $0x3f0] sm:$0xff]
      %v7187 = vld [vmem:[#allocation3 + $0x3f8] sm:$0xff]
      %v7188 = vld [vmem:[#allocation3 + $0x400] sm:$0xff]
      %v7189 = vld [vmem:[#allocation3 + $0x408] sm:$0xff]
      %v7190 = vld [vmem:[#allocation3 + $0x410] sm:$0xff]
      %v7191 = vld [vmem:[#allocation3 + $0x418] sm:$0xff]
      %v7192 = vld [vmem:[#allocation3 + $0x420] sm:$0xff]
      %v7193 = vld [vmem:[#allocation3 + $0x428] sm:$0xff]
      %v7194 = vld [vmem:[#allocation3 + $0x430] sm:$0xff]
      %v7195 = vld [vmem:[#allocation3 + $0x438] sm:$0xff]
      %v7196 = vld [vmem:[#allocation3 + $0x440] sm:$0xff]
      %v7197 = vld [vmem:[#allocation3 + $0x448] sm:$0xff]
      %v7198 = vld [vmem:[#allocation3 + $0x450] sm:$0xff]
      %v7199 = vld [vmem:[#allocation3 + $0x458] sm:$0xff]
      %v7200 = vld [vmem:[#allocation3 + $0x460] sm:$0xff]
      %v7201 = vld [vmem:[#allocation3 + $0x468] sm:$0xff]
      %v7202 = vld [vmem:[#allocation3 + $0x470] sm:$0xff]
      %v7203 = vld [vmem:[#allocation3 + $0x478] sm:$0xff]
      %v7205 = vsel %vm1292, %v7050, 0
      %v7208 = vsel %vm1292, %v7053, 0
      %v7211 = vsel %vm1292, %v7056, 0
      %v7214 = vsel %vm1292, %v7059, 0
      %7216 = vmatprep.subr.mxu0 %v7061
      %7217 = vmatpush1.msra.mxu0 %v7060
      %7218 = vmatprep.subr.mxu0 %v7065
      %7219 = vmatpush1.msra.mxu0 %v7064
      %7220 = vmatprep.subr.mxu0 %v7069
      %7221 = vmatpush1.msra.mxu0 %v7068
      %7222 = vmatprep.subr.mxu0 %v7073
      %7223 = vmatpush1.msra.mxu0 %v7072
      %7224 = vmatprep.subr.mxu0 %v7077
      %7225 = vmatpush1.msra.mxu0 %v7076
      %7226 = vmatprep.subr.mxu0 %v7081
      %7227 = vmatpush1.msra.mxu0 %v7080
      %7228 = vmatprep.subr.mxu0 %v7085
      %7229 = vmatpush1.msra.mxu0 %v7084
      %7230 = vmatprep.subr.mxu0 %v7089
      %7231 = vmatpush1.msra.mxu0 %v7088
      %7232 = vmatprep.subr.mxu0 %v7093
      %7233 = vmatpush1.msra.mxu0 %v7092
      %7234 = vmatprep.subr.mxu0 %v7097
      %7235 = vmatpush1.msra.mxu0 %v7096
      %7236 = vmatprep.subr.mxu0 %v7101
      %7237 = vmatpush1.msra.mxu0 %v7100
      %7238 = vmatprep.subr.mxu0 %v7105
      %7239 = vmatpush1.msra.mxu0 %v7104
      %7240 = vmatprep.subr.mxu0 %v7109
      %7241 = vmatpush1.msra.mxu0 %v7108
      %7242 = vmatprep.subr.mxu0 %v7113
      %7243 = vmatpush1.msra.mxu0 %v7112
      %7244 = vmatprep.subr.mxu0 %v7117
      %7245 = vmatpush1.msra.mxu0 %v7116
      %7246 = vmatprep.subr.mxu0 %v7121
      %7247 = vmatpush1.msra.mxu0 %v7120
      %7248 = vmatprep.subr.mxu0 %v7125
      %7249 = vmatpush1.msra.mxu0 %v7124
      %7250 = vmatprep.subr.mxu0 %v7129
      %7251 = vmatpush1.msra.mxu0 %v7128
      %7252 = vmatprep.subr.mxu0 %v7133
      %7253 = vmatpush1.msra.mxu0 %v7132
      %7254 = vmatprep.subr.mxu0 %v7137
      %7255 = vmatpush1.msra.mxu0 %v7136
      %7256 = vmatprep.subr.mxu0 %v7141
      %7257 = vmatpush1.msra.mxu0 %v7140
      %7258 = vmatprep.subr.mxu0 %v7145
      %7259 = vmatpush1.msra.mxu0 %v7144
      %7260 = vmatprep.subr.mxu0 %v7149
      %7261 = vmatpush1.msra.mxu0 %v7148
      %7262 = vmatprep.subr.mxu0 %v7153
      %7263 = vmatpush1.msra.mxu0 %v7152
      %7264 = vmatprep.subr.mxu0 %v7157
      %7265 = vmatpush1.msra.mxu0 %v7156
      %7266 = vmatprep.subr.mxu0 %v7161
      %7267 = vmatpush1.msra.mxu0 %v7160
      %7268 = vmatprep.subr.mxu0 %v7165
      %7269 = vmatpush1.msra.mxu0 %v7164
      %7270 = vmatprep.subr.mxu0 %v7169
      %7271 = vmatpush1.msra.mxu0 %v7168
      %7272 = vmatprep.subr.mxu0 %v7173
      %7273 = vmatpush1.msra.mxu0 %v7172
      %7274 = vmatprep.subr.mxu0 %v7177
      %7275 = vmatpush1.msra.mxu0 %v7176
      %7276 = vmatprep.subr.mxu0 %v7181
      %7277 = vmatpush1.msra.mxu0 %v7180
      %7278 = vmatprep.subr.mxu0 %v7185
      %7279 = vmatpush1.msra.mxu0 %v7184
      %7280 = vmatprep.mubr.f32.mxu0 %v7049
      %7281 = vmatmul.mubr.f32.gmra.mrb[0].mxu0 %v7048
      %v7282 = vpop.f32.mrb[0].mxu0
      %v7283 = vadd.f32 0.0, %v7282
      %v7284 = vpop.f32.mrb[0].mxu0
      %v7285 = vadd.f32 0.0, %v7284
      %7286 = vmatprep.mubr.f32.mxu0 %v7052
      %7287 = vmatmul.mubr.f32.gmra.mrb[0].mxu0 %v7051
      %v7288 = vpop.f32.mrb[0].mxu0
      %v7289 = vadd.f32 0.0, %v7288
      %v7290 = vpop.f32.mrb[0].mxu0
      %v7291 = vadd.f32 0.0, %v7290
      %7292 = vmatprep.mubr.f32.mxu0 %v7055
      %7293 = vmatmul.mubr.f32.gmra.mrb[0].mxu0 %v7054
      %v7294 = vpop.f32.mrb[0].mxu0
      %v7295 = vadd.f32 0.0, %v7294
      %v7296 = vpop.f32.mrb[0].mxu0
      %v7297 = vadd.f32 0.0, %v7296
      %7298 = vmatprep.mubr.f32.mxu0 %v7058
      %7299 = vmatmul.mubr.f32.gmra.mrb[0].mxu0 %v7057
      %v7300 = vpop.f32.mrb[0].mxu0
      %v7301 = vadd.f32 0.0, %v7300
      %v7302 = vpop.f32.mrb[0].mxu0
      %v7303 = vadd.f32 0.0, %v7302
      %7304 = vdwg.mxu0
      %7305 = vmatprep.subr.mxu0 %v7189
      %7306 = vmatpush1.msra.mxu0 %v7188
      %7307 = vmatprep.subr.mxu0 %v7193
      %7308 = vmatpush1.msra.mxu0 %v7192
      %7309 = vmatprep.subr.mxu0 %v7197
      %7310 = vmatpush1.msra.mxu0 %v7196
      %7311 = vmatprep.subr.mxu0 %v7201
      %7312 = vmatpush1.msra.mxu0 %v7200
      %7313 = vmatprep.subr.mxu0 0.0
      %7314 = vmatpush1.msra.mxu0 0.0
      %7315 = vmatprep.subr.mxu0 0.0
      %7316 = vmatpush1.msra.mxu0 0.0
      %7317 = vmatprep.subr.mxu0 0.0
      %7318 = vmatpush1.msra.mxu0 0.0
      %7319 = vmatprep.subr.mxu0 0.0
      %7320 = vmatpush1.msra.mxu0 0.0
      %7321 = vmatprep.subr.mxu0 0.0
      %7322 = vmatpush1.msra.mxu0 0.0
      %7323 = vmatprep.subr.mxu0 0.0
      %7324 = vmatpush1.msra.mxu0 0.0
      %7325 = vmatprep.subr.mxu0 0.0
      %7326 = vmatpush1.msra.mxu0 0.0
      %7327 = vmatprep.subr.mxu0 0.0
      %7328 = vmatpush1.msra.mxu0 0.0
      %7329 = vmatprep.subr.mxu0 0.0
      %7330 = vmatpush1.msra.mxu0 0.0
      %7331 = vmatprep.subr.mxu0 0.0
      %7332 = vmatpush1.msra.mxu0 0.0
      %7333 = vmatprep.subr.mxu0 0.0
      %7334 = vmatpush1.msra.mxu0 0.0
      %7335 = vmatprep.subr.mxu0 0.0
      %7336 = vmatpush1.msra.mxu0 0.0
      %7337 = vmatprep.subr.mxu0 0.0
      %7338 = vmatpush1.msra.mxu0 0.0
      %7339 = vmatprep.subr.mxu0 0.0
      %7340 = vmatpush1.msra.mxu0 0.0
      %7341 = vmatprep.subr.mxu0 0.0
      %7342 = vmatpush1.msra.mxu0 0.0
      %7343 = vmatprep.subr.mxu0 0.0
      %7344 = vmatpush1.msra.mxu0 0.0
      %7345 = vmatprep.subr.mxu0 0.0
      %7346 = vmatpush1.msra.mxu0 0.0
      %7347 = vmatprep.subr.mxu0 0.0
      %7348 = vmatpush1.msra.mxu0 0.0
      %7349 = vmatprep.subr.mxu0 0.0
      %7350 = vmatpush1.msra.mxu0 0.0
      %7351 = vmatprep.subr.mxu0 0.0
      %7352 = vmatpush1.msra.mxu0 0.0
      %7353 = vmatprep.subr.mxu0 0.0
      %7354 = vmatpush1.msra.mxu0 0.0
      %7355 = vmatprep.subr.mxu0 0.0
      %7356 = vmatpush1.msra.mxu0 0.0
      %7357 = vmatprep.subr.mxu0 0.0
      %7358 = vmatpush1.msra.mxu0 0.0
      %7359 = vmatprep.subr.mxu0 0.0
      %7360 = vmatpush1.msra.mxu0 0.0
      %7361 = vmatprep.subr.mxu0 0.0
      %7362 = vmatpush1.msra.mxu0 0.0
      %7363 = vmatprep.subr.mxu0 0.0
      %7364 = vmatpush1.msra.mxu0 0.0
      %7365 = vmatprep.subr.mxu0 0.0
      %7366 = vmatpush1.msra.mxu0 0.0
      %7367 = vmatprep.subr.mxu0 0.0
      %7368 = vmatpush1.msra.mxu0 0.0
      %7369 = vmatprep.mubr.f32.mxu0 0.0
      %7370 = vmatmul.mubr.f32.gmra.mrb[0].mxu0 %v7205
      %v7371 = vpop.f32.mrb[0].mxu0
      %v7372 = vadd.f32 %v7283, %v7371
      %v7373 = vpop.f32.mrb[0].mxu0
      %v7374 = vadd.f32 %v7285, %v7373
      %7375 = vmatprep.mubr.f32.mxu0 0.0
      %7376 = vmatmul.mubr.f32.gmra.mrb[0].mxu0 %v7208
      %v7377 = vpop.f32.mrb[0].mxu0
      %v7378 = vadd.f32 %v7289, %v7377
      %v7379 = vpop.f32.mrb[0].mxu0
      %v7380 = vadd.f32 %v7291, %v7379
      %7381 = vmatprep.mubr.f32.mxu0 0.0
      %7382 = vmatmul.mubr.f32.gmra.mrb[0].mxu0 %v7211
      %v7383 = vpop.f32.mrb[0].mxu0
      %v7384 = vadd.f32 %v7295, %v7383
      %v7385 = vpop.f32.mrb[0].mxu0
      %v7386 = vadd.f32 %v7297, %v7385
      %7387 = vmatprep.mubr.f32.mxu0 0.0
      %7388 = vmatmul.mubr.f32.gmra.mrb[0].mxu0 %v7214
      %v7389 = vpop.f32.mrb[0].mxu0
      %v7390 = vadd.f32 %v7301, %v7389
      %v7391 = vpop.f32.mrb[0].mxu0
      %v7392 = vadd.f32 %v7303, %v7391
      %7393 = vdwg.mxu0
      %7394 = vmatprep.subr.mxu0 %v7063
      %7395 = vmatpush1.msra.mxu0 %v7062
      %7396 = vmatprep.subr.mxu0 %v7067
      %7397 = vmatpush1.msra.mxu0 %v7066
      %7398 = vmatprep.subr.mxu0 %v7071
      %7399 = vmatpush1.msra.mxu0 %v7070
      %7400 = vmatprep.subr.mxu0 %v7075
      %7401 = vmatpush1.msra.mxu0 %v7074
      %7402 = vmatprep.subr.mxu0 %v7079
      %7403 = vmatpush1.msra.mxu0 %v7078
      %7404 = vmatprep.subr.mxu0 %v7083
      %7405 = vmatpush1.msra.mxu0 %v7082
      %7406 = vmatprep.subr.mxu0 %v7087
      %7407 = vmatpush1.msra.mxu0 %v7086
      %7408 = vmatprep.subr.mxu0 %v7091
      %7409 = vmatpush1.msra.mxu0 %v7090
      %7410 = vmatprep.subr.mxu0 %v7095
      %7411 = vmatpush1.msra.mxu0 %v7094
      %7412 = vmatprep.subr.mxu0 %v7099
      %7413 = vmatpush1.msra.mxu0 %v7098
      %7414 = vmatprep.subr.mxu0 %v7103
      %7415 = vmatpush1.msra.mxu0 %v7102
      %7416 = vmatprep.subr.mxu0 %v7107
      %7417 = vmatpush1.msra.mxu0 %v7106
      %7418 = vmatprep.subr.mxu0 %v7111
      %7419 = vmatpush1.msra.mxu0 %v7110
      %7420 = vmatprep.subr.mxu0 %v7115
      %7421 = vmatpush1.msra.mxu0 %v7114
      %7422 = vmatprep.subr.mxu0 %v7119
      %7423 = vmatpush1.msra.mxu0 %v7118
      %7424 = vmatprep.subr.mxu0 %v7123
      %7425 = vmatpush1.msra.mxu0 %v7122
      %7426 = vmatprep.subr.mxu0 %v7127
      %7427 = vmatpush1.msra.mxu0 %v7126
      %7428 = vmatprep.subr.mxu0 %v7131
      %7429 = vmatpush1.msra.mxu0 %v7130
      %7430 = vmatprep.subr.mxu0 %v7135
      %7431 = vmatpush1.msra.mxu0 %v7134
      %7432 = vmatprep.subr.mxu0 %v7139
      %7433 = vmatpush1.msra.mxu0 %v7138
      %7434 = vmatprep.subr.mxu0 %v7143
      %7435 = vmatpush1.msra.mxu0 %v7142
      %7436 = vmatprep.subr.mxu0 %v7147
      %7437 = vmatpush1.msra.mxu0 %v7146
      %7438 = vmatprep.subr.mxu0 %v7151
      %7439 = vmatpush1.msra.mxu0 %v7150
      %7440 = vmatprep.subr.mxu0 %v7155
      %7441 = vmatpush1.msra.mxu0 %v7154
      %7442 = vmatprep.subr.mxu0 %v7159
      %7443 = vmatpush1.msra.mxu0 %v7158
      %7444 = vmatprep.subr.mxu0 %v7163
      %7445 = vmatpush1.msra.mxu0 %v7162
      %7446 = vmatprep.subr.mxu0 %v7167
      %7447 = vmatpush1.msra.mxu0 %v7166
      %7448 = vmatprep.subr.mxu0 %v7171
      %7449 = vmatpush1.msra.mxu0 %v7170
      %7450 = vmatprep.subr.mxu0 %v7175
      %7451 = vmatpush1.msra.mxu0 %v7174
      %7452 = vmatprep.subr.mxu0 %v7179
      %7453 = vmatpush1.msra.mxu0 %v7178
      %7454 = vmatprep.subr.mxu0 %v7183
      %7455 = vmatpush1.msra.mxu0 %v7182
      %7456 = vmatprep.subr.mxu0 %v7187
      %7457 = vmatpush1.msra.mxu0 %v7186
      %7458 = vmatprep.mubr.f32.mxu0 %v7049
      %7459 = vmatmul.mubr.f32.gmra.mrb[0].mxu0 %v7048
      %v7460 = vpop.f32.mrb[0].mxu0
      %v7461 = vadd.f32 0.0, %v7460
      %v7462 = vpop.f32.mrb[0].mxu0
      %v7463 = vadd.f32 0.0, %v7462
      %7464 = vmatprep.mubr.f32.mxu0 %v7052
      %7465 = vmatmul.mubr.f32.gmra.mrb[0].mxu0 %v7051
      %v7466 = vpop.f32.mrb[0].mxu0
      %v7467 = vadd.f32 0.0, %v7466
      %v7468 = vpop.f32.mrb[0].mxu0
      %v7469 = vadd.f32 0.0, %v7468
      %7470 = vmatprep.mubr.f32.mxu0 %v7055
      %7471 = vmatmul.mubr.f32.gmra.mrb[0].mxu0 %v7054
      %v7472 = vpop.f32.mrb[0].mxu0
      %v7473 = vadd.f32 0.0, %v7472
      %v7474 = vpop.f32.mrb[0].mxu0
      %v7475 = vadd.f32 0.0, %v7474
      %7476 = vmatprep.mubr.f32.mxu0 %v7058
      %7477 = vmatmul.mubr.f32.gmra.mrb[0].mxu0 %v7057
      %v7478 = vpop.f32.mrb[0].mxu0
      %v7479 = vadd.f32 0.0, %v7478
      %v7480 = vpop.f32.mrb[0].mxu0
      %v7481 = vadd.f32 0.0, %v7480
      %7482 = vdwg.mxu0
      %7483 = vmatprep.subr.mxu0 %v7191
      %7484 = vmatpush1.msra.mxu0 %v7190
      %7485 = vmatprep.subr.mxu0 %v7195
      %7486 = vmatpush1.msra.mxu0 %v7194
      %7487 = vmatprep.subr.mxu0 %v7199
      %7488 = vmatpush1.msra.mxu0 %v7198
      %7489 = vmatprep.subr.mxu0 %v7203
      %7490 = vmatpush1.msra.mxu0 %v7202
      %7491 = vmatprep.subr.mxu0 0.0
      %7492 = vmatpush1.msra.mxu0 0.0
      %7493 = vmatprep.subr.mxu0 0.0
      %7494 = vmatpush1.msra.mxu0 0.0
      %7495 = vmatprep.subr.mxu0 0.0
      %7496 = vmatpush1.msra.mxu0 0.0
      %7497 = vmatprep.subr.mxu0 0.0
      %7498 = vmatpush1.msra.mxu0 0.0
      %7499 = vmatprep.subr.mxu0 0.0
      %7500 = vmatpush1.msra.mxu0 0.0
      %7501 = vmatprep.subr.mxu0 0.0
      %7502 = vmatpush1.msra.mxu0 0.0
      %7503 = vmatprep.subr.mxu0 0.0
      %7504 = vmatpush1.msra.mxu0 0.0
      %7505 = vmatprep.subr.mxu0 0.0
      %7506 = vmatpush1.msra.mxu0 0.0
      %7507 = vmatprep.subr.mxu0 0.0
      %7508 = vmatpush1.msra.mxu0 0.0
      %7509 = vmatprep.subr.mxu0 0.0
      %7510 = vmatpush1.msra.mxu0 0.0
      %7511 = vmatprep.subr.mxu0 0.0
      %7512 = vmatpush1.msra.mxu0 0.0
      %7513 = vmatprep.subr.mxu0 0.0
      %7514 = vmatpush1.msra.mxu0 0.0
      %7515 = vmatprep.subr.mxu0 0.0
      %7516 = vmatpush1.msra.mxu0 0.0
      %7517 = vmatprep.subr.mxu0 0.0
      %7518 = vmatpush1.msra.mxu0 0.0
      %7519 = vmatprep.subr.mxu0 0.0
      %7520 = vmatpush1.msra.mxu0 0.0
      %7521 = vmatprep.subr.mxu0 0.0
      %7522 = vmatpush1.msra.mxu0 0.0
      %7523 = vmatprep.subr.mxu0 0.0
      %7524 = vmatpush1.msra.mxu0 0.0
      %7525 = vmatprep.subr.mxu0 0.0
      %7526 = vmatpush1.msra.mxu0 0.0
      %7527 = vmatprep.subr.mxu0 0.0
      %7528 = vmatpush1.msra.mxu0 0.0
      %7529 = vmatprep.subr.mxu0 0.0
      %7530 = vmatpush1.msra.mxu0 0.0
      %7531 = vmatprep.subr.mxu0 0.0
      %7532 = vmatpush1.msra.mxu0 0.0
      %7533 = vmatprep.subr.mxu0 0.0
      %7534 = vmatpush1.msra.mxu0 0.0
      %7535 = vmatprep.subr.mxu0 0.0
      %7536 = vmatpush1.msra.mxu0 0.0
      %7537 = vmatprep.subr.mxu0 0.0
      %7538 = vmatpush1.msra.mxu0 0.0
      %7539 = vmatprep.subr.mxu0 0.0
      %7540 = vmatpush1.msra.mxu0 0.0
      %7541 = vmatprep.subr.mxu0 0.0
      %7542 = vmatpush1.msra.mxu0 0.0
      %7543 = vmatprep.subr.mxu0 0.0
      %7544 = vmatpush1.msra.mxu0 0.0
      %7545 = vmatprep.subr.mxu0 0.0
      %7546 = vmatpush1.msra.mxu0 0.0
      %7547 = vmatprep.mubr.f32.mxu0 0.0
      %7548 = vmatmul.mubr.f32.gmra.mrb[0].mxu0 %v7205
      %v7549 = vpop.f32.mrb[0].mxu0
      %v7550 = vadd.f32 %v7461, %v7549
      %v7551 = vpop.f32.mrb[0].mxu0
      %v7552 = vadd.f32 %v7463, %v7551
      %7553 = vmatprep.mubr.f32.mxu0 0.0
      %7554 = vmatmul.mubr.f32.gmra.mrb[0].mxu0 %v7208
      %v7555 = vpop.f32.mrb[0].mxu0
      %v7556 = vadd.f32 %v7467, %v7555
      %v7557 = vpop.f32.mrb[0].mxu0
      %v7558 = vadd.f32 %v7469, %v7557
      %7559 = vmatprep.mubr.f32.mxu0 0.0
      %7560 = vmatmul.mubr.f32.gmra.mrb[0].mxu0 %v7211
      %v7561 = vpop.f32.mrb[0].mxu0
      %v7562 = vadd.f32 %v7473, %v7561
      %v7563 = vpop.f32.mrb[0].mxu0
      %v7564 = vadd.f32 %v7475, %v7563
      %7565 = vmatprep.mubr.f32.mxu0 0.0
      %7566 = vmatmul.mubr.f32.gmra.mrb[0].mxu0 %v7214
      %v7567 = vpop.f32.mrb[0].mxu0
      %v7568 = vadd.f32 %v7479, %v7567
      %v7569 = vpop.f32.mrb[0].mxu0
      %v7570 = vadd.f32 %v7481, %v7569
      %7571 = vdwg.mxu0
      %v7572 = vsub.f32 %v7372, %v7550
      %v7573 = vsub.f32 %v7374, %v7552
      %v7574 = vsub.f32 %v7378, %v7556
      %v7575 = vsub.f32 %v7380, %v7558
      %v7576 = vsub.f32 %v7384, %v7562
      %v7577 = vsub.f32 %v7386, %v7564
      %v7578 = vsub.f32 %v7390, %v7568
      %v7579 = vsub.f32 %v7392, %v7570
      %v7580 = vmul.f32 %v7572, %v7572
      %v7581 = vmul.f32 %v7573, %v7573
      %v7582 = vmul.f32 %v7574, %v7574
      %v7583 = vmul.f32 %v7575, %v7575
      %v7584 = vmul.f32 %v7576, %v7576
      %v7585 = vmul.f32 %v7577, %v7577
      %v7586 = vmul.f32 %v7578, %v7578
      %v7587 = vmul.f32 %v7579, %v7579
      %v7588 = vmul.f32 %v7580, 6.1035156e-05
      %v7589 = vmul.f32 %v7581, 6.1035156e-05
      %v7590 = vmul.f32 %v7582, 6.1035156e-05
      %v7591 = vmul.f32 %v7583, 6.1035156e-05
      %v7592 = vmul.f32 %v7584, 6.1035156e-05
      %v7593 = vmul.f32 %v7585, 6.1035156e-05
      %v7594 = vmul.f32 %v7586, 6.1035156e-05
      %v7595 = vmul.f32 %v7587, 6.1035156e-05
      %v7596 = vadd.f32 %v6118, %v7588
      %v7597 = vadd.f32 %v6119, %v7589
      %v7598 = vadd.f32 %v6120, %v7590
      %v7599 = vadd.f32 %v6121, %v7591
      %v7600 = vadd.f32 %v6122, %v7592
      %v7601 = vadd.f32 %v6123, %v7593
      %v7602 = vadd.f32 %v6124, %v7594
      %v7603 = vadd.f32 %v6125, %v7595
      %v7604 = vadd.f32 %v7596, %v7597
      %v7605 = vadd.f32 %v7598, %v7599
      %v7606 = vadd.f32 %v7600, %v7601
      %v7607 = vadd.f32 %v7602, %v7603
      %v7608 = vadd.f32 %v7604, %v7605
      %v7609 = vadd.f32 %v7608, %v7606
      %v7610 = vadd.f32 %v7609, %v7607
      %7611 = vst [vmem:[%s242] sm:$0xff] %v7610
      %p7612 = scmp.lt.s32.totalorder %s16, 1
      %s7613 = scalar_select %p7612, %s16, 1
      %s7614 = smul.addr %s7613, 8
      %s7615 = scalar_lea.vmem %s5, %s7614
      // Predicated region
      $region41: #{_lambda_.1} parent=39 // pred_check
        %p7616 = pneg %p149
      $region42: #{_lambda_.1} parent=39 // pred_check_branch
        %7618 = sbr.rel (%p7616) target = $region44
      $region43: #{_lambda_.1} parent=39 // pred_region
        _
      $region44: #{_lambda_.1} parent=39 // pred_fallthru
        _
    $region40: #{_lambda_.1} parent=5 // pred_fallthru
      _
    %p7619 = scmp.le.s32.totalorder 2, %s11
    // Predicated region
    $region45: #{_lambda_.1} parent=5 // pred_check
      %p7620 = pneg %p7619
    $region46: #{_lambda_.1} parent=5 // pred_check_branch
      %7622 = sbr.rel (%p7620) target = $region48
    $region47: #{_lambda_.1} parent=5 // pred_region
      %s7623 = ssub.s32 %s11, 2
      // Predicated region
      $region49: #{_lambda_.1} parent=47 // pred_check
        %p7624 = pneg %p155
      $region50: #{_lambda_.1} parent=47 // pred_check_branch
        %7626 = sbr.rel (%p7624) target = $region52
      $region51: #{_lambda_.1} parent=47 // pred_region
        %p7627 = scmp.lt.s32.totalorder %s17, 1
        %s7628 = scalar_select %p7627, %s17, 1
        %s7629 = smul.addr %s7628, 8
        %s7630 = scalar_lea.vmem %s5, %s7629
      $region52: #{_lambda_.1} parent=47 // pred_fallthru
        _
    $region48: #{_lambda_.1} parent=5 // pred_fallthru
      _
  $region6: #{_lambda_.1} parent=0 // loop_footer
    %s15 = sadd.s32 1, %s11
  $region7: #{_lambda_.1} parent=0 // loop_footer_branch
    %10 = sbr.rel target = $region3
  $region8: #{_lambda_.1} parent=0 // loop_exit
    _

</llo_original>
